<compile_context>
chip_gen: v6e
topology: v6e:2x2x1
jax: 0.10.0
libtpu: 0.0.40
codegen_flags: <defaults>
</compile_context>

<pallas_src>
import functools

import jax
import jax.numpy as jnp
from jax.experimental import pallas as pl
from jax.experimental.pallas import tpu as pltpu

CP = 128                       # persistent channel (lane) padding of activations
TM_MAX = 512                   # M-tile cap for the stem im2col matmul
VMEM_LIMIT = 48 * 1024 * 1024  # <= v7x 64 MiB physical; ample on v5e/v6e


def _round_up(x, m):
    return (x + m - 1) // m * m


# ----------------------------- Pallas kernels -----------------------------

def _conv_s1_kernel(x_ref, w_ref, b_ref, o_ref, *, kh, kw, wp, c):
    # x: (1, HP*WP + kw-1, C) bf16 flattened, spatially zero-padded activation.
    # w: (kh*kw*C, COUT) bf16 BN-folded weights (tap-major, then cin).
    # b: (1, COUT) f32 folded BN bias.  o: (1, OH*WP, COUT) bf16.
    # In-kernel im2col: each tap is a contiguous slice of the flattened input,
    # accumulated with one MXU dot into an f32 accumulator (bias+ReLU epilogue).
    mout, cout = o_ref.shape[1], o_ref.shape[2]
    xv = x_ref[0]                                     # (LIN, C), one VMEM load
    acc = jnp.zeros((mout, cout), jnp.float32)
    t = 0
    for di in range(kh):
        for dj in range(kw):
            start = di * wp + dj
            xs = xv[start:start + mout, :]            # unit-stride tap slice
            wt = w_ref[t * c:(t + 1) * c, :]          # tap weight block
            acc = acc + jnp.dot(xs, wt, preferred_element_type=jnp.float32)
            t += 1
    o_ref[0] = jnp.maximum(acc + b_ref[...], 0.0).astype(o_ref.dtype)


def _mm_bias_relu_kernel(p_ref, w_ref, b_ref, o_ref):
    # Stem (stride-2) conv: (TM, K) bf16 im2col patches @ (K, COUT) bf16 weights.
    acc = jnp.dot(p_ref[...], w_ref[...], preferred_element_type=jnp.float32)
    o_ref[...] = jnp.maximum(acc + b_ref[...], 0.0).astype(o_ref.dtype)


def _max_pool3x3_kernel(x_ref, o_ref):
    # x: (1, H, W, C); 3x3 / stride-1 max from 9 unit-stride window slices.
    oh, ow = o_ref.shape[1], o_ref.shape[2]
    x = x_ref[...]
    acc = x[:, 0:oh, 0:ow, :]
    for i in range(3):
        for j in range(3):
            if i == 0 and j == 0:
                continue
            acc = jnp.maximum(acc, x[:, i:i + oh, j:j + ow, :])
    o_ref[...] = acc


def _global_avg_pool_kernel(x_ref, o_ref):
    # x: (N, H*W, C) -> mean over the spatial axis (AdaptiveAvgPool2d(1)), f32 out.
    hw = x_ref.shape[1]
    o_ref[...] = jnp.sum(x_ref[...].astype(jnp.float32), axis=1) * (1.0 / hw)


# ------------------------------ kernel wrappers ----------------------------

def conv_s1(x, layer, kh, kw, pad):
    """Stride-1 BasicConv2d (Conv + folded eval BN + ReLU) with in-kernel im2col."""
    wm, bias = layer["wm"], layer["bias"]
    n, h, w, c = x.shape
    if pad:
        x = jnp.pad(x, ((0, 0), (pad, pad), (pad, pad), (0, 0)))
    hp, wp = h + 2 * pad, w + 2 * pad
    oh, ow = hp - kh + 1, wp - kw + 1
    mout = oh * wp                                    # full-width rows (junk cols > OW)
    lin = hp * wp + (kw - 1)                          # +tail so every tap slice is in-bounds
    cout = wm.shape[1]

    xf = x.reshape(n, hp * wp, c)                     # free reshape (contiguous)
    if kw > 1:
        xf = jnp.pad(xf, ((0, 0), (0, kw - 1), (0, 0)))

    kernel = functools.partial(_conv_s1_kernel, kh=kh, kw=kw, wp=wp, c=c)
    y = pl.pallas_call(
        kernel,
        out_shape=jax.ShapeDtypeStruct((n, mout, cout), jnp.bfloat16),
        grid=(n,),
        in_specs=[
            pl.BlockSpec((1, lin, c), lambda i: (i, 0, 0)),          # activation tile
            pl.BlockSpec((kh * kw * c, cout), lambda i: (0, 0)),     # weights (invariant)
            pl.BlockSpec((1, cout), lambda i: (0, 0)),               # bias (invariant)
        ],
        out_specs=pl.BlockSpec((1, mout, cout), lambda i: (i, 0, 0)),
        compiler_params=pltpu.CompilerParams(
            dimension_semantics=("parallel",), vmem_limit_bytes=VMEM_LIMIT),
    )(xf, wm, bias)

    y = y.reshape(n, oh, wp, cout)
    if ow != wp:                                      # drop the wrap-around junk columns
        y = y[:, :, :ow, :]
    return y


def matmul_bias_relu(a, wm, bias):
    """(M, K) @ (K, COUT) + bias, ReLU — tiled over M with a ragged final tile."""
    m, k = a.shape
    cout = wm.shape[1]
    # >=2 grid programs when possible (two v7x TensorCores), capped by TM_MAX.
    tm = min(TM_MAX, max(8, _round_up(pl.cdiv(m, 2), 8)))
    grid = pl.cdiv(m, tm)
    return pl.pallas_call(
        _mm_bias_relu_kernel,
        out_shape=jax.ShapeDtypeStruct((m, cout), jnp.bfloat16),
        grid=(grid,),
        in_specs=[
            pl.BlockSpec((tm, k), lambda i: (i, 0)),      # patches: tiled over M
            pl.BlockSpec((k, cout), lambda i: (0, 0)),    # weights: grid-invariant
            pl.BlockSpec((1, cout), lambda i: (0, 0)),    # bias: grid-invariant
        ],
        out_specs=pl.BlockSpec((tm, cout), lambda i: (i, 0)),
        compiler_params=pltpu.CompilerParams(
            dimension_semantics=("parallel",), vmem_limit_bytes=VMEM_LIMIT),
    )(a, wm, bias)


def _im2col(x, kh, kw, stride, pad):
    # XLA-side im2col (only used by the stride-2 stem conv, cin=3, K=27, bf16).
    if pad:
        x = jnp.pad(x, ((0, 0), (pad, pad), (pad, pad), (0, 0)))
    n, h, w, c = x.shape
    oh = (h - kh) // stride + 1
    ow = (w - kw) // stride + 1
    cols = []
    for i in range(kh):
        for j in range(kw):
            cols.append(x[:, i:i + stride * (oh - 1) + 1:stride,
                          j:j + stride * (ow - 1) + 1:stride, :])
    patches = jnp.concatenate(cols, axis=-1)
    return patches.reshape(n * oh * ow, kh * kw * c), oh, ow


def conv_stride2(x, layer, kh, kw, stride):
    """Strided stem conv via bf16 im2col + tiled matmul (kept only for Conv2d_1a)."""
    n = x.shape[0]
    pm, oh, ow = _im2col(x.astype(jnp.bfloat16), kh, kw, stride, 0)
    y = matmul_bias_relu(pm, layer["wm"], layer["bias"])
    return y.reshape(n, oh, ow, layer["wm"].shape[1])


def max_pool_3x3_s2(x):
    # Single input read: stride-1 3x3 max in VMEM, stride-2 subsample as a tiny
    # XLA slice of the pooled tensor (replaces 9 HBM-materialized strided views).
    # TODO(synk): the stride-2 subsample could move in-kernel via strided ds loads.
    n, h, w, c = x.shape
    ohf, owf = h - 2, w - 2
    y = pl.pallas_call(
        _max_pool3x3_kernel,
        out_shape=jax.ShapeDtypeStruct((n, ohf, owf, c), x.dtype),
        grid=(n,),
        in_specs=[pl.BlockSpec((1, h, w, c), lambda b: (b, 0, 0, 0))],
        out_specs=pl.BlockSpec((1, ohf, owf, c), lambda b: (b, 0, 0, 0)),
        compiler_params=pltpu.CompilerParams(
            dimension_semantics=("parallel",), vmem_limit_bytes=VMEM_LIMIT),
    )(x)
    return y[:, ::2, ::2, :]


def global_avg_pool(x):
    n, h, w, c = x.shape
    flat = x.reshape(n, h * w, c)
    return pl.pallas_call(
        _global_avg_pool_kernel,
        out_shape=jax.ShapeDtypeStruct((n, c), jnp.float32),
        grid=(1,),
        in_specs=[pl.BlockSpec((n, h * w, c), lambda i: (0, 0, 0))],
        out_specs=pl.BlockSpec((n, c), lambda i: (0, 0)),
    )(flat)


# ------------------------------ parameters ---------------------------------

def _basic_conv_params(key, cin, cout, kh, kw, eps=1e-3):
    kw_, kg, kb, km, kv = jax.random.split(key, 5)
    w = jax.random.normal(kw_, (cout, cin, kh, kw), jnp.float32)
    w = w * (1.0 / (cin * kh * kw) ** 0.5)
    gamma = 1.0 + 0.1 * jax.random.normal(kg, (cout,), jnp.float32)
    beta = 0.1 * jax.random.normal(kb, (cout,), jnp.float32)
    running_mean = 0.1 * jax.random.normal(km, (cout,), jnp.float32)
    running_var = 1.0 + 0.1 * jax.random.uniform(kv, (cout,), jnp.float32)
    scale = gamma / jnp.sqrt(running_var + eps)        # fold eval-mode BatchNorm
    bias = beta - running_mean * scale
    return {"w": w, "scale": scale, "bias": bias}


def init_params(key):
    keys = iter(jax.random.split(key, 16))
    p = {}
    # stem (scaled-down Conv2d_1a/2a/2b, maxpool1, Conv2d_3b/4a)
    p["conv1a"] = _basic_conv_params(next(keys), 3, 8, 3, 3)
    p["conv2a"] = _basic_conv_params(next(keys), 8, 8, 3, 3)
    p["conv2b"] = _basic_conv_params(next(keys), 8, 16, 3, 3)
    p["conv3b"] = _basic_conv_params(next(keys), 16, 16, 1, 1)
    p["conv4a"] = _basic_conv_params(next(keys), 16, 32, 3, 3)
    # Inception-A style mixed block (scaled down)
    p["m_b1"] = _basic_conv_params(next(keys), 32, 16, 1, 1)
    p["m_b2_1"] = _basic_conv_params(next(keys), 32, 12, 1, 1)
    p["m_b2_2"] = _basic_conv_params(next(keys), 12, 16, 5, 5)
    p["m_b3_1"] = _basic_conv_params(next(keys), 32, 16, 1, 1)
    p["m_b3_2"] = _basic_conv_params(next(keys), 16, 24, 3, 3)
    p["m_b3_3"] = _basic_conv_params(next(keys), 24, 24, 3, 3)
    p["m_b4"] = _basic_conv_params(next(keys), 32, 8, 1, 1)
    return p


def _fold_weight(raw):
    # Fold eval-mode BN scale into the conv weight; layout (kh, kw, cin, cout).
    return (raw["w"] * raw["scale"][:, None, None, None]).transpose(2, 3, 1, 0)


def _prep_conv_taps(raw, cin_offset=0, avg_pool_3x3=False):
    # Tap-major weight layout (kh*kw*CP, CP) for the in-kernel-im2col conv path.
    wf = _fold_weight(raw)
    if avg_pool_3x3:
        # Fuse AvgPool2d(3, stride=1, pad=1, count_include_pad=True) into the
        # following 1x1 conv: equivalent 3x3 conv whose every tap is w_1x1 / 9.
        wf = jnp.tile(wf / 9.0, (3, 3, 1, 1))
    kh, kw, cin, cout = wf.shape
    wm = jnp.zeros((kh * kw, CP, CP), jnp.float32)
    wm = wm.at[:, cin_offset:cin_offset + cin, :cout].set(wf.reshape(kh * kw, cin, cout))
    bias = jnp.zeros((1, CP), jnp.float32).at[:, :cout].set(raw["bias"][None])
    return {"wm": wm.reshape(kh * kw * CP, CP).astype(jnp.bfloat16), "bias": bias}


def _prep_conv_im2col(raw):
    # Unpadded-K weight layout for the stride-2 stem conv (K = kh*kw*cin).
    wf = _fold_weight(raw)
    kh, kw, cin, cout = wf.shape
    wm = jnp.zeros((kh * kw * cin, CP), jnp.float32)
    wm = wm.at[:, :cout].set(wf.reshape(kh * kw * cin, cout))
    bias = jnp.zeros((1, CP), jnp.float32).at[:, :cout].set(raw["bias"][None])
    return {"wm": wm.astype(jnp.bfloat16), "bias": bias}


def _prep_fused_1x1(raws):
    # Fuse several 1x1 convs sharing one input into a single matmul by
    # concatenating their BN-folded weight columns / biases along Cout.
    wm = jnp.zeros((CP, CP), jnp.float32)
    bias = jnp.zeros((1, CP), jnp.float32)
    off, offsets = 0, []
    for raw in raws:
        wf = _fold_weight(raw)                        # (1, 1, cin, cout)
        cin, cout = wf.shape[2], wf.shape[3]
        wm = wm.at[:cin, off:off + cout].set(wf[0, 0])
        bias = bias.at[:, off:off + cout].set(raw["bias"][None])
        offsets.append(off)
        off += cout
    return {"wm": wm.astype(jnp.bfloat16), "bias": bias}, offsets


def prepare_params(raw):
    """Fold BN, pad channels to CP=128 once, lay out tap-major weights, cast bf16."""
    p = {}
    p["conv1a"] = _prep_conv_im2col(raw["conv1a"])              # stride-2 stem, K=27
    p["conv2a"] = _prep_conv_taps(raw["conv2a"])
    p["conv2b"] = _prep_conv_taps(raw["conv2b"])
    p["conv3b"] = _prep_conv_taps(raw["conv3b"])
    p["conv4a"] = _prep_conv_taps(raw["conv4a"])
    fused, offs = _prep_fused_1x1([raw["m_b1"], raw["m_b2_1"], raw["m_b3_1"]])
    p["m_1x1"] = fused
    # Follow-up convs read their branch channels from the fused output by placing
    # their Cin weight rows at that branch's lane offset.
    p["m_b2_2"] = _prep_conv_taps(raw["m_b2_2"], cin_offset=offs[1])
    p["m_b3_2"] = _prep_conv_taps(raw["m_b3_2"], cin_offset=offs[2])
    p["m_b3_3"] = _prep_conv_taps(raw["m_b3_3"])
    p["m_b4"] = _prep_conv_taps(raw["m_b4"], avg_pool_3x3=True)  # fused pool+1x1
    return p


# ------------------------------ forward ------------------------------------

# True (unpadded) output widths of the mixed-block branches (b1, b2, b3, b4).
_BRANCH_WIDTHS = (16, 16, 24, 8)


def inception_fid_forward(params, x_nchw):
    """Eval-mode forward: feature blocks -> AdaptiveAvgPool2d(1) -> flatten."""
    x = jnp.transpose(x_nchw, (0, 2, 3, 1)).astype(jnp.float32)    # NCHW -> NHWC
    x = conv_stride2(x, params["conv1a"], kh=3, kw=3, stride=2)    # Conv2d_1a_3x3
    x = conv_s1(x, params["conv2a"], 3, 3, 0)                      # Conv2d_2a_3x3
    x = conv_s1(x, params["conv2b"], 3, 3, 1)                      # Conv2d_2b_3x3
    x = max_pool_3x3_s2(x)                                         # maxpool1
    x = conv_s1(x, params["conv3b"], 1, 1, 0)                      # Conv2d_3b_1x1
    x = conv_s1(x, params["conv4a"], 3, 3, 0)                      # Conv2d_4a_3x3
    # TODO(synk): full torchvision Inception stack (maxpool2, Mixed_5b..Mixed_7c,
    # AuxLogits, pretrained weights) is represented by one scaled-down Inception-A
    # style block with deterministic synthetic init.
    h = conv_s1(x, params["m_1x1"], 1, 1, 0)          # fused b1 / b2_1 / b3_1 heads
    b2 = conv_s1(h, params["m_b2_2"], 5, 5, 2)
    b3 = conv_s1(conv_s1(h, params["m_b3_2"], 3, 3, 1), params["m_b3_3"], 3, 3, 1)
    b4 = conv_s1(x, params["m_b4"], 3, 3, 1)          # fused avgpool3x3(p1) + 1x1 conv
    # Concatenate the channel-padded branch tensors, pool once, then extract the
    # true branch channels (padded lanes are exactly zero by construction).
    cat = jnp.concatenate([h, b2, b3, b4], axis=-1)                # (N, H, W, 4*CP)
    g = global_avg_pool(cat)                                       # (N, 4*CP) f32
    w1, w2, w3, w4 = _BRANCH_WIDTHS
    feat = jnp.concatenate(
        [g[:, 0:w1], g[:, CP:CP + w2],
         g[:, 2 * CP:2 * CP + w3], g[:, 3 * CP:3 * CP + w4]], axis=1)
    # Dropout is identity in eval(); .view(N, -1) == already (N, C_feat).
    return feat


if __name__ == "__main__":
    key = jax.random.PRNGKey(0)
    pkey, xkey = jax.random.split(key)
    params = prepare_params(init_params(pkey))
    # CIFAR-10-like input, NCHW as in the PyTorch module
    x = jax.random.normal(xkey, (2, 3, 32, 32), jnp.float32)

    fwd = jax.jit(inception_fid_forward)
    out = fwd(params, x)
    jax.block_until_ready(out)
    assert out.shape == (2, 64) and out.dtype == jnp.float32, (out.shape, out.dtype)
    print("KERNEL_OK")
</pallas_src>

<mosaic_0001>
module attributes {stable_mosaic.version = 11 : i64} {
  func.func @_mm_bias_relu_kernel(%arg0: i32, %arg1: memref<232x27xbf16, #tpu.memory_space<vmem>>, %arg2: memref<27x128xbf16, #tpu.memory_space<vmem>>, %arg3: memref<1x128xf32, #tpu.memory_space<vmem>>, %arg4: memref<232x128xbf16, #tpu.memory_space<vmem>>) attributes {dimension_semantics = [#tpu.dimension_semantics<parallel>], iteration_bounds = array<i64: 2>, scalar_prefetch = 0 : i64, scratch_operands = 0 : i64, tpu.core_type = #tpu.core_type<tc>, window_params = [{transform_indices = @transform_0, window_bounds = array<i64: 232, 27>}, {pipeline_mode = #tpu.pipeline_mode<synchronous>, transform_indices = @transform_1, window_bounds = array<i64: 27, 128>}, {pipeline_mode = #tpu.pipeline_mode<synchronous>, transform_indices = @transform_2, window_bounds = array<i64: 1, 128>}, {transform_indices = @transform_3, window_bounds = array<i64: 232, 128>}]} {
    %c0 = arith.constant 0 : index
    %c0_0 = arith.constant 0 : index
    %0 = vector.load %arg1[%c0, %c0_0] : memref<232x27xbf16, #tpu.memory_space<vmem>>, vector<232x27xbf16>
    %c0_1 = arith.constant 0 : index
    %c0_2 = arith.constant 0 : index
    %1 = vector.load %arg2[%c0_1, %c0_2] : memref<27x128xbf16, #tpu.memory_space<vmem>>, vector<27x128xbf16>
    %cst = arith.constant dense<0.000000e+00> : vector<232x128xf32>
    %2 = tpu.matmul %0, %1, %cst {dimension_numbers = #tpu.dot_dimension_numbers<[1], [0], [0], [1], [0, 0, 1, 1], [], []>} : vector<232x27xbf16>, vector<27x128xbf16>, vector<232x128xf32> -> vector<232x128xf32>
    %c0_3 = arith.constant 0 : index
    %c0_4 = arith.constant 0 : index
    %3 = vector.load %arg3[%c0_3, %c0_4] : memref<1x128xf32, #tpu.memory_space<vmem>>, vector<1x128xf32>
    %4 = vector.broadcast %3 : vector<1x128xf32> to vector<232x128xf32>
    %5 = arith.addf %2, %4 : vector<232x128xf32>
    %cst_5 = arith.constant 0.000000e+00 : f32
    %6 = vector.broadcast %cst_5 : f32 to vector<232x128xf32>
    %7 = arith.maximumf %5, %6 : vector<232x128xf32>
    %8 = arith.truncf %7 : vector<232x128xf32> to vector<232x128xbf16>
    %c0_6 = arith.constant 0 : index
    %c0_7 = arith.constant 0 : index
    %9 = vector.load %arg4[%c0_6, %c0_7] : memref<232x128xbf16, #tpu.memory_space<vmem>>, vector<232x128xbf16>
    tpu.vector_store %arg4[%c0_6, %c0_7], %8 {strides = array<i32>} : memref<232x128xbf16, #tpu.memory_space<vmem>>, vector<232x128xbf16>,
    return
  }
  func.func @transform_0(%arg0: i32) -> (i32, i32) {
    %c0_i32 = arith.constant 0 : i32
    %c0_i32_0 = arith.constant 0 : i32
    return %arg0, %c0_i32 : i32, i32
  }
  func.func @transform_1(%arg0: i32) -> (i32, i32) {
    %c0_i32 = arith.constant 0 : i32
    %c0_i32_0 = arith.constant 0 : i32
    %c0_i32_1 = arith.constant 0 : i32
    return %c0_i32, %c0_i32_0 : i32, i32
  }
  func.func @transform_2(%arg0: i32) -> (i32, i32) {
    %c0_i32 = arith.constant 0 : i32
    %c0_i32_0 = arith.constant 0 : i32
    %c0_i32_1 = arith.constant 0 : i32
    return %c0_i32, %c0_i32_0 : i32, i32
  }
  func.func @transform_3(%arg0: i32) -> (i32, i32) {
    %c0_i32 = arith.constant 0 : i32
    %c0_i32_0 = arith.constant 0 : i32
    return %arg0, %c0_i32 : i32, i32
  }
}

module attributes {stable_mosaic.version = 11 : i64} {
  func.func @_conv_s1_kernel(%arg0: i32, %arg1: memref<1x227x128xbf16, #tpu.memory_space<vmem>>, %arg2: memref<1152x128xbf16, #tpu.memory_space<vmem>>, %arg3: memref<1x128xf32, #tpu.memory_space<vmem>>, %arg4: memref<1x195x128xbf16, #tpu.memory_space<vmem>>) attributes {dimension_semantics = [#tpu.dimension_semantics<parallel>], iteration_bounds = array<i64: 2>, scalar_prefetch = 0 : i64, scratch_operands = 0 : i64, tpu.core_type = #tpu.core_type<tc>, window_params = [{transform_indices = @transform_0, window_bounds = array<i64: 1, 227, 128>}, {pipeline_mode = #tpu.pipeline_mode<synchronous>, transform_indices = @transform_1, window_bounds = array<i64: 1152, 128>}, {pipeline_mode = #tpu.pipeline_mode<synchronous>, transform_indices = @transform_2, window_bounds = array<i64: 1, 128>}, {transform_indices = @transform_3, window_bounds = array<i64: 1, 195, 128>}]} {
    %c0 = arith.constant 0 : index
    %c0_0 = arith.constant 0 : index
    %c0_1 = arith.constant 0 : index
    %0 = vector.load %arg1[%c0, %c0_0, %c0_1] : memref<1x227x128xbf16, #tpu.memory_space<vmem>>, vector<1x227x128xbf16>
    %1 = vector.shape_cast %0 : vector<1x227x128xbf16> to vector<227x128xbf16>
    %cst = arith.constant 0.000000e+00 : f32
    %2 = vector.broadcast %cst : f32 to vector<195x128xf32>
    %3 = vector.extract_strided_slice %1 {offsets = [0, 0], sizes = [195, 128], strides = [1, 1]} : vector<227x128xbf16> to vector<195x128xbf16>
    %c0_2 = arith.constant 0 : index
    %c0_3 = arith.constant 0 : index
    %4 = vector.load %arg2[%c0_2, %c0_3] : memref<1152x128xbf16, #tpu.memory_space<vmem>>, vector<128x128xbf16>
    %cst_4 = arith.constant dense<0.000000e+00> : vector<195x128xf32>
    %5 = tpu.matmul %3, %4, %cst_4 {dimension_numbers = #tpu.dot_dimension_numbers<[1], [0], [0], [1], [0, 0, 1, 1], [], []>} : vector<195x128xbf16>, vector<128x128xbf16>, vector<195x128xf32> -> vector<195x128xf32>
    %6 = arith.addf %2, %5 : vector<195x128xf32>
    %7 = vector.extract_strided_slice %1 {offsets = [1, 0], sizes = [195, 128], strides = [1, 1]} : vector<227x128xbf16> to vector<195x128xbf16>
    %c128 = arith.constant 128 : index
    %c0_5 = arith.constant 0 : index
    %8 = vector.load %arg2[%c128, %c0_5] : memref<1152x128xbf16, #tpu.memory_space<vmem>>, vector<128x128xbf16>
    %cst_6 = arith.constant dense<0.000000e+00> : vector<195x128xf32>
    %9 = tpu.matmul %7, %8, %cst_6 {dimension_numbers = #tpu.dot_dimension_numbers<[1], [0], [0], [1], [0, 0, 1, 1], [], []>} : vector<195x128xbf16>, vector<128x128xbf16>, vector<195x128xf32> -> vector<195x128xf32>
    %10 = arith.addf %6, %9 : vector<195x128xf32>
    %11 = vector.extract_strided_slice %1 {offsets = [2, 0], sizes = [195, 128], strides = [1, 1]} : vector<227x128xbf16> to vector<195x128xbf16>
    %c256 = arith.constant 256 : index
    %c0_7 = arith.constant 0 : index
    %12 = vector.load %arg2[%c256, %c0_7] : memref<1152x128xbf16, #tpu.memory_space<vmem>>, vector<128x128xbf16>
    %cst_8 = arith.constant dense<0.000000e+00> : vector<195x128xf32>
    %13 = tpu.matmul %11, %12, %cst_8 {dimension_numbers = #tpu.dot_dimension_numbers<[1], [0], [0], [1], [0, 0, 1, 1], [], []>} : vector<195x128xbf16>, vector<128x128xbf16>, vector<195x128xf32> -> vector<195x128xf32>
    %14 = arith.addf %10, %13 : vector<195x128xf32>
    %15 = vector.extract_strided_slice %1 {offsets = [15, 0], sizes = [195, 128], strides = [1, 1]} : vector<227x128xbf16> to vector<195x128xbf16>
    %c384 = arith.constant 384 : index
    %c0_9 = arith.constant 0 : index
    %16 = vector.load %arg2[%c384, %c0_9] : memref<1152x128xbf16, #tpu.memory_space<vmem>>, vector<128x128xbf16>
    %cst_10 = arith.constant dense<0.000000e+00> : vector<195x128xf32>
    %17 = tpu.matmul %15, %16, %cst_10 {dimension_numbers = #tpu.dot_dimension_numbers<[1], [0], [0], [1], [0, 0, 1, 1], [], []>} : vector<195x128xbf16>, vector<128x128xbf16>, vector<195x128xf32> -> vector<195x128xf32>
    %18 = arith.addf %14, %17 : vector<195x128xf32>
    %19 = vector.extract_strided_slice %1 {offsets = [16, 0], sizes = [195, 128], strides = [1, 1]} : vector<227x128xbf16> to vector<195x128xbf16>
    %c512 = arith.constant 512 : index
    %c0_11 = arith.constant 0 : index
    %20 = vector.load %arg2[%c512, %c0_11] : memref<1152x128xbf16, #tpu.memory_space<vmem>>, vector<128x128xbf16>
    %cst_12 = arith.constant dense<0.000000e+00> : vector<195x128xf32>
    %21 = tpu.matmul %19, %20, %cst_12 {dimension_numbers = #tpu.dot_dimension_numbers<[1], [0], [0], [1], [0, 0, 1, 1], [], []>} : vector<195x128xbf16>, vector<128x128xbf16>, vector<195x128xf32> -> vector<195x128xf32>
    %22 = arith.addf %18, %21 : vector<195x128xf32>
    %23 = vector.extract_strided_slice %1 {offsets = [17, 0], sizes = [195, 128], strides = [1, 1]} : vector<227x128xbf16> to vector<195x128xbf16>
    %c640 = arith.constant 640 : index
    %c0_13 = arith.constant 0 : index
    %24 = vector.load %arg2[%c640, %c0_13] : memref<1152x128xbf16, #tpu.memory_space<vmem>>, vector<128x128xbf16>
    %cst_14 = arith.constant dense<0.000000e+00> : vector<195x128xf32>
    %25 = tpu.matmul %23, %24, %cst_14 {dimension_numbers = #tpu.dot_dimension_numbers<[1], [0], [0], [1], [0, 0, 1, 1], [], []>} : vector<195x128xbf16>, vector<128x128xbf16>, vector<195x128xf32> -> vector<195x128xf32>
    %26 = arith.addf %22, %25 : vector<195x128xf32>
    %27 = vector.extract_strided_slice %1 {offsets = [30, 0], sizes = [195, 128], strides = [1, 1]} : vector<227x128xbf16> to vector<195x128xbf16>
    %c768 = arith.constant 768 : index
    %c0_15 = arith.constant 0 : index
    %28 = vector.load %arg2[%c768, %c0_15] : memref<1152x128xbf16, #tpu.memory_space<vmem>>, vector<128x128xbf16>
    %cst_16 = arith.constant dense<0.000000e+00> : vector<195x128xf32>
    %29 = tpu.matmul %27, %28, %cst_16 {dimension_numbers = #tpu.dot_dimension_numbers<[1], [0], [0], [1], [0, 0, 1, 1], [], []>} : vector<195x128xbf16>, vector<128x128xbf16>, vector<195x128xf32> -> vector<195x128xf32>
    %30 = arith.addf %26, %29 : vector<195x128xf32>
    %31 = vector.extract_strided_slice %1 {offsets = [31, 0], sizes = [195, 128], strides = [1, 1]} : vector<227x128xbf16> to vector<195x128xbf16>
    %c896 = arith.constant 896 : index
    %c0_17 = arith.constant 0 : index
    %32 = vector.load %arg2[%c896, %c0_17] : memref<1152x128xbf16, #tpu.memory_space<vmem>>, vector<128x128xbf16>
    %cst_18 = arith.constant dense<0.000000e+00> : vector<195x128xf32>
    %33 = tpu.matmul %31, %32, %cst_18 {dimension_numbers = #tpu.dot_dimension_numbers<[1], [0], [0], [1], [0, 0, 1, 1], [], []>} : vector<195x128xbf16>, vector<128x128xbf16>, vector<195x128xf32> -> vector<195x128xf32>
    %34 = arith.addf %30, %33 : vector<195x128xf32>
    %35 = vector.extract_strided_slice %1 {offsets = [32, 0], sizes = [195, 128], strides = [1, 1]} : vector<227x128xbf16> to vector<195x128xbf16>
    %c1024 = arith.constant 1024 : index
    %c0_19 = arith.constant 0 : index
    %36 = vector.load %arg2[%c1024, %c0_19] : memref<1152x128xbf16, #tpu.memory_space<vmem>>, vector<128x128xbf16>
    %cst_20 = arith.constant dense<0.000000e+00> : vector<195x128xf32>
    %37 = tpu.matmul %35, %36, %cst_20 {dimension_numbers = #tpu.dot_dimension_numbers<[1], [0], [0], [1], [0, 0, 1, 1], [], []>} : vector<195x128xbf16>, vector<128x128xbf16>, vector<195x128xf32> -> vector<195x128xf32>
    %38 = arith.addf %34, %37 : vector<195x128xf32>
    %c0_21 = arith.constant 0 : index
    %c0_22 = arith.constant 0 : index
    %39 = vector.load %arg3[%c0_21, %c0_22] : memref<1x128xf32, #tpu.memory_space<vmem>>, vector<1x128xf32>
    %40 = vector.broadcast %39 : vector<1x128xf32> to vector<195x128xf32>
    %41 = arith.addf %38, %40 : vector<195x128xf32>
    %cst_23 = arith.constant 0.000000e+00 : f32
    %42 = vector.broadcast %cst_23 : f32 to vector<195x128xf32>
    %43 = arith.maximumf %41, %42 : vector<195x128xf32>
    %44 = arith.truncf %43 : vector<195x128xf32> to vector<195x128xbf16>
    %c0_24 = arith.constant 0 : index
    %c0_25 = arith.constant 0 : index
    %c0_26 = arith.constant 0 : index
    %45 = vector.load %arg4[%c0_24, %c0_25, %c0_26] : memref<1x195x128xbf16, #tpu.memory_space<vmem>>, vector<1x195x128xbf16>
    %46 = vector.shape_cast %45 : vector<1x195x128xbf16> to vector<195x128xbf16>
    %47 = vector.shape_cast %44 : vector<195x128xbf16> to vector<1x195x128xbf16>
    tpu.vector_store %arg4[%c0_24, %c0_25, %c0_26], %47 {strides = array<i32>} : memref<1x195x128xbf16, #tpu.memory_space<vmem>>, vector<1x195x128xbf16>,
    return
  }
  func.func @transform_0(%arg0: i32) -> (i32, i32, i32) {
    %c0_i32 = arith.constant 0 : i32
    %c0_i32_0 = arith.constant 0 : i32
    %c0_i32_1 = arith.constant 0 : i32
    return %arg0, %c0_i32, %c0_i32_0 : i32, i32, i32
  }
  func.func @transform_1(%arg0: i32) -> (i32, i32) {
    %c0_i32 = arith.constant 0 : i32
    %c0_i32_0 = arith.constant 0 : i32
    %c0_i32_1 = arith.constant 0 : i32
    return %c0_i32, %c0_i32_0 : i32, i32
  }
  func.func @transform_2(%arg0: i32) -> (i32, i32) {
    %c0_i32 = arith.constant 0 : i32
    %c0_i32_0 = arith.constant 0 : i32
    %c0_i32_1 = arith.constant 0 : i32
    return %c0_i32, %c0_i32_0 : i32, i32
  }
  func.func @transform_3(%arg0: i32) -> (i32, i32, i32) {
    %c0_i32 = arith.constant 0 : i32
    %c0_i32_0 = arith.constant 0 : i32
    %c0_i32_1 = arith.constant 0 : i32
    return %arg0, %c0_i32, %c0_i32_0 : i32, i32, i32
  }
}

module attributes {stable_mosaic.version = 11 : i64} {
  func.func @_max_pool3x3_kernel(%arg0: i32, %arg1: memref<1x13x13x128xbf16, #tpu.memory_space<vmem>>, %arg2: memref<1x11x11x128xbf16, #tpu.memory_space<vmem>>) attributes {dimension_semantics = [#tpu.dimension_semantics<parallel>], iteration_bounds = array<i64: 2>, scalar_prefetch = 0 : i64, scratch_operands = 0 : i64, tpu.core_type = #tpu.core_type<tc>, window_params = [{transform_indices = @transform_0, window_bounds = array<i64: 1, 13, 13, 128>}, {transform_indices = @transform_1, window_bounds = array<i64: 1, 11, 11, 128>}]} {
    %c0 = arith.constant 0 : index
    %c0_0 = arith.constant 0 : index
    %c0_1 = arith.constant 0 : index
    %c0_2 = arith.constant 0 : index
    %0 = vector.load %arg1[%c0, %c0_0, %c0_1, %c0_2] : memref<1x13x13x128xbf16, #tpu.memory_space<vmem>>, vector<1x13x13x128xbf16>
    %1 = vector.extract_strided_slice %0 {offsets = [0, 0, 0, 0], sizes = [1, 11, 11, 128], strides = [1, 1, 1, 1]} : vector<1x13x13x128xbf16> to vector<1x11x11x128xbf16>
    %2 = vector.extract_strided_slice %0 {offsets = [0, 0, 1, 0], sizes = [1, 11, 11, 128], strides = [1, 1, 1, 1]} : vector<1x13x13x128xbf16> to vector<1x11x11x128xbf16>
    %3 = arith.maximumf %1, %2 : vector<1x11x11x128xbf16>
    %4 = vector.extract_strided_slice %0 {offsets = [0, 0, 2, 0], sizes = [1, 11, 11, 128], strides = [1, 1, 1, 1]} : vector<1x13x13x128xbf16> to vector<1x11x11x128xbf16>
    %5 = arith.maximumf %3, %4 : vector<1x11x11x128xbf16>
    %6 = vector.extract_strided_slice %0 {offsets = [0, 1, 0, 0], sizes = [1, 11, 11, 128], strides = [1, 1, 1, 1]} : vector<1x13x13x128xbf16> to vector<1x11x11x128xbf16>
    %7 = arith.maximumf %5, %6 : vector<1x11x11x128xbf16>
    %8 = vector.extract_strided_slice %0 {offsets = [0, 1, 1, 0], sizes = [1, 11, 11, 128], strides = [1, 1, 1, 1]} : vector<1x13x13x128xbf16> to vector<1x11x11x128xbf16>
    %9 = arith.maximumf %7, %8 : vector<1x11x11x128xbf16>
    %10 = vector.extract_strided_slice %0 {offsets = [0, 1, 2, 0], sizes = [1, 11, 11, 128], strides = [1, 1, 1, 1]} : vector<1x13x13x128xbf16> to vector<1x11x11x128xbf16>
    %11 = arith.maximumf %9, %10 : vector<1x11x11x128xbf16>
    %12 = vector.extract_strided_slice %0 {offsets = [0, 2, 0, 0], sizes = [1, 11, 11, 128], strides = [1, 1, 1, 1]} : vector<1x13x13x128xbf16> to vector<1x11x11x128xbf16>
    %13 = arith.maximumf %11, %12 : vector<1x11x11x128xbf16>
    %14 = vector.extract_strided_slice %0 {offsets = [0, 2, 1, 0], sizes = [1, 11, 11, 128], strides = [1, 1, 1, 1]} : vector<1x13x13x128xbf16> to vector<1x11x11x128xbf16>
    %15 = arith.maximumf %13, %14 : vector<1x11x11x128xbf16>
    %16 = vector.extract_strided_slice %0 {offsets = [0, 2, 2, 0], sizes = [1, 11, 11, 128], strides = [1, 1, 1, 1]} : vector<1x13x13x128xbf16> to vector<1x11x11x128xbf16>
    %17 = arith.maximumf %15, %16 : vector<1x11x11x128xbf16>
    %c0_3 = arith.constant 0 : index
    %c0_4 = arith.constant 0 : index
    %c0_5 = arith.constant 0 : index
    %c0_6 = arith.constant 0 : index
    %18 = vector.load %arg2[%c0_3, %c0_4, %c0_5, %c0_6] : memref<1x11x11x128xbf16, #tpu.memory_space<vmem>>, vector<1x11x11x128xbf16>
    tpu.vector_store %arg2[%c0_3, %c0_4, %c0_5, %c0_6], %17 {strides = array<i32>} : memref<1x11x11x128xbf16, #tpu.memory_space<vmem>>, vector<1x11x11x128xbf16>,
    return
  }
  func.func @transform_0(%arg0: i32) -> (i32, i32, i32, i32) {
    %c0_i32 = arith.constant 0 : i32
    %c0_i32_0 = arith.constant 0 : i32
    %c0_i32_1 = arith.constant 0 : i32
    %c0_i32_2 = arith.constant 0 : i32
    return %arg0, %c0_i32, %c0_i32_0, %c0_i32_1 : i32, i32, i32, i32
  }
  func.func @transform_1(%arg0: i32) -> (i32, i32, i32, i32) {
    %c0_i32 = arith.constant 0 : i32
    %c0_i32_0 = arith.constant 0 : i32
    %c0_i32_1 = arith.constant 0 : i32
    %c0_i32_2 = arith.constant 0 : i32
    return %arg0, %c0_i32, %c0_i32_0, %c0_i32_1 : i32, i32, i32, i32
  }
}

module attributes {stable_mosaic.version = 11 : i64} {
  func.func @_conv_s1_kernel(%arg0: i32, %arg1: memref<1x36x128xbf16, #tpu.memory_space<vmem>>, %arg2: memref<128x128xbf16, #tpu.memory_space<vmem>>, %arg3: memref<1x128xf32, #tpu.memory_space<vmem>>, %arg4: memref<1x36x128xbf16, #tpu.memory_space<vmem>>) attributes {dimension_semantics = [#tpu.dimension_semantics<parallel>], iteration_bounds = array<i64: 2>, scalar_prefetch = 0 : i64, scratch_operands = 0 : i64, tpu.core_type = #tpu.core_type<tc>, window_params = [{transform_indices = @transform_0, window_bounds = array<i64: 1, 36, 128>}, {pipeline_mode = #tpu.pipeline_mode<synchronous>, transform_indices = @transform_1, window_bounds = array<i64: 128, 128>}, {pipeline_mode = #tpu.pipeline_mode<synchronous>, transform_indices = @transform_2, window_bounds = array<i64: 1, 128>}, {transform_indices = @transform_3, window_bounds = array<i64: 1, 36, 128>}]} {
    %c0 = arith.constant 0 : index
    %c0_0 = arith.constant 0 : index
    %c0_1 = arith.constant 0 : index
    %0 = vector.load %arg1[%c0, %c0_0, %c0_1] : memref<1x36x128xbf16, #tpu.memory_space<vmem>>, vector<1x36x128xbf16>
    %1 = vector.shape_cast %0 : vector<1x36x128xbf16> to vector<36x128xbf16>
    %cst = arith.constant 0.000000e+00 : f32
    %2 = vector.broadcast %cst : f32 to vector<36x128xf32>
    %c0_2 = arith.constant 0 : index
    %c0_3 = arith.constant 0 : index
    %3 = vector.load %arg2[%c0_2, %c0_3] : memref<128x128xbf16, #tpu.memory_space<vmem>>, vector<128x128xbf16>
    %cst_4 = arith.constant dense<0.000000e+00> : vector<36x128xf32>
    %4 = tpu.matmul %1, %3, %cst_4 {dimension_numbers = #tpu.dot_dimension_numbers<[1], [0], [0], [1], [0, 0, 1, 1], [], []>} : vector<36x128xbf16>, vector<128x128xbf16>, vector<36x128xf32> -> vector<36x128xf32>
    %5 = arith.addf %2, %4 : vector<36x128xf32>
    %c0_5 = arith.constant 0 : index
    %c0_6 = arith.constant 0 : index
    %6 = vector.load %arg3[%c0_5, %c0_6] : memref<1x128xf32, #tpu.memory_space<vmem>>, vector<1x128xf32>
    %7 = vector.broadcast %6 : vector<1x128xf32> to vector<36x128xf32>
    %8 = arith.addf %5, %7 : vector<36x128xf32>
    %cst_7 = arith.constant 0.000000e+00 : f32
    %9 = vector.broadcast %cst_7 : f32 to vector<36x128xf32>
    %10 = arith.maximumf %8, %9 : vector<36x128xf32>
    %11 = arith.truncf %10 : vector<36x128xf32> to vector<36x128xbf16>
    %c0_8 = arith.constant 0 : index
    %c0_9 = arith.constant 0 : index
    %c0_10 = arith.constant 0 : index
    %12 = vector.load %arg4[%c0_8, %c0_9, %c0_10] : memref<1x36x128xbf16, #tpu.memory_space<vmem>>, vector<1x36x128xbf16>
    %13 = vector.shape_cast %12 : vector<1x36x128xbf16> to vector<36x128xbf16>
    %14 = vector.shape_cast %11 : vector<36x128xbf16> to vector<1x36x128xbf16>
    tpu.vector_store %arg4[%c0_8, %c0_9, %c0_10], %14 {strides = array<i32>} : memref<1x36x128xbf16, #tpu.memory_space<vmem>>, vector<1x36x128xbf16>,
    return
  }
  func.func @transform_0(%arg0: i32) -> (i32, i32, i32) {
    %c0_i32 = arith.constant 0 : i32
    %c0_i32_0 = arith.constant 0 : i32
    %c0_i32_1 = arith.constant 0 : i32
    return %arg0, %c0_i32, %c0_i32_0 : i32, i32, i32
  }
  func.func @transform_1(%arg0: i32) -> (i32, i32) {
    %c0_i32 = arith.constant 0 : i32
    %c0_i32_0 = arith.constant 0 : i32
    %c0_i32_1 = arith.constant 0 : i32
    return %c0_i32, %c0_i32_0 : i32, i32
  }
  func.func @transform_2(%arg0: i32) -> (i32, i32) {
    %c0_i32 = arith.constant 0 : i32
    %c0_i32_0 = arith.constant 0 : i32
    %c0_i32_1 = arith.constant 0 : i32
    return %c0_i32, %c0_i32_0 : i32, i32
  }
  func.func @transform_3(%arg0: i32) -> (i32, i32, i32) {
    %c0_i32 = arith.constant 0 : i32
    %c0_i32_0 = arith.constant 0 : i32
    %c0_i32_1 = arith.constant 0 : i32
    return %arg0, %c0_i32, %c0_i32_0 : i32, i32, i32
  }
}

module attributes {stable_mosaic.version = 11 : i64} {
  func.func @_conv_s1_kernel(%arg0: i32, %arg1: memref<1x38x128xbf16, #tpu.memory_space<vmem>>, %arg2: memref<1152x128xbf16, #tpu.memory_space<vmem>>, %arg3: memref<1x128xf32, #tpu.memory_space<vmem>>, %arg4: memref<1x24x128xbf16, #tpu.memory_space<vmem>>) attributes {dimension_semantics = [#tpu.dimension_semantics<parallel>], iteration_bounds = array<i64: 2>, scalar_prefetch = 0 : i64, scratch_operands = 0 : i64, tpu.core_type = #tpu.core_type<tc>, window_params = [{transform_indices = @transform_0, window_bounds = array<i64: 1, 38, 128>}, {pipeline_mode = #tpu.pipeline_mode<synchronous>, transform_indices = @transform_1, window_bounds = array<i64: 1152, 128>}, {pipeline_mode = #tpu.pipeline_mode<synchronous>, transform_indices = @transform_2, window_bounds = array<i64: 1, 128>}, {transform_indices = @transform_3, window_bounds = array<i64: 1, 24, 128>}]} {
    %c0 = arith.constant 0 : index
    %c0_0 = arith.constant 0 : index
    %c0_1 = arith.constant 0 : index
    %0 = vector.load %arg1[%c0, %c0_0, %c0_1] : memref<1x38x128xbf16, #tpu.memory_space<vmem>>, vector<1x38x128xbf16>
    %1 = vector.shape_cast %0 : vector<1x38x128xbf16> to vector<38x128xbf16>
    %cst = arith.constant 0.000000e+00 : f32
    %2 = vector.broadcast %cst : f32 to vector<24x128xf32>
    %3 = vector.extract_strided_slice %1 {offsets = [0, 0], sizes = [24, 128], strides = [1, 1]} : vector<38x128xbf16> to vector<24x128xbf16>
    %c0_2 = arith.constant 0 : index
    %c0_3 = arith.constant 0 : index
    %4 = vector.load %arg2[%c0_2, %c0_3] : memref<1152x128xbf16, #tpu.memory_space<vmem>>, vector<128x128xbf16>
    %cst_4 = arith.constant dense<0.000000e+00> : vector<24x128xf32>
    %5 = tpu.matmul %3, %4, %cst_4 {dimension_numbers = #tpu.dot_dimension_numbers<[1], [0], [0], [1], [0, 0, 1, 1], [], []>} : vector<24x128xbf16>, vector<128x128xbf16>, vector<24x128xf32> -> vector<24x128xf32>
    %6 = arith.addf %2, %5 : vector<24x128xf32>
    %7 = vector.extract_strided_slice %1 {offsets = [1, 0], sizes = [24, 128], strides = [1, 1]} : vector<38x128xbf16> to vector<24x128xbf16>
    %c128 = arith.constant 128 : index
    %c0_5 = arith.constant 0 : index
    %8 = vector.load %arg2[%c128, %c0_5] : memref<1152x128xbf16, #tpu.memory_space<vmem>>, vector<128x128xbf16>
    %cst_6 = arith.constant dense<0.000000e+00> : vector<24x128xf32>
    %9 = tpu.matmul %7, %8, %cst_6 {dimension_numbers = #tpu.dot_dimension_numbers<[1], [0], [0], [1], [0, 0, 1, 1], [], []>} : vector<24x128xbf16>, vector<128x128xbf16>, vector<24x128xf32> -> vector<24x128xf32>
    %10 = arith.addf %6, %9 : vector<24x128xf32>
    %11 = vector.extract_strided_slice %1 {offsets = [2, 0], sizes = [24, 128], strides = [1, 1]} : vector<38x128xbf16> to vector<24x128xbf16>
    %c256 = arith.constant 256 : index
    %c0_7 = arith.constant 0 : index
    %12 = vector.load %arg2[%c256, %c0_7] : memref<1152x128xbf16, #tpu.memory_space<vmem>>, vector<128x128xbf16>
    %cst_8 = arith.constant dense<0.000000e+00> : vector<24x128xf32>
    %13 = tpu.matmul %11, %12, %cst_8 {dimension_numbers = #tpu.dot_dimension_numbers<[1], [0], [0], [1], [0, 0, 1, 1], [], []>} : vector<24x128xbf16>, vector<128x128xbf16>, vector<24x128xf32> -> vector<24x128xf32>
    %14 = arith.addf %10, %13 : vector<24x128xf32>
    %15 = vector.extract_strided_slice %1 {offsets = [6, 0], sizes = [24, 128], strides = [1, 1]} : vector<38x128xbf16> to vector<24x128xbf16>
    %c384 = arith.constant 384 : index
    %c0_9 = arith.constant 0 : index
    %16 = vector.load %arg2[%c384, %c0_9] : memref<1152x128xbf16, #tpu.memory_space<vmem>>, vector<128x128xbf16>
    %cst_10 = arith.constant dense<0.000000e+00> : vector<24x128xf32>
    %17 = tpu.matmul %15, %16, %cst_10 {dimension_numbers = #tpu.dot_dimension_numbers<[1], [0], [0], [1], [0, 0, 1, 1], [], []>} : vector<24x128xbf16>, vector<128x128xbf16>, vector<24x128xf32> -> vector<24x128xf32>
    %18 = arith.addf %14, %17 : vector<24x128xf32>
    %19 = vector.extract_strided_slice %1 {offsets = [7, 0], sizes = [24, 128], strides = [1, 1]} : vector<38x128xbf16> to vector<24x128xbf16>
    %c512 = arith.constant 512 : index
    %c0_11 = arith.constant 0 : index
    %20 = vector.load %arg2[%c512, %c0_11] : memref<1152x128xbf16, #tpu.memory_space<vmem>>, vector<128x128xbf16>
    %cst_12 = arith.constant dense<0.000000e+00> : vector<24x128xf32>
    %21 = tpu.matmul %19, %20, %cst_12 {dimension_numbers = #tpu.dot_dimension_numbers<[1], [0], [0], [1], [0, 0, 1, 1], [], []>} : vector<24x128xbf16>, vector<128x128xbf16>, vector<24x128xf32> -> vector<24x128xf32>
    %22 = arith.addf %18, %21 : vector<24x128xf32>
    %23 = vector.extract_strided_slice %1 {offsets = [8, 0], sizes = [24, 128], strides = [1, 1]} : vector<38x128xbf16> to vector<24x128xbf16>
    %c640 = arith.constant 640 : index
    %c0_13 = arith.constant 0 : index
    %24 = vector.load %arg2[%c640, %c0_13] : memref<1152x128xbf16, #tpu.memory_space<vmem>>, vector<128x128xbf16>
    %cst_14 = arith.constant dense<0.000000e+00> : vector<24x128xf32>
    %25 = tpu.matmul %23, %24, %cst_14 {dimension_numbers = #tpu.dot_dimension_numbers<[1], [0], [0], [1], [0, 0, 1, 1], [], []>} : vector<24x128xbf16>, vector<128x128xbf16>, vector<24x128xf32> -> vector<24x128xf32>
    %26 = arith.addf %22, %25 : vector<24x128xf32>
    %27 = vector.extract_strided_slice %1 {offsets = [12, 0], sizes = [24, 128], strides = [1, 1]} : vector<38x128xbf16> to vector<24x128xbf16>
    %c768 = arith.constant 768 : index
    %c0_15 = arith.constant 0 : index
    %28 = vector.load %arg2[%c768, %c0_15] : memref<1152x128xbf16, #tpu.memory_space<vmem>>, vector<128x128xbf16>
    %cst_16 = arith.constant dense<0.000000e+00> : vector<24x128xf32>
    %29 = tpu.matmul %27, %28, %cst_16 {dimension_numbers = #tpu.dot_dimension_numbers<[1], [0], [0], [1], [0, 0, 1, 1], [], []>} : vector<24x128xbf16>, vector<128x128xbf16>, vector<24x128xf32> -> vector<24x128xf32>
    %30 = arith.addf %26, %29 : vector<24x128xf32>
    %31 = vector.extract_strided_slice %1 {offsets = [13, 0], sizes = [24, 128], strides = [1, 1]} : vector<38x128xbf16> to vector<24x128xbf16>
    %c896 = arith.constant 896 : index
    %c0_17 = arith.constant 0 : index
    %32 = vector.load %arg2[%c896, %c0_17] : memref<1152x128xbf16, #tpu.memory_space<vmem>>, vector<128x128xbf16>
    %cst_18 = arith.constant dense<0.000000e+00> : vector<24x128xf32>
    %33 = tpu.matmul %31, %32, %cst_18 {dimension_numbers = #tpu.dot_dimension_numbers<[1], [0], [0], [1], [0, 0, 1, 1], [], []>} : vector<24x128xbf16>, vector<128x128xbf16>, vector<24x128xf32> -> vector<24x128xf32>
    %34 = arith.addf %30, %33 : vector<24x128xf32>
    %35 = vector.extract_strided_slice %1 {offsets = [14, 0], sizes = [24, 128], strides = [1, 1]} : vector<38x128xbf16> to vector<24x128xbf16>
    %c1024 = arith.constant 1024 : index
    %c0_19 = arith.constant 0 : index
    %36 = vector.load %arg2[%c1024, %c0_19] : memref<1152x128xbf16, #tpu.memory_space<vmem>>, vector<128x128xbf16>
    %cst_20 = arith.constant dense<0.000000e+00> : vector<24x128xf32>
    %37 = tpu.matmul %35, %36, %cst_20 {dimension_numbers = #tpu.dot_dimension_numbers<[1], [0], [0], [1], [0, 0, 1, 1], [], []>} : vector<24x128xbf16>, vector<128x128xbf16>, vector<24x128xf32> -> vector<24x128xf32>
    %38 = arith.addf %34, %37 : vector<24x128xf32>
    %c0_21 = arith.constant 0 : index
    %c0_22 = arith.constant 0 : index
    %39 = vector.load %arg3[%c0_21, %c0_22] : memref<1x128xf32, #tpu.memory_space<vmem>>, vector<1x128xf32>
    %40 = vector.broadcast %39 : vector<1x128xf32> to vector<24x128xf32>
    %41 = arith.addf %38, %40 : vector<24x128xf32>
    %cst_23 = arith.constant 0.000000e+00 : f32
    %42 = vector.broadcast %cst_23 : f32 to vector<24x128xf32>
    %43 = arith.maximumf %41, %42 : vector<24x128xf32>
    %44 = arith.truncf %43 : vector<24x128xf32> to vector<24x128xbf16>
    %c0_24 = arith.constant 0 : index
    %c0_25 = arith.constant 0 : index
    %c0_26 = arith.constant 0 : index
    %45 = vector.load %arg4[%c0_24, %c0_25, %c0_26] : memref<1x24x128xbf16, #tpu.memory_space<vmem>>, vector<1x24x128xbf16>
    %46 = vector.shape_cast %45 : vector<1x24x128xbf16> to vector<24x128xbf16>
    %47 = vector.shape_cast %44 : vector<24x128xbf16> to vector<1x24x128xbf16>
    tpu.vector_store %arg4[%c0_24, %c0_25, %c0_26], %47 {strides = array<i32>} : memref<1x24x128xbf16, #tpu.memory_space<vmem>>, vector<1x24x128xbf16>,
    return
  }
  func.func @transform_0(%arg0: i32) -> (i32, i32, i32) {
    %c0_i32 = arith.constant 0 : i32
    %c0_i32_0 = arith.constant 0 : i32
    %c0_i32_1 = arith.constant 0 : i32
    return %arg0, %c0_i32, %c0_i32_0 : i32, i32, i32
  }
  func.func @transform_1(%arg0: i32) -> (i32, i32) {
    %c0_i32 = arith.constant 0 : i32
    %c0_i32_0 = arith.constant 0 : i32
    %c0_i32_1 = arith.constant 0 : i32
    return %c0_i32, %c0_i32_0 : i32, i32
  }
  func.func @transform_2(%arg0: i32) -> (i32, i32) {
    %c0_i32 = arith.constant 0 : i32
    %c0_i32_0 = arith.constant 0 : i32
    %c0_i32_1 = arith.constant 0 : i32
    return %c0_i32, %c0_i32_0 : i32, i32
  }
  func.func @transform_3(%arg0: i32) -> (i32, i32, i32) {
    %c0_i32 = arith.constant 0 : i32
    %c0_i32_0 = arith.constant 0 : i32
    %c0_i32_1 = arith.constant 0 : i32
    return %arg0, %c0_i32, %c0_i32_0 : i32, i32, i32
  }
}

module attributes {stable_mosaic.version = 11 : i64} {
  func.func @_conv_s1_kernel(%arg0: i32, %arg1: memref<1x16x128xbf16, #tpu.memory_space<vmem>>, %arg2: memref<128x128xbf16, #tpu.memory_space<vmem>>, %arg3: memref<1x128xf32, #tpu.memory_space<vmem>>, %arg4: memref<1x16x128xbf16, #tpu.memory_space<vmem>>) attributes {dimension_semantics = [#tpu.dimension_semantics<parallel>], iteration_bounds = array<i64: 2>, scalar_prefetch = 0 : i64, scratch_operands = 0 : i64, tpu.core_type = #tpu.core_type<tc>, window_params = [{transform_indices = @transform_0, window_bounds = array<i64: 1, 16, 128>}, {pipeline_mode = #tpu.pipeline_mode<synchronous>, transform_indices = @transform_1, window_bounds = array<i64: 128, 128>}, {pipeline_mode = #tpu.pipeline_mode<synchronous>, transform_indices = @transform_2, window_bounds = array<i64: 1, 128>}, {transform_indices = @transform_3, window_bounds = array<i64: 1, 16, 128>}]} {
    %c0 = arith.constant 0 : index
    %c0_0 = arith.constant 0 : index
    %c0_1 = arith.constant 0 : index
    %0 = vector.load %arg1[%c0, %c0_0, %c0_1] : memref<1x16x128xbf16, #tpu.memory_space<vmem>>, vector<1x16x128xbf16>
    %1 = vector.shape_cast %0 : vector<1x16x128xbf16> to vector<16x128xbf16>
    %cst = arith.constant 0.000000e+00 : f32
    %2 = vector.broadcast %cst : f32 to vector<16x128xf32>
    %c0_2 = arith.constant 0 : index
    %c0_3 = arith.constant 0 : index
    %3 = vector.load %arg2[%c0_2, %c0_3] : memref<128x128xbf16, #tpu.memory_space<vmem>>, vector<128x128xbf16>
    %cst_4 = arith.constant dense<0.000000e+00> : vector<16x128xf32>
    %4 = tpu.matmul %1, %3, %cst_4 {dimension_numbers = #tpu.dot_dimension_numbers<[1], [0], [0], [1], [0, 0, 1, 1], [], []>} : vector<16x128xbf16>, vector<128x128xbf16>, vector<16x128xf32> -> vector<16x128xf32>
    %5 = arith.addf %2, %4 : vector<16x128xf32>
    %c0_5 = arith.constant 0 : index
    %c0_6 = arith.constant 0 : index
    %6 = vector.load %arg3[%c0_5, %c0_6] : memref<1x128xf32, #tpu.memory_space<vmem>>, vector<1x128xf32>
    %7 = vector.broadcast %6 : vector<1x128xf32> to vector<16x128xf32>
    %8 = arith.addf %5, %7 : vector<16x128xf32>
    %cst_7 = arith.constant 0.000000e+00 : f32
    %9 = vector.broadcast %cst_7 : f32 to vector<16x128xf32>
    %10 = arith.maximumf %8, %9 : vector<16x128xf32>
    %11 = arith.truncf %10 : vector<16x128xf32> to vector<16x128xbf16>
    %c0_8 = arith.constant 0 : index
    %c0_9 = arith.constant 0 : index
    %c0_10 = arith.constant 0 : index
    %12 = vector.load %arg4[%c0_8, %c0_9, %c0_10] : memref<1x16x128xbf16, #tpu.memory_space<vmem>>, vector<1x16x128xbf16>
    %13 = vector.shape_cast %12 : vector<1x16x128xbf16> to vector<16x128xbf16>
    %14 = vector.shape_cast %11 : vector<16x128xbf16> to vector<1x16x128xbf16>
    tpu.vector_store %arg4[%c0_8, %c0_9, %c0_10], %14 {strides = array<i32>} : memref<1x16x128xbf16, #tpu.memory_space<vmem>>, vector<1x16x128xbf16>,
    return
  }
  func.func @transform_0(%arg0: i32) -> (i32, i32, i32) {
    %c0_i32 = arith.constant 0 : i32
    %c0_i32_0 = arith.constant 0 : i32
    %c0_i32_1 = arith.constant 0 : i32
    return %arg0, %c0_i32, %c0_i32_0 : i32, i32, i32
  }
  func.func @transform_1(%arg0: i32) -> (i32, i32) {
    %c0_i32 = arith.constant 0 : i32
    %c0_i32_0 = arith.constant 0 : i32
    %c0_i32_1 = arith.constant 0 : i32
    return %c0_i32, %c0_i32_0 : i32, i32
  }
  func.func @transform_2(%arg0: i32) -> (i32, i32) {
    %c0_i32 = arith.constant 0 : i32
    %c0_i32_0 = arith.constant 0 : i32
    %c0_i32_1 = arith.constant 0 : i32
    return %c0_i32, %c0_i32_0 : i32, i32
  }
  func.func @transform_3(%arg0: i32) -> (i32, i32, i32) {
    %c0_i32 = arith.constant 0 : i32
    %c0_i32_0 = arith.constant 0 : i32
    %c0_i32_1 = arith.constant 0 : i32
    return %arg0, %c0_i32, %c0_i32_0 : i32, i32, i32
  }
}

module attributes {stable_mosaic.version = 11 : i64} {
  func.func @_global_avg_pool_kernel(%arg0: i32, %arg1: memref<2x16x512xbf16, #tpu.memory_space<vmem>>, %arg2: memref<2x512xf32, #tpu.memory_space<vmem>>) attributes {dimension_semantics = [#tpu.dimension_semantics<arbitrary>], iteration_bounds = array<i64: 1>, scalar_prefetch = 0 : i64, scratch_operands = 0 : i64, tpu.core_type = #tpu.core_type<tc>, window_params = [{pipeline_mode = #tpu.pipeline_mode<synchronous>, transform_indices = @transform_0, window_bounds = array<i64: 2, 16, 512>}, {pipeline_mode = #tpu.pipeline_mode<synchronous>, transform_indices = @transform_1, window_bounds = array<i64: 2, 512>}]} {
    %c0 = arith.constant 0 : index
    %c0_0 = arith.constant 0 : index
    %c0_1 = arith.constant 0 : index
    %0 = vector.load %arg1[%c0, %c0_0, %c0_1] : memref<2x16x512xbf16, #tpu.memory_space<vmem>>, vector<2x16x512xbf16>
    %1 = arith.extf %0 : vector<2x16x512xbf16> to vector<2x16x512xf32>
    %cst = arith.constant dense<0.000000e+00> : vector<2x512xf32>
    %2 = vector.multi_reduction <add>, %1, %cst [1] : vector<2x16x512xf32> to vector<2x512xf32>
    %cst_2 = arith.constant 6.250000e-02 : f32
    %3 = vector.broadcast %cst_2 : f32 to vector<2x512xf32>
    %4 = arith.mulf %2, %3 : vector<2x512xf32>
    %c0_3 = arith.constant 0 : index
    %c0_4 = arith.constant 0 : index
    %5 = vector.load %arg2[%c0_3, %c0_4] : memref<2x512xf32, #tpu.memory_space<vmem>>, vector<2x512xf32>
    tpu.vector_store %arg2[%c0_3, %c0_4], %4 {strides = array<i32>} : memref<2x512xf32, #tpu.memory_space<vmem>>, vector<2x512xf32>,
    return
  }
  func.func @transform_0(%arg0: i32) -> (i32, i32, i32) {
    %c0_i32 = arith.constant 0 : i32
    %c0_i32_0 = arith.constant 0 : i32
    %c0_i32_1 = arith.constant 0 : i32
    %c0_i32_2 = arith.constant 0 : i32
    return %c0_i32, %c0_i32_0, %c0_i32_1 : i32, i32, i32
  }
  func.func @transform_1(%arg0: i32) -> (i32, i32) {
    %c0_i32 = arith.constant 0 : i32
    %c0_i32_0 = arith.constant 0 : i32
    %c0_i32_1 = arith.constant 0 : i32
    return %c0_i32, %c0_i32_0 : i32, i32
  }
}

module attributes {stable_mosaic.version = 11 : i64} {
  func.func @_conv_s1_kernel(%arg0: i32, %arg1: memref<1x68x128xbf16, #tpu.memory_space<vmem>>, %arg2: memref<3200x128xbf16, #tpu.memory_space<vmem>>, %arg3: memref<1x128xf32, #tpu.memory_space<vmem>>, %arg4: memref<1x32x128xbf16, #tpu.memory_space<vmem>>) attributes {dimension_semantics = [#tpu.dimension_semantics<parallel>], iteration_bounds = array<i64: 2>, scalar_prefetch = 0 : i64, scratch_operands = 0 : i64, tpu.core_type = #tpu.core_type<tc>, window_params = [{transform_indices = @transform_0, window_bounds = array<i64: 1, 68, 128>}, {pipeline_mode = #tpu.pipeline_mode<synchronous>, transform_indices = @transform_1, window_bounds = array<i64: 3200, 128>}, {pipeline_mode = #tpu.pipeline_mode<synchronous>, transform_indices = @transform_2, window_bounds = array<i64: 1, 128>}, {transform_indices = @transform_3, window_bounds = array<i64: 1, 32, 128>}]} {
    %c0 = arith.constant 0 : index
    %c0_0 = arith.constant 0 : index
    %c0_1 = arith.constant 0 : index
    %0 = vector.load %arg1[%c0, %c0_0, %c0_1] : memref<1x68x128xbf16, #tpu.memory_space<vmem>>, vector<1x68x128xbf16>
    %1 = vector.shape_cast %0 : vector<1x68x128xbf16> to vector<68x128xbf16>
    %cst = arith.constant 0.000000e+00 : f32
    %2 = vector.broadcast %cst : f32 to vector<32x128xf32>
    %3 = vector.extract_strided_slice %1 {offsets = [0, 0], sizes = [32, 128], strides = [1, 1]} : vector<68x128xbf16> to vector<32x128xbf16>
    %c0_2 = arith.constant 0 : index
    %c0_3 = arith.constant 0 : index
    %4 = vector.load %arg2[%c0_2, %c0_3] : memref<3200x128xbf16, #tpu.memory_space<vmem>>, vector<128x128xbf16>
    %cst_4 = arith.constant dense<0.000000e+00> : vector<32x128xf32>
    %5 = tpu.matmul %3, %4, %cst_4 {dimension_numbers = #tpu.dot_dimension_numbers<[1], [0], [0], [1], [0, 0, 1, 1], [], []>} : vector<32x128xbf16>, vector<128x128xbf16>, vector<32x128xf32> -> vector<32x128xf32>
    %6 = arith.addf %2, %5 : vector<32x128xf32>
    %7 = vector.extract_strided_slice %1 {offsets = [1, 0], sizes = [32, 128], strides = [1, 1]} : vector<68x128xbf16> to vector<32x128xbf16>
    %c128 = arith.constant 128 : index
    %c0_5 = arith.constant 0 : index
    %8 = vector.load %arg2[%c128, %c0_5] : memref<3200x128xbf16, #tpu.memory_space<vmem>>, vector<128x128xbf16>
    %cst_6 = arith.constant dense<0.000000e+00> : vector<32x128xf32>
    %9 = tpu.matmul %7, %8, %cst_6 {dimension_numbers = #tpu.dot_dimension_numbers<[1], [0], [0], [1], [0, 0, 1, 1], [], []>} : vector<32x128xbf16>, vector<128x128xbf16>, vector<32x128xf32> -> vector<32x128xf32>
    %10 = arith.addf %6, %9 : vector<32x128xf32>
    %11 = vector.extract_strided_slice %1 {offsets = [2, 0], sizes = [32, 128], strides = [1, 1]} : vector<68x128xbf16> to vector<32x128xbf16>
    %c256 = arith.constant 256 : index
    %c0_7 = arith.constant 0 : index
    %12 = vector.load %arg2[%c256, %c0_7] : memref<3200x128xbf16, #tpu.memory_space<vmem>>, vector<128x128xbf16>
    %cst_8 = arith.constant dense<0.000000e+00> : vector<32x128xf32>
    %13 = tpu.matmul %11, %12, %cst_8 {dimension_numbers = #tpu.dot_dimension_numbers<[1], [0], [0], [1], [0, 0, 1, 1], [], []>} : vector<32x128xbf16>, vector<128x128xbf16>, vector<32x128xf32> -> vector<32x128xf32>
    %14 = arith.addf %10, %13 : vector<32x128xf32>
    %15 = vector.extract_strided_slice %1 {offsets = [3, 0], sizes = [32, 128], strides = [1, 1]} : vector<68x128xbf16> to vector<32x128xbf16>
    %c384 = arith.constant 384 : index
    %c0_9 = arith.constant 0 : index
    %16 = vector.load %arg2[%c384, %c0_9] : memref<3200x128xbf16, #tpu.memory_space<vmem>>, vector<128x128xbf16>
    %cst_10 = arith.constant dense<0.000000e+00> : vector<32x128xf32>
    %17 = tpu.matmul %15, %16, %cst_10 {dimension_numbers = #tpu.dot_dimension_numbers<[1], [0], [0], [1], [0, 0, 1, 1], [], []>} : vector<32x128xbf16>, vector<128x128xbf16>, vector<32x128xf32> -> vector<32x128xf32>
    %18 = arith.addf %14, %17 : vector<32x128xf32>
    %19 = vector.extract_strided_slice %1 {offsets = [4, 0], sizes = [32, 128], strides = [1, 1]} : vector<68x128xbf16> to vector<32x128xbf16>
    %c512 = arith.constant 512 : index
    %c0_11 = arith.constant 0 : index
    %20 = vector.load %arg2[%c512, %c0_11] : memref<3200x128xbf16, #tpu.memory_space<vmem>>, vector<128x128xbf16>
    %cst_12 = arith.constant dense<0.000000e+00> : vector<32x128xf32>
    %21 = tpu.matmul %19, %20, %cst_12 {dimension_numbers = #tpu.dot_dimension_numbers<[1], [0], [0], [1], [0, 0, 1, 1], [], []>} : vector<32x128xbf16>, vector<128x128xbf16>, vector<32x128xf32> -> vector<32x128xf32>
    %22 = arith.addf %18, %21 : vector<32x128xf32>
    %23 = vector.extract_strided_slice %1 {offsets = [8, 0], sizes = [32, 128], strides = [1, 1]} : vector<68x128xbf16> to vector<32x128xbf16>
    %c640 = arith.constant 640 : index
    %c0_13 = arith.constant 0 : index
    %24 = vector.load %arg2[%c640, %c0_13] : memref<3200x128xbf16, #tpu.memory_space<vmem>>, vector<128x128xbf16>
    %cst_14 = arith.constant dense<0.000000e+00> : vector<32x128xf32>
    %25 = tpu.matmul %23, %24, %cst_14 {dimension_numbers = #tpu.dot_dimension_numbers<[1], [0], [0], [1], [0, 0, 1, 1], [], []>} : vector<32x128xbf16>, vector<128x128xbf16>, vector<32x128xf32> -> vector<32x128xf32>
    %26 = arith.addf %22, %25 : vector<32x128xf32>
    %27 = vector.extract_strided_slice %1 {offsets = [9, 0], sizes = [32, 128], strides = [1, 1]} : vector<68x128xbf16> to vector<32x128xbf16>
    %c768 = arith.constant 768 : index
    %c0_15 = arith.constant 0 : index
    %28 = vector.load %arg2[%c768, %c0_15] : memref<3200x128xbf16, #tpu.memory_space<vmem>>, vector<128x128xbf16>
    %cst_16 = arith.constant dense<0.000000e+00> : vector<32x128xf32>
    %29 = tpu.matmul %27, %28, %cst_16 {dimension_numbers = #tpu.dot_dimension_numbers<[1], [0], [0], [1], [0, 0, 1, 1], [], []>} : vector<32x128xbf16>, vector<128x128xbf16>, vector<32x128xf32> -> vector<32x128xf32>
    %30 = arith.addf %26, %29 : vector<32x128xf32>
    %31 = vector.extract_strided_slice %1 {offsets = [10, 0], sizes = [32, 128], strides = [1, 1]} : vector<68x128xbf16> to vector<32x128xbf16>
    %c896 = arith.constant 896 : index
    %c0_17 = arith.constant 0 : index
    %32 = vector.load %arg2[%c896, %c0_17] : memref<3200x128xbf16, #tpu.memory_space<vmem>>, vector<128x128xbf16>
    %cst_18 = arith.constant dense<0.000000e+00> : vector<32x128xf32>
    %33 = tpu.matmul %31, %32, %cst_18 {dimension_numbers = #tpu.dot_dimension_numbers<[1], [0], [0], [1], [0, 0, 1, 1], [], []>} : vector<32x128xbf16>, vector<128x128xbf16>, vector<32x128xf32> -> vector<32x128xf32>
    %34 = arith.addf %30, %33 : vector<32x128xf32>
    %35 = vector.extract_strided_slice %1 {offsets = [11, 0], sizes = [32, 128], strides = [1, 1]} : vector<68x128xbf16> to vector<32x128xbf16>
    %c1024 = arith.constant 1024 : index
    %c0_19 = arith.constant 0 : index
    %36 = vector.load %arg2[%c1024, %c0_19] : memref<3200x128xbf16, #tpu.memory_space<vmem>>, vector<128x128xbf16>
    %cst_20 = arith.constant dense<0.000000e+00> : vector<32x128xf32>
    %37 = tpu.matmul %35, %36, %cst_20 {dimension_numbers = #tpu.dot_dimension_numbers<[1], [0], [0], [1], [0, 0, 1, 1], [], []>} : vector<32x128xbf16>, vector<128x128xbf16>, vector<32x128xf32> -> vector<32x128xf32>
    %38 = arith.addf %34, %37 : vector<32x128xf32>
    %39 = vector.extract_strided_slice %1 {offsets = [12, 0], sizes = [32, 128], strides = [1, 1]} : vector<68x128xbf16> to vector<32x128xbf16>
    %c1152 = arith.constant 1152 : index
    %c0_21 = arith.constant 0 : index
    %40 = vector.load %arg2[%c1152, %c0_21] : memref<3200x128xbf16, #tpu.memory_space<vmem>>, vector<128x128xbf16>
    %cst_22 = arith.constant dense<0.000000e+00> : vector<32x128xf32>
    %41 = tpu.matmul %39, %40, %cst_22 {dimension_numbers = #tpu.dot_dimension_numbers<[1], [0], [0], [1], [0, 0, 1, 1], [], []>} : vector<32x128xbf16>, vector<128x128xbf16>, vector<32x128xf32> -> vector<32x128xf32>
    %42 = arith.addf %38, %41 : vector<32x128xf32>
    %43 = vector.extract_strided_slice %1 {offsets = [16, 0], sizes = [32, 128], strides = [1, 1]} : vector<68x128xbf16> to vector<32x128xbf16>
    %c1280 = arith.constant 1280 : index
    %c0_23 = arith.constant 0 : index
    %44 = vector.load %arg2[%c1280, %c0_23] : memref<3200x128xbf16, #tpu.memory_space<vmem>>, vector<128x128xbf16>
    %cst_24 = arith.constant dense<0.000000e+00> : vector<32x128xf32>
    %45 = tpu.matmul %43, %44, %cst_24 {dimension_numbers = #tpu.dot_dimension_numbers<[1], [0], [0], [1], [0, 0, 1, 1], [], []>} : vector<32x128xbf16>, vector<128x128xbf16>, vector<32x128xf32> -> vector<32x128xf32>
    %46 = arith.addf %42, %45 : vector<32x128xf32>
    %47 = vector.extract_strided_slice %1 {offsets = [17, 0], sizes = [32, 128], strides = [1, 1]} : vector<68x128xbf16> to vector<32x128xbf16>
    %c1408 = arith.constant 1408 : index
    %c0_25 = arith.constant 0 : index
    %48 = vector.load %arg2[%c1408, %c0_25] : memref<3200x128xbf16, #tpu.memory_space<vmem>>, vector<128x128xbf16>
    %cst_26 = arith.constant dense<0.000000e+00> : vector<32x128xf32>
    %49 = tpu.matmul %47, %48, %cst_26 {dimension_numbers = #tpu.dot_dimension_numbers<[1], [0], [0], [1], [0, 0, 1, 1], [], []>} : vector<32x128xbf16>, vector<128x128xbf16>, vector<32x128xf32> -> vector<32x128xf32>
    %50 = arith.addf %46, %49 : vector<32x128xf32>
    %51 = vector.extract_strided_slice %1 {offsets = [18, 0], sizes = [32, 128], strides = [1, 1]} : vector<68x128xbf16> to vector<32x128xbf16>
    %c1536 = arith.constant 1536 : index
    %c0_27 = arith.constant 0 : index
    %52 = vector.load %arg2[%c1536, %c0_27] : memref<3200x128xbf16, #tpu.memory_space<vmem>>, vector<128x128xbf16>
    %cst_28 = arith.constant dense<0.000000e+00> : vector<32x128xf32>
    %53 = tpu.matmul %51, %52, %cst_28 {dimension_numbers = #tpu.dot_dimension_numbers<[1], [0], [0], [1], [0, 0, 1, 1], [], []>} : vector<32x128xbf16>, vector<128x128xbf16>, vector<32x128xf32> -> vector<32x128xf32>
    %54 = arith.addf %50, %53 : vector<32x128xf32>
    %55 = vector.extract_strided_slice %1 {offsets = [19, 0], sizes = [32, 128], strides = [1, 1]} : vector<68x128xbf16> to vector<32x128xbf16>
    %c1664 = arith.constant 1664 : index
    %c0_29 = arith.constant 0 : index
    %56 = vector.load %arg2[%c1664, %c0_29] : memref<3200x128xbf16, #tpu.memory_space<vmem>>, vector<128x128xbf16>
    %cst_30 = arith.constant dense<0.000000e+00> : vector<32x128xf32>
    %57 = tpu.matmul %55, %56, %cst_30 {dimension_numbers = #tpu.dot_dimension_numbers<[1], [0], [0], [1], [0, 0, 1, 1], [], []>} : vector<32x128xbf16>, vector<128x128xbf16>, vector<32x128xf32> -> vector<32x128xf32>
    %58 = arith.addf %54, %57 : vector<32x128xf32>
    %59 = vector.extract_strided_slice %1 {offsets = [20, 0], sizes = [32, 128], strides = [1, 1]} : vector<68x128xbf16> to vector<32x128xbf16>
    %c1792 = arith.constant 1792 : index
    %c0_31 = arith.constant 0 : index
    %60 = vector.load %arg2[%c1792, %c0_31] : memref<3200x128xbf16, #tpu.memory_space<vmem>>, vector<128x128xbf16>
    %cst_32 = arith.constant dense<0.000000e+00> : vector<32x128xf32>
    %61 = tpu.matmul %59, %60, %cst_32 {dimension_numbers = #tpu.dot_dimension_numbers<[1], [0], [0], [1], [0, 0, 1, 1], [], []>} : vector<32x128xbf16>, vector<128x128xbf16>, vector<32x128xf32> -> vector<32x128xf32>
    %62 = arith.addf %58, %61 : vector<32x128xf32>
    %63 = vector.extract_strided_slice %1 {offsets = [24, 0], sizes = [32, 128], strides = [1, 1]} : vector<68x128xbf16> to vector<32x128xbf16>
    %c1920 = arith.constant 1920 : index
    %c0_33 = arith.constant 0 : index
    %64 = vector.load %arg2[%c1920, %c0_33] : memref<3200x128xbf16, #tpu.memory_space<vmem>>, vector<128x128xbf16>
    %cst_34 = arith.constant dense<0.000000e+00> : vector<32x128xf32>
    %65 = tpu.matmul %63, %64, %cst_34 {dimension_numbers = #tpu.dot_dimension_numbers<[1], [0], [0], [1], [0, 0, 1, 1], [], []>} : vector<32x128xbf16>, vector<128x128xbf16>, vector<32x128xf32> -> vector<32x128xf32>
    %66 = arith.addf %62, %65 : vector<32x128xf32>
    %67 = vector.extract_strided_slice %1 {offsets = [25, 0], sizes = [32, 128], strides = [1, 1]} : vector<68x128xbf16> to vector<32x128xbf16>
    %c2048 = arith.constant 2048 : index
    %c0_35 = arith.constant 0 : index
    %68 = vector.load %arg2[%c2048, %c0_35] : memref<3200x128xbf16, #tpu.memory_space<vmem>>, vector<128x128xbf16>
    %cst_36 = arith.constant dense<0.000000e+00> : vector<32x128xf32>
    %69 = tpu.matmul %67, %68, %cst_36 {dimension_numbers = #tpu.dot_dimension_numbers<[1], [0], [0], [1], [0, 0, 1, 1], [], []>} : vector<32x128xbf16>, vector<128x128xbf16>, vector<32x128xf32> -> vector<32x128xf32>
    %70 = arith.addf %66, %69 : vector<32x128xf32>
    %71 = vector.extract_strided_slice %1 {offsets = [26, 0], sizes = [32, 128], strides = [1, 1]} : vector<68x128xbf16> to vector<32x128xbf16>
    %c2176 = arith.constant 2176 : index
    %c0_37 = arith.constant 0 : index
    %72 = vector.load %arg2[%c2176, %c0_37] : memref<3200x128xbf16, #tpu.memory_space<vmem>>, vector<128x128xbf16>
    %cst_38 = arith.constant dense<0.000000e+00> : vector<32x128xf32>
    %73 = tpu.matmul %71, %72, %cst_38 {dimension_numbers = #tpu.dot_dimension_numbers<[1], [0], [0], [1], [0, 0, 1, 1], [], []>} : vector<32x128xbf16>, vector<128x128xbf16>, vector<32x128xf32> -> vector<32x128xf32>
    %74 = arith.addf %70, %73 : vector<32x128xf32>
    %75 = vector.extract_strided_slice %1 {offsets = [27, 0], sizes = [32, 128], strides = [1, 1]} : vector<68x128xbf16> to vector<32x128xbf16>
    %c2304 = arith.constant 2304 : index
    %c0_39 = arith.constant 0 : index
    %76 = vector.load %arg2[%c2304, %c0_39] : memref<3200x128xbf16, #tpu.memory_space<vmem>>, vector<128x128xbf16>
    %cst_40 = arith.constant dense<0.000000e+00> : vector<32x128xf32>
    %77 = tpu.matmul %75, %76, %cst_40 {dimension_numbers = #tpu.dot_dimension_numbers<[1], [0], [0], [1], [0, 0, 1, 1], [], []>} : vector<32x128xbf16>, vector<128x128xbf16>, vector<32x128xf32> -> vector<32x128xf32>
    %78 = arith.addf %74, %77 : vector<32x128xf32>
    %79 = vector.extract_strided_slice %1 {offsets = [28, 0], sizes = [32, 128], strides = [1, 1]} : vector<68x128xbf16> to vector<32x128xbf16>
    %c2432 = arith.constant 2432 : index
    %c0_41 = arith.constant 0 : index
    %80 = vector.load %arg2[%c2432, %c0_41] : memref<3200x128xbf16, #tpu.memory_space<vmem>>, vector<128x128xbf16>
    %cst_42 = arith.constant dense<0.000000e+00> : vector<32x128xf32>
    %81 = tpu.matmul %79, %80, %cst_42 {dimension_numbers = #tpu.dot_dimension_numbers<[1], [0], [0], [1], [0, 0, 1, 1], [], []>} : vector<32x128xbf16>, vector<128x128xbf16>, vector<32x128xf32> -> vector<32x128xf32>
    %82 = arith.addf %78, %81 : vector<32x128xf32>
    %83 = vector.extract_strided_slice %1 {offsets = [32, 0], sizes = [32, 128], strides = [1, 1]} : vector<68x128xbf16> to vector<32x128xbf16>
    %c2560 = arith.constant 2560 : index
    %c0_43 = arith.constant 0 : index
    %84 = vector.load %arg2[%c2560, %c0_43] : memref<3200x128xbf16, #tpu.memory_space<vmem>>, vector<128x128xbf16>
    %cst_44 = arith.constant dense<0.000000e+00> : vector<32x128xf32>
    %85 = tpu.matmul %83, %84, %cst_44 {dimension_numbers = #tpu.dot_dimension_numbers<[1], [0], [0], [1], [0, 0, 1, 1], [], []>} : vector<32x128xbf16>, vector<128x128xbf16>, vector<32x128xf32> -> vector<32x128xf32>
    %86 = arith.addf %82, %85 : vector<32x128xf32>
    %87 = vector.extract_strided_slice %1 {offsets = [33, 0], sizes = [32, 128], strides = [1, 1]} : vector<68x128xbf16> to vector<32x128xbf16>
    %c2688 = arith.constant 2688 : index
    %c0_45 = arith.constant 0 : index
    %88 = vector.load %arg2[%c2688, %c0_45] : memref<3200x128xbf16, #tpu.memory_space<vmem>>, vector<128x128xbf16>
    %cst_46 = arith.constant dense<0.000000e+00> : vector<32x128xf32>
    %89 = tpu.matmul %87, %88, %cst_46 {dimension_numbers = #tpu.dot_dimension_numbers<[1], [0], [0], [1], [0, 0, 1, 1], [], []>} : vector<32x128xbf16>, vector<128x128xbf16>, vector<32x128xf32> -> vector<32x128xf32>
    %90 = arith.addf %86, %89 : vector<32x128xf32>
    %91 = vector.extract_strided_slice %1 {offsets = [34, 0], sizes = [32, 128], strides = [1, 1]} : vector<68x128xbf16> to vector<32x128xbf16>
    %c2816 = arith.constant 2816 : index
    %c0_47 = arith.constant 0 : index
    %92 = vector.load %arg2[%c2816, %c0_47] : memref<3200x128xbf16, #tpu.memory_space<vmem>>, vector<128x128xbf16>
    %cst_48 = arith.constant dense<0.000000e+00> : vector<32x128xf32>
    %93 = tpu.matmul %91, %92, %cst_48 {dimension_numbers = #tpu.dot_dimension_numbers<[1], [0], [0], [1], [0, 0, 1, 1], [], []>} : vector<32x128xbf16>, vector<128x128xbf16>, vector<32x128xf32> -> vector<32x128xf32>
    %94 = arith.addf %90, %93 : vector<32x128xf32>
    %95 = vector.extract_strided_slice %1 {offsets = [35, 0], sizes = [32, 128], strides = [1, 1]} : vector<68x128xbf16> to vector<32x128xbf16>
    %c2944 = arith.constant 2944 : index
    %c0_49 = arith.constant 0 : index
    %96 = vector.load %arg2[%c2944, %c0_49] : memref<3200x128xbf16, #tpu.memory_space<vmem>>, vector<128x128xbf16>
    %cst_50 = arith.constant dense<0.000000e+00> : vector<32x128xf32>
    %97 = tpu.matmul %95, %96, %cst_50 {dimension_numbers = #tpu.dot_dimension_numbers<[1], [0], [0], [1], [0, 0, 1, 1], [], []>} : vector<32x128xbf16>, vector<128x128xbf16>, vector<32x128xf32> -> vector<32x128xf32>
    %98 = arith.addf %94, %97 : vector<32x128xf32>
    %99 = vector.extract_strided_slice %1 {offsets = [36, 0], sizes = [32, 128], strides = [1, 1]} : vector<68x128xbf16> to vector<32x128xbf16>
    %c3072 = arith.constant 3072 : index
    %c0_51 = arith.constant 0 : index
    %100 = vector.load %arg2[%c3072, %c0_51] : memref<3200x128xbf16, #tpu.memory_space<vmem>>, vector<128x128xbf16>
    %cst_52 = arith.constant dense<0.000000e+00> : vector<32x128xf32>
    %101 = tpu.matmul %99, %100, %cst_52 {dimension_numbers = #tpu.dot_dimension_numbers<[1], [0], [0], [1], [0, 0, 1, 1], [], []>} : vector<32x128xbf16>, vector<128x128xbf16>, vector<32x128xf32> -> vector<32x128xf32>
    %102 = arith.addf %98, %101 : vector<32x128xf32>
    %c0_53 = arith.constant 0 : index
    %c0_54 = arith.constant 0 : index
    %103 = vector.load %arg3[%c0_53, %c0_54] : memref<1x128xf32, #tpu.memory_space<vmem>>, vector<1x128xf32>
    %104 = vector.broadcast %103 : vector<1x128xf32> to vector<32x128xf32>
    %105 = arith.addf %102, %104 : vector<32x128xf32>
    %cst_55 = arith.constant 0.000000e+00 : f32
    %106 = vector.broadcast %cst_55 : f32 to vector<32x128xf32>
    %107 = arith.maximumf %105, %106 : vector<32x128xf32>
    %108 = arith.truncf %107 : vector<32x128xf32> to vector<32x128xbf16>
    %c0_56 = arith.constant 0 : index
    %c0_57 = arith.constant 0 : index
    %c0_58 = arith.constant 0 : index
    %109 = vector.load %arg4[%c0_56, %c0_57, %c0_58] : memref<1x32x128xbf16, #tpu.memory_space<vmem>>, vector<1x32x128xbf16>
    %110 = vector.shape_cast %109 : vector<1x32x128xbf16> to vector<32x128xbf16>
    %111 = vector.shape_cast %108 : vector<32x128xbf16> to vector<1x32x128xbf16>
    tpu.vector_store %arg4[%c0_56, %c0_57, %c0_58], %111 {strides = array<i32>} : memref<1x32x128xbf16, #tpu.memory_space<vmem>>, vector<1x32x128xbf16>,
    return
  }
  func.func @transform_0(%arg0: i32) -> (i32, i32, i32) {
    %c0_i32 = arith.constant 0 : i32
    %c0_i32_0 = arith.constant 0 : i32
    %c0_i32_1 = arith.constant 0 : i32
    return %arg0, %c0_i32, %c0_i32_0 : i32, i32, i32
  }
  func.func @transform_1(%arg0: i32) -> (i32, i32) {
    %c0_i32 = arith.constant 0 : i32
    %c0_i32_0 = arith.constant 0 : i32
    %c0_i32_1 = arith.constant 0 : i32
    return %c0_i32, %c0_i32_0 : i32, i32
  }
  func.func @transform_2(%arg0: i32) -> (i32, i32) {
    %c0_i32 = arith.constant 0 : i32
    %c0_i32_0 = arith.constant 0 : i32
    %c0_i32_1 = arith.constant 0 : i32
    return %c0_i32, %c0_i32_0 : i32, i32
  }
  func.func @transform_3(%arg0: i32) -> (i32, i32, i32) {
    %c0_i32 = arith.constant 0 : i32
    %c0_i32_0 = arith.constant 0 : i32
    %c0_i32_1 = arith.constant 0 : i32
    return %arg0, %c0_i32, %c0_i32_0 : i32, i32, i32
  }
}

</mosaic_0001>

<llo_original>
// kernel: inception_fid_forward.12
$region0: #{inception_fid_forward.12}
  #allocation0 [shape = 'u32[]', space=smem, size = 0x4, offset = 0x4, fixed_abs, tag = 'smem constant byte address 0x4 - core index']
  #allocation1 [shape = 'u32[144,128]{1,0:T(1,128)}', space=vmem, size = 0x12000, scoped, tag = 'internal scratch']
  %s0 = inlined_call_operand.vmem [shape: bf16[450,27], index: 0, kind: input, shape index: {}]
  %s1 = inlined_call_operand.vmem [shape: bf16[27,128], index: 1, kind: input, shape index: {}]
  %s2 = inlined_call_operand.vmem [shape: f32[1,128], index: 2, kind: input, shape index: {}]
  %s3 = inlined_call_operand.vmem [shape: bf16[450,128], index: 3, kind: output, shape index: {}]
  %s4 = sld [smem:[#allocation0]]
  $region89: #{inception_fid_forward.12} parent=0
    _
  %s6 = ssub.s32 1, %s4
  %s7 = scalar_select 0, %s6, %s4
  $region1: #{inception_fid_forward.12} parent=0
    #allocation2 [shape = 'u8[118784]{0}', space=vmem, size = 0x1d000, scoped, tag = 'output window, operand 0']
    loop: start=0, step=1, limit=4
    $region2: #{inception_fid_forward.12} parent=1 // loop_pre_header
      _
    $region3: #{inception_fid_forward.12} parent=1 // loop_header
      %s9 = sphi 0, %s13
      %p10 = scmp.ge.s32.totalorder %s9, 4
      %s19 = sphi 0, %s21
      %s22 = sphi 0, %s19
      %s23 = sphi 0, %s22
      %s39 = sphi 0, %s23
      %s43 = sphi 0, %s43
      %s45 = sphi 0, %s43
      %s46 = sphi 0, %s45
      %s60 = sphi 0, %s46
      %s64 = sphi 0, %s64
      %s66 = sphi 0, %s64
      %s67 = sphi 0, %s66
      %s81 = sphi 0, %s67
      %s87 = sphi 0, %s89
      %s90 = sphi 0, %s87
      %s91 = sphi 0, %s90
      %s107 = sphi 0, %s91
    $region4: #{inception_fid_forward.12} parent=1 // loop_header_branch
      %12 = sbr.rel (%p10) target = $region8
    $region5: #{inception_fid_forward.12} parent=1 // loop_body
      %s14 = ssub.s32 %s9, 1
      %s15 = ssub.s32 %s9, 2
      %s16 = sadd.s32 %s9, 1
      %s17 = ssub.s32 %s9, %s16
      %p18 = scmp.eq.s32.totalorder %s17, 0
      %s20 = sadd.s32 %s19, 1
      %s21 = scalar_select %p18, %s19, %s20
      %p24 = pneg %p18
      %p25 = scmp.eq.s32.totalorder %s9, 1
      %p26 = por %p24, %p25
      %p27 = scmp.ne.s32.totalorder %s19, %s22
      %p28 = scmp.eq.s32.totalorder %s9, 0
      %p29 = por %p27, %p28
      %p30 = scmp.ne.s32.totalorder %s19, %s22
      %p31 = scmp.eq.s32.totalorder %s14, 1
      %p32 = por %p30, %p31
      %p33 = scmp.ne.s32.totalorder %s22, %s23
      %p34 = scmp.eq.s32.totalorder %s14, 0
      %p35 = por %p33, %p34
      %p36 = scmp.ne.s32.totalorder %s22, %s23
      %p37 = scmp.eq.s32.totalorder %s15, 1
      %p38 = por %p36, %p37
      %p40 = scmp.ne.s32.totalorder %s23, %s39
      %p41 = scmp.eq.s32.totalorder %s15, 0
      %p42 = por %p40, %p41
      %s44 = sadd.s32 %s43, 1
      %p47 = scmp.eq.s32.totalorder %s9, 1
      %p48 = scmp.ne.s32.totalorder %s43, %s45
      %p49 = scmp.eq.s32.totalorder %s9, 0
      %p50 = por %p48, %p49
      %p51 = scmp.ne.s32.totalorder %s43, %s45
      %p52 = scmp.eq.s32.totalorder %s14, 1
      %p53 = por %p51, %p52
      %p54 = scmp.ne.s32.totalorder %s45, %s46
      %p55 = scmp.eq.s32.totalorder %s14, 0
      %p56 = por %p54, %p55
      %p57 = scmp.ne.s32.totalorder %s45, %s46
      %p58 = scmp.eq.s32.totalorder %s15, 1
      %p59 = por %p57, %p58
      %p61 = scmp.ne.s32.totalorder %s46, %s60
      %p62 = scmp.eq.s32.totalorder %s15, 0
      %p63 = por %p61, %p62
      %s65 = sadd.s32 %s64, 1
      %p68 = scmp.eq.s32.totalorder %s9, 1
      %p69 = scmp.ne.s32.totalorder %s64, %s66
      %p70 = scmp.eq.s32.totalorder %s9, 0
      %p71 = por %p69, %p70
      %p72 = scmp.ne.s32.totalorder %s64, %s66
      %p73 = scmp.eq.s32.totalorder %s14, 1
      %p74 = por %p72, %p73
      %p75 = scmp.ne.s32.totalorder %s66, %s67
      %p76 = scmp.eq.s32.totalorder %s14, 0
      %p77 = por %p75, %p76
      %p78 = scmp.ne.s32.totalorder %s66, %s67
      %p79 = scmp.eq.s32.totalorder %s15, 1
      %p80 = por %p78, %p79
      %p82 = scmp.ne.s32.totalorder %s67, %s81
      %p83 = scmp.eq.s32.totalorder %s15, 0
      %p84 = por %p82, %p83
      %s85 = ssub.s32 %s9, %s16
      %p86 = scmp.eq.s32.totalorder %s85, 0
      %s88 = sadd.s32 %s87, 1
      %s89 = scalar_select %p86, %s87, %s88
      %p92 = pneg %p86
      %p93 = scmp.eq.s32.totalorder %s9, 1
      %p94 = por %p92, %p93
      %p95 = scmp.ne.s32.totalorder %s87, %s90
      %p96 = scmp.eq.s32.totalorder %s9, 0
      %p97 = por %p95, %p96
      %p98 = scmp.ne.s32.totalorder %s87, %s90
      %p99 = scmp.eq.s32.totalorder %s14, 1
      %p100 = por %p98, %p99
      %p101 = scmp.ne.s32.totalorder %s90, %s91
      %p102 = scmp.eq.s32.totalorder %s14, 0
      %p103 = por %p101, %p102
      %p104 = scmp.ne.s32.totalorder %s90, %s91
      %p105 = scmp.eq.s32.totalorder %s15, 1
      %p106 = por %p104, %p105
      %p108 = scmp.ne.s32.totalorder %s91, %s107
      %p109 = scmp.eq.s32.totalorder %s15, 0
      %p110 = por %p108, %p109
      %p111 = scmp.le.s32.totalorder 1, %s9
      %p112 = scmp.lt.s32.totalorder %s9, 3
      %p113 = pnand %p111, %p112
      %p114 = pneg %p113
      // Predicated region
      $region9: #{inception_fid_forward.12} parent=5 // pred_check
        _
      $region10: #{inception_fid_forward.12} parent=5 // pred_check_branch
        %116 = sbr.rel (%p113) target = $region12
      $region11: #{inception_fid_forward.12} parent=5 // pred_region
        %s117 = ssub.s32 %s9, 1
        // Predicated region
        $region13: #{inception_fid_forward.12} parent=11 // pred_check
          %p118 = pneg %p56
        $region14: #{inception_fid_forward.12} parent=11 // pred_check_branch
          %120 = sbr.rel (%p118) target = $region16
        $region15: #{inception_fid_forward.12} parent=11 // pred_region
          _
        $region16: #{inception_fid_forward.12} parent=11 // pred_fallthru
          _
        // Predicated region
        $region17: #{inception_fid_forward.12} parent=11 // pred_check
          %p121 = pneg %p77
        $region18: #{inception_fid_forward.12} parent=11 // pred_check_branch
          %123 = sbr.rel (%p121) target = $region20
        $region19: #{inception_fid_forward.12} parent=11 // pred_region
          _
        $region20: #{inception_fid_forward.12} parent=11 // pred_fallthru
          _
      $region12: #{inception_fid_forward.12} parent=5 // pred_fallthru
        _
      %p124 = scmp.lt.s32.totalorder %s9, 2
      // Predicated region
      $region21: #{inception_fid_forward.12} parent=5 // pred_check
        %p125 = pneg %p124
      $region22: #{inception_fid_forward.12} parent=5 // pred_check_branch
        %127 = sbr.rel (%p125) target = $region24
      $region23: #{inception_fid_forward.12} parent=5 // pred_region
        // Predicated region
        $region25: #{inception_fid_forward.12} parent=23 // pred_check
          %p128 = pneg %p29
        $region26: #{inception_fid_forward.12} parent=23 // pred_check_branch
          %130 = sbr.rel (%p128) target = $region28
        $region27: #{inception_fid_forward.12} parent=23 // pred_region
          %s131 = smul.u32 29, %s9
          %s132 = ssub.s32 57, %s131
          %p133 = scmp.lt.s32.totalorder %s132, 29
          %s134 = scalar_select %p133, %s132, 29
          %s135 = smul.u32 64, %s134
          %p136 = scmp.lt.s32.totalorder %s131, 56
          %s137 = scalar_select %p136, %s131, 56
          %s138 = smul.addr %s137, 4
          %s139 = scalar_lea.vmem %s0, %s138
          %s140 = smul.u32 29, %s9
          %s141 = ssub.s32 57, %s140
          %p142 = scmp.lt.s32.totalorder %s141, 29
          %s143 = scalar_select %p142, %s141, 29
          %s144 = smul.u32 64, %s143
        $region28: #{inception_fid_forward.12} parent=23 // pred_fallthru
          _
      $region24: #{inception_fid_forward.12} parent=5 // pred_fallthru
        _
      %p145 = scmp.le.s32.totalorder 1, %s9
      %p146 = scmp.lt.s32.totalorder %s9, 3
      %p147 = pnand %p145, %p146
      %p148 = pneg %p147
      // Predicated region
      $region29: #{inception_fid_forward.12} parent=5 // pred_check
        _
      $region30: #{inception_fid_forward.12} parent=5 // pred_check_branch
        %150 = sbr.rel (%p147) target = $region32
      $region31: #{inception_fid_forward.12} parent=5 // pred_region
        %s151 = ssub.s32 %s9, 1
        %s152 = smul.u32 29, %s14
        %s153 = ssub.s32 57, %s152
        %p154 = scmp.lt.s32.totalorder %s153, 29
        %s155 = scalar_select %p154, %s153, 29
        %s156 = smul.u32 64, %s155
        %p157 = scmp.lt.s32.totalorder %s152, 56
        %s158 = scalar_select %p157, %s152, 56
        %s159 = smul.addr %s158, 4
        %s160 = scalar_lea.vmem %s0, %s159
        %p161 = pneg %p35
        %p162 = pneg %p32
        %p163 = pneg %p56
        %p164 = pneg %p53
        %p165 = pneg %p77
        %p166 = pneg %p74
        %p167 = pneg %p103
        %p168 = pneg %p100
        %s169 = sand.u32 %s90, 1
        %s170 = sand.u32 %s90, 1
        %s171 = smul.addr %s170, 116
        %s172 = scalar_lea.vmem [#allocation2], %s171
        %s173 = smul.u32 29, %s14
        %s174 = ssub.s32 57, %s173
        %p175 = scmp.lt.s32.totalorder %s174, 29
        %s176 = scalar_select %p175, %s174, 29
        %s177 = smul.u32 64, %s176
        %p178 = scmp.lt.s32.totalorder %s173, 56
        %s179 = scalar_select %p178, %s173, 56
        %s180 = smul.addr %s179, 4
        %s181 = scalar_lea.vmem %s0, %s180
        %s182 = smul.u32 29, %s14
        %s183 = ssub.s32 57, %s182
        %p184 = scmp.lt.s32.totalorder %s183, 29
        %s185 = scalar_select %p184, %s183, 29
        %s186 = smul.u32 64, %s185
        %s187 = smul.u32 29, %s14
        %s188 = ssub.s32 57, %s187
        %p189 = scmp.lt.s32.totalorder %s188, 29
        %s190 = scalar_select %p189, %s188, 29
        %s191 = smul.u32 64, %s190
        %v193 = vld [vmem:[%s181] sm:$0xf]
        %v194 = vld [vmem:[%s181 + $0x4] sm:$0xf]
        %v195 = vld [vmem:[%s181 + $0x8] sm:$0xf]
        %v196 = vld [vmem:[%s181 + $0xc] sm:$0xf]
        %v197 = vld [vmem:[%s181 + $0x10] sm:$0xf]
        %v198 = vld [vmem:[%s181 + $0x14] sm:$0xf]
        %v199 = vld [vmem:[%s181 + $0x18] sm:$0xf]
        %v200 = vld [vmem:[%s181 + $0x1c] sm:$0xf]
        %v201 = vld [vmem:[%s181 + $0x20] sm:$0xf]
        %v202 = vld [vmem:[%s181 + $0x24] sm:$0xf]
        %v203 = vld [vmem:[%s181 + $0x28] sm:$0xf]
        %v204 = vld [vmem:[%s181 + $0x2c] sm:$0xf]
        %v205 = vld [vmem:[%s181 + $0x30] sm:$0xf]
        %v206 = vld [vmem:[%s181 + $0x34] sm:$0xf]
        %v207 = vld [vmem:[%s181 + $0x38] sm:$0xf]
        %v208 = vld [vmem:[%s181 + $0x3c] sm:$0xf]
        %v209 = vld [vmem:[%s181 + $0x40] sm:$0xf]
        %v210 = vld [vmem:[%s181 + $0x44] sm:$0xf]
        %v211 = vld [vmem:[%s181 + $0x48] sm:$0xf]
        %v212 = vld [vmem:[%s181 + $0x4c] sm:$0xf]
        %v213 = vld [vmem:[%s181 + $0x50] sm:$0xf]
        %v214 = vld [vmem:[%s181 + $0x54] sm:$0xf]
        %v215 = vld [vmem:[%s181 + $0x58] sm:$0xf]
        %v216 = vld [vmem:[%s181 + $0x5c] sm:$0xf]
        %v217 = vld [vmem:[%s181 + $0x60] sm:$0xf]
        %v218 = vld [vmem:[%s181 + $0x64] sm:$0xf]
        %v219 = vld [vmem:[%s181 + $0x68] sm:$0xf]
        %v220 = vld [vmem:[%s181 + $0x6c] sm:$0xf]
        %v221 = vld [vmem:[%s181 + $0x70] sm:$0xf]
        %v222 = vld [vmem:[%s1] sm:$0xf]
        %v223 = vld [vmem:[%s1 + $0x4] sm:$0xf]
        %v224 = vld [vmem:[%s1 + $0x8] sm:$0xf]
        %v225 = vld [vmem:[%s1 + $0xc] sm:$0x3]
        %v226 = vld [vmem:[%s2] sm:$0x1]
        %v228 = vlaneseq
        %v229 = vshrl.u32 %v228, 7
        %v230 = vsub.s32 0, %v229
        %v231 = vrot.slane %v226, %v230
        %v262 = vunpack.c.l.b16 %v193
        %v263 = vunpack.c.l.b16 %v194
        %v264 = vunpack.c.l.b16 %v195
        %v265 = vunpack.c.l.b16 %v196
        %v266 = vunpack.c.l.b16 %v197
        %v267 = vunpack.c.l.b16 %v198
        %v268 = vunpack.c.l.b16 %v199
        %v269 = vunpack.c.l.b16 %v200
        %v270 = vunpack.c.l.b16 %v201
        %v271 = vunpack.c.l.b16 %v202
        %v272 = vunpack.c.l.b16 %v203
        %v273 = vunpack.c.l.b16 %v204
        %v274 = vunpack.c.l.b16 %v205
        %v275 = vunpack.c.l.b16 %v206
        %v276 = vunpack.c.l.b16 %v207
        %v277 = vunpack.c.l.b16 %v208
        %v278 = vunpack.c.l.b16 %v209
        %v279 = vunpack.c.l.b16 %v210
        %v280 = vunpack.c.l.b16 %v211
        %v281 = vunpack.c.l.b16 %v212
        %v282 = vunpack.c.l.b16 %v213
        %v283 = vunpack.c.l.b16 %v214
        %v284 = vunpack.c.l.b16 %v215
        %v285 = vunpack.c.l.b16 %v216
        %v286 = vunpack.c.l.b16 %v217
        %v287 = vunpack.c.l.b16 %v218
        %v288 = vunpack.c.l.b16 %v219
        %v289 = vunpack.c.l.b16 %v220
        %v290 = vunpack.c.l.b16 %v221
        %v291 = vpack.c.b16 %v263, %v262
        %v292 = vpack.c.b16 %v265, %v264
        %v293 = vpack.c.b16 %v267, %v266
        %v294 = vpack.c.b16 %v269, %v268
        %v295 = vpack.c.b16 %v271, %v270
        %v296 = vpack.c.b16 %v273, %v272
        %v297 = vpack.c.b16 %v275, %v274
        %v298 = vpack.c.b16 %v277, %v276
        %v299 = vpack.c.b16 %v279, %v278
        %v300 = vpack.c.b16 %v281, %v280
        %v301 = vpack.c.b16 %v283, %v282
        %v302 = vpack.c.b16 %v285, %v284
        %v303 = vpack.c.b16 %v287, %v286
        %v304 = vpack.c.b16 %v289, %v288
        %v305 = vpack.c.b16 %v290, %v290
        %v310 = vunpack.c.l.b16 %v222
        %v311 = vunpack.c.l.b16 %v223
        %v312 = vunpack.c.l.b16 %v224
        %v313 = vunpack.c.l.b16 %v225
        %v314 = vpack.c.b16 %v311, %v310
        %v315 = vpack.c.b16 %v313, %v312
        %vm317 = vcmask 220160
        %v319 = vsel %vm317, %v291, 0
        %v322 = vsel %vm317, %v292, 0
        %v325 = vsel %vm317, %v293, 0
        %v328 = vsel %vm317, %v294, 0
        %v331 = vsel %vm317, %v295, 0
        %v334 = vsel %vm317, %v296, 0
        %v337 = vsel %vm317, %v297, 0
        %v340 = vsel %vm317, %v298, 0
        %v343 = vsel %vm317, %v299, 0
        %v346 = vsel %vm317, %v300, 0
        %v349 = vsel %vm317, %v301, 0
        %v352 = vsel %vm317, %v302, 0
        %v355 = vsel %vm317, %v303, 0
        %v358 = vsel %vm317, %v304, 0
        %v361 = vsel %vm317, %v305, 0
        %vm363 = vcmask 1044480
        %vm364 = vcmask 1045504
        %v365 = vsel %vm363, 4294967295, 65535
        %v366 = vsel %vm364, %v365, 0
        %v368 = vand.u32 %v315, %v366
        %370 = vmatprep.subr.bf16.mxu0 0
        %371 = vmatpush1.bf16.msra.mxu0 0
        %372 = vmatprep.subr.bf16.mxu0 0
        %373 = vmatpush1.bf16.msra.mxu0 0
        %374 = vmatprep.subr.bf16.mxu0 0
        %375 = vmatpush1.bf16.msra.mxu0 0
        %376 = vmatprep.subr.bf16.mxu0 0
        %377 = vmatpush1.bf16.msra.mxu0 0
        %378 = vmatprep.subr.bf16.mxu0 0
        %379 = vmatpush1.bf16.msra.mxu0 0
        %380 = vmatprep.subr.bf16.mxu0 0
        %381 = vmatpush1.bf16.msra.mxu0 0
        %382 = vmatprep.subr.bf16.mxu0 0
        %383 = vmatpush1.bf16.msra.mxu0 %v368
        %384 = vmatprep.subr.bf16.mxu0 0
        %385 = vmatpush1.bf16.msra.mxu0 %v314
        %386 = vmatprep.subr.bf16.mxu0 0
        %387 = vmatpush2.bf16.msra.mxu0 0
        %388 = vmatprep.subr.bf16.mxu0 0
        %389 = vmatpush2.bf16.msra.mxu0 0
        %390 = vmatprep.subr.bf16.mxu0 0
        %391 = vmatpush2.bf16.msra.mxu0 0
        %392 = vmatprep.subr.bf16.mxu0 0
        %393 = vmatpush2.bf16.msra.mxu0 0
        %394 = vmatprep.subr.bf16.mxu0 0
        %395 = vmatpush2.bf16.msra.mxu0 0
        %396 = vmatprep.subr.bf16.mxu0 0
        %397 = vmatpush2.bf16.msra.mxu0 0
        %398 = vmatprep.subr.bf16.mxu0 0
        %399 = vmatpush2.bf16.msra.mxu0 0
        %400 = vmatprep.subr.bf16.mxu0 0
        %401 = vmatpush2.bf16.msra.mxu0 0
        %402 = vmatprep.mubr.bf16.mxu0 0
        %403 = vmatmul.mubr.bf16.gmra.mxu0 %v319
        %v404 = vpop.f32.mrf.mxu0
        %v405 = vadd.f32 %v231, %v404
        %v406 = vpop.f32.mrf.mxu0
        %v407 = vpop.f32.mrf.mxu0
        %v408 = vadd.f32 %v231, %v407
        %v409 = vpop.f32.mrf.mxu0
        %410 = vmatprep.mubr.bf16.mxu0 0
        %411 = vmatmul.mubr.bf16.gmra.mxu0 %v322
        %v412 = vpop.f32.mrf.mxu0
        %v413 = vadd.f32 %v231, %v412
        %v414 = vpop.f32.mrf.mxu0
        %v415 = vpop.f32.mrf.mxu0
        %v416 = vadd.f32 %v231, %v415
        %v417 = vpop.f32.mrf.mxu0
        %418 = vmatprep.mubr.bf16.mxu0 0
        %419 = vmatmul.mubr.bf16.gmra.mxu0 %v325
        %v420 = vpop.f32.mrf.mxu0
        %v421 = vadd.f32 %v231, %v420
        %v422 = vpop.f32.mrf.mxu0
        %v423 = vpop.f32.mrf.mxu0
        %v424 = vadd.f32 %v231, %v423
        %v425 = vpop.f32.mrf.mxu0
        %426 = vmatprep.mubr.bf16.mxu0 0
        %427 = vmatmul.mubr.bf16.gmra.mxu0 %v328
        %v428 = vpop.f32.mrf.mxu0
        %v429 = vadd.f32 %v231, %v428
        %v430 = vpop.f32.mrf.mxu0
        %v431 = vpop.f32.mrf.mxu0
        %v432 = vadd.f32 %v231, %v431
        %v433 = vpop.f32.mrf.mxu0
        %434 = vmatprep.mubr.bf16.mxu0 0
        %435 = vmatmul.mubr.bf16.gmra.mxu0 %v331
        %v436 = vpop.f32.mrf.mxu0
        %v437 = vadd.f32 %v231, %v436
        %v438 = vpop.f32.mrf.mxu0
        %v439 = vpop.f32.mrf.mxu0
        %v440 = vadd.f32 %v231, %v439
        %v441 = vpop.f32.mrf.mxu0
        %442 = vmatprep.mubr.bf16.mxu0 0
        %443 = vmatmul.mubr.bf16.gmra.mxu0 %v334
        %v444 = vpop.f32.mrf.mxu0
        %v445 = vadd.f32 %v231, %v444
        %v446 = vpop.f32.mrf.mxu0
        %v447 = vpop.f32.mrf.mxu0
        %v448 = vadd.f32 %v231, %v447
        %v449 = vpop.f32.mrf.mxu0
        %450 = vmatprep.mubr.bf16.mxu0 0
        %451 = vmatmul.mubr.bf16.gmra.mxu0 %v337
        %v452 = vpop.f32.mrf.mxu0
        %v453 = vadd.f32 %v231, %v452
        %v454 = vpop.f32.mrf.mxu0
        %v455 = vpop.f32.mrf.mxu0
        %v456 = vadd.f32 %v231, %v455
        %v457 = vpop.f32.mrf.mxu0
        %458 = vmatprep.mubr.bf16.mxu0 0
        %459 = vmatmul.mubr.bf16.gmra.mxu0 %v340
        %v460 = vpop.f32.mrf.mxu0
        %v461 = vadd.f32 %v231, %v460
        %v462 = vpop.f32.mrf.mxu0
        %v463 = vpop.f32.mrf.mxu0
        %v464 = vadd.f32 %v231, %v463
        %v465 = vpop.f32.mrf.mxu0
        %466 = vmatprep.mubr.bf16.mxu0 0
        %467 = vmatmul.mubr.bf16.gmra.mxu0 %v343
        %v468 = vpop.f32.mrf.mxu0
        %v469 = vadd.f32 %v231, %v468
        %v470 = vpop.f32.mrf.mxu0
        %v471 = vpop.f32.mrf.mxu0
        %v472 = vadd.f32 %v231, %v471
        %v473 = vpop.f32.mrf.mxu0
        %474 = vmatprep.mubr.bf16.mxu0 0
        %475 = vmatmul.mubr.bf16.gmra.mxu0 %v346
        %v476 = vpop.f32.mrf.mxu0
        %v477 = vadd.f32 %v231, %v476
        %v478 = vpop.f32.mrf.mxu0
        %v479 = vpop.f32.mrf.mxu0
        %v480 = vadd.f32 %v231, %v479
        %v481 = vpop.f32.mrf.mxu0
        %482 = vmatprep.mubr.bf16.mxu0 0
        %483 = vmatmul.mubr.bf16.gmra.mxu0 %v349
        %v484 = vpop.f32.mrf.mxu0
        %v485 = vadd.f32 %v231, %v484
        %v486 = vpop.f32.mrf.mxu0
        %v487 = vpop.f32.mrf.mxu0
        %v488 = vadd.f32 %v231, %v487
        %v489 = vpop.f32.mrf.mxu0
        %490 = vmatprep.mubr.bf16.mxu0 0
        %491 = vmatmul.mubr.bf16.gmra.mxu0 %v352
        %v492 = vpop.f32.mrf.mxu0
        %v493 = vadd.f32 %v231, %v492
        %v494 = vpop.f32.mrf.mxu0
        %v495 = vpop.f32.mrf.mxu0
        %v496 = vadd.f32 %v231, %v495
        %v497 = vpop.f32.mrf.mxu0
        %498 = vmatprep.mubr.bf16.mxu0 0
        %499 = vmatmul.mubr.bf16.gmra.mxu0 %v355
        %v500 = vpop.f32.mrf.mxu0
        %v501 = vadd.f32 %v231, %v500
        %v502 = vpop.f32.mrf.mxu0
        %v503 = vpop.f32.mrf.mxu0
        %v504 = vadd.f32 %v231, %v503
        %v505 = vpop.f32.mrf.mxu0
        %506 = vmatprep.mubr.bf16.mxu0 0
        %507 = vmatmul.mubr.bf16.gmra.mxu0 %v358
        %v508 = vpop.f32.mrf.mxu0
        %v509 = vadd.f32 %v231, %v508
        %v510 = vpop.f32.mrf.mxu0
        %v511 = vpop.f32.mrf.mxu0
        %v512 = vadd.f32 %v231, %v511
        %v513 = vpop.f32.mrf.mxu0
        %514 = vmatprep.mubr.bf16.mxu0 0
        %515 = vmatmul.mubr.bf16.gmra.mxu0 %v361
        %v516 = vpop.f32.mrf.mxu0
        %v517 = vadd.f32 %v231, %v516
        %v518 = vpop.f32.mrf.mxu0
        %v519 = vpop.f32.mrf.mxu0
        %v520 = vpop.f32.mrf.mxu0
        %521 = vdwg.mxu0
        %v522 = vmax.f32 %v405, 0.0
        %v523 = vmax.f32 %v408, 0.0
        %v524 = vmax.f32 %v413, 0.0
        %v525 = vmax.f32 %v416, 0.0
        %v526 = vmax.f32 %v421, 0.0
        %v527 = vmax.f32 %v424, 0.0
        %v528 = vmax.f32 %v429, 0.0
        %v529 = vmax.f32 %v432, 0.0
        %v530 = vmax.f32 %v437, 0.0
        %v531 = vmax.f32 %v440, 0.0
        %v532 = vmax.f32 %v445, 0.0
        %v533 = vmax.f32 %v448, 0.0
        %v534 = vmax.f32 %v453, 0.0
        %v535 = vmax.f32 %v456, 0.0
        %v536 = vmax.f32 %v461, 0.0
        %v537 = vmax.f32 %v464, 0.0
        %v538 = vmax.f32 %v469, 0.0
        %v539 = vmax.f32 %v472, 0.0
        %v540 = vmax.f32 %v477, 0.0
        %v541 = vmax.f32 %v480, 0.0
        %v542 = vmax.f32 %v485, 0.0
        %v543 = vmax.f32 %v488, 0.0
        %v544 = vmax.f32 %v493, 0.0
        %v545 = vmax.f32 %v496, 0.0
        %v546 = vmax.f32 %v501, 0.0
        %v547 = vmax.f32 %v504, 0.0
        %v548 = vmax.f32 %v509, 0.0
        %v549 = vmax.f32 %v512, 0.0
        %v550 = vmax.f32 %v517, 0.0
        %v551 = vpack.c.bf16 %v523, %v522
        %v552 = vpack.c.bf16 %v525, %v524
        %v553 = vpack.c.bf16 %v527, %v526
        %v554 = vpack.c.bf16 %v529, %v528
        %v555 = vpack.c.bf16 %v531, %v530
        %v556 = vpack.c.bf16 %v533, %v532
        %v557 = vpack.c.bf16 %v535, %v534
        %v558 = vpack.c.bf16 %v537, %v536
        %v559 = vpack.c.bf16 %v539, %v538
        %v560 = vpack.c.bf16 %v541, %v540
        %v561 = vpack.c.bf16 %v543, %v542
        %v562 = vpack.c.bf16 %v545, %v544
        %v563 = vpack.c.bf16 %v547, %v546
        %v564 = vpack.c.bf16 %v549, %v548
        %v565 = vpack.c.bf16 %v550, %v550
        %v581 = vunpack.c.l.b16 %v551
        %v582 = vunpack.c.h.b16 %v551
        %v583 = vunpack.c.l.b16 %v552
        %v584 = vunpack.c.h.b16 %v552
        %v585 = vunpack.c.l.b16 %v553
        %v586 = vunpack.c.h.b16 %v553
        %v587 = vunpack.c.l.b16 %v554
        %v588 = vunpack.c.h.b16 %v554
        %v589 = vunpack.c.l.b16 %v555
        %v590 = vunpack.c.h.b16 %v555
        %v591 = vunpack.c.l.b16 %v556
        %v592 = vunpack.c.h.b16 %v556
        %v593 = vunpack.c.l.b16 %v557
        %v594 = vunpack.c.h.b16 %v557
        %v595 = vunpack.c.l.b16 %v558
        %v596 = vunpack.c.h.b16 %v558
        %v597 = vunpack.c.l.b16 %v559
        %v598 = vunpack.c.h.b16 %v559
        %v599 = vunpack.c.l.b16 %v560
        %v600 = vunpack.c.h.b16 %v560
        %v601 = vunpack.c.l.b16 %v561
        %v602 = vunpack.c.h.b16 %v561
        %v603 = vunpack.c.l.b16 %v562
        %v604 = vunpack.c.h.b16 %v562
        %v605 = vunpack.c.l.b16 %v563
        %v606 = vunpack.c.h.b16 %v563
        %v607 = vunpack.c.l.b16 %v564
        %v608 = vunpack.c.h.b16 %v564
        %v609 = vunpack.c.l.b16 %v565
        %v610 = vpack.c.b16 %v581, %v581
        %v611 = vpack.c.b16 %v582, %v582
        %v612 = vpack.c.b16 %v583, %v583
        %v613 = vpack.c.b16 %v584, %v584
        %v614 = vpack.c.b16 %v585, %v585
        %v615 = vpack.c.b16 %v586, %v586
        %v616 = vpack.c.b16 %v587, %v587
        %v617 = vpack.c.b16 %v588, %v588
        %v618 = vpack.c.b16 %v589, %v589
        %v619 = vpack.c.b16 %v590, %v590
        %v620 = vpack.c.b16 %v591, %v591
        %v621 = vpack.c.b16 %v592, %v592
        %v622 = vpack.c.b16 %v593, %v593
        %v623 = vpack.c.b16 %v594, %v594
        %v624 = vpack.c.b16 %v595, %v595
        %v625 = vpack.c.b16 %v596, %v596
        %v626 = vpack.c.b16 %v597, %v597
        %v627 = vpack.c.b16 %v598, %v598
        %v628 = vpack.c.b16 %v599, %v599
        %v629 = vpack.c.b16 %v600, %v600
        %v630 = vpack.c.b16 %v601, %v601
        %v631 = vpack.c.b16 %v602, %v602
        %v632 = vpack.c.b16 %v603, %v603
        %v633 = vpack.c.b16 %v604, %v604
        %v634 = vpack.c.b16 %v605, %v605
        %v635 = vpack.c.b16 %v606, %v606
        %v636 = vpack.c.b16 %v607, %v607
        %v637 = vpack.c.b16 %v608, %v608
        %v638 = vpack.c.b16 %v609, %v609
        %668 = vst [vmem:[%s172] sm:$0xf] %v610
        %669 = vst [vmem:[%s172 + $0x4] sm:$0xf] %v611
        %670 = vst [vmem:[%s172 + $0x8] sm:$0xf] %v612
        %671 = vst [vmem:[%s172 + $0xc] sm:$0xf] %v613
        %672 = vst [vmem:[%s172 + $0x10] sm:$0xf] %v614
        %673 = vst [vmem:[%s172 + $0x14] sm:$0xf] %v615
        %674 = vst [vmem:[%s172 + $0x18] sm:$0xf] %v616
        %675 = vst [vmem:[%s172 + $0x1c] sm:$0xf] %v617
        %676 = vst [vmem:[%s172 + $0x20] sm:$0xf] %v618
        %677 = vst [vmem:[%s172 + $0x24] sm:$0xf] %v619
        %678 = vst [vmem:[%s172 + $0x28] sm:$0xf] %v620
        %679 = vst [vmem:[%s172 + $0x2c] sm:$0xf] %v621
        %680 = vst [vmem:[%s172 + $0x30] sm:$0xf] %v622
        %681 = vst [vmem:[%s172 + $0x34] sm:$0xf] %v623
        %682 = vst [vmem:[%s172 + $0x38] sm:$0xf] %v624
        %683 = vst [vmem:[%s172 + $0x3c] sm:$0xf] %v625
        %684 = vst [vmem:[%s172 + $0x40] sm:$0xf] %v626
        %685 = vst [vmem:[%s172 + $0x44] sm:$0xf] %v627
        %686 = vst [vmem:[%s172 + $0x48] sm:$0xf] %v628
        %687 = vst [vmem:[%s172 + $0x4c] sm:$0xf] %v629
        %688 = vst [vmem:[%s172 + $0x50] sm:$0xf] %v630
        %689 = vst [vmem:[%s172 + $0x54] sm:$0xf] %v631
        %690 = vst [vmem:[%s172 + $0x58] sm:$0xf] %v632
        %691 = vst [vmem:[%s172 + $0x5c] sm:$0xf] %v633
        %692 = vst [vmem:[%s172 + $0x60] sm:$0xf] %v634
        %693 = vst [vmem:[%s172 + $0x64] sm:$0xf] %v635
        %694 = vst [vmem:[%s172 + $0x68] sm:$0xf] %v636
        %695 = vst [vmem:[%s172 + $0x6c] sm:$0xf] %v637
        %696 = vst [vmem:[%s172 + $0x70] sm:$0xf] %v638
        %s697 = sand.u32 %s90, 1
        %s698 = sand.u32 %s90, 1
        %s699 = smul.addr %s698, 116
        %s700 = scalar_lea.vmem [#allocation2], %s699
        // Predicated region
        $region33: #{inception_fid_forward.12} parent=31 // pred_check
          %p701 = pneg %p100
        $region34: #{inception_fid_forward.12} parent=31 // pred_check_branch
          %703 = sbr.rel (%p701) target = $region36
        $region35: #{inception_fid_forward.12} parent=31 // pred_region
          %s704 = smul.u32 29, %s14
          %s705 = ssub.s32 57, %s704
          %p706 = scmp.lt.s32.totalorder %s705, 29
          %s707 = scalar_select %p706, %s705, 29
          %s708 = smul.u32 64, %s707
          %p709 = scmp.ne.s32.totalorder 0, %s708
          %s710 = smul.addr %s704, 4
          %s711 = scalar_lea.vmem %s3, %s710
          // Predicated region
          $region37: #{inception_fid_forward.12} parent=35 // pred_check
            %p712 = pneg %p709
          $region38: #{inception_fid_forward.12} parent=35 // pred_check_branch
            %714 = sbr.rel (%p712) target = $region40
          $region39: #{inception_fid_forward.12} parent=35 // pred_region
            // Predicated region
            $region41: #{inception_fid_forward.12} parent=39 // pred_check
              _
            $region42: #{inception_fid_forward.12} parent=39 // pred_check_branch
              %716 = sbr.rel target = $region44
            $region43: #{inception_fid_forward.12} parent=39 // pred_region
              // Predicated region
              $region63: #{inception_fid_forward.12} parent=43 // pred_check
                _
              $region64: #{inception_fid_forward.12} parent=43 // pred_check_branch
                %823 = sbr.rel (0) target = $region66
              $region65: #{inception_fid_forward.12} parent=43 // pred_region
                %s825 = ssub.s32 16, 1
                %s826 = sdiv.u32.pop %s707, 29
                %s827 = srem.u32.pop %s707, 29
                // While loop
                $region67: #{inception_fid_forward.12} parent=65 // loop_pre_header
                  _
                $region68: #{inception_fid_forward.12} parent=65 // loop_header
                  %s829 = sphi 0, %s831
                  %p830 = scmp.ge.s32.totalorder %s829, %s826
                  %s834 = sphi 0, %s897
                  %s835 = sphi %s700, %s900
                  %s836 = sphi %s711, %s901
                $region69: #{inception_fid_forward.12} parent=65 // loop_header_branch
                  %833 = sbr.rel (%p830) target = $region73
                $region70: #{inception_fid_forward.12} parent=65 // loop_body
                  %v837 = vld [vmem:[%s835] sm:%s825]
                  %838 = vst [vmem:[%s836] sm:%s825] %v837
                  %v839 = vld [vmem:[%s835 + $0x4] sm:%s825]
                  %840 = vst [vmem:[%s836 + $0x4] sm:%s825] %v839
                  %v841 = vld [vmem:[%s835 + $0x8] sm:%s825]
                  %842 = vst [vmem:[%s836 + $0x8] sm:%s825] %v841
                  %v843 = vld [vmem:[%s835 + $0xc] sm:%s825]
                  %844 = vst [vmem:[%s836 + $0xc] sm:%s825] %v843
                  %v845 = vld [vmem:[%s835 + $0x10] sm:%s825]
                  %846 = vst [vmem:[%s836 + $0x10] sm:%s825] %v845
                  %v847 = vld [vmem:[%s835 + $0x14] sm:%s825]
                  %848 = vst [vmem:[%s836 + $0x14] sm:%s825] %v847
                  %v849 = vld [vmem:[%s835 + $0x18] sm:%s825]
                  %850 = vst [vmem:[%s836 + $0x18] sm:%s825] %v849
                  %v851 = vld [vmem:[%s835 + $0x1c] sm:%s825]
                  %852 = vst [vmem:[%s836 + $0x1c] sm:%s825] %v851
                  %v853 = vld [vmem:[%s835 + $0x20] sm:%s825]
                  %854 = vst [vmem:[%s836 + $0x20] sm:%s825] %v853
                  %v855 = vld [vmem:[%s835 + $0x24] sm:%s825]
                  %856 = vst [vmem:[%s836 + $0x24] sm:%s825] %v855
                  %v857 = vld [vmem:[%s835 + $0x28] sm:%s825]
                  %858 = vst [vmem:[%s836 + $0x28] sm:%s825] %v857
                  %v859 = vld [vmem:[%s835 + $0x2c] sm:%s825]
                  %860 = vst [vmem:[%s836 + $0x2c] sm:%s825] %v859
                  %v861 = vld [vmem:[%s835 + $0x30] sm:%s825]
                  %862 = vst [vmem:[%s836 + $0x30] sm:%s825] %v861
                  %v863 = vld [vmem:[%s835 + $0x34] sm:%s825]
                  %864 = vst [vmem:[%s836 + $0x34] sm:%s825] %v863
                  %v865 = vld [vmem:[%s835 + $0x38] sm:%s825]
                  %866 = vst [vmem:[%s836 + $0x38] sm:%s825] %v865
                  %v867 = vld [vmem:[%s835 + $0x3c] sm:%s825]
                  %868 = vst [vmem:[%s836 + $0x3c] sm:%s825] %v867
                  %v869 = vld [vmem:[%s835 + $0x40] sm:%s825]
                  %870 = vst [vmem:[%s836 + $0x40] sm:%s825] %v869
                  %v871 = vld [vmem:[%s835 + $0x44] sm:%s825]
                  %872 = vst [vmem:[%s836 + $0x44] sm:%s825] %v871
                  %v873 = vld [vmem:[%s835 + $0x48] sm:%s825]
                  %874 = vst [vmem:[%s836 + $0x48] sm:%s825] %v873
                  %v875 = vld [vmem:[%s835 + $0x4c] sm:%s825]
                  %876 = vst [vmem:[%s836 + $0x4c] sm:%s825] %v875
                  %v877 = vld [vmem:[%s835 + $0x50] sm:%s825]
                  %878 = vst [vmem:[%s836 + $0x50] sm:%s825] %v877
                  %v879 = vld [vmem:[%s835 + $0x54] sm:%s825]
                  %880 = vst [vmem:[%s836 + $0x54] sm:%s825] %v879
                  %v881 = vld [vmem:[%s835 + $0x58] sm:%s825]
                  %882 = vst [vmem:[%s836 + $0x58] sm:%s825] %v881
                  %v883 = vld [vmem:[%s835 + $0x5c] sm:%s825]
                  %884 = vst [vmem:[%s836 + $0x5c] sm:%s825] %v883
                  %v885 = vld [vmem:[%s835 + $0x60] sm:%s825]
                  %886 = vst [vmem:[%s836 + $0x60] sm:%s825] %v885
                  %v887 = vld [vmem:[%s835 + $0x64] sm:%s825]
                  %888 = vst [vmem:[%s836 + $0x64] sm:%s825] %v887
                  %v889 = vld [vmem:[%s835 + $0x68] sm:%s825]
                  %890 = vst [vmem:[%s836 + $0x68] sm:%s825] %v889
                  %v891 = vld [vmem:[%s835 + $0x6c] sm:%s825]
                  %892 = vst [vmem:[%s836 + $0x6c] sm:%s825] %v891
                  %v893 = vld [vmem:[%s835 + $0x70] sm:%s825]
                  %894 = vst [vmem:[%s836 + $0x70] sm:%s825] %v893
                  %s895 = sadd.s32 1, %s834
                  %p896 = scmp.ge.s32.totalorder %s895, %s826
                  %s897 = scalar_select %p896, 0, %s895
                  %s898 = smul.u32 %s897, 116
                  %s899 = smul.u32 %s897, 116
                  %s900 = scalar_lea.vmem %s700, %s898 [#allocation2]
                  %s901 = scalar_lea.vmem %s711, %s899
                $region71: #{inception_fid_forward.12} parent=65 // loop_footer
                  %s831 = sadd.s32 %s829, 1
                $region72: #{inception_fid_forward.12} parent=65 // loop_footer_branch
                  %828 = sbr.rel target = $region68
                $region73: #{inception_fid_forward.12} parent=65 // loop_exit
                  _
                %s902 = sdiv.u32.pop %s707, 29
                %s903 = srem.u32.pop %s707, 29
                %s904 = smul.u32 %s902, 29
                %s905 = smul.u32 4, %s904
                %s906 = scalar_lea.vmem %s700, %s905 [#allocation2]
                %s907 = smul.u32 4, %s904
                %s908 = scalar_lea.vmem %s711, %s907
                // While loop
                $region74: #{inception_fid_forward.12} parent=65 // loop_pre_header
                  _
                $region75: #{inception_fid_forward.12} parent=65 // loop_header
                  %s910 = sphi 0, %s912
                  %p911 = scmp.ge.s32.totalorder %s910, %s903
                  %s915 = sphi 0, %s922
                  %s916 = sphi %s906, %s925
                  %s917 = sphi %s908, %s926
                $region76: #{inception_fid_forward.12} parent=65 // loop_header_branch
                  %914 = sbr.rel (%p911) target = $region80
                $region77: #{inception_fid_forward.12} parent=65 // loop_body
                  %v918 = vld [vmem:[%s916] sm:%s825]
                  %919 = vst [vmem:[%s917] sm:%s825] %v918
                  %s920 = sadd.s32 1, %s915
                  %p921 = scmp.ge.s32.totalorder %s920, %s903
                  %s922 = scalar_select %p921, 0, %s920
                  %s923 = smul.u32 %s922, 4
                  %s924 = smul.u32 %s922, 4
                  %s925 = scalar_lea.vmem %s906, %s923 [#allocation2]
                  %s926 = scalar_lea.vmem %s908, %s924
                $region78: #{inception_fid_forward.12} parent=65 // loop_footer
                  %s912 = sadd.s32 %s910, 1
                $region79: #{inception_fid_forward.12} parent=65 // loop_footer_branch
                  %909 = sbr.rel target = $region75
                $region80: #{inception_fid_forward.12} parent=65 // loop_exit
                  _
              $region66: #{inception_fid_forward.12} parent=43 // pred_fallthru
                _
            $region44: #{inception_fid_forward.12} parent=39 // pred_fallthru
              _
            // Predicated region
            $region45: #{inception_fid_forward.12} parent=39 // pred_check
              _
            $region46: #{inception_fid_forward.12} parent=39 // pred_check_branch
              %718 = sbr.rel (0) target = $region48
            $region47: #{inception_fid_forward.12} parent=39 // pred_region
              %s720 = ssub.s32 16, 1
              %s721 = sdiv.u32.pop %s707, 29
              %s722 = srem.u32.pop %s707, 29
              // While loop
              $region49: #{inception_fid_forward.12} parent=47 // loop_pre_header
                _
              $region50: #{inception_fid_forward.12} parent=47 // loop_header
                %s724 = sphi 0, %s726
                %p725 = scmp.ge.s32.totalorder %s724, %s721
                %s729 = sphi 0, %s792
                %s730 = sphi %s700, %s795
                %s731 = sphi %s711, %s796
              $region51: #{inception_fid_forward.12} parent=47 // loop_header_branch
                %728 = sbr.rel (%p725) target = $region55
              $region52: #{inception_fid_forward.12} parent=47 // loop_body
                %v732 = vld [vmem:[%s730] sm:%s720]
                %733 = vst [vmem:[%s731] sm:%s720] %v732
                %v734 = vld [vmem:[%s730 + $0x4] sm:%s720]
                %735 = vst [vmem:[%s731 + $0x4] sm:%s720] %v734
                %v736 = vld [vmem:[%s730 + $0x8] sm:%s720]
                %737 = vst [vmem:[%s731 + $0x8] sm:%s720] %v736
                %v738 = vld [vmem:[%s730 + $0xc] sm:%s720]
                %739 = vst [vmem:[%s731 + $0xc] sm:%s720] %v738
                %v740 = vld [vmem:[%s730 + $0x10] sm:%s720]
                %741 = vst [vmem:[%s731 + $0x10] sm:%s720] %v740
                %v742 = vld [vmem:[%s730 + $0x14] sm:%s720]
                %743 = vst [vmem:[%s731 + $0x14] sm:%s720] %v742
                %v744 = vld [vmem:[%s730 + $0x18] sm:%s720]
                %745 = vst [vmem:[%s731 + $0x18] sm:%s720] %v744
                %v746 = vld [vmem:[%s730 + $0x1c] sm:%s720]
                %747 = vst [vmem:[%s731 + $0x1c] sm:%s720] %v746
                %v748 = vld [vmem:[%s730 + $0x20] sm:%s720]
                %749 = vst [vmem:[%s731 + $0x20] sm:%s720] %v748
                %v750 = vld [vmem:[%s730 + $0x24] sm:%s720]
                %751 = vst [vmem:[%s731 + $0x24] sm:%s720] %v750
                %v752 = vld [vmem:[%s730 + $0x28] sm:%s720]
                %753 = vst [vmem:[%s731 + $0x28] sm:%s720] %v752
                %v754 = vld [vmem:[%s730 + $0x2c] sm:%s720]
                %755 = vst [vmem:[%s731 + $0x2c] sm:%s720] %v754
                %v756 = vld [vmem:[%s730 + $0x30] sm:%s720]
                %757 = vst [vmem:[%s731 + $0x30] sm:%s720] %v756
                %v758 = vld [vmem:[%s730 + $0x34] sm:%s720]
                %759 = vst [vmem:[%s731 + $0x34] sm:%s720] %v758
                %v760 = vld [vmem:[%s730 + $0x38] sm:%s720]
                %761 = vst [vmem:[%s731 + $0x38] sm:%s720] %v760
                %v762 = vld [vmem:[%s730 + $0x3c] sm:%s720]
                %763 = vst [vmem:[%s731 + $0x3c] sm:%s720] %v762
                %v764 = vld [vmem:[%s730 + $0x40] sm:%s720]
                %765 = vst [vmem:[%s731 + $0x40] sm:%s720] %v764
                %v766 = vld [vmem:[%s730 + $0x44] sm:%s720]
                %767 = vst [vmem:[%s731 + $0x44] sm:%s720] %v766
                %v768 = vld [vmem:[%s730 + $0x48] sm:%s720]
                %769 = vst [vmem:[%s731 + $0x48] sm:%s720] %v768
                %v770 = vld [vmem:[%s730 + $0x4c] sm:%s720]
                %771 = vst [vmem:[%s731 + $0x4c] sm:%s720] %v770
                %v772 = vld [vmem:[%s730 + $0x50] sm:%s720]
                %773 = vst [vmem:[%s731 + $0x50] sm:%s720] %v772
                %v774 = vld [vmem:[%s730 + $0x54] sm:%s720]
                %775 = vst [vmem:[%s731 + $0x54] sm:%s720] %v774
                %v776 = vld [vmem:[%s730 + $0x58] sm:%s720]
                %777 = vst [vmem:[%s731 + $0x58] sm:%s720] %v776
                %v778 = vld [vmem:[%s730 + $0x5c] sm:%s720]
                %779 = vst [vmem:[%s731 + $0x5c] sm:%s720] %v778
                %v780 = vld [vmem:[%s730 + $0x60] sm:%s720]
                %781 = vst [vmem:[%s731 + $0x60] sm:%s720] %v780
                %v782 = vld [vmem:[%s730 + $0x64] sm:%s720]
                %783 = vst [vmem:[%s731 + $0x64] sm:%s720] %v782
                %v784 = vld [vmem:[%s730 + $0x68] sm:%s720]
                %785 = vst [vmem:[%s731 + $0x68] sm:%s720] %v784
                %v786 = vld [vmem:[%s730 + $0x6c] sm:%s720]
                %787 = vst [vmem:[%s731 + $0x6c] sm:%s720] %v786
                %v788 = vld [vmem:[%s730 + $0x70] sm:%s720]
                %789 = vst [vmem:[%s731 + $0x70] sm:%s720] %v788
                %s790 = sadd.s32 1, %s729
                %p791 = scmp.ge.s32.totalorder %s790, %s721
                %s792 = scalar_select %p791, 0, %s790
                %s793 = smul.u32 %s792, 116
                %s794 = smul.u32 %s792, 116
                %s795 = scalar_lea.vmem %s700, %s793 [#allocation2]
                %s796 = scalar_lea.vmem %s711, %s794
              $region53: #{inception_fid_forward.12} parent=47 // loop_footer
                %s726 = sadd.s32 %s724, 1
              $region54: #{inception_fid_forward.12} parent=47 // loop_footer_branch
                %723 = sbr.rel target = $region50
              $region55: #{inception_fid_forward.12} parent=47 // loop_exit
                _
              %s797 = sdiv.u32.pop %s707, 29
              %s798 = srem.u32.pop %s707, 29
              %s799 = smul.u32 %s797, 29
              %s800 = smul.u32 4, %s799
              %s801 = scalar_lea.vmem %s700, %s800 [#allocation2]
              %s802 = smul.u32 4, %s799
              %s803 = scalar_lea.vmem %s711, %s802
              // While loop
              $region56: #{inception_fid_forward.12} parent=47 // loop_pre_header
                _
              $region57: #{inception_fid_forward.12} parent=47 // loop_header
                %s805 = sphi 0, %s807
                %p806 = scmp.ge.s32.totalorder %s805, %s798
                %s810 = sphi 0, %s817
                %s811 = sphi %s801, %s820
                %s812 = sphi %s803, %s821
              $region58: #{inception_fid_forward.12} parent=47 // loop_header_branch
                %809 = sbr.rel (%p806) target = $region62
              $region59: #{inception_fid_forward.12} parent=47 // loop_body
                %v813 = vld [vmem:[%s811] sm:%s720]
                %814 = vst [vmem:[%s812] sm:%s720] %v813
                %s815 = sadd.s32 1, %s810
                %p816 = scmp.ge.s32.totalorder %s815, %s798
                %s817 = scalar_select %p816, 0, %s815
                %s818 = smul.u32 %s817, 4
                %s819 = smul.u32 %s817, 4
                %s820 = scalar_lea.vmem %s801, %s818 [#allocation2]
                %s821 = scalar_lea.vmem %s803, %s819
              $region60: #{inception_fid_forward.12} parent=47 // loop_footer
                %s807 = sadd.s32 %s805, 1
              $region61: #{inception_fid_forward.12} parent=47 // loop_footer_branch
                %804 = sbr.rel target = $region57
              $region62: #{inception_fid_forward.12} parent=47 // loop_exit
                _
            $region48: #{inception_fid_forward.12} parent=39 // pred_fallthru
              _
          $region40: #{inception_fid_forward.12} parent=35 // pred_fallthru
            _
          %927 = vnop
        $region36: #{inception_fid_forward.12} parent=31 // pred_fallthru
          _
      $region32: #{inception_fid_forward.12} parent=5 // pred_fallthru
        _
      %p928 = scmp.le.s32.totalorder 2, %s9
      // Predicated region
      $region81: #{inception_fid_forward.12} parent=5 // pred_check
        %p929 = pneg %p928
      $region82: #{inception_fid_forward.12} parent=5 // pred_check_branch
        %931 = sbr.rel (%p929) target = $region84
      $region83: #{inception_fid_forward.12} parent=5 // pred_region
        %s932 = ssub.s32 %s9, 2
        // Predicated region
        $region85: #{inception_fid_forward.12} parent=83 // pred_check
          %p933 = pneg %p106
        $region86: #{inception_fid_forward.12} parent=83 // pred_check_branch
          %935 = sbr.rel (%p933) target = $region88
        $region87: #{inception_fid_forward.12} parent=83 // pred_region
          %s936 = sand.u32 %s91, 1
          %s937 = sand.u32 %s91, 1
          %s938 = smul.addr %s937, 116
          %s939 = scalar_lea.vmem [#allocation2], %s938
        $region88: #{inception_fid_forward.12} parent=83 // pred_fallthru
          _
      $region84: #{inception_fid_forward.12} parent=5 // pred_fallthru
        _
    $region6: #{inception_fid_forward.12} parent=1 // loop_footer
      %s13 = sadd.s32 1, %s9
    $region7: #{inception_fid_forward.12} parent=1 // loop_footer_branch
      %8 = sbr.rel target = $region3
    $region8: #{inception_fid_forward.12} parent=1 // loop_exit
      _

// kernel: inception_fid_forward.16
$region0: #{inception_fid_forward.16}
  #allocation0 [shape = 'u32[]', space=smem, size = 0x4, offset = 0x4, fixed_abs, tag = 'smem constant byte address 0x4 - core index']
  #allocation1 [shape = 'u32[144,128]{1,0:T(1,128)}', space=vmem, size = 0x12000, scoped, tag = 'internal scratch']
  %s0 = inlined_call_operand.vmem [shape: bf16[2,36,128], index: 0, kind: input, shape index: {}]
  %s1 = inlined_call_operand.vmem [shape: bf16[128,128], index: 1, kind: input, shape index: {}]
  %s2 = inlined_call_operand.vmem [shape: f32[1,128], index: 2, kind: input, shape index: {}]
  %s3 = inlined_call_operand.vmem [shape: bf16[2,36,128], index: 3, kind: output, shape index: {}]
  %s4 = sld [smem:[#allocation0]]
  $region45: #{inception_fid_forward.16} parent=0
    _
  %s6 = ssub.s32 1, %s4
  %s7 = scalar_select 0, %s6, %s4
  loop: start=0, step=1, limit=4
  $region2: #{inception_fid_forward.16} parent=0 // loop_pre_header
    _
  $region3: #{inception_fid_forward.16} parent=0 // loop_header
    %s9 = sphi 0, %s13
    %p10 = scmp.ge.s32.totalorder %s9, 4
    %s19 = sphi 0, %s21
    %s22 = sphi 0, %s19
    %s23 = sphi 0, %s22
    %s39 = sphi 0, %s23
    %s43 = sphi 0, %s43
    %s45 = sphi 0, %s43
    %s46 = sphi 0, %s45
    %s60 = sphi 0, %s46
    %s64 = sphi 0, %s64
    %s66 = sphi 0, %s64
    %s67 = sphi 0, %s66
    %s81 = sphi 0, %s67
    %s87 = sphi 0, %s89
    %s90 = sphi 0, %s87
    %s91 = sphi 0, %s90
    %s107 = sphi 0, %s91
  $region4: #{inception_fid_forward.16} parent=0 // loop_header_branch
    %12 = sbr.rel (%p10) target = $region8
  $region5: #{inception_fid_forward.16} parent=0 // loop_body
    %s14 = ssub.s32 %s9, 1
    %s15 = ssub.s32 %s9, 2
    %s16 = sadd.s32 %s9, 1
    %s17 = ssub.s32 %s9, %s16
    %p18 = scmp.eq.s32.totalorder %s17, 0
    %s20 = sadd.s32 %s19, 1
    %s21 = scalar_select %p18, %s19, %s20
    %p24 = pneg %p18
    %p25 = scmp.eq.s32.totalorder %s9, 1
    %p26 = por %p24, %p25
    %p27 = scmp.ne.s32.totalorder %s19, %s22
    %p28 = scmp.eq.s32.totalorder %s9, 0
    %p29 = por %p27, %p28
    %p30 = scmp.ne.s32.totalorder %s19, %s22
    %p31 = scmp.eq.s32.totalorder %s14, 1
    %p32 = por %p30, %p31
    %p33 = scmp.ne.s32.totalorder %s22, %s23
    %p34 = scmp.eq.s32.totalorder %s14, 0
    %p35 = por %p33, %p34
    %p36 = scmp.ne.s32.totalorder %s22, %s23
    %p37 = scmp.eq.s32.totalorder %s15, 1
    %p38 = por %p36, %p37
    %p40 = scmp.ne.s32.totalorder %s23, %s39
    %p41 = scmp.eq.s32.totalorder %s15, 0
    %p42 = por %p40, %p41
    %s44 = sadd.s32 %s43, 1
    %p47 = scmp.eq.s32.totalorder %s9, 1
    %p48 = scmp.ne.s32.totalorder %s43, %s45
    %p49 = scmp.eq.s32.totalorder %s9, 0
    %p50 = por %p48, %p49
    %p51 = scmp.ne.s32.totalorder %s43, %s45
    %p52 = scmp.eq.s32.totalorder %s14, 1
    %p53 = por %p51, %p52
    %p54 = scmp.ne.s32.totalorder %s45, %s46
    %p55 = scmp.eq.s32.totalorder %s14, 0
    %p56 = por %p54, %p55
    %p57 = scmp.ne.s32.totalorder %s45, %s46
    %p58 = scmp.eq.s32.totalorder %s15, 1
    %p59 = por %p57, %p58
    %p61 = scmp.ne.s32.totalorder %s46, %s60
    %p62 = scmp.eq.s32.totalorder %s15, 0
    %p63 = por %p61, %p62
    %s65 = sadd.s32 %s64, 1
    %p68 = scmp.eq.s32.totalorder %s9, 1
    %p69 = scmp.ne.s32.totalorder %s64, %s66
    %p70 = scmp.eq.s32.totalorder %s9, 0
    %p71 = por %p69, %p70
    %p72 = scmp.ne.s32.totalorder %s64, %s66
    %p73 = scmp.eq.s32.totalorder %s14, 1
    %p74 = por %p72, %p73
    %p75 = scmp.ne.s32.totalorder %s66, %s67
    %p76 = scmp.eq.s32.totalorder %s14, 0
    %p77 = por %p75, %p76
    %p78 = scmp.ne.s32.totalorder %s66, %s67
    %p79 = scmp.eq.s32.totalorder %s15, 1
    %p80 = por %p78, %p79
    %p82 = scmp.ne.s32.totalorder %s67, %s81
    %p83 = scmp.eq.s32.totalorder %s15, 0
    %p84 = por %p82, %p83
    %s85 = ssub.s32 %s9, %s16
    %p86 = scmp.eq.s32.totalorder %s85, 0
    %s88 = sadd.s32 %s87, 1
    %s89 = scalar_select %p86, %s87, %s88
    %p92 = pneg %p86
    %p93 = scmp.eq.s32.totalorder %s9, 1
    %p94 = por %p92, %p93
    %p95 = scmp.ne.s32.totalorder %s87, %s90
    %p96 = scmp.eq.s32.totalorder %s9, 0
    %p97 = por %p95, %p96
    %p98 = scmp.ne.s32.totalorder %s87, %s90
    %p99 = scmp.eq.s32.totalorder %s14, 1
    %p100 = por %p98, %p99
    %p101 = scmp.ne.s32.totalorder %s90, %s91
    %p102 = scmp.eq.s32.totalorder %s14, 0
    %p103 = por %p101, %p102
    %p104 = scmp.ne.s32.totalorder %s90, %s91
    %p105 = scmp.eq.s32.totalorder %s15, 1
    %p106 = por %p104, %p105
    %p108 = scmp.ne.s32.totalorder %s91, %s107
    %p109 = scmp.eq.s32.totalorder %s15, 0
    %p110 = por %p108, %p109
    %p111 = scmp.le.s32.totalorder 1, %s9
    %p112 = scmp.lt.s32.totalorder %s9, 3
    %p113 = pnand %p111, %p112
    %p114 = pneg %p113
    // Predicated region
    $region9: #{inception_fid_forward.16} parent=5 // pred_check
      _
    $region10: #{inception_fid_forward.16} parent=5 // pred_check_branch
      %116 = sbr.rel (%p113) target = $region12
    $region11: #{inception_fid_forward.16} parent=5 // pred_region
      %s117 = ssub.s32 %s9, 1
      // Predicated region
      $region13: #{inception_fid_forward.16} parent=11 // pred_check
        %p118 = pneg %p56
      $region14: #{inception_fid_forward.16} parent=11 // pred_check_branch
        %120 = sbr.rel (%p118) target = $region16
      $region15: #{inception_fid_forward.16} parent=11 // pred_region
        _
      $region16: #{inception_fid_forward.16} parent=11 // pred_fallthru
        _
      // Predicated region
      $region17: #{inception_fid_forward.16} parent=11 // pred_check
        %p121 = pneg %p77
      $region18: #{inception_fid_forward.16} parent=11 // pred_check_branch
        %123 = sbr.rel (%p121) target = $region20
      $region19: #{inception_fid_forward.16} parent=11 // pred_region
        _
      $region20: #{inception_fid_forward.16} parent=11 // pred_fallthru
        _
    $region12: #{inception_fid_forward.16} parent=5 // pred_fallthru
      _
    %p124 = scmp.lt.s32.totalorder %s9, 2
    // Predicated region
    $region21: #{inception_fid_forward.16} parent=5 // pred_check
      %p125 = pneg %p124
    $region22: #{inception_fid_forward.16} parent=5 // pred_check_branch
      %127 = sbr.rel (%p125) target = $region24
    $region23: #{inception_fid_forward.16} parent=5 // pred_region
      // Predicated region
      $region25: #{inception_fid_forward.16} parent=23 // pred_check
        %p128 = pneg %p29
      $region26: #{inception_fid_forward.16} parent=23 // pred_check_branch
        %130 = sbr.rel (%p128) target = $region28
      $region27: #{inception_fid_forward.16} parent=23 // pred_region
        %p131 = scmp.lt.s32.totalorder %s9, 1
        %s132 = scalar_select %p131, %s9, 1
        %s133 = smul.addr %s132, 5
        %s134 = smul.addr %s133, 4
        %s135 = scalar_lea.vmem %s0, %s134
      $region28: #{inception_fid_forward.16} parent=23 // pred_fallthru
        _
    $region24: #{inception_fid_forward.16} parent=5 // pred_fallthru
      _
    %p136 = scmp.le.s32.totalorder 1, %s9
    %p137 = scmp.lt.s32.totalorder %s9, 3
    %p138 = pnand %p136, %p137
    %p139 = pneg %p138
    // Predicated region
    $region29: #{inception_fid_forward.16} parent=5 // pred_check
      _
    $region30: #{inception_fid_forward.16} parent=5 // pred_check_branch
      %141 = sbr.rel (%p138) target = $region32
    $region31: #{inception_fid_forward.16} parent=5 // pred_region
      %s142 = ssub.s32 %s9, 1
      %p143 = scmp.lt.s32.totalorder %s14, 1
      %s144 = scalar_select %p143, %s14, 1
      %s145 = smul.addr %s144, 5
      %s146 = smul.addr %s145, 4
      %s147 = scalar_lea.vmem %s0, %s146
      %p148 = pneg %p35
      %p149 = pneg %p32
      %p150 = pneg %p56
      %p151 = pneg %p53
      %p152 = pneg %p77
      %p153 = pneg %p74
      %p154 = pneg %p103
      %p155 = pneg %p100
      %p156 = scmp.lt.s32.totalorder %s14, 1
      %s157 = scalar_select %p156, %s14, 1
      %s158 = smul.addr %s157, 5
      %s159 = smul.addr %s158, 4
      %s160 = scalar_lea.vmem %s3, %s159
      %p161 = scmp.lt.s32.totalorder %s14, 1
      %s162 = scalar_select %p161, %s14, 1
      %s163 = smul.addr %s162, 5
      %s164 = smul.addr %s163, 4
      %s165 = scalar_lea.vmem %s0, %s164
      %p166 = scmp.lt.s32.totalorder %s14, 1
      %s167 = scalar_select %p166, %s14, 1
      %s168 = smul.addr %s167, 5
      %s169 = smul.addr %s168, 4
      %s170 = scalar_lea.vmem %s3, %s169
      %v172 = vld [vmem:[%s165] sm:$0xf]
      %v173 = vld [vmem:[%s165 + $0x4] sm:$0xf]
      %v174 = vld [vmem:[%s165 + $0x8] sm:$0xf]
      %v175 = vld [vmem:[%s165 + $0xc] sm:$0xf]
      %v176 = vld [vmem:[%s165 + $0x10] sm:$0x3]
      %v177 = vld [vmem:[%s1] sm:$0xf]
      %v178 = vld [vmem:[%s1 + $0x4] sm:$0xf]
      %v179 = vld [vmem:[%s1 + $0x8] sm:$0xf]
      %v180 = vld [vmem:[%s1 + $0xc] sm:$0xf]
      %v181 = vld [vmem:[%s1 + $0x10] sm:$0xf]
      %v182 = vld [vmem:[%s1 + $0x14] sm:$0xf]
      %v183 = vld [vmem:[%s1 + $0x18] sm:$0xf]
      %v184 = vld [vmem:[%s1 + $0x1c] sm:$0xf]
      %v185 = vld [vmem:[%s1 + $0x20] sm:$0xf]
      %v186 = vld [vmem:[%s1 + $0x24] sm:$0xf]
      %v187 = vld [vmem:[%s1 + $0x28] sm:$0xf]
      %v188 = vld [vmem:[%s1 + $0x2c] sm:$0xf]
      %v189 = vld [vmem:[%s1 + $0x30] sm:$0xf]
      %v190 = vld [vmem:[%s1 + $0x34] sm:$0xf]
      %v191 = vld [vmem:[%s1 + $0x38] sm:$0xf]
      %v192 = vld [vmem:[%s1 + $0x3c] sm:$0xf]
      %v193 = vld [vmem:[%s2] sm:$0x1]
      %v195 = vlaneseq
      %v196 = vshrl.u32 %v195, 7
      %v197 = vsub.s32 0, %v196
      %v198 = vrot.slane %v193, %v197
      %v205 = vunpack.c.l.b16 %v172
      %v206 = vunpack.c.l.b16 %v173
      %v207 = vunpack.c.l.b16 %v174
      %v208 = vunpack.c.l.b16 %v175
      %v209 = vunpack.c.l.b16 %v176
      %v210 = vpack.c.b16 %v206, %v205
      %v211 = vpack.c.b16 %v208, %v207
      %v212 = vpack.c.b16 %v209, %v209
      %v232 = vunpack.c.l.b16 %v177
      %v233 = vunpack.c.l.b16 %v178
      %v234 = vunpack.c.l.b16 %v179
      %v235 = vunpack.c.l.b16 %v180
      %v236 = vunpack.c.l.b16 %v181
      %v237 = vunpack.c.l.b16 %v182
      %v238 = vunpack.c.l.b16 %v183
      %v239 = vunpack.c.l.b16 %v184
      %v240 = vunpack.c.l.b16 %v185
      %v241 = vunpack.c.l.b16 %v186
      %v242 = vunpack.c.l.b16 %v187
      %v243 = vunpack.c.l.b16 %v188
      %v244 = vunpack.c.l.b16 %v189
      %v245 = vunpack.c.l.b16 %v190
      %v246 = vunpack.c.l.b16 %v191
      %v247 = vunpack.c.l.b16 %v192
      %v248 = vpack.c.b16 %v233, %v232
      %v249 = vpack.c.b16 %v235, %v234
      %v250 = vpack.c.b16 %v237, %v236
      %v251 = vpack.c.b16 %v239, %v238
      %v252 = vpack.c.b16 %v241, %v240
      %v253 = vpack.c.b16 %v243, %v242
      %v254 = vpack.c.b16 %v245, %v244
      %v255 = vpack.c.b16 %v247, %v246
      %264 = vmatprep.subr.bf16.mxu0 0
      %265 = vmatpush1.bf16.msra.mxu0 %v255
      %266 = vmatprep.subr.bf16.mxu0 0
      %267 = vmatpush1.bf16.msra.mxu0 %v254
      %268 = vmatprep.subr.bf16.mxu0 0
      %269 = vmatpush1.bf16.msra.mxu0 %v253
      %270 = vmatprep.subr.bf16.mxu0 0
      %271 = vmatpush1.bf16.msra.mxu0 %v252
      %272 = vmatprep.subr.bf16.mxu0 0
      %273 = vmatpush1.bf16.msra.mxu0 %v251
      %274 = vmatprep.subr.bf16.mxu0 0
      %275 = vmatpush1.bf16.msra.mxu0 %v250
      %276 = vmatprep.subr.bf16.mxu0 0
      %277 = vmatpush1.bf16.msra.mxu0 %v249
      %278 = vmatprep.subr.bf16.mxu0 0
      %279 = vmatpush1.bf16.msra.mxu0 %v248
      %280 = vmatprep.subr.bf16.mxu0 0
      %281 = vmatpush2.bf16.msra.mxu0 0
      %282 = vmatprep.subr.bf16.mxu0 0
      %283 = vmatpush2.bf16.msra.mxu0 0
      %284 = vmatprep.subr.bf16.mxu0 0
      %285 = vmatpush2.bf16.msra.mxu0 0
      %286 = vmatprep.subr.bf16.mxu0 0
      %287 = vmatpush2.bf16.msra.mxu0 0
      %288 = vmatprep.subr.bf16.mxu0 0
      %289 = vmatpush2.bf16.msra.mxu0 0
      %290 = vmatprep.subr.bf16.mxu0 0
      %291 = vmatpush2.bf16.msra.mxu0 0
      %292 = vmatprep.subr.bf16.mxu0 0
      %293 = vmatpush2.bf16.msra.mxu0 0
      %294 = vmatprep.subr.bf16.mxu0 0
      %295 = vmatpush2.bf16.msra.mxu0 0
      %296 = vmatprep.mubr.bf16.mxu0 0
      %297 = vmatmul.mubr.bf16.gmra.mxu0 %v210
      %v298 = vpop.f32.mrf.mxu0
      %v299 = vadd.f32 %v198, %v298
      %v300 = vpop.f32.mrf.mxu0
      %v301 = vpop.f32.mrf.mxu0
      %v302 = vadd.f32 %v198, %v301
      %v303 = vpop.f32.mrf.mxu0
      %304 = vmatprep.mubr.bf16.mxu0 0
      %305 = vmatmul.mubr.bf16.gmra.mxu0 %v211
      %v306 = vpop.f32.mrf.mxu0
      %v307 = vadd.f32 %v198, %v306
      %v308 = vpop.f32.mrf.mxu0
      %v309 = vpop.f32.mrf.mxu0
      %v310 = vadd.f32 %v198, %v309
      %v311 = vpop.f32.mrf.mxu0
      %312 = vmatprep.mubr.bf16.mxu0 0
      %313 = vmatmul.mubr.bf16.gmra.mxu0 %v212
      %v314 = vpop.f32.mrf.mxu0
      %v315 = vadd.f32 %v198, %v314
      %v316 = vpop.f32.mrf.mxu0
      %v317 = vpop.f32.mrf.mxu0
      %v318 = vpop.f32.mrf.mxu0
      %319 = vdwg.mxu0
      %v320 = vmax.f32 %v299, 0.0
      %v321 = vmax.f32 %v302, 0.0
      %v322 = vmax.f32 %v307, 0.0
      %v323 = vmax.f32 %v310, 0.0
      %v324 = vmax.f32 %v315, 0.0
      %v325 = vpack.c.bf16 %v321, %v320
      %v326 = vpack.c.bf16 %v323, %v322
      %v327 = vpack.c.bf16 %v324, %v324
      %v331 = vunpack.c.l.b16 %v325
      %v332 = vunpack.c.h.b16 %v325
      %v333 = vunpack.c.l.b16 %v326
      %v334 = vunpack.c.h.b16 %v326
      %v335 = vunpack.c.l.b16 %v327
      %v336 = vpack.c.b16 %v331, %v331
      %v337 = vpack.c.b16 %v332, %v332
      %v338 = vpack.c.b16 %v333, %v333
      %v339 = vpack.c.b16 %v334, %v334
      %v340 = vpack.c.b16 %v335, %v335
      %346 = vst [vmem:[%s170] sm:$0xf] %v336
      %347 = vst [vmem:[%s170 + $0x4] sm:$0xf] %v337
      %348 = vst [vmem:[%s170 + $0x8] sm:$0xf] %v338
      %349 = vst [vmem:[%s170 + $0xc] sm:$0xf] %v339
      %350 = vst [vmem:[%s170 + $0x10] sm:$0x3] %v340
      %p351 = scmp.lt.s32.totalorder %s14, 1
      %s352 = scalar_select %p351, %s14, 1
      %s353 = smul.addr %s352, 5
      %s354 = smul.addr %s353, 4
      %s355 = scalar_lea.vmem %s3, %s354
      // Predicated region
      $region33: #{inception_fid_forward.16} parent=31 // pred_check
        %p356 = pneg %p100
      $region34: #{inception_fid_forward.16} parent=31 // pred_check_branch
        %358 = sbr.rel (%p356) target = $region36
      $region35: #{inception_fid_forward.16} parent=31 // pred_region
        _
      $region36: #{inception_fid_forward.16} parent=31 // pred_fallthru
        _
    $region32: #{inception_fid_forward.16} parent=5 // pred_fallthru
      _
    %p359 = scmp.le.s32.totalorder 2, %s9
    // Predicated region
    $region37: #{inception_fid_forward.16} parent=5 // pred_check
      %p360 = pneg %p359
    $region38: #{inception_fid_forward.16} parent=5 // pred_check_branch
      %362 = sbr.rel (%p360) target = $region40
    $region39: #{inception_fid_forward.16} parent=5 // pred_region
      %s363 = ssub.s32 %s9, 2
      // Predicated region
      $region41: #{inception_fid_forward.16} parent=39 // pred_check
        %p364 = pneg %p106
      $region42: #{inception_fid_forward.16} parent=39 // pred_check_branch
        %366 = sbr.rel (%p364) target = $region44
      $region43: #{inception_fid_forward.16} parent=39 // pred_region
        %p367 = scmp.lt.s32.totalorder %s15, 1
        %s368 = scalar_select %p367, %s15, 1
        %s369 = smul.addr %s368, 5
        %s370 = smul.addr %s369, 4
        %s371 = scalar_lea.vmem %s3, %s370
      $region44: #{inception_fid_forward.16} parent=39 // pred_fallthru
        _
    $region40: #{inception_fid_forward.16} parent=5 // pred_fallthru
      _
  $region6: #{inception_fid_forward.16} parent=0 // loop_footer
    %s13 = sadd.s32 1, %s9
  $region7: #{inception_fid_forward.16} parent=0 // loop_footer_branch
    %8 = sbr.rel target = $region3
  $region8: #{inception_fid_forward.16} parent=0 // loop_exit
    _

// kernel: inception_fid_forward.13
$region0: #{inception_fid_forward.13}
  #allocation0 [shape = 'u32[]', space=smem, size = 0x4, offset = 0x4, fixed_abs, tag = 'smem constant byte address 0x4 - core index']
  #allocation1 [shape = 'u32[144,128]{1,0:T(1,128)}', space=vmem, size = 0x12000, scoped, tag = 'internal scratch']
  %s0 = inlined_call_operand.vmem [shape: bf16[2,227,128], index: 0, kind: input, shape index: {}]
  %s1 = inlined_call_operand.vmem [shape: bf16[1152,128], index: 1, kind: input, shape index: {}]
  %s2 = inlined_call_operand.vmem [shape: f32[1,128], index: 2, kind: input, shape index: {}]
  %s3 = inlined_call_operand.vmem [shape: bf16[2,195,128], index: 3, kind: output, shape index: {}]
  %s4 = sld [smem:[#allocation0]]
  $region45: #{inception_fid_forward.13} parent=0
    _
  %s6 = ssub.s32 1, %s4
  %s7 = scalar_select 0, %s6, %s4
  loop: start=0, step=1, limit=4
  $region2: #{inception_fid_forward.13} parent=0 // loop_pre_header
    _
  $region3: #{inception_fid_forward.13} parent=0 // loop_header
    %s9 = sphi 0, %s13
    %p10 = scmp.ge.s32.totalorder %s9, 4
    %s19 = sphi 0, %s21
    %s22 = sphi 0, %s19
    %s23 = sphi 0, %s22
    %s39 = sphi 0, %s23
    %s43 = sphi 0, %s43
    %s45 = sphi 0, %s43
    %s46 = sphi 0, %s45
    %s60 = sphi 0, %s46
    %s64 = sphi 0, %s64
    %s66 = sphi 0, %s64
    %s67 = sphi 0, %s66
    %s81 = sphi 0, %s67
    %s87 = sphi 0, %s89
    %s90 = sphi 0, %s87
    %s91 = sphi 0, %s90
    %s107 = sphi 0, %s91
  $region4: #{inception_fid_forward.13} parent=0 // loop_header_branch
    %12 = sbr.rel (%p10) target = $region8
  $region5: #{inception_fid_forward.13} parent=0 // loop_body
    %s14 = ssub.s32 %s9, 1
    %s15 = ssub.s32 %s9, 2
    %s16 = sadd.s32 %s9, 1
    %s17 = ssub.s32 %s9, %s16
    %p18 = scmp.eq.s32.totalorder %s17, 0
    %s20 = sadd.s32 %s19, 1
    %s21 = scalar_select %p18, %s19, %s20
    %p24 = pneg %p18
    %p25 = scmp.eq.s32.totalorder %s9, 1
    %p26 = por %p24, %p25
    %p27 = scmp.ne.s32.totalorder %s19, %s22
    %p28 = scmp.eq.s32.totalorder %s9, 0
    %p29 = por %p27, %p28
    %p30 = scmp.ne.s32.totalorder %s19, %s22
    %p31 = scmp.eq.s32.totalorder %s14, 1
    %p32 = por %p30, %p31
    %p33 = scmp.ne.s32.totalorder %s22, %s23
    %p34 = scmp.eq.s32.totalorder %s14, 0
    %p35 = por %p33, %p34
    %p36 = scmp.ne.s32.totalorder %s22, %s23
    %p37 = scmp.eq.s32.totalorder %s15, 1
    %p38 = por %p36, %p37
    %p40 = scmp.ne.s32.totalorder %s23, %s39
    %p41 = scmp.eq.s32.totalorder %s15, 0
    %p42 = por %p40, %p41
    %s44 = sadd.s32 %s43, 1
    %p47 = scmp.eq.s32.totalorder %s9, 1
    %p48 = scmp.ne.s32.totalorder %s43, %s45
    %p49 = scmp.eq.s32.totalorder %s9, 0
    %p50 = por %p48, %p49
    %p51 = scmp.ne.s32.totalorder %s43, %s45
    %p52 = scmp.eq.s32.totalorder %s14, 1
    %p53 = por %p51, %p52
    %p54 = scmp.ne.s32.totalorder %s45, %s46
    %p55 = scmp.eq.s32.totalorder %s14, 0
    %p56 = por %p54, %p55
    %p57 = scmp.ne.s32.totalorder %s45, %s46
    %p58 = scmp.eq.s32.totalorder %s15, 1
    %p59 = por %p57, %p58
    %p61 = scmp.ne.s32.totalorder %s46, %s60
    %p62 = scmp.eq.s32.totalorder %s15, 0
    %p63 = por %p61, %p62
    %s65 = sadd.s32 %s64, 1
    %p68 = scmp.eq.s32.totalorder %s9, 1
    %p69 = scmp.ne.s32.totalorder %s64, %s66
    %p70 = scmp.eq.s32.totalorder %s9, 0
    %p71 = por %p69, %p70
    %p72 = scmp.ne.s32.totalorder %s64, %s66
    %p73 = scmp.eq.s32.totalorder %s14, 1
    %p74 = por %p72, %p73
    %p75 = scmp.ne.s32.totalorder %s66, %s67
    %p76 = scmp.eq.s32.totalorder %s14, 0
    %p77 = por %p75, %p76
    %p78 = scmp.ne.s32.totalorder %s66, %s67
    %p79 = scmp.eq.s32.totalorder %s15, 1
    %p80 = por %p78, %p79
    %p82 = scmp.ne.s32.totalorder %s67, %s81
    %p83 = scmp.eq.s32.totalorder %s15, 0
    %p84 = por %p82, %p83
    %s85 = ssub.s32 %s9, %s16
    %p86 = scmp.eq.s32.totalorder %s85, 0
    %s88 = sadd.s32 %s87, 1
    %s89 = scalar_select %p86, %s87, %s88
    %p92 = pneg %p86
    %p93 = scmp.eq.s32.totalorder %s9, 1
    %p94 = por %p92, %p93
    %p95 = scmp.ne.s32.totalorder %s87, %s90
    %p96 = scmp.eq.s32.totalorder %s9, 0
    %p97 = por %p95, %p96
    %p98 = scmp.ne.s32.totalorder %s87, %s90
    %p99 = scmp.eq.s32.totalorder %s14, 1
    %p100 = por %p98, %p99
    %p101 = scmp.ne.s32.totalorder %s90, %s91
    %p102 = scmp.eq.s32.totalorder %s14, 0
    %p103 = por %p101, %p102
    %p104 = scmp.ne.s32.totalorder %s90, %s91
    %p105 = scmp.eq.s32.totalorder %s15, 1
    %p106 = por %p104, %p105
    %p108 = scmp.ne.s32.totalorder %s91, %s107
    %p109 = scmp.eq.s32.totalorder %s15, 0
    %p110 = por %p108, %p109
    %p111 = scmp.le.s32.totalorder 1, %s9
    %p112 = scmp.lt.s32.totalorder %s9, 3
    %p113 = pnand %p111, %p112
    %p114 = pneg %p113
    // Predicated region
    $region9: #{inception_fid_forward.13} parent=5 // pred_check
      _
    $region10: #{inception_fid_forward.13} parent=5 // pred_check_branch
      %116 = sbr.rel (%p113) target = $region12
    $region11: #{inception_fid_forward.13} parent=5 // pred_region
      %s117 = ssub.s32 %s9, 1
      // Predicated region
      $region13: #{inception_fid_forward.13} parent=11 // pred_check
        %p118 = pneg %p56
      $region14: #{inception_fid_forward.13} parent=11 // pred_check_branch
        %120 = sbr.rel (%p118) target = $region16
      $region15: #{inception_fid_forward.13} parent=11 // pred_region
        _
      $region16: #{inception_fid_forward.13} parent=11 // pred_fallthru
        _
      // Predicated region
      $region17: #{inception_fid_forward.13} parent=11 // pred_check
        %p121 = pneg %p77
      $region18: #{inception_fid_forward.13} parent=11 // pred_check_branch
        %123 = sbr.rel (%p121) target = $region20
      $region19: #{inception_fid_forward.13} parent=11 // pred_region
        _
      $region20: #{inception_fid_forward.13} parent=11 // pred_fallthru
        _
    $region12: #{inception_fid_forward.13} parent=5 // pred_fallthru
      _
    %p124 = scmp.lt.s32.totalorder %s9, 2
    // Predicated region
    $region21: #{inception_fid_forward.13} parent=5 // pred_check
      %p125 = pneg %p124
    $region22: #{inception_fid_forward.13} parent=5 // pred_check_branch
      %127 = sbr.rel (%p125) target = $region24
    $region23: #{inception_fid_forward.13} parent=5 // pred_region
      // Predicated region
      $region25: #{inception_fid_forward.13} parent=23 // pred_check
        %p128 = pneg %p29
      $region26: #{inception_fid_forward.13} parent=23 // pred_check_branch
        %130 = sbr.rel (%p128) target = $region28
      $region27: #{inception_fid_forward.13} parent=23 // pred_region
        %p131 = scmp.lt.s32.totalorder %s9, 1
        %s132 = scalar_select %p131, %s9, 1
        %s133 = smul.addr %s132, 29
        %s134 = smul.addr %s133, 4
        %s135 = scalar_lea.vmem %s0, %s134
      $region28: #{inception_fid_forward.13} parent=23 // pred_fallthru
        _
    $region24: #{inception_fid_forward.13} parent=5 // pred_fallthru
      _
    %p136 = scmp.le.s32.totalorder 1, %s9
    %p137 = scmp.lt.s32.totalorder %s9, 3
    %p138 = pnand %p136, %p137
    %p139 = pneg %p138
    // Predicated region
    $region29: #{inception_fid_forward.13} parent=5 // pred_check
      _
    $region30: #{inception_fid_forward.13} parent=5 // pred_check_branch
      %141 = sbr.rel (%p138) target = $region32
    $region31: #{inception_fid_forward.13} parent=5 // pred_region
      %s142 = ssub.s32 %s9, 1
      %p143 = scmp.lt.s32.totalorder %s14, 1
      %s144 = scalar_select %p143, %s14, 1
      %s145 = smul.addr %s144, 29
      %s146 = smul.addr %s145, 4
      %s147 = scalar_lea.vmem %s0, %s146
      %p148 = pneg %p35
      %p149 = pneg %p32
      %p150 = pneg %p56
      %p151 = pneg %p53
      %p152 = pneg %p77
      %p153 = pneg %p74
      %p154 = pneg %p103
      %p155 = pneg %p100
      %p156 = scmp.lt.s32.totalorder %s14, 1
      %s157 = scalar_select %p156, %s14, 1
      %s158 = smul.addr %s157, 25
      %s159 = smul.addr %s158, 4
      %s160 = scalar_lea.vmem %s3, %s159
      %p161 = scmp.lt.s32.totalorder %s14, 1
      %s162 = scalar_select %p161, %s14, 1
      %s163 = smul.addr %s162, 29
      %s164 = smul.addr %s163, 4
      %s165 = scalar_lea.vmem %s0, %s164
      %p166 = scmp.lt.s32.totalorder %s14, 1
      %s167 = scalar_select %p166, %s14, 1
      %s168 = smul.addr %s167, 25
      %s169 = smul.addr %s168, 4
      %s170 = scalar_lea.vmem %s3, %s169
      %v172 = vld [vmem:[%s165] sm:$0xf]
      %v173 = vld [vmem:[%s165 + $0x4] sm:$0xf]
      %v174 = vld [vmem:[%s165 + $0x8] sm:$0xf]
      %v175 = vld [vmem:[%s165 + $0xc] sm:$0xf]
      %v176 = vld [vmem:[%s165 + $0x10] sm:$0xf]
      %v177 = vld [vmem:[%s165 + $0x14] sm:$0xf]
      %v178 = vld [vmem:[%s165 + $0x18] sm:$0xf]
      %v179 = vld [vmem:[%s165 + $0x1c] sm:$0xf]
      %v180 = vld [vmem:[%s165 + $0x20] sm:$0xf]
      %v181 = vld [vmem:[%s165 + $0x24] sm:$0xf]
      %v182 = vld [vmem:[%s165 + $0x28] sm:$0xf]
      %v183 = vld [vmem:[%s165 + $0x2c] sm:$0xf]
      %v184 = vld [vmem:[%s165 + $0x30] sm:$0xf]
      %v185 = vld [vmem:[%s165 + $0x34] sm:$0xf]
      %v186 = vld [vmem:[%s165 + $0x38] sm:$0xf]
      %v187 = vld [vmem:[%s165 + $0x3c] sm:$0xf]
      %v188 = vld [vmem:[%s165 + $0x40] sm:$0xf]
      %v189 = vld [vmem:[%s165 + $0x44] sm:$0xf]
      %v190 = vld [vmem:[%s165 + $0x48] sm:$0xf]
      %v191 = vld [vmem:[%s165 + $0x4c] sm:$0xf]
      %v192 = vld [vmem:[%s165 + $0x50] sm:$0xf]
      %v193 = vld [vmem:[%s165 + $0x54] sm:$0xf]
      %v194 = vld [vmem:[%s165 + $0x58] sm:$0xf]
      %v195 = vld [vmem:[%s165 + $0x5c] sm:$0xf]
      %v196 = vld [vmem:[%s165 + $0x60] sm:$0xf]
      %v197 = vld [vmem:[%s165 + $0x64] sm:$0xf]
      %v198 = vld [vmem:[%s165 + $0x68] sm:$0xf]
      %v199 = vld [vmem:[%s165 + $0x6c] sm:$0xf]
      %v200 = vld [vmem:[%s165 + $0x70] sm:$0x3]
      %v201 = vld [vmem:[%s1] sm:$0xf]
      %v202 = vld [vmem:[%s1 + $0x4] sm:$0xf]
      %v203 = vld [vmem:[%s1 + $0x8] sm:$0xf]
      %v204 = vld [vmem:[%s1 + $0xc] sm:$0xf]
      %v205 = vld [vmem:[%s1 + $0x10] sm:$0xf]
      %v206 = vld [vmem:[%s1 + $0x14] sm:$0xf]
      %v207 = vld [vmem:[%s1 + $0x18] sm:$0xf]
      %v208 = vld [vmem:[%s1 + $0x1c] sm:$0xf]
      %v209 = vld [vmem:[%s1 + $0x20] sm:$0xf]
      %v210 = vld [vmem:[%s1 + $0x24] sm:$0xf]
      %v211 = vld [vmem:[%s1 + $0x28] sm:$0xf]
      %v212 = vld [vmem:[%s1 + $0x2c] sm:$0xf]
      %v213 = vld [vmem:[%s1 + $0x30] sm:$0xf]
      %v214 = vld [vmem:[%s1 + $0x34] sm:$0xf]
      %v215 = vld [vmem:[%s1 + $0x38] sm:$0xf]
      %v216 = vld [vmem:[%s1 + $0x3c] sm:$0xf]
      %v217 = vld [vmem:[%s1 + $0x40] sm:$0xf]
      %v218 = vld [vmem:[%s1 + $0x44] sm:$0xf]
      %v219 = vld [vmem:[%s1 + $0x48] sm:$0xf]
      %v220 = vld [vmem:[%s1 + $0x4c] sm:$0xf]
      %v221 = vld [vmem:[%s1 + $0x50] sm:$0xf]
      %v222 = vld [vmem:[%s1 + $0x54] sm:$0xf]
      %v223 = vld [vmem:[%s1 + $0x58] sm:$0xf]
      %v224 = vld [vmem:[%s1 + $0x5c] sm:$0xf]
      %v225 = vld [vmem:[%s1 + $0x60] sm:$0xf]
      %v226 = vld [vmem:[%s1 + $0x64] sm:$0xf]
      %v227 = vld [vmem:[%s1 + $0x68] sm:$0xf]
      %v228 = vld [vmem:[%s1 + $0x6c] sm:$0xf]
      %v229 = vld [vmem:[%s1 + $0x70] sm:$0xf]
      %v230 = vld [vmem:[%s1 + $0x74] sm:$0xf]
      %v231 = vld [vmem:[%s1 + $0x78] sm:$0xf]
      %v232 = vld [vmem:[%s1 + $0x7c] sm:$0xf]
      %v258 = vunpack.c.l.b16 %v172
      %v259 = vunpack.c.l.b16 %v173
      %v260 = vunpack.c.l.b16 %v174
      %v261 = vunpack.c.l.b16 %v175
      %v262 = vunpack.c.l.b16 %v176
      %v263 = vunpack.c.l.b16 %v177
      %v264 = vunpack.c.l.b16 %v178
      %v265 = vunpack.c.l.b16 %v179
      %v266 = vunpack.c.l.b16 %v180
      %v267 = vunpack.c.l.b16 %v181
      %v268 = vunpack.c.l.b16 %v182
      %v269 = vunpack.c.l.b16 %v183
      %v270 = vunpack.c.l.b16 %v184
      %v271 = vunpack.c.l.b16 %v185
      %v272 = vunpack.c.l.b16 %v186
      %v273 = vunpack.c.l.b16 %v187
      %v274 = vunpack.c.l.b16 %v188
      %v275 = vunpack.c.l.b16 %v189
      %v276 = vunpack.c.l.b16 %v190
      %v277 = vunpack.c.l.b16 %v191
      %v278 = vunpack.c.l.b16 %v192
      %v279 = vunpack.c.l.b16 %v193
      %v280 = vunpack.c.l.b16 %v194
      %v281 = vunpack.c.l.b16 %v195
      %v282 = vunpack.c.l.b16 %v196
      %v283 = vpack.c.b16 %v259, %v258
      %v284 = vpack.c.b16 %v261, %v260
      %v285 = vpack.c.b16 %v263, %v262
      %v286 = vpack.c.b16 %v265, %v264
      %v287 = vpack.c.b16 %v267, %v266
      %v288 = vpack.c.b16 %v269, %v268
      %v289 = vpack.c.b16 %v271, %v270
      %v290 = vpack.c.b16 %v273, %v272
      %v291 = vpack.c.b16 %v275, %v274
      %v292 = vpack.c.b16 %v277, %v276
      %v293 = vpack.c.b16 %v279, %v278
      %v294 = vpack.c.b16 %v281, %v280
      %v295 = vpack.c.b16 %v282, %v282
      %vm296 = vsmask.f32 7424
      %v298 = vshrl.u32 %v283, 16
      %v300 = vshll.u32 %v283, 16
      %v302 = vrot.slane %v300, 1
      %v303 = vor.u32 %v298, %v302
      %v305 = vshll.u32 %v284, 16
      %v307 = vrot.slane %v305, 1
      %v308 = vsel %vm296, %v303, %v307
      %v309 = vshrl.u32 %v284, 16
      %v311 = vor.u32 %v309, %v307
      %v313 = vshll.u32 %v285, 16
      %v315 = vrot.slane %v313, 1
      %v316 = vsel %vm296, %v311, %v315
      %v317 = vshrl.u32 %v285, 16
      %v319 = vor.u32 %v317, %v315
      %v321 = vshll.u32 %v286, 16
      %v323 = vrot.slane %v321, 1
      %v324 = vsel %vm296, %v319, %v323
      %v325 = vshrl.u32 %v286, 16
      %v327 = vor.u32 %v325, %v323
      %v329 = vshll.u32 %v287, 16
      %v331 = vrot.slane %v329, 1
      %v332 = vsel %vm296, %v327, %v331
      %v333 = vshrl.u32 %v287, 16
      %v335 = vor.u32 %v333, %v331
      %v337 = vshll.u32 %v288, 16
      %v339 = vrot.slane %v337, 1
      %v340 = vsel %vm296, %v335, %v339
      %v341 = vshrl.u32 %v288, 16
      %v343 = vor.u32 %v341, %v339
      %v345 = vshll.u32 %v289, 16
      %v347 = vrot.slane %v345, 1
      %v348 = vsel %vm296, %v343, %v347
      %v349 = vshrl.u32 %v289, 16
      %v351 = vor.u32 %v349, %v347
      %v353 = vshll.u32 %v290, 16
      %v355 = vrot.slane %v353, 1
      %v356 = vsel %vm296, %v351, %v355
      %v357 = vshrl.u32 %v290, 16
      %v359 = vor.u32 %v357, %v355
      %v361 = vshll.u32 %v291, 16
      %v363 = vrot.slane %v361, 1
      %v364 = vsel %vm296, %v359, %v363
      %v365 = vshrl.u32 %v291, 16
      %v367 = vor.u32 %v365, %v363
      %v369 = vshll.u32 %v292, 16
      %v371 = vrot.slane %v369, 1
      %v372 = vsel %vm296, %v367, %v371
      %v373 = vshrl.u32 %v292, 16
      %v375 = vor.u32 %v373, %v371
      %v377 = vshll.u32 %v293, 16
      %v379 = vrot.slane %v377, 1
      %v380 = vsel %vm296, %v375, %v379
      %v381 = vshrl.u32 %v293, 16
      %v383 = vor.u32 %v381, %v379
      %v385 = vshll.u32 %v294, 16
      %v387 = vrot.slane %v385, 1
      %v388 = vsel %vm296, %v383, %v387
      %v389 = vshrl.u32 %v294, 16
      %v391 = vor.u32 %v389, %v387
      %v393 = vshll.u32 %v295, 16
      %v395 = vrot.slane %v393, 1
      %v396 = vsel %vm296, %v391, %v395
      %v397 = vshrl.u32 %v295, 16
      %v399 = vor.u32 %v397, %v395
      %v429 = vunpack.c.l.b16 %v217
      %v430 = vunpack.c.l.b16 %v218
      %v431 = vunpack.c.l.b16 %v219
      %v432 = vunpack.c.l.b16 %v220
      %v433 = vunpack.c.l.b16 %v221
      %v434 = vunpack.c.l.b16 %v222
      %v435 = vunpack.c.l.b16 %v223
      %v436 = vunpack.c.l.b16 %v224
      %v437 = vunpack.c.l.b16 %v225
      %v438 = vunpack.c.l.b16 %v226
      %v439 = vunpack.c.l.b16 %v227
      %v440 = vunpack.c.l.b16 %v228
      %v441 = vunpack.c.l.b16 %v229
      %v442 = vunpack.c.l.b16 %v230
      %v443 = vunpack.c.l.b16 %v231
      %v444 = vunpack.c.l.b16 %v232
      %v445 = vpack.c.b16 %v430, %v429
      %v446 = vpack.c.b16 %v432, %v431
      %v447 = vpack.c.b16 %v434, %v433
      %v448 = vpack.c.b16 %v436, %v435
      %v449 = vpack.c.b16 %v438, %v437
      %v450 = vpack.c.b16 %v440, %v439
      %v451 = vpack.c.b16 %v442, %v441
      %v452 = vpack.c.b16 %v444, %v443
      %461 = vmatprep.subr.bf16.mxu0 0
      %462 = vmatpush1.bf16.msra.mxu0 %v452
      %463 = vmatprep.subr.bf16.mxu0 0
      %464 = vmatpush1.bf16.msra.mxu0 %v451
      %465 = vmatprep.subr.bf16.mxu0 0
      %466 = vmatpush1.bf16.msra.mxu0 %v450
      %467 = vmatprep.subr.bf16.mxu0 0
      %468 = vmatpush1.bf16.msra.mxu0 %v449
      %469 = vmatprep.subr.bf16.mxu0 0
      %470 = vmatpush1.bf16.msra.mxu0 %v448
      %471 = vmatprep.subr.bf16.mxu0 0
      %472 = vmatpush1.bf16.msra.mxu0 %v447
      %473 = vmatprep.subr.bf16.mxu0 0
      %474 = vmatpush1.bf16.msra.mxu0 %v446
      %475 = vmatprep.subr.bf16.mxu0 0
      %476 = vmatpush1.bf16.msra.mxu0 %v445
      %477 = vmatprep.subr.bf16.mxu0 0
      %478 = vmatpush2.bf16.msra.mxu0 0
      %479 = vmatprep.subr.bf16.mxu0 0
      %480 = vmatpush2.bf16.msra.mxu0 0
      %481 = vmatprep.subr.bf16.mxu0 0
      %482 = vmatpush2.bf16.msra.mxu0 0
      %483 = vmatprep.subr.bf16.mxu0 0
      %484 = vmatpush2.bf16.msra.mxu0 0
      %485 = vmatprep.subr.bf16.mxu0 0
      %486 = vmatpush2.bf16.msra.mxu0 0
      %487 = vmatprep.subr.bf16.mxu0 0
      %488 = vmatpush2.bf16.msra.mxu0 0
      %489 = vmatprep.subr.bf16.mxu0 0
      %490 = vmatpush2.bf16.msra.mxu0 0
      %491 = vmatprep.subr.bf16.mxu0 0
      %492 = vmatpush2.bf16.msra.mxu0 0
      %493 = vmatprep.mubr.bf16.mxu0 0
      %494 = vmatmul.mubr.bf16.gmra.mxu0 %v308
      %v495 = vpop.f32.mrf.mxu0
      %v496 = vadd.f32 0.0, %v495
      %v497 = vpop.f32.mrf.mxu0
      %v498 = vpop.f32.mrf.mxu0
      %v499 = vadd.f32 0.0, %v498
      %v500 = vpop.f32.mrf.mxu0
      %501 = vmatprep.mubr.bf16.mxu0 0
      %502 = vmatmul.mubr.bf16.gmra.mxu0 %v316
      %v503 = vpop.f32.mrf.mxu0
      %v504 = vadd.f32 0.0, %v503
      %v505 = vpop.f32.mrf.mxu0
      %v506 = vpop.f32.mrf.mxu0
      %v507 = vadd.f32 0.0, %v506
      %v508 = vpop.f32.mrf.mxu0
      %509 = vmatprep.mubr.bf16.mxu0 0
      %510 = vmatmul.mubr.bf16.gmra.mxu0 %v324
      %v511 = vpop.f32.mrf.mxu0
      %v512 = vadd.f32 0.0, %v511
      %v513 = vpop.f32.mrf.mxu0
      %v514 = vpop.f32.mrf.mxu0
      %v515 = vadd.f32 0.0, %v514
      %v516 = vpop.f32.mrf.mxu0
      %517 = vmatprep.mubr.bf16.mxu0 0
      %518 = vmatmul.mubr.bf16.gmra.mxu0 %v332
      %v519 = vpop.f32.mrf.mxu0
      %v520 = vadd.f32 0.0, %v519
      %v521 = vpop.f32.mrf.mxu0
      %v522 = vpop.f32.mrf.mxu0
      %v523 = vadd.f32 0.0, %v522
      %v524 = vpop.f32.mrf.mxu0
      %525 = vmatprep.mubr.bf16.mxu0 0
      %526 = vmatmul.mubr.bf16.gmra.mxu0 %v340
      %v527 = vpop.f32.mrf.mxu0
      %v528 = vadd.f32 0.0, %v527
      %v529 = vpop.f32.mrf.mxu0
      %v530 = vpop.f32.mrf.mxu0
      %v531 = vadd.f32 0.0, %v530
      %v532 = vpop.f32.mrf.mxu0
      %533 = vmatprep.mubr.bf16.mxu0 0
      %534 = vmatmul.mubr.bf16.gmra.mxu0 %v348
      %v535 = vpop.f32.mrf.mxu0
      %v536 = vadd.f32 0.0, %v535
      %v537 = vpop.f32.mrf.mxu0
      %v538 = vpop.f32.mrf.mxu0
      %v539 = vadd.f32 0.0, %v538
      %v540 = vpop.f32.mrf.mxu0
      %541 = vmatprep.mubr.bf16.mxu0 0
      %542 = vmatmul.mubr.bf16.gmra.mxu0 %v356
      %v543 = vpop.f32.mrf.mxu0
      %v544 = vadd.f32 0.0, %v543
      %v545 = vpop.f32.mrf.mxu0
      %v546 = vpop.f32.mrf.mxu0
      %v547 = vadd.f32 0.0, %v546
      %v548 = vpop.f32.mrf.mxu0
      %549 = vmatprep.mubr.bf16.mxu0 0
      %550 = vmatmul.mubr.bf16.gmra.mxu0 %v364
      %v551 = vpop.f32.mrf.mxu0
      %v552 = vadd.f32 0.0, %v551
      %v553 = vpop.f32.mrf.mxu0
      %v554 = vpop.f32.mrf.mxu0
      %v555 = vadd.f32 0.0, %v554
      %v556 = vpop.f32.mrf.mxu0
      %557 = vmatprep.mubr.bf16.mxu0 0
      %558 = vmatmul.mubr.bf16.gmra.mxu0 %v372
      %v559 = vpop.f32.mrf.mxu0
      %v560 = vadd.f32 0.0, %v559
      %v561 = vpop.f32.mrf.mxu0
      %v562 = vpop.f32.mrf.mxu0
      %v563 = vadd.f32 0.0, %v562
      %v564 = vpop.f32.mrf.mxu0
      %565 = vmatprep.mubr.bf16.mxu0 0
      %566 = vmatmul.mubr.bf16.gmra.mxu0 %v380
      %v567 = vpop.f32.mrf.mxu0
      %v568 = vadd.f32 0.0, %v567
      %v569 = vpop.f32.mrf.mxu0
      %v570 = vpop.f32.mrf.mxu0
      %v571 = vadd.f32 0.0, %v570
      %v572 = vpop.f32.mrf.mxu0
      %573 = vmatprep.mubr.bf16.mxu0 0
      %574 = vmatmul.mubr.bf16.gmra.mxu0 %v388
      %v575 = vpop.f32.mrf.mxu0
      %v576 = vadd.f32 0.0, %v575
      %v577 = vpop.f32.mrf.mxu0
      %v578 = vpop.f32.mrf.mxu0
      %v579 = vadd.f32 0.0, %v578
      %v580 = vpop.f32.mrf.mxu0
      %581 = vmatprep.mubr.bf16.mxu0 0
      %582 = vmatmul.mubr.bf16.gmra.mxu0 %v396
      %v583 = vpop.f32.mrf.mxu0
      %v584 = vadd.f32 0.0, %v583
      %v585 = vpop.f32.mrf.mxu0
      %v586 = vpop.f32.mrf.mxu0
      %v587 = vadd.f32 0.0, %v586
      %v588 = vpop.f32.mrf.mxu0
      %589 = vmatprep.mubr.bf16.mxu0 0
      %590 = vmatmul.mubr.bf16.gmra.mxu0 %v399
      %v591 = vpop.f32.mrf.mxu0
      %v592 = vadd.f32 0.0, %v591
      %v593 = vpop.f32.mrf.mxu0
      %v594 = vpop.f32.mrf.mxu0
      %v595 = vpop.f32.mrf.mxu0
      %596 = vdwg.mxu0
      %v626 = vunpack.c.l.b16 %v201
      %v627 = vunpack.c.l.b16 %v202
      %v628 = vunpack.c.l.b16 %v203
      %v629 = vunpack.c.l.b16 %v204
      %v630 = vunpack.c.l.b16 %v205
      %v631 = vunpack.c.l.b16 %v206
      %v632 = vunpack.c.l.b16 %v207
      %v633 = vunpack.c.l.b16 %v208
      %v634 = vunpack.c.l.b16 %v209
      %v635 = vunpack.c.l.b16 %v210
      %v636 = vunpack.c.l.b16 %v211
      %v637 = vunpack.c.l.b16 %v212
      %v638 = vunpack.c.l.b16 %v213
      %v639 = vunpack.c.l.b16 %v214
      %v640 = vunpack.c.l.b16 %v215
      %v641 = vunpack.c.l.b16 %v216
      %v642 = vpack.c.b16 %v627, %v626
      %v643 = vpack.c.b16 %v629, %v628
      %v644 = vpack.c.b16 %v631, %v630
      %v645 = vpack.c.b16 %v633, %v632
      %v646 = vpack.c.b16 %v635, %v634
      %v647 = vpack.c.b16 %v637, %v636
      %v648 = vpack.c.b16 %v639, %v638
      %v649 = vpack.c.b16 %v641, %v640
      %658 = vmatprep.subr.bf16.mxu0 0
      %659 = vmatpush1.bf16.msra.mxu0 %v649
      %660 = vmatprep.subr.bf16.mxu0 0
      %661 = vmatpush1.bf16.msra.mxu0 %v648
      %662 = vmatprep.subr.bf16.mxu0 0
      %663 = vmatpush1.bf16.msra.mxu0 %v647
      %664 = vmatprep.subr.bf16.mxu0 0
      %665 = vmatpush1.bf16.msra.mxu0 %v646
      %666 = vmatprep.subr.bf16.mxu0 0
      %667 = vmatpush1.bf16.msra.mxu0 %v645
      %668 = vmatprep.subr.bf16.mxu0 0
      %669 = vmatpush1.bf16.msra.mxu0 %v644
      %670 = vmatprep.subr.bf16.mxu0 0
      %671 = vmatpush1.bf16.msra.mxu0 %v643
      %672 = vmatprep.subr.bf16.mxu0 0
      %673 = vmatpush1.bf16.msra.mxu0 %v642
      %674 = vmatprep.subr.bf16.mxu0 0
      %675 = vmatpush2.bf16.msra.mxu0 0
      %676 = vmatprep.subr.bf16.mxu0 0
      %677 = vmatpush2.bf16.msra.mxu0 0
      %678 = vmatprep.subr.bf16.mxu0 0
      %679 = vmatpush2.bf16.msra.mxu0 0
      %680 = vmatprep.subr.bf16.mxu0 0
      %681 = vmatpush2.bf16.msra.mxu0 0
      %682 = vmatprep.subr.bf16.mxu0 0
      %683 = vmatpush2.bf16.msra.mxu0 0
      %684 = vmatprep.subr.bf16.mxu0 0
      %685 = vmatpush2.bf16.msra.mxu0 0
      %686 = vmatprep.subr.bf16.mxu0 0
      %687 = vmatpush2.bf16.msra.mxu0 0
      %688 = vmatprep.subr.bf16.mxu0 0
      %689 = vmatpush2.bf16.msra.mxu0 0
      %690 = vmatprep.mubr.bf16.mxu0 0
      %691 = vmatmul.mubr.bf16.gmra.mxu0 %v283
      %v692 = vpop.f32.mrf.mxu0
      %v693 = vadd.f32 %v496, %v692
      %v694 = vpop.f32.mrf.mxu0
      %v695 = vpop.f32.mrf.mxu0
      %v696 = vadd.f32 %v499, %v695
      %v697 = vpop.f32.mrf.mxu0
      %698 = vmatprep.mubr.bf16.mxu0 0
      %699 = vmatmul.mubr.bf16.gmra.mxu0 %v284
      %v700 = vpop.f32.mrf.mxu0
      %v701 = vadd.f32 %v504, %v700
      %v702 = vpop.f32.mrf.mxu0
      %v703 = vpop.f32.mrf.mxu0
      %v704 = vadd.f32 %v507, %v703
      %v705 = vpop.f32.mrf.mxu0
      %706 = vmatprep.mubr.bf16.mxu0 0
      %707 = vmatmul.mubr.bf16.gmra.mxu0 %v285
      %v708 = vpop.f32.mrf.mxu0
      %v709 = vadd.f32 %v512, %v708
      %v710 = vpop.f32.mrf.mxu0
      %v711 = vpop.f32.mrf.mxu0
      %v712 = vadd.f32 %v515, %v711
      %v713 = vpop.f32.mrf.mxu0
      %714 = vmatprep.mubr.bf16.mxu0 0
      %715 = vmatmul.mubr.bf16.gmra.mxu0 %v286
      %v716 = vpop.f32.mrf.mxu0
      %v717 = vadd.f32 %v520, %v716
      %v718 = vpop.f32.mrf.mxu0
      %v719 = vpop.f32.mrf.mxu0
      %v720 = vadd.f32 %v523, %v719
      %v721 = vpop.f32.mrf.mxu0
      %722 = vmatprep.mubr.bf16.mxu0 0
      %723 = vmatmul.mubr.bf16.gmra.mxu0 %v287
      %v724 = vpop.f32.mrf.mxu0
      %v725 = vadd.f32 %v528, %v724
      %v726 = vpop.f32.mrf.mxu0
      %v727 = vpop.f32.mrf.mxu0
      %v728 = vadd.f32 %v531, %v727
      %v729 = vpop.f32.mrf.mxu0
      %730 = vmatprep.mubr.bf16.mxu0 0
      %731 = vmatmul.mubr.bf16.gmra.mxu0 %v288
      %v732 = vpop.f32.mrf.mxu0
      %v733 = vadd.f32 %v536, %v732
      %v734 = vpop.f32.mrf.mxu0
      %v735 = vpop.f32.mrf.mxu0
      %v736 = vadd.f32 %v539, %v735
      %v737 = vpop.f32.mrf.mxu0
      %738 = vmatprep.mubr.bf16.mxu0 0
      %739 = vmatmul.mubr.bf16.gmra.mxu0 %v289
      %v740 = vpop.f32.mrf.mxu0
      %v741 = vadd.f32 %v544, %v740
      %v742 = vpop.f32.mrf.mxu0
      %v743 = vpop.f32.mrf.mxu0
      %v744 = vadd.f32 %v547, %v743
      %v745 = vpop.f32.mrf.mxu0
      %746 = vmatprep.mubr.bf16.mxu0 0
      %747 = vmatmul.mubr.bf16.gmra.mxu0 %v290
      %v748 = vpop.f32.mrf.mxu0
      %v749 = vadd.f32 %v552, %v748
      %v750 = vpop.f32.mrf.mxu0
      %v751 = vpop.f32.mrf.mxu0
      %v752 = vadd.f32 %v555, %v751
      %v753 = vpop.f32.mrf.mxu0
      %754 = vmatprep.mubr.bf16.mxu0 0
      %755 = vmatmul.mubr.bf16.gmra.mxu0 %v291
      %v756 = vpop.f32.mrf.mxu0
      %v757 = vadd.f32 %v560, %v756
      %v758 = vpop.f32.mrf.mxu0
      %v759 = vpop.f32.mrf.mxu0
      %v760 = vadd.f32 %v563, %v759
      %v761 = vpop.f32.mrf.mxu0
      %762 = vmatprep.mubr.bf16.mxu0 0
      %763 = vmatmul.mubr.bf16.gmra.mxu0 %v292
      %v764 = vpop.f32.mrf.mxu0
      %v765 = vadd.f32 %v568, %v764
      %v766 = vpop.f32.mrf.mxu0
      %v767 = vpop.f32.mrf.mxu0
      %v768 = vadd.f32 %v571, %v767
      %v769 = vpop.f32.mrf.mxu0
      %770 = vmatprep.mubr.bf16.mxu0 0
      %771 = vmatmul.mubr.bf16.gmra.mxu0 %v293
      %v772 = vpop.f32.mrf.mxu0
      %v773 = vadd.f32 %v576, %v772
      %v774 = vpop.f32.mrf.mxu0
      %v775 = vpop.f32.mrf.mxu0
      %v776 = vadd.f32 %v579, %v775
      %v777 = vpop.f32.mrf.mxu0
      %778 = vmatprep.mubr.bf16.mxu0 0
      %779 = vmatmul.mubr.bf16.gmra.mxu0 %v294
      %v780 = vpop.f32.mrf.mxu0
      %v781 = vadd.f32 %v584, %v780
      %v782 = vpop.f32.mrf.mxu0
      %v783 = vpop.f32.mrf.mxu0
      %v784 = vadd.f32 %v587, %v783
      %v785 = vpop.f32.mrf.mxu0
      %786 = vmatprep.mubr.bf16.mxu0 0
      %787 = vmatmul.mubr.bf16.gmra.mxu0 %v295
      %v788 = vpop.f32.mrf.mxu0
      %v789 = vadd.f32 %v592, %v788
      %v790 = vpop.f32.mrf.mxu0
      %v791 = vpop.f32.mrf.mxu0
      %v792 = vpop.f32.mrf.mxu0
      %793 = vdwg.mxu0
      %v794 = vld [vmem:[%s1 + $0x80] sm:$0xf]
      %v795 = vld [vmem:[%s1 + $0x84] sm:$0xf]
      %v796 = vld [vmem:[%s1 + $0x88] sm:$0xf]
      %v797 = vld [vmem:[%s1 + $0x8c] sm:$0xf]
      %v798 = vld [vmem:[%s1 + $0x90] sm:$0xf]
      %v799 = vld [vmem:[%s1 + $0x94] sm:$0xf]
      %v800 = vld [vmem:[%s1 + $0x98] sm:$0xf]
      %v801 = vld [vmem:[%s1 + $0x9c] sm:$0xf]
      %v802 = vld [vmem:[%s1 + $0xa0] sm:$0xf]
      %v803 = vld [vmem:[%s1 + $0xa4] sm:$0xf]
      %v804 = vld [vmem:[%s1 + $0xa8] sm:$0xf]
      %v805 = vld [vmem:[%s1 + $0xac] sm:$0xf]
      %v806 = vld [vmem:[%s1 + $0xb0] sm:$0xf]
      %v807 = vld [vmem:[%s1 + $0xb4] sm:$0xf]
      %v808 = vld [vmem:[%s1 + $0xb8] sm:$0xf]
      %v809 = vld [vmem:[%s1 + $0xbc] sm:$0xf]
      %vm810 = vcmask 1046528
      %v811 = vrot.slane %v283, 1
      %v812 = vrot.slane %v284, 1
      %v813 = vsel %vm810, %v811, %v812
      %v814 = vrot.slane %v285, 1
      %v815 = vsel %vm810, %v812, %v814
      %v816 = vrot.slane %v286, 1
      %v817 = vsel %vm810, %v814, %v816
      %v818 = vrot.slane %v287, 1
      %v819 = vsel %vm810, %v816, %v818
      %v820 = vrot.slane %v288, 1
      %v821 = vsel %vm810, %v818, %v820
      %v822 = vrot.slane %v289, 1
      %v823 = vsel %vm810, %v820, %v822
      %v824 = vrot.slane %v290, 1
      %v825 = vsel %vm810, %v822, %v824
      %v826 = vrot.slane %v291, 1
      %v827 = vsel %vm810, %v824, %v826
      %v828 = vrot.slane %v292, 1
      %v829 = vsel %vm810, %v826, %v828
      %v830 = vrot.slane %v293, 1
      %v831 = vsel %vm810, %v828, %v830
      %v832 = vrot.slane %v294, 1
      %v833 = vsel %vm810, %v830, %v832
      %v834 = vrot.slane %v295, 1
      %v835 = vsel %vm810, %v832, %v834
      %v865 = vunpack.c.l.b16 %v794
      %v866 = vunpack.c.l.b16 %v795
      %v867 = vunpack.c.l.b16 %v796
      %v868 = vunpack.c.l.b16 %v797
      %v869 = vunpack.c.l.b16 %v798
      %v870 = vunpack.c.l.b16 %v799
      %v871 = vunpack.c.l.b16 %v800
      %v872 = vunpack.c.l.b16 %v801
      %v873 = vunpack.c.l.b16 %v802
      %v874 = vunpack.c.l.b16 %v803
      %v875 = vunpack.c.l.b16 %v804
      %v876 = vunpack.c.l.b16 %v805
      %v877 = vunpack.c.l.b16 %v806
      %v878 = vunpack.c.l.b16 %v807
      %v879 = vunpack.c.l.b16 %v808
      %v880 = vunpack.c.l.b16 %v809
      %v881 = vpack.c.b16 %v866, %v865
      %v882 = vpack.c.b16 %v868, %v867
      %v883 = vpack.c.b16 %v870, %v869
      %v884 = vpack.c.b16 %v872, %v871
      %v885 = vpack.c.b16 %v874, %v873
      %v886 = vpack.c.b16 %v876, %v875
      %v887 = vpack.c.b16 %v878, %v877
      %v888 = vpack.c.b16 %v880, %v879
      %897 = vmatprep.subr.bf16.mxu0 0
      %898 = vmatpush1.bf16.msra.mxu0 %v888
      %899 = vmatprep.subr.bf16.mxu0 0
      %900 = vmatpush1.bf16.msra.mxu0 %v887
      %901 = vmatprep.subr.bf16.mxu0 0
      %902 = vmatpush1.bf16.msra.mxu0 %v886
      %903 = vmatprep.subr.bf16.mxu0 0
      %904 = vmatpush1.bf16.msra.mxu0 %v885
      %905 = vmatprep.subr.bf16.mxu0 0
      %906 = vmatpush1.bf16.msra.mxu0 %v884
      %907 = vmatprep.subr.bf16.mxu0 0
      %908 = vmatpush1.bf16.msra.mxu0 %v883
      %909 = vmatprep.subr.bf16.mxu0 0
      %910 = vmatpush1.bf16.msra.mxu0 %v882
      %911 = vmatprep.subr.bf16.mxu0 0
      %912 = vmatpush1.bf16.msra.mxu0 %v881
      %913 = vmatprep.subr.bf16.mxu0 0
      %914 = vmatpush2.bf16.msra.mxu0 0
      %915 = vmatprep.subr.bf16.mxu0 0
      %916 = vmatpush2.bf16.msra.mxu0 0
      %917 = vmatprep.subr.bf16.mxu0 0
      %918 = vmatpush2.bf16.msra.mxu0 0
      %919 = vmatprep.subr.bf16.mxu0 0
      %920 = vmatpush2.bf16.msra.mxu0 0
      %921 = vmatprep.subr.bf16.mxu0 0
      %922 = vmatpush2.bf16.msra.mxu0 0
      %923 = vmatprep.subr.bf16.mxu0 0
      %924 = vmatpush2.bf16.msra.mxu0 0
      %925 = vmatprep.subr.bf16.mxu0 0
      %926 = vmatpush2.bf16.msra.mxu0 0
      %927 = vmatprep.subr.bf16.mxu0 0
      %928 = vmatpush2.bf16.msra.mxu0 0
      %929 = vmatprep.mubr.bf16.mxu0 0
      %930 = vmatmul.mubr.bf16.gmra.mxu0 %v813
      %v931 = vpop.f32.mrf.mxu0
      %v932 = vadd.f32 0.0, %v931
      %v933 = vpop.f32.mrf.mxu0
      %v934 = vpop.f32.mrf.mxu0
      %v935 = vadd.f32 0.0, %v934
      %v936 = vpop.f32.mrf.mxu0
      %937 = vmatprep.mubr.bf16.mxu0 0
      %938 = vmatmul.mubr.bf16.gmra.mxu0 %v815
      %v939 = vpop.f32.mrf.mxu0
      %v940 = vadd.f32 0.0, %v939
      %v941 = vpop.f32.mrf.mxu0
      %v942 = vpop.f32.mrf.mxu0
      %v943 = vadd.f32 0.0, %v942
      %v944 = vpop.f32.mrf.mxu0
      %945 = vmatprep.mubr.bf16.mxu0 0
      %946 = vmatmul.mubr.bf16.gmra.mxu0 %v817
      %v947 = vpop.f32.mrf.mxu0
      %v948 = vadd.f32 0.0, %v947
      %v949 = vpop.f32.mrf.mxu0
      %v950 = vpop.f32.mrf.mxu0
      %v951 = vadd.f32 0.0, %v950
      %v952 = vpop.f32.mrf.mxu0
      %953 = vmatprep.mubr.bf16.mxu0 0
      %954 = vmatmul.mubr.bf16.gmra.mxu0 %v819
      %v955 = vpop.f32.mrf.mxu0
      %v956 = vadd.f32 0.0, %v955
      %v957 = vpop.f32.mrf.mxu0
      %v958 = vpop.f32.mrf.mxu0
      %v959 = vadd.f32 0.0, %v958
      %v960 = vpop.f32.mrf.mxu0
      %961 = vmatprep.mubr.bf16.mxu0 0
      %962 = vmatmul.mubr.bf16.gmra.mxu0 %v821
      %v963 = vpop.f32.mrf.mxu0
      %v964 = vadd.f32 0.0, %v963
      %v965 = vpop.f32.mrf.mxu0
      %v966 = vpop.f32.mrf.mxu0
      %v967 = vadd.f32 0.0, %v966
      %v968 = vpop.f32.mrf.mxu0
      %969 = vmatprep.mubr.bf16.mxu0 0
      %970 = vmatmul.mubr.bf16.gmra.mxu0 %v823
      %v971 = vpop.f32.mrf.mxu0
      %v972 = vadd.f32 0.0, %v971
      %v973 = vpop.f32.mrf.mxu0
      %v974 = vpop.f32.mrf.mxu0
      %v975 = vadd.f32 0.0, %v974
      %v976 = vpop.f32.mrf.mxu0
      %977 = vmatprep.mubr.bf16.mxu0 0
      %978 = vmatmul.mubr.bf16.gmra.mxu0 %v825
      %v979 = vpop.f32.mrf.mxu0
      %v980 = vadd.f32 0.0, %v979
      %v981 = vpop.f32.mrf.mxu0
      %v982 = vpop.f32.mrf.mxu0
      %v983 = vadd.f32 0.0, %v982
      %v984 = vpop.f32.mrf.mxu0
      %985 = vmatprep.mubr.bf16.mxu0 0
      %986 = vmatmul.mubr.bf16.gmra.mxu0 %v827
      %v987 = vpop.f32.mrf.mxu0
      %v988 = vadd.f32 0.0, %v987
      %v989 = vpop.f32.mrf.mxu0
      %v990 = vpop.f32.mrf.mxu0
      %v991 = vadd.f32 0.0, %v990
      %v992 = vpop.f32.mrf.mxu0
      %993 = vmatprep.mubr.bf16.mxu0 0
      %994 = vmatmul.mubr.bf16.gmra.mxu0 %v829
      %v995 = vpop.f32.mrf.mxu0
      %v996 = vadd.f32 0.0, %v995
      %v997 = vpop.f32.mrf.mxu0
      %v998 = vpop.f32.mrf.mxu0
      %v999 = vadd.f32 0.0, %v998
      %v1000 = vpop.f32.mrf.mxu0
      %1001 = vmatprep.mubr.bf16.mxu0 0
      %1002 = vmatmul.mubr.bf16.gmra.mxu0 %v831
      %v1003 = vpop.f32.mrf.mxu0
      %v1004 = vadd.f32 0.0, %v1003
      %v1005 = vpop.f32.mrf.mxu0
      %v1006 = vpop.f32.mrf.mxu0
      %v1007 = vadd.f32 0.0, %v1006
      %v1008 = vpop.f32.mrf.mxu0
      %1009 = vmatprep.mubr.bf16.mxu0 0
      %1010 = vmatmul.mubr.bf16.gmra.mxu0 %v833
      %v1011 = vpop.f32.mrf.mxu0
      %v1012 = vadd.f32 0.0, %v1011
      %v1013 = vpop.f32.mrf.mxu0
      %v1014 = vpop.f32.mrf.mxu0
      %v1015 = vadd.f32 0.0, %v1014
      %v1016 = vpop.f32.mrf.mxu0
      %1017 = vmatprep.mubr.bf16.mxu0 0
      %1018 = vmatmul.mubr.bf16.gmra.mxu0 %v835
      %v1019 = vpop.f32.mrf.mxu0
      %v1020 = vadd.f32 0.0, %v1019
      %v1021 = vpop.f32.mrf.mxu0
      %v1022 = vpop.f32.mrf.mxu0
      %v1023 = vadd.f32 0.0, %v1022
      %v1024 = vpop.f32.mrf.mxu0
      %1025 = vmatprep.mubr.bf16.mxu0 0
      %1026 = vmatmul.mubr.bf16.gmra.mxu0 %v834
      %v1027 = vpop.f32.mrf.mxu0
      %v1028 = vadd.f32 0.0, %v1027
      %v1029 = vpop.f32.mrf.mxu0
      %v1030 = vpop.f32.mrf.mxu0
      %v1031 = vpop.f32.mrf.mxu0
      %1032 = vdwg.mxu0
      %v1033 = vadd.f32 %v693, %v932
      %v1034 = vadd.f32 %v696, %v935
      %v1035 = vadd.f32 %v701, %v940
      %v1036 = vadd.f32 %v704, %v943
      %v1037 = vadd.f32 %v709, %v948
      %v1038 = vadd.f32 %v712, %v951
      %v1039 = vadd.f32 %v717, %v956
      %v1040 = vadd.f32 %v720, %v959
      %v1041 = vadd.f32 %v725, %v964
      %v1042 = vadd.f32 %v728, %v967
      %v1043 = vadd.f32 %v733, %v972
      %v1044 = vadd.f32 %v736, %v975
      %v1045 = vadd.f32 %v741, %v980
      %v1046 = vadd.f32 %v744, %v983
      %v1047 = vadd.f32 %v749, %v988
      %v1048 = vadd.f32 %v752, %v991
      %v1049 = vadd.f32 %v757, %v996
      %v1050 = vadd.f32 %v760, %v999
      %v1051 = vadd.f32 %v765, %v1004
      %v1052 = vadd.f32 %v768, %v1007
      %v1053 = vadd.f32 %v773, %v1012
      %v1054 = vadd.f32 %v776, %v1015
      %v1055 = vadd.f32 %v781, %v1020
      %v1056 = vadd.f32 %v784, %v1023
      %v1057 = vadd.f32 %v789, %v1028
      %v1058 = vld [vmem:[%s1 + $0xc0] sm:$0xf]
      %v1059 = vld [vmem:[%s1 + $0xc4] sm:$0xf]
      %v1060 = vld [vmem:[%s1 + $0xc8] sm:$0xf]
      %v1061 = vld [vmem:[%s1 + $0xcc] sm:$0xf]
      %v1062 = vld [vmem:[%s1 + $0xd0] sm:$0xf]
      %v1063 = vld [vmem:[%s1 + $0xd4] sm:$0xf]
      %v1064 = vld [vmem:[%s1 + $0xd8] sm:$0xf]
      %v1065 = vld [vmem:[%s1 + $0xdc] sm:$0xf]
      %v1066 = vld [vmem:[%s1 + $0xe0] sm:$0xf]
      %v1067 = vld [vmem:[%s1 + $0xe4] sm:$0xf]
      %v1068 = vld [vmem:[%s1 + $0xe8] sm:$0xf]
      %v1069 = vld [vmem:[%s1 + $0xec] sm:$0xf]
      %v1070 = vld [vmem:[%s1 + $0xf0] sm:$0xf]
      %v1071 = vld [vmem:[%s1 + $0xf4] sm:$0xf]
      %v1072 = vld [vmem:[%s1 + $0xf8] sm:$0xf]
      %v1073 = vld [vmem:[%s1 + $0xfc] sm:$0xf]
      %v1076 = vunpack.c.l.b16 %v197
      %v1077 = vunpack.c.l.b16 %v198
      %v1078 = vpack.c.b16 %v260, %v259
      %v1079 = vpack.c.b16 %v262, %v261
      %v1080 = vpack.c.b16 %v264, %v263
      %v1081 = vpack.c.b16 %v266, %v265
      %v1082 = vpack.c.b16 %v268, %v267
      %v1083 = vpack.c.b16 %v270, %v269
      %v1084 = vpack.c.b16 %v272, %v271
      %v1085 = vpack.c.b16 %v274, %v273
      %v1086 = vpack.c.b16 %v276, %v275
      %v1087 = vpack.c.b16 %v278, %v277
      %v1088 = vpack.c.b16 %v280, %v279
      %v1089 = vpack.c.b16 %v282, %v281
      %v1090 = vpack.c.b16 %v1077, %v1076
      %vm1091 = vsmask.f32 4352
      %v1093 = vshrl.u32 %v1078, 16
      %v1095 = vrot.slane %v1093, 3
      %v1096 = vshll.u32 %v1078, 16
      %v1098 = vrot.slane %v1096, 4
      %v1099 = vor.u32 %v1095, %v1098
      %v1101 = vshrl.u32 %v1079, 16
      %v1103 = vrot.slane %v1101, 3
      %v1104 = vshll.u32 %v1079, 16
      %v1106 = vrot.slane %v1104, 4
      %v1107 = vor.u32 %v1103, %v1106
      %v1108 = vsel %vm1091, %v1099, %v1107
      %v1110 = vshrl.u32 %v1080, 16
      %v1112 = vrot.slane %v1110, 3
      %v1113 = vshll.u32 %v1080, 16
      %v1115 = vrot.slane %v1113, 4
      %v1116 = vor.u32 %v1112, %v1115
      %v1117 = vsel %vm1091, %v1107, %v1116
      %v1119 = vshrl.u32 %v1081, 16
      %v1121 = vrot.slane %v1119, 3
      %v1122 = vshll.u32 %v1081, 16
      %v1124 = vrot.slane %v1122, 4
      %v1125 = vor.u32 %v1121, %v1124
      %v1126 = vsel %vm1091, %v1116, %v1125
      %v1128 = vshrl.u32 %v1082, 16
      %v1130 = vrot.slane %v1128, 3
      %v1131 = vshll.u32 %v1082, 16
      %v1133 = vrot.slane %v1131, 4
      %v1134 = vor.u32 %v1130, %v1133
      %v1135 = vsel %vm1091, %v1125, %v1134
      %v1137 = vshrl.u32 %v1083, 16
      %v1139 = vrot.slane %v1137, 3
      %v1140 = vshll.u32 %v1083, 16
      %v1142 = vrot.slane %v1140, 4
      %v1143 = vor.u32 %v1139, %v1142
      %v1144 = vsel %vm1091, %v1134, %v1143
      %v1146 = vshrl.u32 %v1084, 16
      %v1148 = vrot.slane %v1146, 3
      %v1149 = vshll.u32 %v1084, 16
      %v1151 = vrot.slane %v1149, 4
      %v1152 = vor.u32 %v1148, %v1151
      %v1153 = vsel %vm1091, %v1143, %v1152
      %v1155 = vshrl.u32 %v1085, 16
      %v1157 = vrot.slane %v1155, 3
      %v1158 = vshll.u32 %v1085, 16
      %v1160 = vrot.slane %v1158, 4
      %v1161 = vor.u32 %v1157, %v1160
      %v1162 = vsel %vm1091, %v1152, %v1161
      %v1164 = vshrl.u32 %v1086, 16
      %v1166 = vrot.slane %v1164, 3
      %v1167 = vshll.u32 %v1086, 16
      %v1169 = vrot.slane %v1167, 4
      %v1170 = vor.u32 %v1166, %v1169
      %v1171 = vsel %vm1091, %v1161, %v1170
      %v1173 = vshrl.u32 %v1087, 16
      %v1175 = vrot.slane %v1173, 3
      %v1176 = vshll.u32 %v1087, 16
      %v1178 = vrot.slane %v1176, 4
      %v1179 = vor.u32 %v1175, %v1178
      %v1180 = vsel %vm1091, %v1170, %v1179
      %v1182 = vshrl.u32 %v1088, 16
      %v1184 = vrot.slane %v1182, 3
      %v1185 = vshll.u32 %v1088, 16
      %v1187 = vrot.slane %v1185, 4
      %v1188 = vor.u32 %v1184, %v1187
      %v1189 = vsel %vm1091, %v1179, %v1188
      %v1191 = vshrl.u32 %v1089, 16
      %v1193 = vrot.slane %v1191, 3
      %v1194 = vshll.u32 %v1089, 16
      %v1196 = vrot.slane %v1194, 4
      %v1197 = vor.u32 %v1193, %v1196
      %v1198 = vsel %vm1091, %v1188, %v1197
      %v1200 = vshrl.u32 %v1090, 16
      %v1202 = vrot.slane %v1200, 3
      %v1203 = vshll.u32 %v1090, 16
      %v1205 = vrot.slane %v1203, 4
      %v1206 = vor.u32 %v1202, %v1205
      %v1207 = vsel %vm1091, %v1197, %v1206
      %v1237 = vunpack.c.l.b16 %v1058
      %v1238 = vunpack.c.l.b16 %v1059
      %v1239 = vunpack.c.l.b16 %v1060
      %v1240 = vunpack.c.l.b16 %v1061
      %v1241 = vunpack.c.l.b16 %v1062
      %v1242 = vunpack.c.l.b16 %v1063
      %v1243 = vunpack.c.l.b16 %v1064
      %v1244 = vunpack.c.l.b16 %v1065
      %v1245 = vunpack.c.l.b16 %v1066
      %v1246 = vunpack.c.l.b16 %v1067
      %v1247 = vunpack.c.l.b16 %v1068
      %v1248 = vunpack.c.l.b16 %v1069
      %v1249 = vunpack.c.l.b16 %v1070
      %v1250 = vunpack.c.l.b16 %v1071
      %v1251 = vunpack.c.l.b16 %v1072
      %v1252 = vunpack.c.l.b16 %v1073
      %v1253 = vpack.c.b16 %v1238, %v1237
      %v1254 = vpack.c.b16 %v1240, %v1239
      %v1255 = vpack.c.b16 %v1242, %v1241
      %v1256 = vpack.c.b16 %v1244, %v1243
      %v1257 = vpack.c.b16 %v1246, %v1245
      %v1258 = vpack.c.b16 %v1248, %v1247
      %v1259 = vpack.c.b16 %v1250, %v1249
      %v1260 = vpack.c.b16 %v1252, %v1251
      %1269 = vmatprep.subr.bf16.mxu0 0
      %1270 = vmatpush1.bf16.msra.mxu0 %v1260
      %1271 = vmatprep.subr.bf16.mxu0 0
      %1272 = vmatpush1.bf16.msra.mxu0 %v1259
      %1273 = vmatprep.subr.bf16.mxu0 0
      %1274 = vmatpush1.bf16.msra.mxu0 %v1258
      %1275 = vmatprep.subr.bf16.mxu0 0
      %1276 = vmatpush1.bf16.msra.mxu0 %v1257
      %1277 = vmatprep.subr.bf16.mxu0 0
      %1278 = vmatpush1.bf16.msra.mxu0 %v1256
      %1279 = vmatprep.subr.bf16.mxu0 0
      %1280 = vmatpush1.bf16.msra.mxu0 %v1255
      %1281 = vmatprep.subr.bf16.mxu0 0
      %1282 = vmatpush1.bf16.msra.mxu0 %v1254
      %1283 = vmatprep.subr.bf16.mxu0 0
      %1284 = vmatpush1.bf16.msra.mxu0 %v1253
      %1285 = vmatprep.subr.bf16.mxu0 0
      %1286 = vmatpush2.bf16.msra.mxu0 0
      %1287 = vmatprep.subr.bf16.mxu0 0
      %1288 = vmatpush2.bf16.msra.mxu0 0
      %1289 = vmatprep.subr.bf16.mxu0 0
      %1290 = vmatpush2.bf16.msra.mxu0 0
      %1291 = vmatprep.subr.bf16.mxu0 0
      %1292 = vmatpush2.bf16.msra.mxu0 0
      %1293 = vmatprep.subr.bf16.mxu0 0
      %1294 = vmatpush2.bf16.msra.mxu0 0
      %1295 = vmatprep.subr.bf16.mxu0 0
      %1296 = vmatpush2.bf16.msra.mxu0 0
      %1297 = vmatprep.subr.bf16.mxu0 0
      %1298 = vmatpush2.bf16.msra.mxu0 0
      %1299 = vmatprep.subr.bf16.mxu0 0
      %1300 = vmatpush2.bf16.msra.mxu0 0
      %1301 = vmatprep.mubr.bf16.mxu0 0
      %1302 = vmatmul.mubr.bf16.gmra.mxu0 %v1108
      %v1303 = vpop.f32.mrf.mxu0
      %v1304 = vadd.f32 0.0, %v1303
      %v1305 = vpop.f32.mrf.mxu0
      %v1306 = vpop.f32.mrf.mxu0
      %v1307 = vadd.f32 0.0, %v1306
      %v1308 = vpop.f32.mrf.mxu0
      %1309 = vmatprep.mubr.bf16.mxu0 0
      %1310 = vmatmul.mubr.bf16.gmra.mxu0 %v1117
      %v1311 = vpop.f32.mrf.mxu0
      %v1312 = vadd.f32 0.0, %v1311
      %v1313 = vpop.f32.mrf.mxu0
      %v1314 = vpop.f32.mrf.mxu0
      %v1315 = vadd.f32 0.0, %v1314
      %v1316 = vpop.f32.mrf.mxu0
      %1317 = vmatprep.mubr.bf16.mxu0 0
      %1318 = vmatmul.mubr.bf16.gmra.mxu0 %v1126
      %v1319 = vpop.f32.mrf.mxu0
      %v1320 = vadd.f32 0.0, %v1319
      %v1321 = vpop.f32.mrf.mxu0
      %v1322 = vpop.f32.mrf.mxu0
      %v1323 = vadd.f32 0.0, %v1322
      %v1324 = vpop.f32.mrf.mxu0
      %1325 = vmatprep.mubr.bf16.mxu0 0
      %1326 = vmatmul.mubr.bf16.gmra.mxu0 %v1135
      %v1327 = vpop.f32.mrf.mxu0
      %v1328 = vadd.f32 0.0, %v1327
      %v1329 = vpop.f32.mrf.mxu0
      %v1330 = vpop.f32.mrf.mxu0
      %v1331 = vadd.f32 0.0, %v1330
      %v1332 = vpop.f32.mrf.mxu0
      %1333 = vmatprep.mubr.bf16.mxu0 0
      %1334 = vmatmul.mubr.bf16.gmra.mxu0 %v1144
      %v1335 = vpop.f32.mrf.mxu0
      %v1336 = vadd.f32 0.0, %v1335
      %v1337 = vpop.f32.mrf.mxu0
      %v1338 = vpop.f32.mrf.mxu0
      %v1339 = vadd.f32 0.0, %v1338
      %v1340 = vpop.f32.mrf.mxu0
      %1341 = vmatprep.mubr.bf16.mxu0 0
      %1342 = vmatmul.mubr.bf16.gmra.mxu0 %v1153
      %v1343 = vpop.f32.mrf.mxu0
      %v1344 = vadd.f32 0.0, %v1343
      %v1345 = vpop.f32.mrf.mxu0
      %v1346 = vpop.f32.mrf.mxu0
      %v1347 = vadd.f32 0.0, %v1346
      %v1348 = vpop.f32.mrf.mxu0
      %1349 = vmatprep.mubr.bf16.mxu0 0
      %1350 = vmatmul.mubr.bf16.gmra.mxu0 %v1162
      %v1351 = vpop.f32.mrf.mxu0
      %v1352 = vadd.f32 0.0, %v1351
      %v1353 = vpop.f32.mrf.mxu0
      %v1354 = vpop.f32.mrf.mxu0
      %v1355 = vadd.f32 0.0, %v1354
      %v1356 = vpop.f32.mrf.mxu0
      %1357 = vmatprep.mubr.bf16.mxu0 0
      %1358 = vmatmul.mubr.bf16.gmra.mxu0 %v1171
      %v1359 = vpop.f32.mrf.mxu0
      %v1360 = vadd.f32 0.0, %v1359
      %v1361 = vpop.f32.mrf.mxu0
      %v1362 = vpop.f32.mrf.mxu0
      %v1363 = vadd.f32 0.0, %v1362
      %v1364 = vpop.f32.mrf.mxu0
      %1365 = vmatprep.mubr.bf16.mxu0 0
      %1366 = vmatmul.mubr.bf16.gmra.mxu0 %v1180
      %v1367 = vpop.f32.mrf.mxu0
      %v1368 = vadd.f32 0.0, %v1367
      %v1369 = vpop.f32.mrf.mxu0
      %v1370 = vpop.f32.mrf.mxu0
      %v1371 = vadd.f32 0.0, %v1370
      %v1372 = vpop.f32.mrf.mxu0
      %1373 = vmatprep.mubr.bf16.mxu0 0
      %1374 = vmatmul.mubr.bf16.gmra.mxu0 %v1189
      %v1375 = vpop.f32.mrf.mxu0
      %v1376 = vadd.f32 0.0, %v1375
      %v1377 = vpop.f32.mrf.mxu0
      %v1378 = vpop.f32.mrf.mxu0
      %v1379 = vadd.f32 0.0, %v1378
      %v1380 = vpop.f32.mrf.mxu0
      %1381 = vmatprep.mubr.bf16.mxu0 0
      %1382 = vmatmul.mubr.bf16.gmra.mxu0 %v1198
      %v1383 = vpop.f32.mrf.mxu0
      %v1384 = vadd.f32 0.0, %v1383
      %v1385 = vpop.f32.mrf.mxu0
      %v1386 = vpop.f32.mrf.mxu0
      %v1387 = vadd.f32 0.0, %v1386
      %v1388 = vpop.f32.mrf.mxu0
      %1389 = vmatprep.mubr.bf16.mxu0 0
      %1390 = vmatmul.mubr.bf16.gmra.mxu0 %v1207
      %v1391 = vpop.f32.mrf.mxu0
      %v1392 = vadd.f32 0.0, %v1391
      %v1393 = vpop.f32.mrf.mxu0
      %v1394 = vpop.f32.mrf.mxu0
      %v1395 = vadd.f32 0.0, %v1394
      %v1396 = vpop.f32.mrf.mxu0
      %1397 = vmatprep.mubr.bf16.mxu0 0
      %1398 = vmatmul.mubr.bf16.gmra.mxu0 %v1206
      %v1399 = vpop.f32.mrf.mxu0
      %v1400 = vadd.f32 0.0, %v1399
      %v1401 = vpop.f32.mrf.mxu0
      %v1402 = vpop.f32.mrf.mxu0
      %v1403 = vpop.f32.mrf.mxu0
      %1404 = vdwg.mxu0
      %v1405 = vadd.f32 %v1033, %v1304
      %v1406 = vadd.f32 %v1034, %v1307
      %v1407 = vadd.f32 %v1035, %v1312
      %v1408 = vadd.f32 %v1036, %v1315
      %v1409 = vadd.f32 %v1037, %v1320
      %v1410 = vadd.f32 %v1038, %v1323
      %v1411 = vadd.f32 %v1039, %v1328
      %v1412 = vadd.f32 %v1040, %v1331
      %v1413 = vadd.f32 %v1041, %v1336
      %v1414 = vadd.f32 %v1042, %v1339
      %v1415 = vadd.f32 %v1043, %v1344
      %v1416 = vadd.f32 %v1044, %v1347
      %v1417 = vadd.f32 %v1045, %v1352
      %v1418 = vadd.f32 %v1046, %v1355
      %v1419 = vadd.f32 %v1047, %v1360
      %v1420 = vadd.f32 %v1048, %v1363
      %v1421 = vadd.f32 %v1049, %v1368
      %v1422 = vadd.f32 %v1050, %v1371
      %v1423 = vadd.f32 %v1051, %v1376
      %v1424 = vadd.f32 %v1052, %v1379
      %v1425 = vadd.f32 %v1053, %v1384
      %v1426 = vadd.f32 %v1054, %v1387
      %v1427 = vadd.f32 %v1055, %v1392
      %v1428 = vadd.f32 %v1056, %v1395
      %v1429 = vadd.f32 %v1057, %v1400
      %v1430 = vld [vmem:[%s1 + $0x100] sm:$0xf]
      %v1431 = vld [vmem:[%s1 + $0x104] sm:$0xf]
      %v1432 = vld [vmem:[%s1 + $0x108] sm:$0xf]
      %v1433 = vld [vmem:[%s1 + $0x10c] sm:$0xf]
      %v1434 = vld [vmem:[%s1 + $0x110] sm:$0xf]
      %v1435 = vld [vmem:[%s1 + $0x114] sm:$0xf]
      %v1436 = vld [vmem:[%s1 + $0x118] sm:$0xf]
      %v1437 = vld [vmem:[%s1 + $0x11c] sm:$0xf]
      %v1438 = vld [vmem:[%s1 + $0x120] sm:$0xf]
      %v1439 = vld [vmem:[%s1 + $0x124] sm:$0xf]
      %v1440 = vld [vmem:[%s1 + $0x128] sm:$0xf]
      %v1441 = vld [vmem:[%s1 + $0x12c] sm:$0xf]
      %v1442 = vld [vmem:[%s1 + $0x130] sm:$0xf]
      %v1443 = vld [vmem:[%s1 + $0x134] sm:$0xf]
      %v1444 = vld [vmem:[%s1 + $0x138] sm:$0xf]
      %v1445 = vld [vmem:[%s1 + $0x13c] sm:$0xf]
      %v1446 = vpack.c.b16 %v1076, %v282
      %v1447 = vpack.c.b16 %v1077, %v1077
      %v1466 = vunpack.c.l.b16 %v1430
      %v1467 = vunpack.c.l.b16 %v1431
      %v1468 = vunpack.c.l.b16 %v1432
      %v1469 = vunpack.c.l.b16 %v1433
      %v1470 = vunpack.c.l.b16 %v1434
      %v1471 = vunpack.c.l.b16 %v1435
      %v1472 = vunpack.c.l.b16 %v1436
      %v1473 = vunpack.c.l.b16 %v1437
      %v1474 = vunpack.c.l.b16 %v1438
      %v1475 = vunpack.c.l.b16 %v1439
      %v1476 = vunpack.c.l.b16 %v1440
      %v1477 = vunpack.c.l.b16 %v1441
      %v1478 = vunpack.c.l.b16 %v1442
      %v1479 = vunpack.c.l.b16 %v1443
      %v1480 = vunpack.c.l.b16 %v1444
      %v1481 = vunpack.c.l.b16 %v1445
      %v1482 = vpack.c.b16 %v1467, %v1466
      %v1483 = vpack.c.b16 %v1469, %v1468
      %v1484 = vpack.c.b16 %v1471, %v1470
      %v1485 = vpack.c.b16 %v1473, %v1472
      %v1486 = vpack.c.b16 %v1475, %v1474
      %v1487 = vpack.c.b16 %v1477, %v1476
      %v1488 = vpack.c.b16 %v1479, %v1478
      %v1489 = vpack.c.b16 %v1481, %v1480
      %1498 = vmatprep.subr.bf16.mxu0 0
      %1499 = vmatpush1.bf16.msra.mxu0 %v1489
      %1500 = vmatprep.subr.bf16.mxu0 0
      %1501 = vmatpush1.bf16.msra.mxu0 %v1488
      %1502 = vmatprep.subr.bf16.mxu0 0
      %1503 = vmatpush1.bf16.msra.mxu0 %v1487
      %1504 = vmatprep.subr.bf16.mxu0 0
      %1505 = vmatpush1.bf16.msra.mxu0 %v1486
      %1506 = vmatprep.subr.bf16.mxu0 0
      %1507 = vmatpush1.bf16.msra.mxu0 %v1485
      %1508 = vmatprep.subr.bf16.mxu0 0
      %1509 = vmatpush1.bf16.msra.mxu0 %v1484
      %1510 = vmatprep.subr.bf16.mxu0 0
      %1511 = vmatpush1.bf16.msra.mxu0 %v1483
      %1512 = vmatprep.subr.bf16.mxu0 0
      %1513 = vmatpush1.bf16.msra.mxu0 %v1482
      %1514 = vmatprep.subr.bf16.mxu0 0
      %1515 = vmatpush2.bf16.msra.mxu0 0
      %1516 = vmatprep.subr.bf16.mxu0 0
      %1517 = vmatpush2.bf16.msra.mxu0 0
      %1518 = vmatprep.subr.bf16.mxu0 0
      %1519 = vmatpush2.bf16.msra.mxu0 0
      %1520 = vmatprep.subr.bf16.mxu0 0
      %1521 = vmatpush2.bf16.msra.mxu0 0
      %1522 = vmatprep.subr.bf16.mxu0 0
      %1523 = vmatpush2.bf16.msra.mxu0 0
      %1524 = vmatprep.subr.bf16.mxu0 0
      %1525 = vmatpush2.bf16.msra.mxu0 0
      %1526 = vmatprep.subr.bf16.mxu0 0
      %1527 = vmatpush2.bf16.msra.mxu0 0
      %1528 = vmatprep.subr.bf16.mxu0 0
      %1529 = vmatpush2.bf16.msra.mxu0 0
      %1530 = vmatprep.mubr.bf16.mxu0 0
      %1531 = vmatmul.mubr.bf16.gmra.mxu0 %v284
      %v1532 = vpop.f32.mrf.mxu0
      %v1533 = vadd.f32 0.0, %v1532
      %v1534 = vpop.f32.mrf.mxu0
      %v1535 = vpop.f32.mrf.mxu0
      %v1536 = vadd.f32 0.0, %v1535
      %v1537 = vpop.f32.mrf.mxu0
      %1538 = vmatprep.mubr.bf16.mxu0 0
      %1539 = vmatmul.mubr.bf16.gmra.mxu0 %v285
      %v1540 = vpop.f32.mrf.mxu0
      %v1541 = vadd.f32 0.0, %v1540
      %v1542 = vpop.f32.mrf.mxu0
      %v1543 = vpop.f32.mrf.mxu0
      %v1544 = vadd.f32 0.0, %v1543
      %v1545 = vpop.f32.mrf.mxu0
      %1546 = vmatprep.mubr.bf16.mxu0 0
      %1547 = vmatmul.mubr.bf16.gmra.mxu0 %v286
      %v1548 = vpop.f32.mrf.mxu0
      %v1549 = vadd.f32 0.0, %v1548
      %v1550 = vpop.f32.mrf.mxu0
      %v1551 = vpop.f32.mrf.mxu0
      %v1552 = vadd.f32 0.0, %v1551
      %v1553 = vpop.f32.mrf.mxu0
      %1554 = vmatprep.mubr.bf16.mxu0 0
      %1555 = vmatmul.mubr.bf16.gmra.mxu0 %v287
      %v1556 = vpop.f32.mrf.mxu0
      %v1557 = vadd.f32 0.0, %v1556
      %v1558 = vpop.f32.mrf.mxu0
      %v1559 = vpop.f32.mrf.mxu0
      %v1560 = vadd.f32 0.0, %v1559
      %v1561 = vpop.f32.mrf.mxu0
      %1562 = vmatprep.mubr.bf16.mxu0 0
      %1563 = vmatmul.mubr.bf16.gmra.mxu0 %v288
      %v1564 = vpop.f32.mrf.mxu0
      %v1565 = vadd.f32 0.0, %v1564
      %v1566 = vpop.f32.mrf.mxu0
      %v1567 = vpop.f32.mrf.mxu0
      %v1568 = vadd.f32 0.0, %v1567
      %v1569 = vpop.f32.mrf.mxu0
      %1570 = vmatprep.mubr.bf16.mxu0 0
      %1571 = vmatmul.mubr.bf16.gmra.mxu0 %v289
      %v1572 = vpop.f32.mrf.mxu0
      %v1573 = vadd.f32 0.0, %v1572
      %v1574 = vpop.f32.mrf.mxu0
      %v1575 = vpop.f32.mrf.mxu0
      %v1576 = vadd.f32 0.0, %v1575
      %v1577 = vpop.f32.mrf.mxu0
      %1578 = vmatprep.mubr.bf16.mxu0 0
      %1579 = vmatmul.mubr.bf16.gmra.mxu0 %v290
      %v1580 = vpop.f32.mrf.mxu0
      %v1581 = vadd.f32 0.0, %v1580
      %v1582 = vpop.f32.mrf.mxu0
      %v1583 = vpop.f32.mrf.mxu0
      %v1584 = vadd.f32 0.0, %v1583
      %v1585 = vpop.f32.mrf.mxu0
      %1586 = vmatprep.mubr.bf16.mxu0 0
      %1587 = vmatmul.mubr.bf16.gmra.mxu0 %v291
      %v1588 = vpop.f32.mrf.mxu0
      %v1589 = vadd.f32 0.0, %v1588
      %v1590 = vpop.f32.mrf.mxu0
      %v1591 = vpop.f32.mrf.mxu0
      %v1592 = vadd.f32 0.0, %v1591
      %v1593 = vpop.f32.mrf.mxu0
      %1594 = vmatprep.mubr.bf16.mxu0 0
      %1595 = vmatmul.mubr.bf16.gmra.mxu0 %v292
      %v1596 = vpop.f32.mrf.mxu0
      %v1597 = vadd.f32 0.0, %v1596
      %v1598 = vpop.f32.mrf.mxu0
      %v1599 = vpop.f32.mrf.mxu0
      %v1600 = vadd.f32 0.0, %v1599
      %v1601 = vpop.f32.mrf.mxu0
      %1602 = vmatprep.mubr.bf16.mxu0 0
      %1603 = vmatmul.mubr.bf16.gmra.mxu0 %v293
      %v1604 = vpop.f32.mrf.mxu0
      %v1605 = vadd.f32 0.0, %v1604
      %v1606 = vpop.f32.mrf.mxu0
      %v1607 = vpop.f32.mrf.mxu0
      %v1608 = vadd.f32 0.0, %v1607
      %v1609 = vpop.f32.mrf.mxu0
      %1610 = vmatprep.mubr.bf16.mxu0 0
      %1611 = vmatmul.mubr.bf16.gmra.mxu0 %v294
      %v1612 = vpop.f32.mrf.mxu0
      %v1613 = vadd.f32 0.0, %v1612
      %v1614 = vpop.f32.mrf.mxu0
      %v1615 = vpop.f32.mrf.mxu0
      %v1616 = vadd.f32 0.0, %v1615
      %v1617 = vpop.f32.mrf.mxu0
      %1618 = vmatprep.mubr.bf16.mxu0 0
      %1619 = vmatmul.mubr.bf16.gmra.mxu0 %v1446
      %v1620 = vpop.f32.mrf.mxu0
      %v1621 = vadd.f32 0.0, %v1620
      %v1622 = vpop.f32.mrf.mxu0
      %v1623 = vpop.f32.mrf.mxu0
      %v1624 = vadd.f32 0.0, %v1623
      %v1625 = vpop.f32.mrf.mxu0
      %1626 = vmatprep.mubr.bf16.mxu0 0
      %1627 = vmatmul.mubr.bf16.gmra.mxu0 %v1447
      %v1628 = vpop.f32.mrf.mxu0
      %v1629 = vadd.f32 0.0, %v1628
      %v1630 = vpop.f32.mrf.mxu0
      %v1631 = vpop.f32.mrf.mxu0
      %v1632 = vpop.f32.mrf.mxu0
      %1633 = vdwg.mxu0
      %v1634 = vadd.f32 %v1405, %v1533
      %v1635 = vadd.f32 %v1406, %v1536
      %v1636 = vadd.f32 %v1407, %v1541
      %v1637 = vadd.f32 %v1408, %v1544
      %v1638 = vadd.f32 %v1409, %v1549
      %v1639 = vadd.f32 %v1410, %v1552
      %v1640 = vadd.f32 %v1411, %v1557
      %v1641 = vadd.f32 %v1412, %v1560
      %v1642 = vadd.f32 %v1413, %v1565
      %v1643 = vadd.f32 %v1414, %v1568
      %v1644 = vadd.f32 %v1415, %v1573
      %v1645 = vadd.f32 %v1416, %v1576
      %v1646 = vadd.f32 %v1417, %v1581
      %v1647 = vadd.f32 %v1418, %v1584
      %v1648 = vadd.f32 %v1419, %v1589
      %v1649 = vadd.f32 %v1420, %v1592
      %v1650 = vadd.f32 %v1421, %v1597
      %v1651 = vadd.f32 %v1422, %v1600
      %v1652 = vadd.f32 %v1423, %v1605
      %v1653 = vadd.f32 %v1424, %v1608
      %v1654 = vadd.f32 %v1425, %v1613
      %v1655 = vadd.f32 %v1426, %v1616
      %v1656 = vadd.f32 %v1427, %v1621
      %v1657 = vadd.f32 %v1428, %v1624
      %v1658 = vadd.f32 %v1429, %v1629
      %v1659 = vld [vmem:[%s1 + $0x140] sm:$0xf]
      %v1660 = vld [vmem:[%s1 + $0x144] sm:$0xf]
      %v1661 = vld [vmem:[%s1 + $0x148] sm:$0xf]
      %v1662 = vld [vmem:[%s1 + $0x14c] sm:$0xf]
      %v1663 = vld [vmem:[%s1 + $0x150] sm:$0xf]
      %v1664 = vld [vmem:[%s1 + $0x154] sm:$0xf]
      %v1665 = vld [vmem:[%s1 + $0x158] sm:$0xf]
      %v1666 = vld [vmem:[%s1 + $0x15c] sm:$0xf]
      %v1667 = vld [vmem:[%s1 + $0x160] sm:$0xf]
      %v1668 = vld [vmem:[%s1 + $0x164] sm:$0xf]
      %v1669 = vld [vmem:[%s1 + $0x168] sm:$0xf]
      %v1670 = vld [vmem:[%s1 + $0x16c] sm:$0xf]
      %v1671 = vld [vmem:[%s1 + $0x170] sm:$0xf]
      %v1672 = vld [vmem:[%s1 + $0x174] sm:$0xf]
      %v1673 = vld [vmem:[%s1 + $0x178] sm:$0xf]
      %v1674 = vld [vmem:[%s1 + $0x17c] sm:$0xf]
      %v1676 = vshll.u32 %v1446, 16
      %v1678 = vrot.slane %v1676, 1
      %v1679 = vsel %vm296, %v391, %v1678
      %v1680 = vshrl.u32 %v1446, 16
      %v1682 = vor.u32 %v1680, %v1678
      %v1684 = vshll.u32 %v1447, 16
      %v1686 = vrot.slane %v1684, 1
      %v1687 = vsel %vm296, %v1682, %v1686
      %v1688 = vshrl.u32 %v1447, 16
      %v1690 = vor.u32 %v1688, %v1686
      %v1710 = vunpack.c.l.b16 %v1659
      %v1711 = vunpack.c.l.b16 %v1660
      %v1712 = vunpack.c.l.b16 %v1661
      %v1713 = vunpack.c.l.b16 %v1662
      %v1714 = vunpack.c.l.b16 %v1663
      %v1715 = vunpack.c.l.b16 %v1664
      %v1716 = vunpack.c.l.b16 %v1665
      %v1717 = vunpack.c.l.b16 %v1666
      %v1718 = vunpack.c.l.b16 %v1667
      %v1719 = vunpack.c.l.b16 %v1668
      %v1720 = vunpack.c.l.b16 %v1669
      %v1721 = vunpack.c.l.b16 %v1670
      %v1722 = vunpack.c.l.b16 %v1671
      %v1723 = vunpack.c.l.b16 %v1672
      %v1724 = vunpack.c.l.b16 %v1673
      %v1725 = vunpack.c.l.b16 %v1674
      %v1726 = vpack.c.b16 %v1711, %v1710
      %v1727 = vpack.c.b16 %v1713, %v1712
      %v1728 = vpack.c.b16 %v1715, %v1714
      %v1729 = vpack.c.b16 %v1717, %v1716
      %v1730 = vpack.c.b16 %v1719, %v1718
      %v1731 = vpack.c.b16 %v1721, %v1720
      %v1732 = vpack.c.b16 %v1723, %v1722
      %v1733 = vpack.c.b16 %v1725, %v1724
      %1742 = vmatprep.subr.bf16.mxu0 0
      %1743 = vmatpush1.bf16.msra.mxu0 %v1733
      %1744 = vmatprep.subr.bf16.mxu0 0
      %1745 = vmatpush1.bf16.msra.mxu0 %v1732
      %1746 = vmatprep.subr.bf16.mxu0 0
      %1747 = vmatpush1.bf16.msra.mxu0 %v1731
      %1748 = vmatprep.subr.bf16.mxu0 0
      %1749 = vmatpush1.bf16.msra.mxu0 %v1730
      %1750 = vmatprep.subr.bf16.mxu0 0
      %1751 = vmatpush1.bf16.msra.mxu0 %v1729
      %1752 = vmatprep.subr.bf16.mxu0 0
      %1753 = vmatpush1.bf16.msra.mxu0 %v1728
      %1754 = vmatprep.subr.bf16.mxu0 0
      %1755 = vmatpush1.bf16.msra.mxu0 %v1727
      %1756 = vmatprep.subr.bf16.mxu0 0
      %1757 = vmatpush1.bf16.msra.mxu0 %v1726
      %1758 = vmatprep.subr.bf16.mxu0 0
      %1759 = vmatpush2.bf16.msra.mxu0 0
      %1760 = vmatprep.subr.bf16.mxu0 0
      %1761 = vmatpush2.bf16.msra.mxu0 0
      %1762 = vmatprep.subr.bf16.mxu0 0
      %1763 = vmatpush2.bf16.msra.mxu0 0
      %1764 = vmatprep.subr.bf16.mxu0 0
      %1765 = vmatpush2.bf16.msra.mxu0 0
      %1766 = vmatprep.subr.bf16.mxu0 0
      %1767 = vmatpush2.bf16.msra.mxu0 0
      %1768 = vmatprep.subr.bf16.mxu0 0
      %1769 = vmatpush2.bf16.msra.mxu0 0
      %1770 = vmatprep.subr.bf16.mxu0 0
      %1771 = vmatpush2.bf16.msra.mxu0 0
      %1772 = vmatprep.subr.bf16.mxu0 0
      %1773 = vmatpush2.bf16.msra.mxu0 0
      %1774 = vmatprep.mubr.bf16.mxu0 0
      %1775 = vmatmul.mubr.bf16.gmra.mxu0 %v316
      %v1776 = vpop.f32.mrf.mxu0
      %v1777 = vadd.f32 0.0, %v1776
      %v1778 = vpop.f32.mrf.mxu0
      %v1779 = vpop.f32.mrf.mxu0
      %v1780 = vadd.f32 0.0, %v1779
      %v1781 = vpop.f32.mrf.mxu0
      %1782 = vmatprep.mubr.bf16.mxu0 0
      %1783 = vmatmul.mubr.bf16.gmra.mxu0 %v324
      %v1784 = vpop.f32.mrf.mxu0
      %v1785 = vadd.f32 0.0, %v1784
      %v1786 = vpop.f32.mrf.mxu0
      %v1787 = vpop.f32.mrf.mxu0
      %v1788 = vadd.f32 0.0, %v1787
      %v1789 = vpop.f32.mrf.mxu0
      %1790 = vmatprep.mubr.bf16.mxu0 0
      %1791 = vmatmul.mubr.bf16.gmra.mxu0 %v332
      %v1792 = vpop.f32.mrf.mxu0
      %v1793 = vadd.f32 0.0, %v1792
      %v1794 = vpop.f32.mrf.mxu0
      %v1795 = vpop.f32.mrf.mxu0
      %v1796 = vadd.f32 0.0, %v1795
      %v1797 = vpop.f32.mrf.mxu0
      %1798 = vmatprep.mubr.bf16.mxu0 0
      %1799 = vmatmul.mubr.bf16.gmra.mxu0 %v340
      %v1800 = vpop.f32.mrf.mxu0
      %v1801 = vadd.f32 0.0, %v1800
      %v1802 = vpop.f32.mrf.mxu0
      %v1803 = vpop.f32.mrf.mxu0
      %v1804 = vadd.f32 0.0, %v1803
      %v1805 = vpop.f32.mrf.mxu0
      %1806 = vmatprep.mubr.bf16.mxu0 0
      %1807 = vmatmul.mubr.bf16.gmra.mxu0 %v348
      %v1808 = vpop.f32.mrf.mxu0
      %v1809 = vadd.f32 0.0, %v1808
      %v1810 = vpop.f32.mrf.mxu0
      %v1811 = vpop.f32.mrf.mxu0
      %v1812 = vadd.f32 0.0, %v1811
      %v1813 = vpop.f32.mrf.mxu0
      %1814 = vmatprep.mubr.bf16.mxu0 0
      %1815 = vmatmul.mubr.bf16.gmra.mxu0 %v356
      %v1816 = vpop.f32.mrf.mxu0
      %v1817 = vadd.f32 0.0, %v1816
      %v1818 = vpop.f32.mrf.mxu0
      %v1819 = vpop.f32.mrf.mxu0
      %v1820 = vadd.f32 0.0, %v1819
      %v1821 = vpop.f32.mrf.mxu0
      %1822 = vmatprep.mubr.bf16.mxu0 0
      %1823 = vmatmul.mubr.bf16.gmra.mxu0 %v364
      %v1824 = vpop.f32.mrf.mxu0
      %v1825 = vadd.f32 0.0, %v1824
      %v1826 = vpop.f32.mrf.mxu0
      %v1827 = vpop.f32.mrf.mxu0
      %v1828 = vadd.f32 0.0, %v1827
      %v1829 = vpop.f32.mrf.mxu0
      %1830 = vmatprep.mubr.bf16.mxu0 0
      %1831 = vmatmul.mubr.bf16.gmra.mxu0 %v372
      %v1832 = vpop.f32.mrf.mxu0
      %v1833 = vadd.f32 0.0, %v1832
      %v1834 = vpop.f32.mrf.mxu0
      %v1835 = vpop.f32.mrf.mxu0
      %v1836 = vadd.f32 0.0, %v1835
      %v1837 = vpop.f32.mrf.mxu0
      %1838 = vmatprep.mubr.bf16.mxu0 0
      %1839 = vmatmul.mubr.bf16.gmra.mxu0 %v380
      %v1840 = vpop.f32.mrf.mxu0
      %v1841 = vadd.f32 0.0, %v1840
      %v1842 = vpop.f32.mrf.mxu0
      %v1843 = vpop.f32.mrf.mxu0
      %v1844 = vadd.f32 0.0, %v1843
      %v1845 = vpop.f32.mrf.mxu0
      %1846 = vmatprep.mubr.bf16.mxu0 0
      %1847 = vmatmul.mubr.bf16.gmra.mxu0 %v388
      %v1848 = vpop.f32.mrf.mxu0
      %v1849 = vadd.f32 0.0, %v1848
      %v1850 = vpop.f32.mrf.mxu0
      %v1851 = vpop.f32.mrf.mxu0
      %v1852 = vadd.f32 0.0, %v1851
      %v1853 = vpop.f32.mrf.mxu0
      %1854 = vmatprep.mubr.bf16.mxu0 0
      %1855 = vmatmul.mubr.bf16.gmra.mxu0 %v1679
      %v1856 = vpop.f32.mrf.mxu0
      %v1857 = vadd.f32 0.0, %v1856
      %v1858 = vpop.f32.mrf.mxu0
      %v1859 = vpop.f32.mrf.mxu0
      %v1860 = vadd.f32 0.0, %v1859
      %v1861 = vpop.f32.mrf.mxu0
      %1862 = vmatprep.mubr.bf16.mxu0 0
      %1863 = vmatmul.mubr.bf16.gmra.mxu0 %v1687
      %v1864 = vpop.f32.mrf.mxu0
      %v1865 = vadd.f32 0.0, %v1864
      %v1866 = vpop.f32.mrf.mxu0
      %v1867 = vpop.f32.mrf.mxu0
      %v1868 = vadd.f32 0.0, %v1867
      %v1869 = vpop.f32.mrf.mxu0
      %1870 = vmatprep.mubr.bf16.mxu0 0
      %1871 = vmatmul.mubr.bf16.gmra.mxu0 %v1690
      %v1872 = vpop.f32.mrf.mxu0
      %v1873 = vadd.f32 0.0, %v1872
      %v1874 = vpop.f32.mrf.mxu0
      %v1875 = vpop.f32.mrf.mxu0
      %v1876 = vpop.f32.mrf.mxu0
      %1877 = vdwg.mxu0
      %v1878 = vadd.f32 %v1634, %v1777
      %v1879 = vadd.f32 %v1635, %v1780
      %v1880 = vadd.f32 %v1636, %v1785
      %v1881 = vadd.f32 %v1637, %v1788
      %v1882 = vadd.f32 %v1638, %v1793
      %v1883 = vadd.f32 %v1639, %v1796
      %v1884 = vadd.f32 %v1640, %v1801
      %v1885 = vadd.f32 %v1641, %v1804
      %v1886 = vadd.f32 %v1642, %v1809
      %v1887 = vadd.f32 %v1643, %v1812
      %v1888 = vadd.f32 %v1644, %v1817
      %v1889 = vadd.f32 %v1645, %v1820
      %v1890 = vadd.f32 %v1646, %v1825
      %v1891 = vadd.f32 %v1647, %v1828
      %v1892 = vadd.f32 %v1648, %v1833
      %v1893 = vadd.f32 %v1649, %v1836
      %v1894 = vadd.f32 %v1650, %v1841
      %v1895 = vadd.f32 %v1651, %v1844
      %v1896 = vadd.f32 %v1652, %v1849
      %v1897 = vadd.f32 %v1653, %v1852
      %v1898 = vadd.f32 %v1654, %v1857
      %v1899 = vadd.f32 %v1655, %v1860
      %v1900 = vadd.f32 %v1656, %v1865
      %v1901 = vadd.f32 %v1657, %v1868
      %v1902 = vadd.f32 %v1658, %v1873
      %v1903 = vld [vmem:[%s1 + $0x180] sm:$0xf]
      %v1904 = vld [vmem:[%s1 + $0x184] sm:$0xf]
      %v1905 = vld [vmem:[%s1 + $0x188] sm:$0xf]
      %v1906 = vld [vmem:[%s1 + $0x18c] sm:$0xf]
      %v1907 = vld [vmem:[%s1 + $0x190] sm:$0xf]
      %v1908 = vld [vmem:[%s1 + $0x194] sm:$0xf]
      %v1909 = vld [vmem:[%s1 + $0x198] sm:$0xf]
      %v1910 = vld [vmem:[%s1 + $0x19c] sm:$0xf]
      %v1911 = vld [vmem:[%s1 + $0x1a0] sm:$0xf]
      %v1912 = vld [vmem:[%s1 + $0x1a4] sm:$0xf]
      %v1913 = vld [vmem:[%s1 + $0x1a8] sm:$0xf]
      %v1914 = vld [vmem:[%s1 + $0x1ac] sm:$0xf]
      %v1915 = vld [vmem:[%s1 + $0x1b0] sm:$0xf]
      %v1916 = vld [vmem:[%s1 + $0x1b4] sm:$0xf]
      %v1917 = vld [vmem:[%s1 + $0x1b8] sm:$0xf]
      %v1918 = vld [vmem:[%s1 + $0x1bc] sm:$0xf]
      %v1921 = vunpack.c.l.b16 %v199
      %v1922 = vunpack.c.l.b16 %v200
      %v1923 = vpack.c.b16 %v1922, %v1921
      %vm1924 = vcmask 1044480
      %v1925 = vrot.slane %v1079, 3
      %v1926 = vrot.slane %v1080, 3
      %v1927 = vsel %vm1924, %v1925, %v1926
      %v1928 = vrot.slane %v1081, 3
      %v1929 = vsel %vm1924, %v1926, %v1928
      %v1930 = vrot.slane %v1082, 3
      %v1931 = vsel %vm1924, %v1928, %v1930
      %v1932 = vrot.slane %v1083, 3
      %v1933 = vsel %vm1924, %v1930, %v1932
      %v1934 = vrot.slane %v1084, 3
      %v1935 = vsel %vm1924, %v1932, %v1934
      %v1936 = vrot.slane %v1085, 3
      %v1937 = vsel %vm1924, %v1934, %v1936
      %v1938 = vrot.slane %v1086, 3
      %v1939 = vsel %vm1924, %v1936, %v1938
      %v1940 = vrot.slane %v1087, 3
      %v1941 = vsel %vm1924, %v1938, %v1940
      %v1942 = vrot.slane %v1088, 3
      %v1943 = vsel %vm1924, %v1940, %v1942
      %v1944 = vrot.slane %v1089, 3
      %v1945 = vsel %vm1924, %v1942, %v1944
      %v1946 = vrot.slane %v1090, 3
      %v1947 = vsel %vm1924, %v1944, %v1946
      %v1948 = vrot.slane %v1923, 3
      %v1949 = vsel %vm1924, %v1946, %v1948
      %v1979 = vunpack.c.l.b16 %v1903
      %v1980 = vunpack.c.l.b16 %v1904
      %v1981 = vunpack.c.l.b16 %v1905
      %v1982 = vunpack.c.l.b16 %v1906
      %v1983 = vunpack.c.l.b16 %v1907
      %v1984 = vunpack.c.l.b16 %v1908
      %v1985 = vunpack.c.l.b16 %v1909
      %v1986 = vunpack.c.l.b16 %v1910
      %v1987 = vunpack.c.l.b16 %v1911
      %v1988 = vunpack.c.l.b16 %v1912
      %v1989 = vunpack.c.l.b16 %v1913
      %v1990 = vunpack.c.l.b16 %v1914
      %v1991 = vunpack.c.l.b16 %v1915
      %v1992 = vunpack.c.l.b16 %v1916
      %v1993 = vunpack.c.l.b16 %v1917
      %v1994 = vunpack.c.l.b16 %v1918
      %v1995 = vpack.c.b16 %v1980, %v1979
      %v1996 = vpack.c.b16 %v1982, %v1981
      %v1997 = vpack.c.b16 %v1984, %v1983
      %v1998 = vpack.c.b16 %v1986, %v1985
      %v1999 = vpack.c.b16 %v1988, %v1987
      %v2000 = vpack.c.b16 %v1990, %v1989
      %v2001 = vpack.c.b16 %v1992, %v1991
      %v2002 = vpack.c.b16 %v1994, %v1993
      %2011 = vmatprep.subr.bf16.mxu0 0
      %2012 = vmatpush1.bf16.msra.mxu0 %v2002
      %2013 = vmatprep.subr.bf16.mxu0 0
      %2014 = vmatpush1.bf16.msra.mxu0 %v2001
      %2015 = vmatprep.subr.bf16.mxu0 0
      %2016 = vmatpush1.bf16.msra.mxu0 %v2000
      %2017 = vmatprep.subr.bf16.mxu0 0
      %2018 = vmatpush1.bf16.msra.mxu0 %v1999
      %2019 = vmatprep.subr.bf16.mxu0 0
      %2020 = vmatpush1.bf16.msra.mxu0 %v1998
      %2021 = vmatprep.subr.bf16.mxu0 0
      %2022 = vmatpush1.bf16.msra.mxu0 %v1997
      %2023 = vmatprep.subr.bf16.mxu0 0
      %2024 = vmatpush1.bf16.msra.mxu0 %v1996
      %2025 = vmatprep.subr.bf16.mxu0 0
      %2026 = vmatpush1.bf16.msra.mxu0 %v1995
      %2027 = vmatprep.subr.bf16.mxu0 0
      %2028 = vmatpush2.bf16.msra.mxu0 0
      %2029 = vmatprep.subr.bf16.mxu0 0
      %2030 = vmatpush2.bf16.msra.mxu0 0
      %2031 = vmatprep.subr.bf16.mxu0 0
      %2032 = vmatpush2.bf16.msra.mxu0 0
      %2033 = vmatprep.subr.bf16.mxu0 0
      %2034 = vmatpush2.bf16.msra.mxu0 0
      %2035 = vmatprep.subr.bf16.mxu0 0
      %2036 = vmatpush2.bf16.msra.mxu0 0
      %2037 = vmatprep.subr.bf16.mxu0 0
      %2038 = vmatpush2.bf16.msra.mxu0 0
      %2039 = vmatprep.subr.bf16.mxu0 0
      %2040 = vmatpush2.bf16.msra.mxu0 0
      %2041 = vmatprep.subr.bf16.mxu0 0
      %2042 = vmatpush2.bf16.msra.mxu0 0
      %2043 = vmatprep.mubr.bf16.mxu0 0
      %2044 = vmatmul.mubr.bf16.gmra.mxu0 %v1927
      %v2045 = vpop.f32.mrf.mxu0
      %v2046 = vadd.f32 0.0, %v2045
      %v2047 = vpop.f32.mrf.mxu0
      %v2048 = vpop.f32.mrf.mxu0
      %v2049 = vadd.f32 0.0, %v2048
      %v2050 = vpop.f32.mrf.mxu0
      %2051 = vmatprep.mubr.bf16.mxu0 0
      %2052 = vmatmul.mubr.bf16.gmra.mxu0 %v1929
      %v2053 = vpop.f32.mrf.mxu0
      %v2054 = vadd.f32 0.0, %v2053
      %v2055 = vpop.f32.mrf.mxu0
      %v2056 = vpop.f32.mrf.mxu0
      %v2057 = vadd.f32 0.0, %v2056
      %v2058 = vpop.f32.mrf.mxu0
      %2059 = vmatprep.mubr.bf16.mxu0 0
      %2060 = vmatmul.mubr.bf16.gmra.mxu0 %v1931
      %v2061 = vpop.f32.mrf.mxu0
      %v2062 = vadd.f32 0.0, %v2061
      %v2063 = vpop.f32.mrf.mxu0
      %v2064 = vpop.f32.mrf.mxu0
      %v2065 = vadd.f32 0.0, %v2064
      %v2066 = vpop.f32.mrf.mxu0
      %2067 = vmatprep.mubr.bf16.mxu0 0
      %2068 = vmatmul.mubr.bf16.gmra.mxu0 %v1933
      %v2069 = vpop.f32.mrf.mxu0
      %v2070 = vadd.f32 0.0, %v2069
      %v2071 = vpop.f32.mrf.mxu0
      %v2072 = vpop.f32.mrf.mxu0
      %v2073 = vadd.f32 0.0, %v2072
      %v2074 = vpop.f32.mrf.mxu0
      %2075 = vmatprep.mubr.bf16.mxu0 0
      %2076 = vmatmul.mubr.bf16.gmra.mxu0 %v1935
      %v2077 = vpop.f32.mrf.mxu0
      %v2078 = vadd.f32 0.0, %v2077
      %v2079 = vpop.f32.mrf.mxu0
      %v2080 = vpop.f32.mrf.mxu0
      %v2081 = vadd.f32 0.0, %v2080
      %v2082 = vpop.f32.mrf.mxu0
      %2083 = vmatprep.mubr.bf16.mxu0 0
      %2084 = vmatmul.mubr.bf16.gmra.mxu0 %v1937
      %v2085 = vpop.f32.mrf.mxu0
      %v2086 = vadd.f32 0.0, %v2085
      %v2087 = vpop.f32.mrf.mxu0
      %v2088 = vpop.f32.mrf.mxu0
      %v2089 = vadd.f32 0.0, %v2088
      %v2090 = vpop.f32.mrf.mxu0
      %2091 = vmatprep.mubr.bf16.mxu0 0
      %2092 = vmatmul.mubr.bf16.gmra.mxu0 %v1939
      %v2093 = vpop.f32.mrf.mxu0
      %v2094 = vadd.f32 0.0, %v2093
      %v2095 = vpop.f32.mrf.mxu0
      %v2096 = vpop.f32.mrf.mxu0
      %v2097 = vadd.f32 0.0, %v2096
      %v2098 = vpop.f32.mrf.mxu0
      %2099 = vmatprep.mubr.bf16.mxu0 0
      %2100 = vmatmul.mubr.bf16.gmra.mxu0 %v1941
      %v2101 = vpop.f32.mrf.mxu0
      %v2102 = vadd.f32 0.0, %v2101
      %v2103 = vpop.f32.mrf.mxu0
      %v2104 = vpop.f32.mrf.mxu0
      %v2105 = vadd.f32 0.0, %v2104
      %v2106 = vpop.f32.mrf.mxu0
      %2107 = vmatprep.mubr.bf16.mxu0 0
      %2108 = vmatmul.mubr.bf16.gmra.mxu0 %v1943
      %v2109 = vpop.f32.mrf.mxu0
      %v2110 = vadd.f32 0.0, %v2109
      %v2111 = vpop.f32.mrf.mxu0
      %v2112 = vpop.f32.mrf.mxu0
      %v2113 = vadd.f32 0.0, %v2112
      %v2114 = vpop.f32.mrf.mxu0
      %2115 = vmatprep.mubr.bf16.mxu0 0
      %2116 = vmatmul.mubr.bf16.gmra.mxu0 %v1945
      %v2117 = vpop.f32.mrf.mxu0
      %v2118 = vadd.f32 0.0, %v2117
      %v2119 = vpop.f32.mrf.mxu0
      %v2120 = vpop.f32.mrf.mxu0
      %v2121 = vadd.f32 0.0, %v2120
      %v2122 = vpop.f32.mrf.mxu0
      %2123 = vmatprep.mubr.bf16.mxu0 0
      %2124 = vmatmul.mubr.bf16.gmra.mxu0 %v1947
      %v2125 = vpop.f32.mrf.mxu0
      %v2126 = vadd.f32 0.0, %v2125
      %v2127 = vpop.f32.mrf.mxu0
      %v2128 = vpop.f32.mrf.mxu0
      %v2129 = vadd.f32 0.0, %v2128
      %v2130 = vpop.f32.mrf.mxu0
      %2131 = vmatprep.mubr.bf16.mxu0 0
      %2132 = vmatmul.mubr.bf16.gmra.mxu0 %v1949
      %v2133 = vpop.f32.mrf.mxu0
      %v2134 = vadd.f32 0.0, %v2133
      %v2135 = vpop.f32.mrf.mxu0
      %v2136 = vpop.f32.mrf.mxu0
      %v2137 = vadd.f32 0.0, %v2136
      %v2138 = vpop.f32.mrf.mxu0
      %2139 = vmatprep.mubr.bf16.mxu0 0
      %2140 = vmatmul.mubr.bf16.gmra.mxu0 %v1948
      %v2141 = vpop.f32.mrf.mxu0
      %v2142 = vadd.f32 0.0, %v2141
      %v2143 = vpop.f32.mrf.mxu0
      %v2144 = vpop.f32.mrf.mxu0
      %v2145 = vpop.f32.mrf.mxu0
      %2146 = vdwg.mxu0
      %v2147 = vadd.f32 %v1878, %v2046
      %v2148 = vadd.f32 %v1879, %v2049
      %v2149 = vadd.f32 %v1880, %v2054
      %v2150 = vadd.f32 %v1881, %v2057
      %v2151 = vadd.f32 %v1882, %v2062
      %v2152 = vadd.f32 %v1883, %v2065
      %v2153 = vadd.f32 %v1884, %v2070
      %v2154 = vadd.f32 %v1885, %v2073
      %v2155 = vadd.f32 %v1886, %v2078
      %v2156 = vadd.f32 %v1887, %v2081
      %v2157 = vadd.f32 %v1888, %v2086
      %v2158 = vadd.f32 %v1889, %v2089
      %v2159 = vadd.f32 %v1890, %v2094
      %v2160 = vadd.f32 %v1891, %v2097
      %v2161 = vadd.f32 %v1892, %v2102
      %v2162 = vadd.f32 %v1893, %v2105
      %v2163 = vadd.f32 %v1894, %v2110
      %v2164 = vadd.f32 %v1895, %v2113
      %v2165 = vadd.f32 %v1896, %v2118
      %v2166 = vadd.f32 %v1897, %v2121
      %v2167 = vadd.f32 %v1898, %v2126
      %v2168 = vadd.f32 %v1899, %v2129
      %v2169 = vadd.f32 %v1900, %v2134
      %v2170 = vadd.f32 %v1901, %v2137
      %v2171 = vadd.f32 %v1902, %v2142
      %v2172 = vld [vmem:[%s1 + $0x1c0] sm:$0xf]
      %v2173 = vld [vmem:[%s1 + $0x1c4] sm:$0xf]
      %v2174 = vld [vmem:[%s1 + $0x1c8] sm:$0xf]
      %v2175 = vld [vmem:[%s1 + $0x1cc] sm:$0xf]
      %v2176 = vld [vmem:[%s1 + $0x1d0] sm:$0xf]
      %v2177 = vld [vmem:[%s1 + $0x1d4] sm:$0xf]
      %v2178 = vld [vmem:[%s1 + $0x1d8] sm:$0xf]
      %v2179 = vld [vmem:[%s1 + $0x1dc] sm:$0xf]
      %v2180 = vld [vmem:[%s1 + $0x1e0] sm:$0xf]
      %v2181 = vld [vmem:[%s1 + $0x1e4] sm:$0xf]
      %v2182 = vld [vmem:[%s1 + $0x1e8] sm:$0xf]
      %v2183 = vld [vmem:[%s1 + $0x1ec] sm:$0xf]
      %v2184 = vld [vmem:[%s1 + $0x1f0] sm:$0xf]
      %v2185 = vld [vmem:[%s1 + $0x1f4] sm:$0xf]
      %v2186 = vld [vmem:[%s1 + $0x1f8] sm:$0xf]
      %v2187 = vld [vmem:[%s1 + $0x1fc] sm:$0xf]
      %v2189 = vshrl.u32 %v1923, 16
      %v2191 = vrot.slane %v2189, 3
      %v2192 = vshll.u32 %v1923, 16
      %v2194 = vrot.slane %v2192, 4
      %v2195 = vor.u32 %v2191, %v2194
      %v2196 = vsel %vm1091, %v1206, %v2195
      %v2215 = vunpack.c.l.b16 %v2172
      %v2216 = vunpack.c.l.b16 %v2173
      %v2217 = vunpack.c.l.b16 %v2174
      %v2218 = vunpack.c.l.b16 %v2175
      %v2219 = vunpack.c.l.b16 %v2176
      %v2220 = vunpack.c.l.b16 %v2177
      %v2221 = vunpack.c.l.b16 %v2178
      %v2222 = vunpack.c.l.b16 %v2179
      %v2223 = vunpack.c.l.b16 %v2180
      %v2224 = vunpack.c.l.b16 %v2181
      %v2225 = vunpack.c.l.b16 %v2182
      %v2226 = vunpack.c.l.b16 %v2183
      %v2227 = vunpack.c.l.b16 %v2184
      %v2228 = vunpack.c.l.b16 %v2185
      %v2229 = vunpack.c.l.b16 %v2186
      %v2230 = vunpack.c.l.b16 %v2187
      %v2231 = vpack.c.b16 %v2216, %v2215
      %v2232 = vpack.c.b16 %v2218, %v2217
      %v2233 = vpack.c.b16 %v2220, %v2219
      %v2234 = vpack.c.b16 %v2222, %v2221
      %v2235 = vpack.c.b16 %v2224, %v2223
      %v2236 = vpack.c.b16 %v2226, %v2225
      %v2237 = vpack.c.b16 %v2228, %v2227
      %v2238 = vpack.c.b16 %v2230, %v2229
      %2247 = vmatprep.subr.bf16.mxu0 0
      %2248 = vmatpush1.bf16.msra.mxu0 %v2238
      %2249 = vmatprep.subr.bf16.mxu0 0
      %2250 = vmatpush1.bf16.msra.mxu0 %v2237
      %2251 = vmatprep.subr.bf16.mxu0 0
      %2252 = vmatpush1.bf16.msra.mxu0 %v2236
      %2253 = vmatprep.subr.bf16.mxu0 0
      %2254 = vmatpush1.bf16.msra.mxu0 %v2235
      %2255 = vmatprep.subr.bf16.mxu0 0
      %2256 = vmatpush1.bf16.msra.mxu0 %v2234
      %2257 = vmatprep.subr.bf16.mxu0 0
      %2258 = vmatpush1.bf16.msra.mxu0 %v2233
      %2259 = vmatprep.subr.bf16.mxu0 0
      %2260 = vmatpush1.bf16.msra.mxu0 %v2232
      %2261 = vmatprep.subr.bf16.mxu0 0
      %2262 = vmatpush1.bf16.msra.mxu0 %v2231
      %2263 = vmatprep.subr.bf16.mxu0 0
      %2264 = vmatpush2.bf16.msra.mxu0 0
      %2265 = vmatprep.subr.bf16.mxu0 0
      %2266 = vmatpush2.bf16.msra.mxu0 0
      %2267 = vmatprep.subr.bf16.mxu0 0
      %2268 = vmatpush2.bf16.msra.mxu0 0
      %2269 = vmatprep.subr.bf16.mxu0 0
      %2270 = vmatpush2.bf16.msra.mxu0 0
      %2271 = vmatprep.subr.bf16.mxu0 0
      %2272 = vmatpush2.bf16.msra.mxu0 0
      %2273 = vmatprep.subr.bf16.mxu0 0
      %2274 = vmatpush2.bf16.msra.mxu0 0
      %2275 = vmatprep.subr.bf16.mxu0 0
      %2276 = vmatpush2.bf16.msra.mxu0 0
      %2277 = vmatprep.subr.bf16.mxu0 0
      %2278 = vmatpush2.bf16.msra.mxu0 0
      %2279 = vmatprep.mubr.bf16.mxu0 0
      %2280 = vmatmul.mubr.bf16.gmra.mxu0 %v1117
      %v2281 = vpop.f32.mrf.mxu0
      %v2282 = vadd.f32 0.0, %v2281
      %v2283 = vpop.f32.mrf.mxu0
      %v2284 = vpop.f32.mrf.mxu0
      %v2285 = vadd.f32 0.0, %v2284
      %v2286 = vpop.f32.mrf.mxu0
      %2287 = vmatprep.mubr.bf16.mxu0 0
      %2288 = vmatmul.mubr.bf16.gmra.mxu0 %v1126
      %v2289 = vpop.f32.mrf.mxu0
      %v2290 = vadd.f32 0.0, %v2289
      %v2291 = vpop.f32.mrf.mxu0
      %v2292 = vpop.f32.mrf.mxu0
      %v2293 = vadd.f32 0.0, %v2292
      %v2294 = vpop.f32.mrf.mxu0
      %2295 = vmatprep.mubr.bf16.mxu0 0
      %2296 = vmatmul.mubr.bf16.gmra.mxu0 %v1135
      %v2297 = vpop.f32.mrf.mxu0
      %v2298 = vadd.f32 0.0, %v2297
      %v2299 = vpop.f32.mrf.mxu0
      %v2300 = vpop.f32.mrf.mxu0
      %v2301 = vadd.f32 0.0, %v2300
      %v2302 = vpop.f32.mrf.mxu0
      %2303 = vmatprep.mubr.bf16.mxu0 0
      %2304 = vmatmul.mubr.bf16.gmra.mxu0 %v1144
      %v2305 = vpop.f32.mrf.mxu0
      %v2306 = vadd.f32 0.0, %v2305
      %v2307 = vpop.f32.mrf.mxu0
      %v2308 = vpop.f32.mrf.mxu0
      %v2309 = vadd.f32 0.0, %v2308
      %v2310 = vpop.f32.mrf.mxu0
      %2311 = vmatprep.mubr.bf16.mxu0 0
      %2312 = vmatmul.mubr.bf16.gmra.mxu0 %v1153
      %v2313 = vpop.f32.mrf.mxu0
      %v2314 = vadd.f32 0.0, %v2313
      %v2315 = vpop.f32.mrf.mxu0
      %v2316 = vpop.f32.mrf.mxu0
      %v2317 = vadd.f32 0.0, %v2316
      %v2318 = vpop.f32.mrf.mxu0
      %2319 = vmatprep.mubr.bf16.mxu0 0
      %2320 = vmatmul.mubr.bf16.gmra.mxu0 %v1162
      %v2321 = vpop.f32.mrf.mxu0
      %v2322 = vadd.f32 0.0, %v2321
      %v2323 = vpop.f32.mrf.mxu0
      %v2324 = vpop.f32.mrf.mxu0
      %v2325 = vadd.f32 0.0, %v2324
      %v2326 = vpop.f32.mrf.mxu0
      %2327 = vmatprep.mubr.bf16.mxu0 0
      %2328 = vmatmul.mubr.bf16.gmra.mxu0 %v1171
      %v2329 = vpop.f32.mrf.mxu0
      %v2330 = vadd.f32 0.0, %v2329
      %v2331 = vpop.f32.mrf.mxu0
      %v2332 = vpop.f32.mrf.mxu0
      %v2333 = vadd.f32 0.0, %v2332
      %v2334 = vpop.f32.mrf.mxu0
      %2335 = vmatprep.mubr.bf16.mxu0 0
      %2336 = vmatmul.mubr.bf16.gmra.mxu0 %v1180
      %v2337 = vpop.f32.mrf.mxu0
      %v2338 = vadd.f32 0.0, %v2337
      %v2339 = vpop.f32.mrf.mxu0
      %v2340 = vpop.f32.mrf.mxu0
      %v2341 = vadd.f32 0.0, %v2340
      %v2342 = vpop.f32.mrf.mxu0
      %2343 = vmatprep.mubr.bf16.mxu0 0
      %2344 = vmatmul.mubr.bf16.gmra.mxu0 %v1189
      %v2345 = vpop.f32.mrf.mxu0
      %v2346 = vadd.f32 0.0, %v2345
      %v2347 = vpop.f32.mrf.mxu0
      %v2348 = vpop.f32.mrf.mxu0
      %v2349 = vadd.f32 0.0, %v2348
      %v2350 = vpop.f32.mrf.mxu0
      %2351 = vmatprep.mubr.bf16.mxu0 0
      %2352 = vmatmul.mubr.bf16.gmra.mxu0 %v1198
      %v2353 = vpop.f32.mrf.mxu0
      %v2354 = vadd.f32 0.0, %v2353
      %v2355 = vpop.f32.mrf.mxu0
      %v2356 = vpop.f32.mrf.mxu0
      %v2357 = vadd.f32 0.0, %v2356
      %v2358 = vpop.f32.mrf.mxu0
      %2359 = vmatprep.mubr.bf16.mxu0 0
      %2360 = vmatmul.mubr.bf16.gmra.mxu0 %v1207
      %v2361 = vpop.f32.mrf.mxu0
      %v2362 = vadd.f32 0.0, %v2361
      %v2363 = vpop.f32.mrf.mxu0
      %v2364 = vpop.f32.mrf.mxu0
      %v2365 = vadd.f32 0.0, %v2364
      %v2366 = vpop.f32.mrf.mxu0
      %2367 = vmatprep.mubr.bf16.mxu0 0
      %2368 = vmatmul.mubr.bf16.gmra.mxu0 %v2196
      %v2369 = vpop.f32.mrf.mxu0
      %v2370 = vadd.f32 0.0, %v2369
      %v2371 = vpop.f32.mrf.mxu0
      %v2372 = vpop.f32.mrf.mxu0
      %v2373 = vadd.f32 0.0, %v2372
      %v2374 = vpop.f32.mrf.mxu0
      %2375 = vmatprep.mubr.bf16.mxu0 0
      %2376 = vmatmul.mubr.bf16.gmra.mxu0 %v2195
      %v2377 = vpop.f32.mrf.mxu0
      %v2378 = vadd.f32 0.0, %v2377
      %v2379 = vpop.f32.mrf.mxu0
      %v2380 = vpop.f32.mrf.mxu0
      %v2381 = vpop.f32.mrf.mxu0
      %2382 = vdwg.mxu0
      %v2383 = vadd.f32 %v2147, %v2282
      %v2384 = vadd.f32 %v2148, %v2285
      %v2385 = vadd.f32 %v2149, %v2290
      %v2386 = vadd.f32 %v2150, %v2293
      %v2387 = vadd.f32 %v2151, %v2298
      %v2388 = vadd.f32 %v2152, %v2301
      %v2389 = vadd.f32 %v2153, %v2306
      %v2390 = vadd.f32 %v2154, %v2309
      %v2391 = vadd.f32 %v2155, %v2314
      %v2392 = vadd.f32 %v2156, %v2317
      %v2393 = vadd.f32 %v2157, %v2322
      %v2394 = vadd.f32 %v2158, %v2325
      %v2395 = vadd.f32 %v2159, %v2330
      %v2396 = vadd.f32 %v2160, %v2333
      %v2397 = vadd.f32 %v2161, %v2338
      %v2398 = vadd.f32 %v2162, %v2341
      %v2399 = vadd.f32 %v2163, %v2346
      %v2400 = vadd.f32 %v2164, %v2349
      %v2401 = vadd.f32 %v2165, %v2354
      %v2402 = vadd.f32 %v2166, %v2357
      %v2403 = vadd.f32 %v2167, %v2362
      %v2404 = vadd.f32 %v2168, %v2365
      %v2405 = vadd.f32 %v2169, %v2370
      %v2406 = vadd.f32 %v2170, %v2373
      %v2407 = vadd.f32 %v2171, %v2378
      %v2408 = vld [vmem:[%s1 + $0x200] sm:$0xf]
      %v2409 = vld [vmem:[%s1 + $0x204] sm:$0xf]
      %v2410 = vld [vmem:[%s1 + $0x208] sm:$0xf]
      %v2411 = vld [vmem:[%s1 + $0x20c] sm:$0xf]
      %v2412 = vld [vmem:[%s1 + $0x210] sm:$0xf]
      %v2413 = vld [vmem:[%s1 + $0x214] sm:$0xf]
      %v2414 = vld [vmem:[%s1 + $0x218] sm:$0xf]
      %v2415 = vld [vmem:[%s1 + $0x21c] sm:$0xf]
      %v2416 = vld [vmem:[%s1 + $0x220] sm:$0xf]
      %v2417 = vld [vmem:[%s1 + $0x224] sm:$0xf]
      %v2418 = vld [vmem:[%s1 + $0x228] sm:$0xf]
      %v2419 = vld [vmem:[%s1 + $0x22c] sm:$0xf]
      %v2420 = vld [vmem:[%s1 + $0x230] sm:$0xf]
      %v2421 = vld [vmem:[%s1 + $0x234] sm:$0xf]
      %v2422 = vld [vmem:[%s1 + $0x238] sm:$0xf]
      %v2423 = vld [vmem:[%s1 + $0x23c] sm:$0xf]
      %v2424 = vpack.c.b16 %v1921, %v1077
      %v2425 = vpack.c.b16 %v1922, %v1922
      %v2444 = vunpack.c.l.b16 %v2408
      %v2445 = vunpack.c.l.b16 %v2409
      %v2446 = vunpack.c.l.b16 %v2410
      %v2447 = vunpack.c.l.b16 %v2411
      %v2448 = vunpack.c.l.b16 %v2412
      %v2449 = vunpack.c.l.b16 %v2413
      %v2450 = vunpack.c.l.b16 %v2414
      %v2451 = vunpack.c.l.b16 %v2415
      %v2452 = vunpack.c.l.b16 %v2416
      %v2453 = vunpack.c.l.b16 %v2417
      %v2454 = vunpack.c.l.b16 %v2418
      %v2455 = vunpack.c.l.b16 %v2419
      %v2456 = vunpack.c.l.b16 %v2420
      %v2457 = vunpack.c.l.b16 %v2421
      %v2458 = vunpack.c.l.b16 %v2422
      %v2459 = vunpack.c.l.b16 %v2423
      %v2460 = vpack.c.b16 %v2445, %v2444
      %v2461 = vpack.c.b16 %v2447, %v2446
      %v2462 = vpack.c.b16 %v2449, %v2448
      %v2463 = vpack.c.b16 %v2451, %v2450
      %v2464 = vpack.c.b16 %v2453, %v2452
      %v2465 = vpack.c.b16 %v2455, %v2454
      %v2466 = vpack.c.b16 %v2457, %v2456
      %v2467 = vpack.c.b16 %v2459, %v2458
      %2476 = vmatprep.subr.bf16.mxu0 0
      %2477 = vmatpush1.bf16.msra.mxu0 %v2467
      %2478 = vmatprep.subr.bf16.mxu0 0
      %2479 = vmatpush1.bf16.msra.mxu0 %v2466
      %2480 = vmatprep.subr.bf16.mxu0 0
      %2481 = vmatpush1.bf16.msra.mxu0 %v2465
      %2482 = vmatprep.subr.bf16.mxu0 0
      %2483 = vmatpush1.bf16.msra.mxu0 %v2464
      %2484 = vmatprep.subr.bf16.mxu0 0
      %2485 = vmatpush1.bf16.msra.mxu0 %v2463
      %2486 = vmatprep.subr.bf16.mxu0 0
      %2487 = vmatpush1.bf16.msra.mxu0 %v2462
      %2488 = vmatprep.subr.bf16.mxu0 0
      %2489 = vmatpush1.bf16.msra.mxu0 %v2461
      %2490 = vmatprep.subr.bf16.mxu0 0
      %2491 = vmatpush1.bf16.msra.mxu0 %v2460
      %2492 = vmatprep.subr.bf16.mxu0 0
      %2493 = vmatpush2.bf16.msra.mxu0 0
      %2494 = vmatprep.subr.bf16.mxu0 0
      %2495 = vmatpush2.bf16.msra.mxu0 0
      %2496 = vmatprep.subr.bf16.mxu0 0
      %2497 = vmatpush2.bf16.msra.mxu0 0
      %2498 = vmatprep.subr.bf16.mxu0 0
      %2499 = vmatpush2.bf16.msra.mxu0 0
      %2500 = vmatprep.subr.bf16.mxu0 0
      %2501 = vmatpush2.bf16.msra.mxu0 0
      %2502 = vmatprep.subr.bf16.mxu0 0
      %2503 = vmatpush2.bf16.msra.mxu0 0
      %2504 = vmatprep.subr.bf16.mxu0 0
      %2505 = vmatpush2.bf16.msra.mxu0 0
      %2506 = vmatprep.subr.bf16.mxu0 0
      %2507 = vmatpush2.bf16.msra.mxu0 0
      %2508 = vmatprep.mubr.bf16.mxu0 0
      %2509 = vmatmul.mubr.bf16.gmra.mxu0 %v285
      %v2510 = vpop.f32.mrf.mxu0
      %v2511 = vadd.f32 0.0, %v2510
      %v2512 = vpop.f32.mrf.mxu0
      %v2513 = vpop.f32.mrf.mxu0
      %v2514 = vadd.f32 0.0, %v2513
      %v2515 = vpop.f32.mrf.mxu0
      %2516 = vmatprep.mubr.bf16.mxu0 0
      %2517 = vmatmul.mubr.bf16.gmra.mxu0 %v286
      %v2518 = vpop.f32.mrf.mxu0
      %v2519 = vadd.f32 0.0, %v2518
      %v2520 = vpop.f32.mrf.mxu0
      %v2521 = vpop.f32.mrf.mxu0
      %v2522 = vadd.f32 0.0, %v2521
      %v2523 = vpop.f32.mrf.mxu0
      %2524 = vmatprep.mubr.bf16.mxu0 0
      %2525 = vmatmul.mubr.bf16.gmra.mxu0 %v287
      %v2526 = vpop.f32.mrf.mxu0
      %v2527 = vadd.f32 0.0, %v2526
      %v2528 = vpop.f32.mrf.mxu0
      %v2529 = vpop.f32.mrf.mxu0
      %v2530 = vadd.f32 0.0, %v2529
      %v2531 = vpop.f32.mrf.mxu0
      %2532 = vmatprep.mubr.bf16.mxu0 0
      %2533 = vmatmul.mubr.bf16.gmra.mxu0 %v288
      %v2534 = vpop.f32.mrf.mxu0
      %v2535 = vadd.f32 0.0, %v2534
      %v2536 = vpop.f32.mrf.mxu0
      %v2537 = vpop.f32.mrf.mxu0
      %v2538 = vadd.f32 0.0, %v2537
      %v2539 = vpop.f32.mrf.mxu0
      %2540 = vmatprep.mubr.bf16.mxu0 0
      %2541 = vmatmul.mubr.bf16.gmra.mxu0 %v289
      %v2542 = vpop.f32.mrf.mxu0
      %v2543 = vadd.f32 0.0, %v2542
      %v2544 = vpop.f32.mrf.mxu0
      %v2545 = vpop.f32.mrf.mxu0
      %v2546 = vadd.f32 0.0, %v2545
      %v2547 = vpop.f32.mrf.mxu0
      %2548 = vmatprep.mubr.bf16.mxu0 0
      %2549 = vmatmul.mubr.bf16.gmra.mxu0 %v290
      %v2550 = vpop.f32.mrf.mxu0
      %v2551 = vadd.f32 0.0, %v2550
      %v2552 = vpop.f32.mrf.mxu0
      %v2553 = vpop.f32.mrf.mxu0
      %v2554 = vadd.f32 0.0, %v2553
      %v2555 = vpop.f32.mrf.mxu0
      %2556 = vmatprep.mubr.bf16.mxu0 0
      %2557 = vmatmul.mubr.bf16.gmra.mxu0 %v291
      %v2558 = vpop.f32.mrf.mxu0
      %v2559 = vadd.f32 0.0, %v2558
      %v2560 = vpop.f32.mrf.mxu0
      %v2561 = vpop.f32.mrf.mxu0
      %v2562 = vadd.f32 0.0, %v2561
      %v2563 = vpop.f32.mrf.mxu0
      %2564 = vmatprep.mubr.bf16.mxu0 0
      %2565 = vmatmul.mubr.bf16.gmra.mxu0 %v292
      %v2566 = vpop.f32.mrf.mxu0
      %v2567 = vadd.f32 0.0, %v2566
      %v2568 = vpop.f32.mrf.mxu0
      %v2569 = vpop.f32.mrf.mxu0
      %v2570 = vadd.f32 0.0, %v2569
      %v2571 = vpop.f32.mrf.mxu0
      %2572 = vmatprep.mubr.bf16.mxu0 0
      %2573 = vmatmul.mubr.bf16.gmra.mxu0 %v293
      %v2574 = vpop.f32.mrf.mxu0
      %v2575 = vadd.f32 0.0, %v2574
      %v2576 = vpop.f32.mrf.mxu0
      %v2577 = vpop.f32.mrf.mxu0
      %v2578 = vadd.f32 0.0, %v2577
      %v2579 = vpop.f32.mrf.mxu0
      %2580 = vmatprep.mubr.bf16.mxu0 0
      %2581 = vmatmul.mubr.bf16.gmra.mxu0 %v294
      %v2582 = vpop.f32.mrf.mxu0
      %v2583 = vadd.f32 0.0, %v2582
      %v2584 = vpop.f32.mrf.mxu0
      %v2585 = vpop.f32.mrf.mxu0
      %v2586 = vadd.f32 0.0, %v2585
      %v2587 = vpop.f32.mrf.mxu0
      %2588 = vmatprep.mubr.bf16.mxu0 0
      %2589 = vmatmul.mubr.bf16.gmra.mxu0 %v1446
      %v2590 = vpop.f32.mrf.mxu0
      %v2591 = vadd.f32 0.0, %v2590
      %v2592 = vpop.f32.mrf.mxu0
      %v2593 = vpop.f32.mrf.mxu0
      %v2594 = vadd.f32 0.0, %v2593
      %v2595 = vpop.f32.mrf.mxu0
      %2596 = vmatprep.mubr.bf16.mxu0 0
      %2597 = vmatmul.mubr.bf16.gmra.mxu0 %v2424
      %v2598 = vpop.f32.mrf.mxu0
      %v2599 = vadd.f32 0.0, %v2598
      %v2600 = vpop.f32.mrf.mxu0
      %v2601 = vpop.f32.mrf.mxu0
      %v2602 = vadd.f32 0.0, %v2601
      %v2603 = vpop.f32.mrf.mxu0
      %2604 = vmatprep.mubr.bf16.mxu0 0
      %2605 = vmatmul.mubr.bf16.gmra.mxu0 %v2425
      %v2606 = vpop.f32.mrf.mxu0
      %v2607 = vadd.f32 0.0, %v2606
      %v2608 = vpop.f32.mrf.mxu0
      %v2609 = vpop.f32.mrf.mxu0
      %v2610 = vpop.f32.mrf.mxu0
      %2611 = vdwg.mxu0
      %v2612 = vadd.f32 %v2383, %v2511
      %v2613 = vadd.f32 %v2384, %v2514
      %v2614 = vadd.f32 %v2385, %v2519
      %v2615 = vadd.f32 %v2386, %v2522
      %v2616 = vadd.f32 %v2387, %v2527
      %v2617 = vadd.f32 %v2388, %v2530
      %v2618 = vadd.f32 %v2389, %v2535
      %v2619 = vadd.f32 %v2390, %v2538
      %v2620 = vadd.f32 %v2391, %v2543
      %v2621 = vadd.f32 %v2392, %v2546
      %v2622 = vadd.f32 %v2393, %v2551
      %v2623 = vadd.f32 %v2394, %v2554
      %v2624 = vadd.f32 %v2395, %v2559
      %v2625 = vadd.f32 %v2396, %v2562
      %v2626 = vadd.f32 %v2397, %v2567
      %v2627 = vadd.f32 %v2398, %v2570
      %v2628 = vadd.f32 %v2399, %v2575
      %v2629 = vadd.f32 %v2400, %v2578
      %v2630 = vadd.f32 %v2401, %v2583
      %v2631 = vadd.f32 %v2402, %v2586
      %v2632 = vadd.f32 %v2403, %v2591
      %v2633 = vadd.f32 %v2404, %v2594
      %v2634 = vadd.f32 %v2405, %v2599
      %v2635 = vadd.f32 %v2406, %v2602
      %v2636 = vadd.f32 %v2407, %v2607
      %v2637 = vld [vmem:[%s2] sm:$0x1]
      %v2639 = vlaneseq
      %v2640 = vshrl.u32 %v2639, 7
      %v2641 = vsub.s32 0, %v2640
      %v2642 = vrot.slane %v2637, %v2641
      %v2644 = vadd.f32 %v2612, %v2642
      %v2645 = vadd.f32 %v2613, %v2642
      %v2646 = vadd.f32 %v2614, %v2642
      %v2647 = vadd.f32 %v2615, %v2642
      %v2648 = vadd.f32 %v2616, %v2642
      %v2649 = vadd.f32 %v2617, %v2642
      %v2650 = vadd.f32 %v2618, %v2642
      %v2651 = vadd.f32 %v2619, %v2642
      %v2652 = vadd.f32 %v2620, %v2642
      %v2653 = vadd.f32 %v2621, %v2642
      %v2654 = vadd.f32 %v2622, %v2642
      %v2655 = vadd.f32 %v2623, %v2642
      %v2656 = vadd.f32 %v2624, %v2642
      %v2657 = vadd.f32 %v2625, %v2642
      %v2658 = vadd.f32 %v2626, %v2642
      %v2659 = vadd.f32 %v2627, %v2642
      %v2660 = vadd.f32 %v2628, %v2642
      %v2661 = vadd.f32 %v2629, %v2642
      %v2662 = vadd.f32 %v2630, %v2642
      %v2663 = vadd.f32 %v2631, %v2642
      %v2664 = vadd.f32 %v2632, %v2642
      %v2665 = vadd.f32 %v2633, %v2642
      %v2666 = vadd.f32 %v2634, %v2642
      %v2667 = vadd.f32 %v2635, %v2642
      %v2668 = vadd.f32 %v2636, %v2642
      %v2669 = vmax.f32 %v2644, 0.0
      %v2670 = vmax.f32 %v2645, 0.0
      %v2671 = vmax.f32 %v2646, 0.0
      %v2672 = vmax.f32 %v2647, 0.0
      %v2673 = vmax.f32 %v2648, 0.0
      %v2674 = vmax.f32 %v2649, 0.0
      %v2675 = vmax.f32 %v2650, 0.0
      %v2676 = vmax.f32 %v2651, 0.0
      %v2677 = vmax.f32 %v2652, 0.0
      %v2678 = vmax.f32 %v2653, 0.0
      %v2679 = vmax.f32 %v2654, 0.0
      %v2680 = vmax.f32 %v2655, 0.0
      %v2681 = vmax.f32 %v2656, 0.0
      %v2682 = vmax.f32 %v2657, 0.0
      %v2683 = vmax.f32 %v2658, 0.0
      %v2684 = vmax.f32 %v2659, 0.0
      %v2685 = vmax.f32 %v2660, 0.0
      %v2686 = vmax.f32 %v2661, 0.0
      %v2687 = vmax.f32 %v2662, 0.0
      %v2688 = vmax.f32 %v2663, 0.0
      %v2689 = vmax.f32 %v2664, 0.0
      %v2690 = vmax.f32 %v2665, 0.0
      %v2691 = vmax.f32 %v2666, 0.0
      %v2692 = vmax.f32 %v2667, 0.0
      %v2693 = vmax.f32 %v2668, 0.0
      %v2694 = vpack.c.bf16 %v2670, %v2669
      %v2695 = vpack.c.bf16 %v2672, %v2671
      %v2696 = vpack.c.bf16 %v2674, %v2673
      %v2697 = vpack.c.bf16 %v2676, %v2675
      %v2698 = vpack.c.bf16 %v2678, %v2677
      %v2699 = vpack.c.bf16 %v2680, %v2679
      %v2700 = vpack.c.bf16 %v2682, %v2681
      %v2701 = vpack.c.bf16 %v2684, %v2683
      %v2702 = vpack.c.bf16 %v2686, %v2685
      %v2703 = vpack.c.bf16 %v2688, %v2687
      %v2704 = vpack.c.bf16 %v2690, %v2689
      %v2705 = vpack.c.bf16 %v2692, %v2691
      %v2706 = vpack.c.bf16 %v2693, %v2693
      %v2720 = vunpack.c.l.b16 %v2694
      %v2721 = vunpack.c.h.b16 %v2694
      %v2722 = vunpack.c.l.b16 %v2695
      %v2723 = vunpack.c.h.b16 %v2695
      %v2724 = vunpack.c.l.b16 %v2696
      %v2725 = vunpack.c.h.b16 %v2696
      %v2726 = vunpack.c.l.b16 %v2697
      %v2727 = vunpack.c.h.b16 %v2697
      %v2728 = vunpack.c.l.b16 %v2698
      %v2729 = vunpack.c.h.b16 %v2698
      %v2730 = vunpack.c.l.b16 %v2699
      %v2731 = vunpack.c.h.b16 %v2699
      %v2732 = vunpack.c.l.b16 %v2700
      %v2733 = vunpack.c.h.b16 %v2700
      %v2734 = vunpack.c.l.b16 %v2701
      %v2735 = vunpack.c.h.b16 %v2701
      %v2736 = vunpack.c.l.b16 %v2702
      %v2737 = vunpack.c.h.b16 %v2702
      %v2738 = vunpack.c.l.b16 %v2703
      %v2739 = vunpack.c.h.b16 %v2703
      %v2740 = vunpack.c.l.b16 %v2704
      %v2741 = vunpack.c.h.b16 %v2704
      %v2742 = vunpack.c.l.b16 %v2705
      %v2743 = vunpack.c.h.b16 %v2705
      %v2744 = vunpack.c.l.b16 %v2706
      %v2745 = vpack.c.b16 %v2720, %v2720
      %v2746 = vpack.c.b16 %v2721, %v2721
      %v2747 = vpack.c.b16 %v2722, %v2722
      %v2748 = vpack.c.b16 %v2723, %v2723
      %v2749 = vpack.c.b16 %v2724, %v2724
      %v2750 = vpack.c.b16 %v2725, %v2725
      %v2751 = vpack.c.b16 %v2726, %v2726
      %v2752 = vpack.c.b16 %v2727, %v2727
      %v2753 = vpack.c.b16 %v2728, %v2728
      %v2754 = vpack.c.b16 %v2729, %v2729
      %v2755 = vpack.c.b16 %v2730, %v2730
      %v2756 = vpack.c.b16 %v2731, %v2731
      %v2757 = vpack.c.b16 %v2732, %v2732
      %v2758 = vpack.c.b16 %v2733, %v2733
      %v2759 = vpack.c.b16 %v2734, %v2734
      %v2760 = vpack.c.b16 %v2735, %v2735
      %v2761 = vpack.c.b16 %v2736, %v2736
      %v2762 = vpack.c.b16 %v2737, %v2737
      %v2763 = vpack.c.b16 %v2738, %v2738
      %v2764 = vpack.c.b16 %v2739, %v2739
      %v2765 = vpack.c.b16 %v2740, %v2740
      %v2766 = vpack.c.b16 %v2741, %v2741
      %v2767 = vpack.c.b16 %v2742, %v2742
      %v2768 = vpack.c.b16 %v2743, %v2743
      %v2769 = vpack.c.b16 %v2744, %v2744
      %2795 = vst [vmem:[%s170] sm:$0xf] %v2745
      %2796 = vst [vmem:[%s170 + $0x4] sm:$0xf] %v2746
      %2797 = vst [vmem:[%s170 + $0x8] sm:$0xf] %v2747
      %2798 = vst [vmem:[%s170 + $0xc] sm:$0xf] %v2748
      %2799 = vst [vmem:[%s170 + $0x10] sm:$0xf] %v2749
      %2800 = vst [vmem:[%s170 + $0x14] sm:$0xf] %v2750
      %2801 = vst [vmem:[%s170 + $0x18] sm:$0xf] %v2751
      %2802 = vst [vmem:[%s170 + $0x1c] sm:$0xf] %v2752
      %2803 = vst [vmem:[%s170 + $0x20] sm:$0xf] %v2753
      %2804 = vst [vmem:[%s170 + $0x24] sm:$0xf] %v2754
      %2805 = vst [vmem:[%s170 + $0x28] sm:$0xf] %v2755
      %2806 = vst [vmem:[%s170 + $0x2c] sm:$0xf] %v2756
      %2807 = vst [vmem:[%s170 + $0x30] sm:$0xf] %v2757
      %2808 = vst [vmem:[%s170 + $0x34] sm:$0xf] %v2758
      %2809 = vst [vmem:[%s170 + $0x38] sm:$0xf] %v2759
      %2810 = vst [vmem:[%s170 + $0x3c] sm:$0xf] %v2760
      %2811 = vst [vmem:[%s170 + $0x40] sm:$0xf] %v2761
      %2812 = vst [vmem:[%s170 + $0x44] sm:$0xf] %v2762
      %2813 = vst [vmem:[%s170 + $0x48] sm:$0xf] %v2763
      %2814 = vst [vmem:[%s170 + $0x4c] sm:$0xf] %v2764
      %2815 = vst [vmem:[%s170 + $0x50] sm:$0xf] %v2765
      %2816 = vst [vmem:[%s170 + $0x54] sm:$0xf] %v2766
      %2817 = vst [vmem:[%s170 + $0x58] sm:$0xf] %v2767
      %2818 = vst [vmem:[%s170 + $0x5c] sm:$0xf] %v2768
      %vm2819 = vcmask 1041408
      %vm2820 = vsmask.f32 1280
      %vm2821 = vmand %vm2819, %vm2820
      %v2822 = vld [vmem:[%s170 + $0x60] sm:$0x3]
      %v2823 = vsel %vm2821, %v2769, %v2822
      %2824 = vst [vmem:[%s170 + $0x60] sm:$0x3] %v2823
      %p2825 = scmp.lt.s32.totalorder %s14, 1
      %s2826 = scalar_select %p2825, %s14, 1
      %s2827 = smul.addr %s2826, 25
      %s2828 = smul.addr %s2827, 4
      %s2829 = scalar_lea.vmem %s3, %s2828
      // Predicated region
      $region33: #{inception_fid_forward.13} parent=31 // pred_check
        %p2830 = pneg %p100
      $region34: #{inception_fid_forward.13} parent=31 // pred_check_branch
        %2832 = sbr.rel (%p2830) target = $region36
      $region35: #{inception_fid_forward.13} parent=31 // pred_region
        _
      $region36: #{inception_fid_forward.13} parent=31 // pred_fallthru
        _
    $region32: #{inception_fid_forward.13} parent=5 // pred_fallthru
      _
    %p2833 = scmp.le.s32.totalorder 2, %s9
    // Predicated region
    $region37: #{inception_fid_forward.13} parent=5 // pred_check
      %p2834 = pneg %p2833
    $region38: #{inception_fid_forward.13} parent=5 // pred_check_branch
      %2836 = sbr.rel (%p2834) target = $region40
    $region39: #{inception_fid_forward.13} parent=5 // pred_region
      %s2837 = ssub.s32 %s9, 2
      // Predicated region
      $region41: #{inception_fid_forward.13} parent=39 // pred_check
        %p2838 = pneg %p106
      $region42: #{inception_fid_forward.13} parent=39 // pred_check_branch
        %2840 = sbr.rel (%p2838) target = $region44
      $region43: #{inception_fid_forward.13} parent=39 // pred_region
        %p2841 = scmp.lt.s32.totalorder %s15, 1
        %s2842 = scalar_select %p2841, %s15, 1
        %s2843 = smul.addr %s2842, 25
        %s2844 = smul.addr %s2843, 4
        %s2845 = scalar_lea.vmem %s3, %s2844
      $region44: #{inception_fid_forward.13} parent=39 // pred_fallthru
        _
    $region40: #{inception_fid_forward.13} parent=5 // pred_fallthru
      _
  $region6: #{inception_fid_forward.13} parent=0 // loop_footer
    %s13 = sadd.s32 1, %s9
  $region7: #{inception_fid_forward.13} parent=0 // loop_footer_branch
    %8 = sbr.rel target = $region3
  $region8: #{inception_fid_forward.13} parent=0 // loop_exit
    _

// kernel: inception_fid_forward.15
$region0: #{inception_fid_forward.15}
  #allocation0 [shape = 'u32[]', space=smem, size = 0x4, offset = 0x4, fixed_abs, tag = 'smem constant byte address 0x4 - core index']
  #allocation1 [shape = 'u32[144,128]{1,0:T(1,128)}', space=vmem, size = 0x12000, scoped, tag = 'internal scratch']
  %s0 = inlined_call_operand.vmem [shape: bf16[2,13,13,128], index: 0, kind: input, shape index: {}]
  %s1 = inlined_call_operand.vmem [shape: bf16[2,11,11,128], index: 1, kind: output, shape index: {}]
  %s2 = sld [smem:[#allocation0]]
  $region37: #{inception_fid_forward.15} parent=0
    _
  %s4 = ssub.s32 1, %s2
  %s5 = scalar_select 0, %s4, %s2
  loop: start=0, step=1, limit=4
  $region2: #{inception_fid_forward.15} parent=0 // loop_pre_header
    _
  $region3: #{inception_fid_forward.15} parent=0 // loop_header
    %s7 = sphi 0, %s11
    %p8 = scmp.ge.s32.totalorder %s7, 4
    %s17 = sphi 0, %s19
    %s20 = sphi 0, %s17
    %s21 = sphi 0, %s20
    %s37 = sphi 0, %s21
    %s43 = sphi 0, %s45
    %s46 = sphi 0, %s43
    %s47 = sphi 0, %s46
    %s63 = sphi 0, %s47
  $region4: #{inception_fid_forward.15} parent=0 // loop_header_branch
    %10 = sbr.rel (%p8) target = $region8
  $region5: #{inception_fid_forward.15} parent=0 // loop_body
    %s12 = ssub.s32 %s7, 1
    %s13 = ssub.s32 %s7, 2
    %s14 = sadd.s32 %s7, 1
    %s15 = ssub.s32 %s7, %s14
    %p16 = scmp.eq.s32.totalorder %s15, 0
    %s18 = sadd.s32 %s17, 1
    %s19 = scalar_select %p16, %s17, %s18
    %p22 = pneg %p16
    %p23 = scmp.eq.s32.totalorder %s7, 1
    %p24 = por %p22, %p23
    %p25 = scmp.ne.s32.totalorder %s17, %s20
    %p26 = scmp.eq.s32.totalorder %s7, 0
    %p27 = por %p25, %p26
    %p28 = scmp.ne.s32.totalorder %s17, %s20
    %p29 = scmp.eq.s32.totalorder %s12, 1
    %p30 = por %p28, %p29
    %p31 = scmp.ne.s32.totalorder %s20, %s21
    %p32 = scmp.eq.s32.totalorder %s12, 0
    %p33 = por %p31, %p32
    %p34 = scmp.ne.s32.totalorder %s20, %s21
    %p35 = scmp.eq.s32.totalorder %s13, 1
    %p36 = por %p34, %p35
    %p38 = scmp.ne.s32.totalorder %s21, %s37
    %p39 = scmp.eq.s32.totalorder %s13, 0
    %p40 = por %p38, %p39
    %s41 = ssub.s32 %s7, %s14
    %p42 = scmp.eq.s32.totalorder %s41, 0
    %s44 = sadd.s32 %s43, 1
    %s45 = scalar_select %p42, %s43, %s44
    %p48 = pneg %p42
    %p49 = scmp.eq.s32.totalorder %s7, 1
    %p50 = por %p48, %p49
    %p51 = scmp.ne.s32.totalorder %s43, %s46
    %p52 = scmp.eq.s32.totalorder %s7, 0
    %p53 = por %p51, %p52
    %p54 = scmp.ne.s32.totalorder %s43, %s46
    %p55 = scmp.eq.s32.totalorder %s12, 1
    %p56 = por %p54, %p55
    %p57 = scmp.ne.s32.totalorder %s46, %s47
    %p58 = scmp.eq.s32.totalorder %s12, 0
    %p59 = por %p57, %p58
    %p60 = scmp.ne.s32.totalorder %s46, %s47
    %p61 = scmp.eq.s32.totalorder %s13, 1
    %p62 = por %p60, %p61
    %p64 = scmp.ne.s32.totalorder %s47, %s63
    %p65 = scmp.eq.s32.totalorder %s13, 0
    %p66 = por %p64, %p65
    %p67 = scmp.le.s32.totalorder 1, %s7
    %p68 = scmp.lt.s32.totalorder %s7, 3
    %p69 = pnand %p67, %p68
    %p70 = pneg %p69
    // Predicated region
    $region9: #{inception_fid_forward.15} parent=5 // pred_check
      _
    $region10: #{inception_fid_forward.15} parent=5 // pred_check_branch
      %72 = sbr.rel (%p69) target = $region12
    $region11: #{inception_fid_forward.15} parent=5 // pred_region
      %s73 = ssub.s32 %s7, 1
    $region12: #{inception_fid_forward.15} parent=5 // pred_fallthru
      _
    %p74 = scmp.lt.s32.totalorder %s7, 2
    // Predicated region
    $region13: #{inception_fid_forward.15} parent=5 // pred_check
      %p75 = pneg %p74
    $region14: #{inception_fid_forward.15} parent=5 // pred_check_branch
      %77 = sbr.rel (%p75) target = $region16
    $region15: #{inception_fid_forward.15} parent=5 // pred_region
      // Predicated region
      $region17: #{inception_fid_forward.15} parent=15 // pred_check
        %p78 = pneg %p27
      $region18: #{inception_fid_forward.15} parent=15 // pred_check_branch
        %80 = sbr.rel (%p78) target = $region20
      $region19: #{inception_fid_forward.15} parent=15 // pred_region
        %p81 = scmp.lt.s32.totalorder %s7, 1
        %s82 = scalar_select %p81, %s7, 1
        %s83 = smul.addr %s82, 26
        %s84 = smul.addr %s83, 4
        %s85 = scalar_lea.vmem %s0, %s84
      $region20: #{inception_fid_forward.15} parent=15 // pred_fallthru
        _
    $region16: #{inception_fid_forward.15} parent=5 // pred_fallthru
      _
    %p86 = scmp.le.s32.totalorder 1, %s7
    %p87 = scmp.lt.s32.totalorder %s7, 3
    %p88 = pnand %p86, %p87
    %p89 = pneg %p88
    // Predicated region
    $region21: #{inception_fid_forward.15} parent=5 // pred_check
      _
    $region22: #{inception_fid_forward.15} parent=5 // pred_check_branch
      %91 = sbr.rel (%p88) target = $region24
    $region23: #{inception_fid_forward.15} parent=5 // pred_region
      %s92 = ssub.s32 %s7, 1
      %p93 = scmp.lt.s32.totalorder %s12, 1
      %s94 = scalar_select %p93, %s12, 1
      %s95 = smul.addr %s94, 26
      %s96 = smul.addr %s95, 4
      %s97 = scalar_lea.vmem %s0, %s96
      %p98 = pneg %p33
      %p99 = pneg %p30
      %p100 = pneg %p59
      %p101 = pneg %p56
      %p102 = scmp.lt.s32.totalorder %s12, 1
      %s103 = scalar_select %p102, %s12, 1
      %s104 = smul.addr %s103, 22
      %s105 = smul.addr %s104, 4
      %s106 = scalar_lea.vmem %s1, %s105
      %p107 = scmp.lt.s32.totalorder %s12, 1
      %s108 = scalar_select %p107, %s12, 1
      %s109 = smul.addr %s108, 26
      %s110 = smul.addr %s109, 4
      %s111 = scalar_lea.vmem %s0, %s110
      %p112 = scmp.lt.s32.totalorder %s12, 1
      %s113 = scalar_select %p112, %s12, 1
      %s114 = smul.addr %s113, 22
      %s115 = smul.addr %s114, 4
      %s116 = scalar_lea.vmem %s1, %s115
      %v117 = vld [vmem:[%s111] sm:$0xf]
      %v118 = vld [vmem:[%s111 + $0x4] sm:$0x7]
      %v119 = vld [vmem:[%s111 + $0x8] sm:$0xf]
      %v120 = vld [vmem:[%s111 + $0xc] sm:$0x7]
      %v121 = vld [vmem:[%s111 + $0x10] sm:$0xf]
      %v122 = vld [vmem:[%s111 + $0x14] sm:$0x7]
      %v123 = vld [vmem:[%s111 + $0x18] sm:$0xf]
      %v124 = vld [vmem:[%s111 + $0x1c] sm:$0x7]
      %v125 = vld [vmem:[%s111 + $0x20] sm:$0xf]
      %v126 = vld [vmem:[%s111 + $0x24] sm:$0x7]
      %v127 = vld [vmem:[%s111 + $0x28] sm:$0xf]
      %v128 = vld [vmem:[%s111 + $0x2c] sm:$0x7]
      %v129 = vld [vmem:[%s111 + $0x30] sm:$0xf]
      %v130 = vld [vmem:[%s111 + $0x34] sm:$0x7]
      %v131 = vld [vmem:[%s111 + $0x38] sm:$0xf]
      %v132 = vld [vmem:[%s111 + $0x3c] sm:$0x7]
      %v133 = vld [vmem:[%s111 + $0x40] sm:$0xf]
      %v134 = vld [vmem:[%s111 + $0x44] sm:$0x7]
      %v135 = vld [vmem:[%s111 + $0x48] sm:$0xf]
      %v136 = vld [vmem:[%s111 + $0x4c] sm:$0x7]
      %v137 = vld [vmem:[%s111 + $0x50] sm:$0xf]
      %v138 = vld [vmem:[%s111 + $0x54] sm:$0x7]
      %v139 = vld [vmem:[%s111 + $0x58] sm:$0xf]
      %v140 = vld [vmem:[%s111 + $0x5c] sm:$0x7]
      %v141 = vld [vmem:[%s111 + $0x60] sm:$0xf]
      %v142 = vld [vmem:[%s111 + $0x64] sm:$0x7]
      %vm143 = vsmask.f32 3328
      %vm144 = vsmask.f32 7440
      %vm145 = vmor %vm143, %vm144
      %v147 = vshrl.u32 %v117, 16
      %v149 = vrot.slane %v147, 4
      %v150 = vshll.u32 %v117, 16
      %v152 = vrot.slane %v150, 5
      %v153 = vor.u32 %v149, %v152
      %v154 = vrot.slane %v153, 4
      %v156 = vshll.u32 %v118, 16
      %v158 = vrot.slane %v156, 5
      %v159 = vsel %vm145, %v154, %v158
      %v160 = vshrl.u32 %v118, 16
      %v162 = vrot.slane %v160, 4
      %v163 = vor.u32 %v162, %v158
      %v164 = vrot.slane %v163, 4
      %v166 = vshrl.u32 %v119, 16
      %v168 = vrot.slane %v166, 4
      %v169 = vshll.u32 %v119, 16
      %v171 = vrot.slane %v169, 5
      %v172 = vor.u32 %v168, %v171
      %v173 = vrot.slane %v172, 4
      %v175 = vshll.u32 %v120, 16
      %v177 = vrot.slane %v175, 5
      %v178 = vsel %vm145, %v173, %v177
      %v179 = vshrl.u32 %v120, 16
      %v181 = vrot.slane %v179, 4
      %v182 = vor.u32 %v181, %v177
      %v183 = vrot.slane %v182, 4
      %v185 = vshrl.u32 %v121, 16
      %v187 = vrot.slane %v185, 4
      %v188 = vshll.u32 %v121, 16
      %v190 = vrot.slane %v188, 5
      %v191 = vor.u32 %v187, %v190
      %v192 = vrot.slane %v191, 4
      %v194 = vshll.u32 %v122, 16
      %v196 = vrot.slane %v194, 5
      %v197 = vsel %vm145, %v192, %v196
      %v198 = vshrl.u32 %v122, 16
      %v200 = vrot.slane %v198, 4
      %v201 = vor.u32 %v200, %v196
      %v202 = vrot.slane %v201, 4
      %v204 = vshrl.u32 %v123, 16
      %v206 = vrot.slane %v204, 4
      %v207 = vshll.u32 %v123, 16
      %v209 = vrot.slane %v207, 5
      %v210 = vor.u32 %v206, %v209
      %v211 = vrot.slane %v210, 4
      %v213 = vshll.u32 %v124, 16
      %v215 = vrot.slane %v213, 5
      %v216 = vsel %vm145, %v211, %v215
      %v217 = vshrl.u32 %v124, 16
      %v219 = vrot.slane %v217, 4
      %v220 = vor.u32 %v219, %v215
      %v221 = vrot.slane %v220, 4
      %v223 = vshrl.u32 %v125, 16
      %v225 = vrot.slane %v223, 4
      %v226 = vshll.u32 %v125, 16
      %v228 = vrot.slane %v226, 5
      %v229 = vor.u32 %v225, %v228
      %v230 = vrot.slane %v229, 4
      %v232 = vshll.u32 %v126, 16
      %v234 = vrot.slane %v232, 5
      %v235 = vsel %vm145, %v230, %v234
      %v236 = vshrl.u32 %v126, 16
      %v238 = vrot.slane %v236, 4
      %v239 = vor.u32 %v238, %v234
      %v240 = vrot.slane %v239, 4
      %v242 = vshrl.u32 %v127, 16
      %v244 = vrot.slane %v242, 4
      %v245 = vshll.u32 %v127, 16
      %v247 = vrot.slane %v245, 5
      %v248 = vor.u32 %v244, %v247
      %v249 = vrot.slane %v248, 4
      %v251 = vshll.u32 %v128, 16
      %v253 = vrot.slane %v251, 5
      %v254 = vsel %vm145, %v249, %v253
      %v255 = vshrl.u32 %v128, 16
      %v257 = vrot.slane %v255, 4
      %v258 = vor.u32 %v257, %v253
      %v259 = vrot.slane %v258, 4
      %v261 = vshrl.u32 %v129, 16
      %v263 = vrot.slane %v261, 4
      %v264 = vshll.u32 %v129, 16
      %v266 = vrot.slane %v264, 5
      %v267 = vor.u32 %v263, %v266
      %v268 = vrot.slane %v267, 4
      %v270 = vshll.u32 %v130, 16
      %v272 = vrot.slane %v270, 5
      %v273 = vsel %vm145, %v268, %v272
      %v274 = vshrl.u32 %v130, 16
      %v276 = vrot.slane %v274, 4
      %v277 = vor.u32 %v276, %v272
      %v278 = vrot.slane %v277, 4
      %v280 = vshrl.u32 %v131, 16
      %v282 = vrot.slane %v280, 4
      %v283 = vshll.u32 %v131, 16
      %v285 = vrot.slane %v283, 5
      %v286 = vor.u32 %v282, %v285
      %v287 = vrot.slane %v286, 4
      %v289 = vshll.u32 %v132, 16
      %v291 = vrot.slane %v289, 5
      %v292 = vsel %vm145, %v287, %v291
      %v293 = vshrl.u32 %v132, 16
      %v295 = vrot.slane %v293, 4
      %v296 = vor.u32 %v295, %v291
      %v297 = vrot.slane %v296, 4
      %v299 = vshrl.u32 %v133, 16
      %v301 = vrot.slane %v299, 4
      %v302 = vshll.u32 %v133, 16
      %v304 = vrot.slane %v302, 5
      %v305 = vor.u32 %v301, %v304
      %v306 = vrot.slane %v305, 4
      %v308 = vshll.u32 %v134, 16
      %v310 = vrot.slane %v308, 5
      %v311 = vsel %vm145, %v306, %v310
      %v312 = vshrl.u32 %v134, 16
      %v314 = vrot.slane %v312, 4
      %v315 = vor.u32 %v314, %v310
      %v316 = vrot.slane %v315, 4
      %v318 = vshrl.u32 %v135, 16
      %v320 = vrot.slane %v318, 4
      %v321 = vshll.u32 %v135, 16
      %v323 = vrot.slane %v321, 5
      %v324 = vor.u32 %v320, %v323
      %v325 = vrot.slane %v324, 4
      %v327 = vshll.u32 %v136, 16
      %v329 = vrot.slane %v327, 5
      %v330 = vsel %vm145, %v325, %v329
      %v331 = vshrl.u32 %v136, 16
      %v333 = vrot.slane %v331, 4
      %v334 = vor.u32 %v333, %v329
      %v335 = vrot.slane %v334, 4
      %v337 = vshrl.u32 %v137, 16
      %v339 = vrot.slane %v337, 4
      %v340 = vshll.u32 %v137, 16
      %v342 = vrot.slane %v340, 5
      %v343 = vor.u32 %v339, %v342
      %v344 = vrot.slane %v343, 4
      %v346 = vshll.u32 %v138, 16
      %v348 = vrot.slane %v346, 5
      %v349 = vsel %vm145, %v344, %v348
      %v350 = vshrl.u32 %v138, 16
      %v352 = vrot.slane %v350, 4
      %v353 = vor.u32 %v352, %v348
      %v354 = vrot.slane %v353, 4
      %v377 = vmax.bf16 %v117, %v159
      %v378 = vmax.bf16 %v118, %v164
      %v379 = vmax.bf16 %v119, %v178
      %v380 = vmax.bf16 %v120, %v183
      %v381 = vmax.bf16 %v121, %v197
      %v382 = vmax.bf16 %v122, %v202
      %v383 = vmax.bf16 %v123, %v216
      %v384 = vmax.bf16 %v124, %v221
      %v385 = vmax.bf16 %v125, %v235
      %v386 = vmax.bf16 %v126, %v240
      %v387 = vmax.bf16 %v127, %v254
      %v388 = vmax.bf16 %v128, %v259
      %v389 = vmax.bf16 %v129, %v273
      %v390 = vmax.bf16 %v130, %v278
      %v391 = vmax.bf16 %v131, %v292
      %v392 = vmax.bf16 %v132, %v297
      %v393 = vmax.bf16 %v133, %v311
      %v394 = vmax.bf16 %v134, %v316
      %v395 = vmax.bf16 %v135, %v330
      %v396 = vmax.bf16 %v136, %v335
      %v397 = vmax.bf16 %v137, %v349
      %v398 = vmax.bf16 %v138, %v354
      %vm421 = vcmask 1042432
      %vm422 = vcmask 1046532
      %vm423 = vmor %vm421, %vm422
      %v424 = vrot.slane %v117, 5
      %v425 = vrot.slane %v424, 4
      %v426 = vrot.slane %v118, 5
      %v427 = vsel %vm423, %v425, %v426
      %v428 = vrot.slane %v426, 4
      %v429 = vrot.slane %v119, 5
      %v430 = vrot.slane %v429, 4
      %v431 = vrot.slane %v120, 5
      %v432 = vsel %vm423, %v430, %v431
      %v433 = vrot.slane %v431, 4
      %v434 = vrot.slane %v121, 5
      %v435 = vrot.slane %v434, 4
      %v436 = vrot.slane %v122, 5
      %v437 = vsel %vm423, %v435, %v436
      %v438 = vrot.slane %v436, 4
      %v439 = vrot.slane %v123, 5
      %v440 = vrot.slane %v439, 4
      %v441 = vrot.slane %v124, 5
      %v442 = vsel %vm423, %v440, %v441
      %v443 = vrot.slane %v441, 4
      %v444 = vrot.slane %v125, 5
      %v445 = vrot.slane %v444, 4
      %v446 = vrot.slane %v126, 5
      %v447 = vsel %vm423, %v445, %v446
      %v448 = vrot.slane %v446, 4
      %v449 = vrot.slane %v127, 5
      %v450 = vrot.slane %v449, 4
      %v451 = vrot.slane %v128, 5
      %v452 = vsel %vm423, %v450, %v451
      %v453 = vrot.slane %v451, 4
      %v454 = vrot.slane %v129, 5
      %v455 = vrot.slane %v454, 4
      %v456 = vrot.slane %v130, 5
      %v457 = vsel %vm423, %v455, %v456
      %v458 = vrot.slane %v456, 4
      %v459 = vrot.slane %v131, 5
      %v460 = vrot.slane %v459, 4
      %v461 = vrot.slane %v132, 5
      %v462 = vsel %vm423, %v460, %v461
      %v463 = vrot.slane %v461, 4
      %v464 = vrot.slane %v133, 5
      %v465 = vrot.slane %v464, 4
      %v466 = vrot.slane %v134, 5
      %v467 = vsel %vm423, %v465, %v466
      %v468 = vrot.slane %v466, 4
      %v469 = vrot.slane %v135, 5
      %v470 = vrot.slane %v469, 4
      %v471 = vrot.slane %v136, 5
      %v472 = vsel %vm423, %v470, %v471
      %v473 = vrot.slane %v471, 4
      %v474 = vrot.slane %v137, 5
      %v475 = vrot.slane %v474, 4
      %v476 = vrot.slane %v138, 5
      %v477 = vsel %vm423, %v475, %v476
      %v478 = vrot.slane %v476, 4
      %v501 = vmax.bf16 %v377, %v427
      %v502 = vmax.bf16 %v378, %v428
      %v503 = vmax.bf16 %v379, %v432
      %v504 = vmax.bf16 %v380, %v433
      %v505 = vmax.bf16 %v381, %v437
      %v506 = vmax.bf16 %v382, %v438
      %v507 = vmax.bf16 %v383, %v442
      %v508 = vmax.bf16 %v384, %v443
      %v509 = vmax.bf16 %v385, %v447
      %v510 = vmax.bf16 %v386, %v448
      %v511 = vmax.bf16 %v387, %v452
      %v512 = vmax.bf16 %v388, %v453
      %v513 = vmax.bf16 %v389, %v457
      %v514 = vmax.bf16 %v390, %v458
      %v515 = vmax.bf16 %v391, %v462
      %v516 = vmax.bf16 %v392, %v463
      %v517 = vmax.bf16 %v393, %v467
      %v518 = vmax.bf16 %v394, %v468
      %v519 = vmax.bf16 %v395, %v472
      %v520 = vmax.bf16 %v396, %v473
      %v521 = vmax.bf16 %v397, %v477
      %v522 = vmax.bf16 %v398, %v478
      %v523 = vmax.bf16 %v501, %v119
      %v524 = vmax.bf16 %v502, %v120
      %v525 = vmax.bf16 %v503, %v121
      %v526 = vmax.bf16 %v504, %v122
      %v527 = vmax.bf16 %v505, %v123
      %v528 = vmax.bf16 %v506, %v124
      %v529 = vmax.bf16 %v507, %v125
      %v530 = vmax.bf16 %v508, %v126
      %v531 = vmax.bf16 %v509, %v127
      %v532 = vmax.bf16 %v510, %v128
      %v533 = vmax.bf16 %v511, %v129
      %v534 = vmax.bf16 %v512, %v130
      %v535 = vmax.bf16 %v513, %v131
      %v536 = vmax.bf16 %v514, %v132
      %v537 = vmax.bf16 %v515, %v133
      %v538 = vmax.bf16 %v516, %v134
      %v539 = vmax.bf16 %v517, %v135
      %v540 = vmax.bf16 %v518, %v136
      %v541 = vmax.bf16 %v519, %v137
      %v542 = vmax.bf16 %v520, %v138
      %v543 = vmax.bf16 %v521, %v139
      %v544 = vmax.bf16 %v522, %v140
      %v546 = vshrl.u32 %v139, 16
      %v548 = vrot.slane %v546, 4
      %v549 = vshll.u32 %v139, 16
      %v551 = vrot.slane %v549, 5
      %v552 = vor.u32 %v548, %v551
      %v553 = vrot.slane %v552, 4
      %v555 = vshll.u32 %v140, 16
      %v557 = vrot.slane %v555, 5
      %v558 = vsel %vm145, %v553, %v557
      %v559 = vshrl.u32 %v140, 16
      %v561 = vrot.slane %v559, 4
      %v562 = vor.u32 %v561, %v557
      %v563 = vrot.slane %v562, 4
      %v566 = vmax.bf16 %v523, %v178
      %v567 = vmax.bf16 %v524, %v183
      %v568 = vmax.bf16 %v525, %v197
      %v569 = vmax.bf16 %v526, %v202
      %v570 = vmax.bf16 %v527, %v216
      %v571 = vmax.bf16 %v528, %v221
      %v572 = vmax.bf16 %v529, %v235
      %v573 = vmax.bf16 %v530, %v240
      %v574 = vmax.bf16 %v531, %v254
      %v575 = vmax.bf16 %v532, %v259
      %v576 = vmax.bf16 %v533, %v273
      %v577 = vmax.bf16 %v534, %v278
      %v578 = vmax.bf16 %v535, %v292
      %v579 = vmax.bf16 %v536, %v297
      %v580 = vmax.bf16 %v537, %v311
      %v581 = vmax.bf16 %v538, %v316
      %v582 = vmax.bf16 %v539, %v330
      %v583 = vmax.bf16 %v540, %v335
      %v584 = vmax.bf16 %v541, %v349
      %v585 = vmax.bf16 %v542, %v354
      %v586 = vmax.bf16 %v543, %v558
      %v587 = vmax.bf16 %v544, %v563
      %v590 = vrot.slane %v139, 5
      %v591 = vrot.slane %v590, 4
      %v592 = vrot.slane %v140, 5
      %v593 = vsel %vm423, %v591, %v592
      %v594 = vrot.slane %v592, 4
      %v597 = vmax.bf16 %v566, %v432
      %v598 = vmax.bf16 %v567, %v433
      %v599 = vmax.bf16 %v568, %v437
      %v600 = vmax.bf16 %v569, %v438
      %v601 = vmax.bf16 %v570, %v442
      %v602 = vmax.bf16 %v571, %v443
      %v603 = vmax.bf16 %v572, %v447
      %v604 = vmax.bf16 %v573, %v448
      %v605 = vmax.bf16 %v574, %v452
      %v606 = vmax.bf16 %v575, %v453
      %v607 = vmax.bf16 %v576, %v457
      %v608 = vmax.bf16 %v577, %v458
      %v609 = vmax.bf16 %v578, %v462
      %v610 = vmax.bf16 %v579, %v463
      %v611 = vmax.bf16 %v580, %v467
      %v612 = vmax.bf16 %v581, %v468
      %v613 = vmax.bf16 %v582, %v472
      %v614 = vmax.bf16 %v583, %v473
      %v615 = vmax.bf16 %v584, %v477
      %v616 = vmax.bf16 %v585, %v478
      %v617 = vmax.bf16 %v586, %v593
      %v618 = vmax.bf16 %v587, %v594
      %v619 = vmax.bf16 %v597, %v121
      %v620 = vmax.bf16 %v598, %v122
      %v621 = vmax.bf16 %v599, %v123
      %v622 = vmax.bf16 %v600, %v124
      %v623 = vmax.bf16 %v601, %v125
      %v624 = vmax.bf16 %v602, %v126
      %v625 = vmax.bf16 %v603, %v127
      %v626 = vmax.bf16 %v604, %v128
      %v627 = vmax.bf16 %v605, %v129
      %v628 = vmax.bf16 %v606, %v130
      %v629 = vmax.bf16 %v607, %v131
      %v630 = vmax.bf16 %v608, %v132
      %v631 = vmax.bf16 %v609, %v133
      %v632 = vmax.bf16 %v610, %v134
      %v633 = vmax.bf16 %v611, %v135
      %v634 = vmax.bf16 %v612, %v136
      %v635 = vmax.bf16 %v613, %v137
      %v636 = vmax.bf16 %v614, %v138
      %v637 = vmax.bf16 %v615, %v139
      %v638 = vmax.bf16 %v616, %v140
      %v639 = vmax.bf16 %v617, %v141
      %v640 = vmax.bf16 %v618, %v142
      %v642 = vshrl.u32 %v141, 16
      %v644 = vrot.slane %v642, 4
      %v645 = vshll.u32 %v141, 16
      %v647 = vrot.slane %v645, 5
      %v648 = vor.u32 %v644, %v647
      %v649 = vrot.slane %v648, 4
      %v651 = vshll.u32 %v142, 16
      %v653 = vrot.slane %v651, 5
      %v654 = vsel %vm145, %v649, %v653
      %v655 = vshrl.u32 %v142, 16
      %v657 = vrot.slane %v655, 4
      %v658 = vor.u32 %v657, %v653
      %v659 = vrot.slane %v658, 4
      %v662 = vmax.bf16 %v619, %v197
      %v663 = vmax.bf16 %v620, %v202
      %v664 = vmax.bf16 %v621, %v216
      %v665 = vmax.bf16 %v622, %v221
      %v666 = vmax.bf16 %v623, %v235
      %v667 = vmax.bf16 %v624, %v240
      %v668 = vmax.bf16 %v625, %v254
      %v669 = vmax.bf16 %v626, %v259
      %v670 = vmax.bf16 %v627, %v273
      %v671 = vmax.bf16 %v628, %v278
      %v672 = vmax.bf16 %v629, %v292
      %v673 = vmax.bf16 %v630, %v297
      %v674 = vmax.bf16 %v631, %v311
      %v675 = vmax.bf16 %v632, %v316
      %v676 = vmax.bf16 %v633, %v330
      %v677 = vmax.bf16 %v634, %v335
      %v678 = vmax.bf16 %v635, %v349
      %v679 = vmax.bf16 %v636, %v354
      %v680 = vmax.bf16 %v637, %v558
      %v681 = vmax.bf16 %v638, %v563
      %v682 = vmax.bf16 %v639, %v654
      %v683 = vmax.bf16 %v640, %v659
      %v686 = vrot.slane %v141, 5
      %v687 = vrot.slane %v686, 4
      %v688 = vrot.slane %v142, 5
      %v689 = vsel %vm423, %v687, %v688
      %v690 = vrot.slane %v688, 4
      %v693 = vmax.bf16 %v662, %v437
      %v694 = vmax.bf16 %v663, %v438
      %v695 = vmax.bf16 %v664, %v442
      %v696 = vmax.bf16 %v665, %v443
      %v697 = vmax.bf16 %v666, %v447
      %v698 = vmax.bf16 %v667, %v448
      %v699 = vmax.bf16 %v668, %v452
      %v700 = vmax.bf16 %v669, %v453
      %v701 = vmax.bf16 %v670, %v457
      %v702 = vmax.bf16 %v671, %v458
      %v703 = vmax.bf16 %v672, %v462
      %v704 = vmax.bf16 %v673, %v463
      %v705 = vmax.bf16 %v674, %v467
      %v706 = vmax.bf16 %v675, %v468
      %v707 = vmax.bf16 %v676, %v472
      %v708 = vmax.bf16 %v677, %v473
      %v709 = vmax.bf16 %v678, %v477
      %v710 = vmax.bf16 %v679, %v478
      %v711 = vmax.bf16 %v680, %v593
      %v712 = vmax.bf16 %v681, %v594
      %v713 = vmax.bf16 %v682, %v689
      %v714 = vmax.bf16 %v683, %v690
      %715 = vst [vmem:[%s116] sm:$0xf] %v693
      %vm716 = vcmask 1041408
      %vm717 = vsmask.f32 1280
      %vm718 = vmand %vm716, %vm717
      %v719 = vld [vmem:[%s116 + $0x4] sm:$0x3]
      %v720 = vsel %vm718, %v694, %v719
      %721 = vst [vmem:[%s116 + $0x4] sm:$0x3] %v720
      %722 = vst [vmem:[%s116 + $0x8] sm:$0xf] %v695
      %v723 = vld [vmem:[%s116 + $0xc] sm:$0x3]
      %v724 = vsel %vm718, %v696, %v723
      %725 = vst [vmem:[%s116 + $0xc] sm:$0x3] %v724
      %726 = vst [vmem:[%s116 + $0x10] sm:$0xf] %v697
      %v727 = vld [vmem:[%s116 + $0x14] sm:$0x3]
      %v728 = vsel %vm718, %v698, %v727
      %729 = vst [vmem:[%s116 + $0x14] sm:$0x3] %v728
      %730 = vst [vmem:[%s116 + $0x18] sm:$0xf] %v699
      %v731 = vld [vmem:[%s116 + $0x1c] sm:$0x3]
      %v732 = vsel %vm718, %v700, %v731
      %733 = vst [vmem:[%s116 + $0x1c] sm:$0x3] %v732
      %734 = vst [vmem:[%s116 + $0x20] sm:$0xf] %v701
      %v735 = vld [vmem:[%s116 + $0x24] sm:$0x3]
      %v736 = vsel %vm718, %v702, %v735
      %737 = vst [vmem:[%s116 + $0x24] sm:$0x3] %v736
      %738 = vst [vmem:[%s116 + $0x28] sm:$0xf] %v703
      %v739 = vld [vmem:[%s116 + $0x2c] sm:$0x3]
      %v740 = vsel %vm718, %v704, %v739
      %741 = vst [vmem:[%s116 + $0x2c] sm:$0x3] %v740
      %742 = vst [vmem:[%s116 + $0x30] sm:$0xf] %v705
      %v743 = vld [vmem:[%s116 + $0x34] sm:$0x3]
      %v744 = vsel %vm718, %v706, %v743
      %745 = vst [vmem:[%s116 + $0x34] sm:$0x3] %v744
      %746 = vst [vmem:[%s116 + $0x38] sm:$0xf] %v707
      %v747 = vld [vmem:[%s116 + $0x3c] sm:$0x3]
      %v748 = vsel %vm718, %v708, %v747
      %749 = vst [vmem:[%s116 + $0x3c] sm:$0x3] %v748
      %750 = vst [vmem:[%s116 + $0x40] sm:$0xf] %v709
      %v751 = vld [vmem:[%s116 + $0x44] sm:$0x3]
      %v752 = vsel %vm718, %v710, %v751
      %753 = vst [vmem:[%s116 + $0x44] sm:$0x3] %v752
      %754 = vst [vmem:[%s116 + $0x48] sm:$0xf] %v711
      %v755 = vld [vmem:[%s116 + $0x4c] sm:$0x3]
      %v756 = vsel %vm718, %v712, %v755
      %757 = vst [vmem:[%s116 + $0x4c] sm:$0x3] %v756
      %758 = vst [vmem:[%s116 + $0x50] sm:$0xf] %v713
      %v759 = vld [vmem:[%s116 + $0x54] sm:$0x3]
      %v760 = vsel %vm718, %v714, %v759
      %761 = vst [vmem:[%s116 + $0x54] sm:$0x3] %v760
      %p762 = scmp.lt.s32.totalorder %s12, 1
      %s763 = scalar_select %p762, %s12, 1
      %s764 = smul.addr %s763, 22
      %s765 = smul.addr %s764, 4
      %s766 = scalar_lea.vmem %s1, %s765
      // Predicated region
      $region25: #{inception_fid_forward.15} parent=23 // pred_check
        %p767 = pneg %p56
      $region26: #{inception_fid_forward.15} parent=23 // pred_check_branch
        %769 = sbr.rel (%p767) target = $region28
      $region27: #{inception_fid_forward.15} parent=23 // pred_region
        _
      $region28: #{inception_fid_forward.15} parent=23 // pred_fallthru
        _
    $region24: #{inception_fid_forward.15} parent=5 // pred_fallthru
      _
    %p770 = scmp.le.s32.totalorder 2, %s7
    // Predicated region
    $region29: #{inception_fid_forward.15} parent=5 // pred_check
      %p771 = pneg %p770
    $region30: #{inception_fid_forward.15} parent=5 // pred_check_branch
      %773 = sbr.rel (%p771) target = $region32
    $region31: #{inception_fid_forward.15} parent=5 // pred_region
      %s774 = ssub.s32 %s7, 2
      // Predicated region
      $region33: #{inception_fid_forward.15} parent=31 // pred_check
        %p775 = pneg %p62
      $region34: #{inception_fid_forward.15} parent=31 // pred_check_branch
        %777 = sbr.rel (%p775) target = $region36
      $region35: #{inception_fid_forward.15} parent=31 // pred_region
        %p778 = scmp.lt.s32.totalorder %s13, 1
        %s779 = scalar_select %p778, %s13, 1
        %s780 = smul.addr %s779, 22
        %s781 = smul.addr %s780, 4
        %s782 = scalar_lea.vmem %s1, %s781
      $region36: #{inception_fid_forward.15} parent=31 // pred_fallthru
        _
    $region32: #{inception_fid_forward.15} parent=5 // pred_fallthru
      _
  $region6: #{inception_fid_forward.15} parent=0 // loop_footer
    %s11 = sadd.s32 1, %s7
  $region7: #{inception_fid_forward.15} parent=0 // loop_footer_branch
    %6 = sbr.rel target = $region3
  $region8: #{inception_fid_forward.15} parent=0 // loop_exit
    _

// kernel: inception_fid_forward.18
$region0: #{inception_fid_forward.18}
  #allocation0 [shape = 'u32[]', space=smem, size = 0x4, offset = 0x4, fixed_abs, tag = 'smem constant byte address 0x4 - core index']
  #allocation1 [shape = 'u32[144,128]{1,0:T(1,128)}', space=vmem, size = 0x12000, scoped, tag = 'internal scratch']
  %s0 = inlined_call_operand.vmem [shape: bf16[2,16,128], index: 0, kind: input, shape index: {}]
  %s1 = inlined_call_operand.vmem [shape: bf16[128,128], index: 1, kind: input, shape index: {}]
  %s2 = inlined_call_operand.vmem [shape: f32[1,128], index: 2, kind: input, shape index: {}]
  %s3 = inlined_call_operand.vmem [shape: bf16[2,16,128], index: 3, kind: output, shape index: {}]
  %s4 = sld [smem:[#allocation0]]
  $region45: #{inception_fid_forward.18} parent=0
    _
  %s6 = ssub.s32 1, %s4
  %s7 = scalar_select 0, %s6, %s4
  loop: start=0, step=1, limit=4
  $region2: #{inception_fid_forward.18} parent=0 // loop_pre_header
    _
  $region3: #{inception_fid_forward.18} parent=0 // loop_header
    %s9 = sphi 0, %s13
    %p10 = scmp.ge.s32.totalorder %s9, 4
    %s19 = sphi 0, %s21
    %s22 = sphi 0, %s19
    %s23 = sphi 0, %s22
    %s39 = sphi 0, %s23
    %s43 = sphi 0, %s43
    %s45 = sphi 0, %s43
    %s46 = sphi 0, %s45
    %s60 = sphi 0, %s46
    %s64 = sphi 0, %s64
    %s66 = sphi 0, %s64
    %s67 = sphi 0, %s66
    %s81 = sphi 0, %s67
    %s87 = sphi 0, %s89
    %s90 = sphi 0, %s87
    %s91 = sphi 0, %s90
    %s107 = sphi 0, %s91
  $region4: #{inception_fid_forward.18} parent=0 // loop_header_branch
    %12 = sbr.rel (%p10) target = $region8
  $region5: #{inception_fid_forward.18} parent=0 // loop_body
    %s14 = ssub.s32 %s9, 1
    %s15 = ssub.s32 %s9, 2
    %s16 = sadd.s32 %s9, 1
    %s17 = ssub.s32 %s9, %s16
    %p18 = scmp.eq.s32.totalorder %s17, 0
    %s20 = sadd.s32 %s19, 1
    %s21 = scalar_select %p18, %s19, %s20
    %p24 = pneg %p18
    %p25 = scmp.eq.s32.totalorder %s9, 1
    %p26 = por %p24, %p25
    %p27 = scmp.ne.s32.totalorder %s19, %s22
    %p28 = scmp.eq.s32.totalorder %s9, 0
    %p29 = por %p27, %p28
    %p30 = scmp.ne.s32.totalorder %s19, %s22
    %p31 = scmp.eq.s32.totalorder %s14, 1
    %p32 = por %p30, %p31
    %p33 = scmp.ne.s32.totalorder %s22, %s23
    %p34 = scmp.eq.s32.totalorder %s14, 0
    %p35 = por %p33, %p34
    %p36 = scmp.ne.s32.totalorder %s22, %s23
    %p37 = scmp.eq.s32.totalorder %s15, 1
    %p38 = por %p36, %p37
    %p40 = scmp.ne.s32.totalorder %s23, %s39
    %p41 = scmp.eq.s32.totalorder %s15, 0
    %p42 = por %p40, %p41
    %s44 = sadd.s32 %s43, 1
    %p47 = scmp.eq.s32.totalorder %s9, 1
    %p48 = scmp.ne.s32.totalorder %s43, %s45
    %p49 = scmp.eq.s32.totalorder %s9, 0
    %p50 = por %p48, %p49
    %p51 = scmp.ne.s32.totalorder %s43, %s45
    %p52 = scmp.eq.s32.totalorder %s14, 1
    %p53 = por %p51, %p52
    %p54 = scmp.ne.s32.totalorder %s45, %s46
    %p55 = scmp.eq.s32.totalorder %s14, 0
    %p56 = por %p54, %p55
    %p57 = scmp.ne.s32.totalorder %s45, %s46
    %p58 = scmp.eq.s32.totalorder %s15, 1
    %p59 = por %p57, %p58
    %p61 = scmp.ne.s32.totalorder %s46, %s60
    %p62 = scmp.eq.s32.totalorder %s15, 0
    %p63 = por %p61, %p62
    %s65 = sadd.s32 %s64, 1
    %p68 = scmp.eq.s32.totalorder %s9, 1
    %p69 = scmp.ne.s32.totalorder %s64, %s66
    %p70 = scmp.eq.s32.totalorder %s9, 0
    %p71 = por %p69, %p70
    %p72 = scmp.ne.s32.totalorder %s64, %s66
    %p73 = scmp.eq.s32.totalorder %s14, 1
    %p74 = por %p72, %p73
    %p75 = scmp.ne.s32.totalorder %s66, %s67
    %p76 = scmp.eq.s32.totalorder %s14, 0
    %p77 = por %p75, %p76
    %p78 = scmp.ne.s32.totalorder %s66, %s67
    %p79 = scmp.eq.s32.totalorder %s15, 1
    %p80 = por %p78, %p79
    %p82 = scmp.ne.s32.totalorder %s67, %s81
    %p83 = scmp.eq.s32.totalorder %s15, 0
    %p84 = por %p82, %p83
    %s85 = ssub.s32 %s9, %s16
    %p86 = scmp.eq.s32.totalorder %s85, 0
    %s88 = sadd.s32 %s87, 1
    %s89 = scalar_select %p86, %s87, %s88
    %p92 = pneg %p86
    %p93 = scmp.eq.s32.totalorder %s9, 1
    %p94 = por %p92, %p93
    %p95 = scmp.ne.s32.totalorder %s87, %s90
    %p96 = scmp.eq.s32.totalorder %s9, 0
    %p97 = por %p95, %p96
    %p98 = scmp.ne.s32.totalorder %s87, %s90
    %p99 = scmp.eq.s32.totalorder %s14, 1
    %p100 = por %p98, %p99
    %p101 = scmp.ne.s32.totalorder %s90, %s91
    %p102 = scmp.eq.s32.totalorder %s14, 0
    %p103 = por %p101, %p102
    %p104 = scmp.ne.s32.totalorder %s90, %s91
    %p105 = scmp.eq.s32.totalorder %s15, 1
    %p106 = por %p104, %p105
    %p108 = scmp.ne.s32.totalorder %s91, %s107
    %p109 = scmp.eq.s32.totalorder %s15, 0
    %p110 = por %p108, %p109
    %p111 = scmp.le.s32.totalorder 1, %s9
    %p112 = scmp.lt.s32.totalorder %s9, 3
    %p113 = pnand %p111, %p112
    %p114 = pneg %p113
    // Predicated region
    $region9: #{inception_fid_forward.18} parent=5 // pred_check
      _
    $region10: #{inception_fid_forward.18} parent=5 // pred_check_branch
      %116 = sbr.rel (%p113) target = $region12
    $region11: #{inception_fid_forward.18} parent=5 // pred_region
      %s117 = ssub.s32 %s9, 1
      // Predicated region
      $region13: #{inception_fid_forward.18} parent=11 // pred_check
        %p118 = pneg %p56
      $region14: #{inception_fid_forward.18} parent=11 // pred_check_branch
        %120 = sbr.rel (%p118) target = $region16
      $region15: #{inception_fid_forward.18} parent=11 // pred_region
        _
      $region16: #{inception_fid_forward.18} parent=11 // pred_fallthru
        _
      // Predicated region
      $region17: #{inception_fid_forward.18} parent=11 // pred_check
        %p121 = pneg %p77
      $region18: #{inception_fid_forward.18} parent=11 // pred_check_branch
        %123 = sbr.rel (%p121) target = $region20
      $region19: #{inception_fid_forward.18} parent=11 // pred_region
        _
      $region20: #{inception_fid_forward.18} parent=11 // pred_fallthru
        _
    $region12: #{inception_fid_forward.18} parent=5 // pred_fallthru
      _
    %p124 = scmp.lt.s32.totalorder %s9, 2
    // Predicated region
    $region21: #{inception_fid_forward.18} parent=5 // pred_check
      %p125 = pneg %p124
    $region22: #{inception_fid_forward.18} parent=5 // pred_check_branch
      %127 = sbr.rel (%p125) target = $region24
    $region23: #{inception_fid_forward.18} parent=5 // pred_region
      // Predicated region
      $region25: #{inception_fid_forward.18} parent=23 // pred_check
        %p128 = pneg %p29
      $region26: #{inception_fid_forward.18} parent=23 // pred_check_branch
        %130 = sbr.rel (%p128) target = $region28
      $region27: #{inception_fid_forward.18} parent=23 // pred_region
        %p131 = scmp.lt.s32.totalorder %s9, 1
        %s132 = scalar_select %p131, %s9, 1
        %s133 = smul.addr %s132, 2
        %s134 = smul.addr %s133, 4
        %s135 = scalar_lea.vmem %s0, %s134
      $region28: #{inception_fid_forward.18} parent=23 // pred_fallthru
        _
    $region24: #{inception_fid_forward.18} parent=5 // pred_fallthru
      _
    %p136 = scmp.le.s32.totalorder 1, %s9
    %p137 = scmp.lt.s32.totalorder %s9, 3
    %p138 = pnand %p136, %p137
    %p139 = pneg %p138
    // Predicated region
    $region29: #{inception_fid_forward.18} parent=5 // pred_check
      _
    $region30: #{inception_fid_forward.18} parent=5 // pred_check_branch
      %141 = sbr.rel (%p138) target = $region32
    $region31: #{inception_fid_forward.18} parent=5 // pred_region
      %s142 = ssub.s32 %s9, 1
      %p143 = scmp.lt.s32.totalorder %s14, 1
      %s144 = scalar_select %p143, %s14, 1
      %s145 = smul.addr %s144, 2
      %s146 = smul.addr %s145, 4
      %s147 = scalar_lea.vmem %s0, %s146
      %p148 = pneg %p35
      %p149 = pneg %p32
      %p150 = pneg %p56
      %p151 = pneg %p53
      %p152 = pneg %p77
      %p153 = pneg %p74
      %p154 = pneg %p103
      %p155 = pneg %p100
      %p156 = scmp.lt.s32.totalorder %s14, 1
      %s157 = scalar_select %p156, %s14, 1
      %s158 = smul.addr %s157, 2
      %s159 = smul.addr %s158, 4
      %s160 = scalar_lea.vmem %s3, %s159
      %p161 = scmp.lt.s32.totalorder %s14, 1
      %s162 = scalar_select %p161, %s14, 1
      %s163 = smul.addr %s162, 2
      %s164 = smul.addr %s163, 4
      %s165 = scalar_lea.vmem %s0, %s164
      %p166 = scmp.lt.s32.totalorder %s14, 1
      %s167 = scalar_select %p166, %s14, 1
      %s168 = smul.addr %s167, 2
      %s169 = smul.addr %s168, 4
      %s170 = scalar_lea.vmem %s3, %s169
      %v172 = vld [vmem:[%s165] sm:$0xf]
      %v173 = vld [vmem:[%s165 + $0x4] sm:$0xf]
      %v174 = vld [vmem:[%s1] sm:$0xf]
      %v175 = vld [vmem:[%s1 + $0x4] sm:$0xf]
      %v176 = vld [vmem:[%s1 + $0x8] sm:$0xf]
      %v177 = vld [vmem:[%s1 + $0xc] sm:$0xf]
      %v178 = vld [vmem:[%s1 + $0x10] sm:$0xf]
      %v179 = vld [vmem:[%s1 + $0x14] sm:$0xf]
      %v180 = vld [vmem:[%s1 + $0x18] sm:$0xf]
      %v181 = vld [vmem:[%s1 + $0x1c] sm:$0xf]
      %v182 = vld [vmem:[%s1 + $0x20] sm:$0xf]
      %v183 = vld [vmem:[%s1 + $0x24] sm:$0xf]
      %v184 = vld [vmem:[%s1 + $0x28] sm:$0xf]
      %v185 = vld [vmem:[%s1 + $0x2c] sm:$0xf]
      %v186 = vld [vmem:[%s1 + $0x30] sm:$0xf]
      %v187 = vld [vmem:[%s1 + $0x34] sm:$0xf]
      %v188 = vld [vmem:[%s1 + $0x38] sm:$0xf]
      %v189 = vld [vmem:[%s1 + $0x3c] sm:$0xf]
      %v190 = vld [vmem:[%s2] sm:$0x1]
      %v192 = vlaneseq
      %v193 = vshrl.u32 %v192, 7
      %v194 = vsub.s32 0, %v193
      %v195 = vrot.slane %v190, %v194
      %v199 = vunpack.c.l.b16 %v172
      %v200 = vunpack.c.l.b16 %v173
      %v201 = vpack.c.b16 %v200, %v199
      %v219 = vunpack.c.l.b16 %v174
      %v220 = vunpack.c.l.b16 %v175
      %v221 = vunpack.c.l.b16 %v176
      %v222 = vunpack.c.l.b16 %v177
      %v223 = vunpack.c.l.b16 %v178
      %v224 = vunpack.c.l.b16 %v179
      %v225 = vunpack.c.l.b16 %v180
      %v226 = vunpack.c.l.b16 %v181
      %v227 = vunpack.c.l.b16 %v182
      %v228 = vunpack.c.l.b16 %v183
      %v229 = vunpack.c.l.b16 %v184
      %v230 = vunpack.c.l.b16 %v185
      %v231 = vunpack.c.l.b16 %v186
      %v232 = vunpack.c.l.b16 %v187
      %v233 = vunpack.c.l.b16 %v188
      %v234 = vunpack.c.l.b16 %v189
      %v235 = vpack.c.b16 %v220, %v219
      %v236 = vpack.c.b16 %v222, %v221
      %v237 = vpack.c.b16 %v224, %v223
      %v238 = vpack.c.b16 %v226, %v225
      %v239 = vpack.c.b16 %v228, %v227
      %v240 = vpack.c.b16 %v230, %v229
      %v241 = vpack.c.b16 %v232, %v231
      %v242 = vpack.c.b16 %v234, %v233
      %251 = vmatprep.subr.bf16.mxu0 0
      %252 = vmatpush1.bf16.msra.mxu0 %v242
      %253 = vmatprep.subr.bf16.mxu0 0
      %254 = vmatpush1.bf16.msra.mxu0 %v241
      %255 = vmatprep.subr.bf16.mxu0 0
      %256 = vmatpush1.bf16.msra.mxu0 %v240
      %257 = vmatprep.subr.bf16.mxu0 0
      %258 = vmatpush1.bf16.msra.mxu0 %v239
      %259 = vmatprep.subr.bf16.mxu0 0
      %260 = vmatpush1.bf16.msra.mxu0 %v238
      %261 = vmatprep.subr.bf16.mxu0 0
      %262 = vmatpush1.bf16.msra.mxu0 %v237
      %263 = vmatprep.subr.bf16.mxu0 0
      %264 = vmatpush1.bf16.msra.mxu0 %v236
      %265 = vmatprep.subr.bf16.mxu0 0
      %266 = vmatpush1.bf16.msra.mxu0 %v235
      %267 = vmatprep.subr.bf16.mxu0 0
      %268 = vmatpush2.bf16.msra.mxu0 0
      %269 = vmatprep.subr.bf16.mxu0 0
      %270 = vmatpush2.bf16.msra.mxu0 0
      %271 = vmatprep.subr.bf16.mxu0 0
      %272 = vmatpush2.bf16.msra.mxu0 0
      %273 = vmatprep.subr.bf16.mxu0 0
      %274 = vmatpush2.bf16.msra.mxu0 0
      %275 = vmatprep.subr.bf16.mxu0 0
      %276 = vmatpush2.bf16.msra.mxu0 0
      %277 = vmatprep.subr.bf16.mxu0 0
      %278 = vmatpush2.bf16.msra.mxu0 0
      %279 = vmatprep.subr.bf16.mxu0 0
      %280 = vmatpush2.bf16.msra.mxu0 0
      %281 = vmatprep.subr.bf16.mxu0 0
      %282 = vmatpush2.bf16.msra.mxu0 0
      %283 = vmatprep.mubr.bf16.mxu0 0
      %284 = vmatmul.mubr.bf16.gmra.mxu0 %v201
      %v285 = vpop.f32.mrf.mxu0
      %v286 = vadd.f32 %v195, %v285
      %v287 = vpop.f32.mrf.mxu0
      %v288 = vpop.f32.mrf.mxu0
      %v289 = vadd.f32 %v195, %v288
      %v290 = vpop.f32.mrf.mxu0
      %291 = vdwg.mxu0
      %v292 = vmax.f32 %v286, 0.0
      %v293 = vmax.f32 %v289, 0.0
      %v294 = vpack.c.bf16 %v293, %v292
      %v296 = vunpack.c.l.b16 %v294
      %v297 = vunpack.c.h.b16 %v294
      %v298 = vpack.c.b16 %v296, %v296
      %v299 = vpack.c.b16 %v297, %v297
      %302 = vst [vmem:[%s170] sm:$0xf] %v298
      %303 = vst [vmem:[%s170 + $0x4] sm:$0xf] %v299
      %p304 = scmp.lt.s32.totalorder %s14, 1
      %s305 = scalar_select %p304, %s14, 1
      %s306 = smul.addr %s305, 2
      %s307 = smul.addr %s306, 4
      %s308 = scalar_lea.vmem %s3, %s307
      // Predicated region
      $region33: #{inception_fid_forward.18} parent=31 // pred_check
        %p309 = pneg %p100
      $region34: #{inception_fid_forward.18} parent=31 // pred_check_branch
        %311 = sbr.rel (%p309) target = $region36
      $region35: #{inception_fid_forward.18} parent=31 // pred_region
        _
      $region36: #{inception_fid_forward.18} parent=31 // pred_fallthru
        _
    $region32: #{inception_fid_forward.18} parent=5 // pred_fallthru
      _
    %p312 = scmp.le.s32.totalorder 2, %s9
    // Predicated region
    $region37: #{inception_fid_forward.18} parent=5 // pred_check
      %p313 = pneg %p312
    $region38: #{inception_fid_forward.18} parent=5 // pred_check_branch
      %315 = sbr.rel (%p313) target = $region40
    $region39: #{inception_fid_forward.18} parent=5 // pred_region
      %s316 = ssub.s32 %s9, 2
      // Predicated region
      $region41: #{inception_fid_forward.18} parent=39 // pred_check
        %p317 = pneg %p106
      $region42: #{inception_fid_forward.18} parent=39 // pred_check_branch
        %319 = sbr.rel (%p317) target = $region44
      $region43: #{inception_fid_forward.18} parent=39 // pred_region
        %p320 = scmp.lt.s32.totalorder %s15, 1
        %s321 = scalar_select %p320, %s15, 1
        %s322 = smul.addr %s321, 2
        %s323 = smul.addr %s322, 4
        %s324 = scalar_lea.vmem %s3, %s323
      $region44: #{inception_fid_forward.18} parent=39 // pred_fallthru
        _
    $region40: #{inception_fid_forward.18} parent=5 // pred_fallthru
      _
  $region6: #{inception_fid_forward.18} parent=0 // loop_footer
    %s13 = sadd.s32 1, %s9
  $region7: #{inception_fid_forward.18} parent=0 // loop_footer_branch
    %8 = sbr.rel target = $region3
  $region8: #{inception_fid_forward.18} parent=0 // loop_exit
    _

// kernel: inception_fid_forward.17
$region0: #{inception_fid_forward.17}
  #allocation0 [shape = 'u32[]', space=smem, size = 0x4, offset = 0x4, fixed_abs, tag = 'smem constant byte address 0x4 - core index']
  #allocation1 [shape = 'u32[144,128]{1,0:T(1,128)}', space=vmem, size = 0x12000, scoped, tag = 'internal scratch']
  %s0 = inlined_call_operand.vmem [shape: bf16[2,38,128], index: 0, kind: input, shape index: {}]
  %s1 = inlined_call_operand.vmem [shape: bf16[1152,128], index: 1, kind: input, shape index: {}]
  %s2 = inlined_call_operand.vmem [shape: f32[1,128], index: 2, kind: input, shape index: {}]
  %s3 = inlined_call_operand.vmem [shape: bf16[2,24,128], index: 3, kind: output, shape index: {}]
  %s4 = sld [smem:[#allocation0]]
  $region45: #{inception_fid_forward.17} parent=0
    _
  %s6 = ssub.s32 1, %s4
  %s7 = scalar_select 0, %s6, %s4
  loop: start=0, step=1, limit=4
  $region2: #{inception_fid_forward.17} parent=0 // loop_pre_header
    _
  $region3: #{inception_fid_forward.17} parent=0 // loop_header
    %s9 = sphi 0, %s13
    %p10 = scmp.ge.s32.totalorder %s9, 4
    %s19 = sphi 0, %s21
    %s22 = sphi 0, %s19
    %s23 = sphi 0, %s22
    %s39 = sphi 0, %s23
    %s43 = sphi 0, %s43
    %s45 = sphi 0, %s43
    %s46 = sphi 0, %s45
    %s60 = sphi 0, %s46
    %s64 = sphi 0, %s64
    %s66 = sphi 0, %s64
    %s67 = sphi 0, %s66
    %s81 = sphi 0, %s67
    %s87 = sphi 0, %s89
    %s90 = sphi 0, %s87
    %s91 = sphi 0, %s90
    %s107 = sphi 0, %s91
  $region4: #{inception_fid_forward.17} parent=0 // loop_header_branch
    %12 = sbr.rel (%p10) target = $region8
  $region5: #{inception_fid_forward.17} parent=0 // loop_body
    %s14 = ssub.s32 %s9, 1
    %s15 = ssub.s32 %s9, 2
    %s16 = sadd.s32 %s9, 1
    %s17 = ssub.s32 %s9, %s16
    %p18 = scmp.eq.s32.totalorder %s17, 0
    %s20 = sadd.s32 %s19, 1
    %s21 = scalar_select %p18, %s19, %s20
    %p24 = pneg %p18
    %p25 = scmp.eq.s32.totalorder %s9, 1
    %p26 = por %p24, %p25
    %p27 = scmp.ne.s32.totalorder %s19, %s22
    %p28 = scmp.eq.s32.totalorder %s9, 0
    %p29 = por %p27, %p28
    %p30 = scmp.ne.s32.totalorder %s19, %s22
    %p31 = scmp.eq.s32.totalorder %s14, 1
    %p32 = por %p30, %p31
    %p33 = scmp.ne.s32.totalorder %s22, %s23
    %p34 = scmp.eq.s32.totalorder %s14, 0
    %p35 = por %p33, %p34
    %p36 = scmp.ne.s32.totalorder %s22, %s23
    %p37 = scmp.eq.s32.totalorder %s15, 1
    %p38 = por %p36, %p37
    %p40 = scmp.ne.s32.totalorder %s23, %s39
    %p41 = scmp.eq.s32.totalorder %s15, 0
    %p42 = por %p40, %p41
    %s44 = sadd.s32 %s43, 1
    %p47 = scmp.eq.s32.totalorder %s9, 1
    %p48 = scmp.ne.s32.totalorder %s43, %s45
    %p49 = scmp.eq.s32.totalorder %s9, 0
    %p50 = por %p48, %p49
    %p51 = scmp.ne.s32.totalorder %s43, %s45
    %p52 = scmp.eq.s32.totalorder %s14, 1
    %p53 = por %p51, %p52
    %p54 = scmp.ne.s32.totalorder %s45, %s46
    %p55 = scmp.eq.s32.totalorder %s14, 0
    %p56 = por %p54, %p55
    %p57 = scmp.ne.s32.totalorder %s45, %s46
    %p58 = scmp.eq.s32.totalorder %s15, 1
    %p59 = por %p57, %p58
    %p61 = scmp.ne.s32.totalorder %s46, %s60
    %p62 = scmp.eq.s32.totalorder %s15, 0
    %p63 = por %p61, %p62
    %s65 = sadd.s32 %s64, 1
    %p68 = scmp.eq.s32.totalorder %s9, 1
    %p69 = scmp.ne.s32.totalorder %s64, %s66
    %p70 = scmp.eq.s32.totalorder %s9, 0
    %p71 = por %p69, %p70
    %p72 = scmp.ne.s32.totalorder %s64, %s66
    %p73 = scmp.eq.s32.totalorder %s14, 1
    %p74 = por %p72, %p73
    %p75 = scmp.ne.s32.totalorder %s66, %s67
    %p76 = scmp.eq.s32.totalorder %s14, 0
    %p77 = por %p75, %p76
    %p78 = scmp.ne.s32.totalorder %s66, %s67
    %p79 = scmp.eq.s32.totalorder %s15, 1
    %p80 = por %p78, %p79
    %p82 = scmp.ne.s32.totalorder %s67, %s81
    %p83 = scmp.eq.s32.totalorder %s15, 0
    %p84 = por %p82, %p83
    %s85 = ssub.s32 %s9, %s16
    %p86 = scmp.eq.s32.totalorder %s85, 0
    %s88 = sadd.s32 %s87, 1
    %s89 = scalar_select %p86, %s87, %s88
    %p92 = pneg %p86
    %p93 = scmp.eq.s32.totalorder %s9, 1
    %p94 = por %p92, %p93
    %p95 = scmp.ne.s32.totalorder %s87, %s90
    %p96 = scmp.eq.s32.totalorder %s9, 0
    %p97 = por %p95, %p96
    %p98 = scmp.ne.s32.totalorder %s87, %s90
    %p99 = scmp.eq.s32.totalorder %s14, 1
    %p100 = por %p98, %p99
    %p101 = scmp.ne.s32.totalorder %s90, %s91
    %p102 = scmp.eq.s32.totalorder %s14, 0
    %p103 = por %p101, %p102
    %p104 = scmp.ne.s32.totalorder %s90, %s91
    %p105 = scmp.eq.s32.totalorder %s15, 1
    %p106 = por %p104, %p105
    %p108 = scmp.ne.s32.totalorder %s91, %s107
    %p109 = scmp.eq.s32.totalorder %s15, 0
    %p110 = por %p108, %p109
    %p111 = scmp.le.s32.totalorder 1, %s9
    %p112 = scmp.lt.s32.totalorder %s9, 3
    %p113 = pnand %p111, %p112
    %p114 = pneg %p113
    // Predicated region
    $region9: #{inception_fid_forward.17} parent=5 // pred_check
      _
    $region10: #{inception_fid_forward.17} parent=5 // pred_check_branch
      %116 = sbr.rel (%p113) target = $region12
    $region11: #{inception_fid_forward.17} parent=5 // pred_region
      %s117 = ssub.s32 %s9, 1
      // Predicated region
      $region13: #{inception_fid_forward.17} parent=11 // pred_check
        %p118 = pneg %p56
      $region14: #{inception_fid_forward.17} parent=11 // pred_check_branch
        %120 = sbr.rel (%p118) target = $region16
      $region15: #{inception_fid_forward.17} parent=11 // pred_region
        _
      $region16: #{inception_fid_forward.17} parent=11 // pred_fallthru
        _
      // Predicated region
      $region17: #{inception_fid_forward.17} parent=11 // pred_check
        %p121 = pneg %p77
      $region18: #{inception_fid_forward.17} parent=11 // pred_check_branch
        %123 = sbr.rel (%p121) target = $region20
      $region19: #{inception_fid_forward.17} parent=11 // pred_region
        _
      $region20: #{inception_fid_forward.17} parent=11 // pred_fallthru
        _
    $region12: #{inception_fid_forward.17} parent=5 // pred_fallthru
      _
    %p124 = scmp.lt.s32.totalorder %s9, 2
    // Predicated region
    $region21: #{inception_fid_forward.17} parent=5 // pred_check
      %p125 = pneg %p124
    $region22: #{inception_fid_forward.17} parent=5 // pred_check_branch
      %127 = sbr.rel (%p125) target = $region24
    $region23: #{inception_fid_forward.17} parent=5 // pred_region
      // Predicated region
      $region25: #{inception_fid_forward.17} parent=23 // pred_check
        %p128 = pneg %p29
      $region26: #{inception_fid_forward.17} parent=23 // pred_check_branch
        %130 = sbr.rel (%p128) target = $region28
      $region27: #{inception_fid_forward.17} parent=23 // pred_region
        %p131 = scmp.lt.s32.totalorder %s9, 1
        %s132 = scalar_select %p131, %s9, 1
        %s133 = smul.addr %s132, 5
        %s134 = smul.addr %s133, 4
        %s135 = scalar_lea.vmem %s0, %s134
      $region28: #{inception_fid_forward.17} parent=23 // pred_fallthru
        _
    $region24: #{inception_fid_forward.17} parent=5 // pred_fallthru
      _
    %p136 = scmp.le.s32.totalorder 1, %s9
    %p137 = scmp.lt.s32.totalorder %s9, 3
    %p138 = pnand %p136, %p137
    %p139 = pneg %p138
    // Predicated region
    $region29: #{inception_fid_forward.17} parent=5 // pred_check
      _
    $region30: #{inception_fid_forward.17} parent=5 // pred_check_branch
      %141 = sbr.rel (%p138) target = $region32
    $region31: #{inception_fid_forward.17} parent=5 // pred_region
      %s142 = ssub.s32 %s9, 1
      %p143 = scmp.lt.s32.totalorder %s14, 1
      %s144 = scalar_select %p143, %s14, 1
      %s145 = smul.addr %s144, 5
      %s146 = smul.addr %s145, 4
      %s147 = scalar_lea.vmem %s0, %s146
      %p148 = pneg %p35
      %p149 = pneg %p32
      %p150 = pneg %p56
      %p151 = pneg %p53
      %p152 = pneg %p77
      %p153 = pneg %p74
      %p154 = pneg %p103
      %p155 = pneg %p100
      %p156 = scmp.lt.s32.totalorder %s14, 1
      %s157 = scalar_select %p156, %s14, 1
      %s158 = smul.addr %s157, 3
      %s159 = smul.addr %s158, 4
      %s160 = scalar_lea.vmem %s3, %s159
      %p161 = scmp.lt.s32.totalorder %s14, 1
      %s162 = scalar_select %p161, %s14, 1
      %s163 = smul.addr %s162, 5
      %s164 = smul.addr %s163, 4
      %s165 = scalar_lea.vmem %s0, %s164
      %p166 = scmp.lt.s32.totalorder %s14, 1
      %s167 = scalar_select %p166, %s14, 1
      %s168 = smul.addr %s167, 3
      %s169 = smul.addr %s168, 4
      %s170 = scalar_lea.vmem %s3, %s169
      %v172 = vld [vmem:[%s165] sm:$0xf]
      %v173 = vld [vmem:[%s165 + $0x4] sm:$0xf]
      %v174 = vld [vmem:[%s165 + $0x8] sm:$0xf]
      %v175 = vld [vmem:[%s165 + $0xc] sm:$0xf]
      %v176 = vld [vmem:[%s165 + $0x10] sm:$0x7]
      %v177 = vld [vmem:[%s1] sm:$0xf]
      %v178 = vld [vmem:[%s1 + $0x4] sm:$0xf]
      %v179 = vld [vmem:[%s1 + $0x8] sm:$0xf]
      %v180 = vld [vmem:[%s1 + $0xc] sm:$0xf]
      %v181 = vld [vmem:[%s1 + $0x10] sm:$0xf]
      %v182 = vld [vmem:[%s1 + $0x14] sm:$0xf]
      %v183 = vld [vmem:[%s1 + $0x18] sm:$0xf]
      %v184 = vld [vmem:[%s1 + $0x1c] sm:$0xf]
      %v185 = vld [vmem:[%s1 + $0x20] sm:$0xf]
      %v186 = vld [vmem:[%s1 + $0x24] sm:$0xf]
      %v187 = vld [vmem:[%s1 + $0x28] sm:$0xf]
      %v188 = vld [vmem:[%s1 + $0x2c] sm:$0xf]
      %v189 = vld [vmem:[%s1 + $0x30] sm:$0xf]
      %v190 = vld [vmem:[%s1 + $0x34] sm:$0xf]
      %v191 = vld [vmem:[%s1 + $0x38] sm:$0xf]
      %v192 = vld [vmem:[%s1 + $0x3c] sm:$0xf]
      %v193 = vld [vmem:[%s1 + $0x40] sm:$0xf]
      %v194 = vld [vmem:[%s1 + $0x44] sm:$0xf]
      %v195 = vld [vmem:[%s1 + $0x48] sm:$0xf]
      %v196 = vld [vmem:[%s1 + $0x4c] sm:$0xf]
      %v197 = vld [vmem:[%s1 + $0x50] sm:$0xf]
      %v198 = vld [vmem:[%s1 + $0x54] sm:$0xf]
      %v199 = vld [vmem:[%s1 + $0x58] sm:$0xf]
      %v200 = vld [vmem:[%s1 + $0x5c] sm:$0xf]
      %v201 = vld [vmem:[%s1 + $0x60] sm:$0xf]
      %v202 = vld [vmem:[%s1 + $0x64] sm:$0xf]
      %v203 = vld [vmem:[%s1 + $0x68] sm:$0xf]
      %v204 = vld [vmem:[%s1 + $0x6c] sm:$0xf]
      %v205 = vld [vmem:[%s1 + $0x70] sm:$0xf]
      %v206 = vld [vmem:[%s1 + $0x74] sm:$0xf]
      %v207 = vld [vmem:[%s1 + $0x78] sm:$0xf]
      %v208 = vld [vmem:[%s1 + $0x7c] sm:$0xf]
      %v213 = vunpack.c.l.b16 %v172
      %v214 = vunpack.c.l.b16 %v173
      %v215 = vunpack.c.l.b16 %v174
      %v216 = vunpack.c.l.b16 %v175
      %v217 = vpack.c.b16 %v214, %v213
      %v218 = vpack.c.b16 %v216, %v215
      %vm219 = vsmask.f32 7424
      %v221 = vshrl.u32 %v217, 16
      %v223 = vshll.u32 %v217, 16
      %v225 = vrot.slane %v223, 1
      %v226 = vor.u32 %v221, %v225
      %v228 = vshll.u32 %v218, 16
      %v230 = vrot.slane %v228, 1
      %v231 = vsel %vm219, %v226, %v230
      %v232 = vshrl.u32 %v218, 16
      %v234 = vor.u32 %v232, %v230
      %v253 = vunpack.c.l.b16 %v193
      %v254 = vunpack.c.l.b16 %v194
      %v255 = vunpack.c.l.b16 %v195
      %v256 = vunpack.c.l.b16 %v196
      %v257 = vunpack.c.l.b16 %v197
      %v258 = vunpack.c.l.b16 %v198
      %v259 = vunpack.c.l.b16 %v199
      %v260 = vunpack.c.l.b16 %v200
      %v261 = vunpack.c.l.b16 %v201
      %v262 = vunpack.c.l.b16 %v202
      %v263 = vunpack.c.l.b16 %v203
      %v264 = vunpack.c.l.b16 %v204
      %v265 = vunpack.c.l.b16 %v205
      %v266 = vunpack.c.l.b16 %v206
      %v267 = vunpack.c.l.b16 %v207
      %v268 = vunpack.c.l.b16 %v208
      %v269 = vpack.c.b16 %v254, %v253
      %v270 = vpack.c.b16 %v256, %v255
      %v271 = vpack.c.b16 %v258, %v257
      %v272 = vpack.c.b16 %v260, %v259
      %v273 = vpack.c.b16 %v262, %v261
      %v274 = vpack.c.b16 %v264, %v263
      %v275 = vpack.c.b16 %v266, %v265
      %v276 = vpack.c.b16 %v268, %v267
      %285 = vmatprep.subr.bf16.mxu0 0
      %286 = vmatpush1.bf16.msra.mxu0 %v276
      %287 = vmatprep.subr.bf16.mxu0 0
      %288 = vmatpush1.bf16.msra.mxu0 %v275
      %289 = vmatprep.subr.bf16.mxu0 0
      %290 = vmatpush1.bf16.msra.mxu0 %v274
      %291 = vmatprep.subr.bf16.mxu0 0
      %292 = vmatpush1.bf16.msra.mxu0 %v273
      %293 = vmatprep.subr.bf16.mxu0 0
      %294 = vmatpush1.bf16.msra.mxu0 %v272
      %295 = vmatprep.subr.bf16.mxu0 0
      %296 = vmatpush1.bf16.msra.mxu0 %v271
      %297 = vmatprep.subr.bf16.mxu0 0
      %298 = vmatpush1.bf16.msra.mxu0 %v270
      %299 = vmatprep.subr.bf16.mxu0 0
      %300 = vmatpush1.bf16.msra.mxu0 %v269
      %301 = vmatprep.subr.bf16.mxu0 0
      %302 = vmatpush2.bf16.msra.mxu0 0
      %303 = vmatprep.subr.bf16.mxu0 0
      %304 = vmatpush2.bf16.msra.mxu0 0
      %305 = vmatprep.subr.bf16.mxu0 0
      %306 = vmatpush2.bf16.msra.mxu0 0
      %307 = vmatprep.subr.bf16.mxu0 0
      %308 = vmatpush2.bf16.msra.mxu0 0
      %309 = vmatprep.subr.bf16.mxu0 0
      %310 = vmatpush2.bf16.msra.mxu0 0
      %311 = vmatprep.subr.bf16.mxu0 0
      %312 = vmatpush2.bf16.msra.mxu0 0
      %313 = vmatprep.subr.bf16.mxu0 0
      %314 = vmatpush2.bf16.msra.mxu0 0
      %315 = vmatprep.subr.bf16.mxu0 0
      %316 = vmatpush2.bf16.msra.mxu0 0
      %317 = vmatprep.mubr.bf16.mxu0 0
      %318 = vmatmul.mubr.bf16.gmra.mxu0 %v231
      %v319 = vpop.f32.mrf.mxu0
      %v320 = vadd.f32 0.0, %v319
      %v321 = vpop.f32.mrf.mxu0
      %v322 = vpop.f32.mrf.mxu0
      %v323 = vadd.f32 0.0, %v322
      %v324 = vpop.f32.mrf.mxu0
      %325 = vmatprep.mubr.bf16.mxu0 0
      %326 = vmatmul.mubr.bf16.gmra.mxu0 %v234
      %v327 = vpop.f32.mrf.mxu0
      %v328 = vadd.f32 0.0, %v327
      %v329 = vpop.f32.mrf.mxu0
      %v330 = vpop.f32.mrf.mxu0
      %v331 = vpop.f32.mrf.mxu0
      %332 = vdwg.mxu0
      %v333 = vpack.c.b16 %v215, %v215
      %v352 = vunpack.c.l.b16 %v177
      %v353 = vunpack.c.l.b16 %v178
      %v354 = vunpack.c.l.b16 %v179
      %v355 = vunpack.c.l.b16 %v180
      %v356 = vunpack.c.l.b16 %v181
      %v357 = vunpack.c.l.b16 %v182
      %v358 = vunpack.c.l.b16 %v183
      %v359 = vunpack.c.l.b16 %v184
      %v360 = vunpack.c.l.b16 %v185
      %v361 = vunpack.c.l.b16 %v186
      %v362 = vunpack.c.l.b16 %v187
      %v363 = vunpack.c.l.b16 %v188
      %v364 = vunpack.c.l.b16 %v189
      %v365 = vunpack.c.l.b16 %v190
      %v366 = vunpack.c.l.b16 %v191
      %v367 = vunpack.c.l.b16 %v192
      %v368 = vpack.c.b16 %v353, %v352
      %v369 = vpack.c.b16 %v355, %v354
      %v370 = vpack.c.b16 %v357, %v356
      %v371 = vpack.c.b16 %v359, %v358
      %v372 = vpack.c.b16 %v361, %v360
      %v373 = vpack.c.b16 %v363, %v362
      %v374 = vpack.c.b16 %v365, %v364
      %v375 = vpack.c.b16 %v367, %v366
      %384 = vmatprep.subr.bf16.mxu0 0
      %385 = vmatpush1.bf16.msra.mxu0 %v375
      %386 = vmatprep.subr.bf16.mxu0 0
      %387 = vmatpush1.bf16.msra.mxu0 %v374
      %388 = vmatprep.subr.bf16.mxu0 0
      %389 = vmatpush1.bf16.msra.mxu0 %v373
      %390 = vmatprep.subr.bf16.mxu0 0
      %391 = vmatpush1.bf16.msra.mxu0 %v372
      %392 = vmatprep.subr.bf16.mxu0 0
      %393 = vmatpush1.bf16.msra.mxu0 %v371
      %394 = vmatprep.subr.bf16.mxu0 0
      %395 = vmatpush1.bf16.msra.mxu0 %v370
      %396 = vmatprep.subr.bf16.mxu0 0
      %397 = vmatpush1.bf16.msra.mxu0 %v369
      %398 = vmatprep.subr.bf16.mxu0 0
      %399 = vmatpush1.bf16.msra.mxu0 %v368
      %400 = vmatprep.subr.bf16.mxu0 0
      %401 = vmatpush2.bf16.msra.mxu0 0
      %402 = vmatprep.subr.bf16.mxu0 0
      %403 = vmatpush2.bf16.msra.mxu0 0
      %404 = vmatprep.subr.bf16.mxu0 0
      %405 = vmatpush2.bf16.msra.mxu0 0
      %406 = vmatprep.subr.bf16.mxu0 0
      %407 = vmatpush2.bf16.msra.mxu0 0
      %408 = vmatprep.subr.bf16.mxu0 0
      %409 = vmatpush2.bf16.msra.mxu0 0
      %410 = vmatprep.subr.bf16.mxu0 0
      %411 = vmatpush2.bf16.msra.mxu0 0
      %412 = vmatprep.subr.bf16.mxu0 0
      %413 = vmatpush2.bf16.msra.mxu0 0
      %414 = vmatprep.subr.bf16.mxu0 0
      %415 = vmatpush2.bf16.msra.mxu0 0
      %416 = vmatprep.mubr.bf16.mxu0 0
      %417 = vmatmul.mubr.bf16.gmra.mxu0 %v217
      %v418 = vpop.f32.mrf.mxu0
      %v419 = vadd.f32 %v320, %v418
      %v420 = vpop.f32.mrf.mxu0
      %v421 = vpop.f32.mrf.mxu0
      %v422 = vadd.f32 %v323, %v421
      %v423 = vpop.f32.mrf.mxu0
      %424 = vmatprep.mubr.bf16.mxu0 0
      %425 = vmatmul.mubr.bf16.gmra.mxu0 %v333
      %v426 = vpop.f32.mrf.mxu0
      %v427 = vadd.f32 %v328, %v426
      %v428 = vpop.f32.mrf.mxu0
      %v429 = vpop.f32.mrf.mxu0
      %v430 = vpop.f32.mrf.mxu0
      %431 = vdwg.mxu0
      %v432 = vld [vmem:[%s1 + $0x80] sm:$0xf]
      %v433 = vld [vmem:[%s1 + $0x84] sm:$0xf]
      %v434 = vld [vmem:[%s1 + $0x88] sm:$0xf]
      %v435 = vld [vmem:[%s1 + $0x8c] sm:$0xf]
      %v436 = vld [vmem:[%s1 + $0x90] sm:$0xf]
      %v437 = vld [vmem:[%s1 + $0x94] sm:$0xf]
      %v438 = vld [vmem:[%s1 + $0x98] sm:$0xf]
      %v439 = vld [vmem:[%s1 + $0x9c] sm:$0xf]
      %v440 = vld [vmem:[%s1 + $0xa0] sm:$0xf]
      %v441 = vld [vmem:[%s1 + $0xa4] sm:$0xf]
      %v442 = vld [vmem:[%s1 + $0xa8] sm:$0xf]
      %v443 = vld [vmem:[%s1 + $0xac] sm:$0xf]
      %v444 = vld [vmem:[%s1 + $0xb0] sm:$0xf]
      %v445 = vld [vmem:[%s1 + $0xb4] sm:$0xf]
      %v446 = vld [vmem:[%s1 + $0xb8] sm:$0xf]
      %v447 = vld [vmem:[%s1 + $0xbc] sm:$0xf]
      %vm448 = vcmask 1046528
      %v449 = vrot.slane %v217, 1
      %v450 = vrot.slane %v218, 1
      %v451 = vsel %vm448, %v449, %v450
      %v470 = vunpack.c.l.b16 %v432
      %v471 = vunpack.c.l.b16 %v433
      %v472 = vunpack.c.l.b16 %v434
      %v473 = vunpack.c.l.b16 %v435
      %v474 = vunpack.c.l.b16 %v436
      %v475 = vunpack.c.l.b16 %v437
      %v476 = vunpack.c.l.b16 %v438
      %v477 = vunpack.c.l.b16 %v439
      %v478 = vunpack.c.l.b16 %v440
      %v479 = vunpack.c.l.b16 %v441
      %v480 = vunpack.c.l.b16 %v442
      %v481 = vunpack.c.l.b16 %v443
      %v482 = vunpack.c.l.b16 %v444
      %v483 = vunpack.c.l.b16 %v445
      %v484 = vunpack.c.l.b16 %v446
      %v485 = vunpack.c.l.b16 %v447
      %v486 = vpack.c.b16 %v471, %v470
      %v487 = vpack.c.b16 %v473, %v472
      %v488 = vpack.c.b16 %v475, %v474
      %v489 = vpack.c.b16 %v477, %v476
      %v490 = vpack.c.b16 %v479, %v478
      %v491 = vpack.c.b16 %v481, %v480
      %v492 = vpack.c.b16 %v483, %v482
      %v493 = vpack.c.b16 %v485, %v484
      %502 = vmatprep.subr.bf16.mxu0 0
      %503 = vmatpush1.bf16.msra.mxu0 %v493
      %504 = vmatprep.subr.bf16.mxu0 0
      %505 = vmatpush1.bf16.msra.mxu0 %v492
      %506 = vmatprep.subr.bf16.mxu0 0
      %507 = vmatpush1.bf16.msra.mxu0 %v491
      %508 = vmatprep.subr.bf16.mxu0 0
      %509 = vmatpush1.bf16.msra.mxu0 %v490
      %510 = vmatprep.subr.bf16.mxu0 0
      %511 = vmatpush1.bf16.msra.mxu0 %v489
      %512 = vmatprep.subr.bf16.mxu0 0
      %513 = vmatpush1.bf16.msra.mxu0 %v488
      %514 = vmatprep.subr.bf16.mxu0 0
      %515 = vmatpush1.bf16.msra.mxu0 %v487
      %516 = vmatprep.subr.bf16.mxu0 0
      %517 = vmatpush1.bf16.msra.mxu0 %v486
      %518 = vmatprep.subr.bf16.mxu0 0
      %519 = vmatpush2.bf16.msra.mxu0 0
      %520 = vmatprep.subr.bf16.mxu0 0
      %521 = vmatpush2.bf16.msra.mxu0 0
      %522 = vmatprep.subr.bf16.mxu0 0
      %523 = vmatpush2.bf16.msra.mxu0 0
      %524 = vmatprep.subr.bf16.mxu0 0
      %525 = vmatpush2.bf16.msra.mxu0 0
      %526 = vmatprep.subr.bf16.mxu0 0
      %527 = vmatpush2.bf16.msra.mxu0 0
      %528 = vmatprep.subr.bf16.mxu0 0
      %529 = vmatpush2.bf16.msra.mxu0 0
      %530 = vmatprep.subr.bf16.mxu0 0
      %531 = vmatpush2.bf16.msra.mxu0 0
      %532 = vmatprep.subr.bf16.mxu0 0
      %533 = vmatpush2.bf16.msra.mxu0 0
      %534 = vmatprep.mubr.bf16.mxu0 0
      %535 = vmatmul.mubr.bf16.gmra.mxu0 %v451
      %v536 = vpop.f32.mrf.mxu0
      %v537 = vadd.f32 0.0, %v536
      %v538 = vpop.f32.mrf.mxu0
      %v539 = vpop.f32.mrf.mxu0
      %v540 = vadd.f32 0.0, %v539
      %v541 = vpop.f32.mrf.mxu0
      %542 = vmatprep.mubr.bf16.mxu0 0
      %543 = vmatmul.mubr.bf16.gmra.mxu0 %v450
      %v544 = vpop.f32.mrf.mxu0
      %v545 = vadd.f32 0.0, %v544
      %v546 = vpop.f32.mrf.mxu0
      %v547 = vpop.f32.mrf.mxu0
      %v548 = vpop.f32.mrf.mxu0
      %549 = vdwg.mxu0
      %v550 = vadd.f32 %v419, %v537
      %v551 = vadd.f32 %v422, %v540
      %v552 = vadd.f32 %v427, %v545
      %v553 = vld [vmem:[%s1 + $0xc0] sm:$0xf]
      %v554 = vld [vmem:[%s1 + $0xc4] sm:$0xf]
      %v555 = vld [vmem:[%s1 + $0xc8] sm:$0xf]
      %v556 = vld [vmem:[%s1 + $0xcc] sm:$0xf]
      %v557 = vld [vmem:[%s1 + $0xd0] sm:$0xf]
      %v558 = vld [vmem:[%s1 + $0xd4] sm:$0xf]
      %v559 = vld [vmem:[%s1 + $0xd8] sm:$0xf]
      %v560 = vld [vmem:[%s1 + $0xdc] sm:$0xf]
      %v561 = vld [vmem:[%s1 + $0xe0] sm:$0xf]
      %v562 = vld [vmem:[%s1 + $0xe4] sm:$0xf]
      %v563 = vld [vmem:[%s1 + $0xe8] sm:$0xf]
      %v564 = vld [vmem:[%s1 + $0xec] sm:$0xf]
      %v565 = vld [vmem:[%s1 + $0xf0] sm:$0xf]
      %v566 = vld [vmem:[%s1 + $0xf4] sm:$0xf]
      %v567 = vld [vmem:[%s1 + $0xf8] sm:$0xf]
      %v568 = vld [vmem:[%s1 + $0xfc] sm:$0xf]
      %vm569 = vcmask 1044480
      %v570 = vrot.slane %v217, 3
      %v571 = vrot.slane %v218, 3
      %v572 = vsel %vm569, %v570, %v571
      %v591 = vunpack.c.l.b16 %v553
      %v592 = vunpack.c.l.b16 %v554
      %v593 = vunpack.c.l.b16 %v555
      %v594 = vunpack.c.l.b16 %v556
      %v595 = vunpack.c.l.b16 %v557
      %v596 = vunpack.c.l.b16 %v558
      %v597 = vunpack.c.l.b16 %v559
      %v598 = vunpack.c.l.b16 %v560
      %v599 = vunpack.c.l.b16 %v561
      %v600 = vunpack.c.l.b16 %v562
      %v601 = vunpack.c.l.b16 %v563
      %v602 = vunpack.c.l.b16 %v564
      %v603 = vunpack.c.l.b16 %v565
      %v604 = vunpack.c.l.b16 %v566
      %v605 = vunpack.c.l.b16 %v567
      %v606 = vunpack.c.l.b16 %v568
      %v607 = vpack.c.b16 %v592, %v591
      %v608 = vpack.c.b16 %v594, %v593
      %v609 = vpack.c.b16 %v596, %v595
      %v610 = vpack.c.b16 %v598, %v597
      %v611 = vpack.c.b16 %v600, %v599
      %v612 = vpack.c.b16 %v602, %v601
      %v613 = vpack.c.b16 %v604, %v603
      %v614 = vpack.c.b16 %v606, %v605
      %623 = vmatprep.subr.bf16.mxu0 0
      %624 = vmatpush1.bf16.msra.mxu0 %v614
      %625 = vmatprep.subr.bf16.mxu0 0
      %626 = vmatpush1.bf16.msra.mxu0 %v613
      %627 = vmatprep.subr.bf16.mxu0 0
      %628 = vmatpush1.bf16.msra.mxu0 %v612
      %629 = vmatprep.subr.bf16.mxu0 0
      %630 = vmatpush1.bf16.msra.mxu0 %v611
      %631 = vmatprep.subr.bf16.mxu0 0
      %632 = vmatpush1.bf16.msra.mxu0 %v610
      %633 = vmatprep.subr.bf16.mxu0 0
      %634 = vmatpush1.bf16.msra.mxu0 %v609
      %635 = vmatprep.subr.bf16.mxu0 0
      %636 = vmatpush1.bf16.msra.mxu0 %v608
      %637 = vmatprep.subr.bf16.mxu0 0
      %638 = vmatpush1.bf16.msra.mxu0 %v607
      %639 = vmatprep.subr.bf16.mxu0 0
      %640 = vmatpush2.bf16.msra.mxu0 0
      %641 = vmatprep.subr.bf16.mxu0 0
      %642 = vmatpush2.bf16.msra.mxu0 0
      %643 = vmatprep.subr.bf16.mxu0 0
      %644 = vmatpush2.bf16.msra.mxu0 0
      %645 = vmatprep.subr.bf16.mxu0 0
      %646 = vmatpush2.bf16.msra.mxu0 0
      %647 = vmatprep.subr.bf16.mxu0 0
      %648 = vmatpush2.bf16.msra.mxu0 0
      %649 = vmatprep.subr.bf16.mxu0 0
      %650 = vmatpush2.bf16.msra.mxu0 0
      %651 = vmatprep.subr.bf16.mxu0 0
      %652 = vmatpush2.bf16.msra.mxu0 0
      %653 = vmatprep.subr.bf16.mxu0 0
      %654 = vmatpush2.bf16.msra.mxu0 0
      %655 = vmatprep.mubr.bf16.mxu0 0
      %656 = vmatmul.mubr.bf16.gmra.mxu0 %v572
      %v657 = vpop.f32.mrf.mxu0
      %v658 = vadd.f32 0.0, %v657
      %v659 = vpop.f32.mrf.mxu0
      %v660 = vpop.f32.mrf.mxu0
      %v661 = vadd.f32 0.0, %v660
      %v662 = vpop.f32.mrf.mxu0
      %663 = vmatprep.mubr.bf16.mxu0 0
      %664 = vmatmul.mubr.bf16.gmra.mxu0 %v571
      %v665 = vpop.f32.mrf.mxu0
      %v666 = vadd.f32 0.0, %v665
      %v667 = vpop.f32.mrf.mxu0
      %v668 = vpop.f32.mrf.mxu0
      %v669 = vpop.f32.mrf.mxu0
      %670 = vdwg.mxu0
      %v671 = vadd.f32 %v550, %v658
      %v672 = vadd.f32 %v551, %v661
      %v673 = vadd.f32 %v552, %v666
      %v674 = vld [vmem:[%s1 + $0x100] sm:$0xf]
      %v675 = vld [vmem:[%s1 + $0x104] sm:$0xf]
      %v676 = vld [vmem:[%s1 + $0x108] sm:$0xf]
      %v677 = vld [vmem:[%s1 + $0x10c] sm:$0xf]
      %v678 = vld [vmem:[%s1 + $0x110] sm:$0xf]
      %v679 = vld [vmem:[%s1 + $0x114] sm:$0xf]
      %v680 = vld [vmem:[%s1 + $0x118] sm:$0xf]
      %v681 = vld [vmem:[%s1 + $0x11c] sm:$0xf]
      %v682 = vld [vmem:[%s1 + $0x120] sm:$0xf]
      %v683 = vld [vmem:[%s1 + $0x124] sm:$0xf]
      %v684 = vld [vmem:[%s1 + $0x128] sm:$0xf]
      %v685 = vld [vmem:[%s1 + $0x12c] sm:$0xf]
      %v686 = vld [vmem:[%s1 + $0x130] sm:$0xf]
      %v687 = vld [vmem:[%s1 + $0x134] sm:$0xf]
      %v688 = vld [vmem:[%s1 + $0x138] sm:$0xf]
      %v689 = vld [vmem:[%s1 + $0x13c] sm:$0xf]
      %vm690 = vsmask.f32 4352
      %v691 = vrot.slane %v221, 3
      %v692 = vrot.slane %v223, 4
      %v693 = vor.u32 %v691, %v692
      %v694 = vrot.slane %v232, 3
      %v695 = vrot.slane %v228, 4
      %v696 = vor.u32 %v694, %v695
      %v697 = vsel %vm690, %v693, %v696
      %v716 = vunpack.c.l.b16 %v674
      %v717 = vunpack.c.l.b16 %v675
      %v718 = vunpack.c.l.b16 %v676
      %v719 = vunpack.c.l.b16 %v677
      %v720 = vunpack.c.l.b16 %v678
      %v721 = vunpack.c.l.b16 %v679
      %v722 = vunpack.c.l.b16 %v680
      %v723 = vunpack.c.l.b16 %v681
      %v724 = vunpack.c.l.b16 %v682
      %v725 = vunpack.c.l.b16 %v683
      %v726 = vunpack.c.l.b16 %v684
      %v727 = vunpack.c.l.b16 %v685
      %v728 = vunpack.c.l.b16 %v686
      %v729 = vunpack.c.l.b16 %v687
      %v730 = vunpack.c.l.b16 %v688
      %v731 = vunpack.c.l.b16 %v689
      %v732 = vpack.c.b16 %v717, %v716
      %v733 = vpack.c.b16 %v719, %v718
      %v734 = vpack.c.b16 %v721, %v720
      %v735 = vpack.c.b16 %v723, %v722
      %v736 = vpack.c.b16 %v725, %v724
      %v737 = vpack.c.b16 %v727, %v726
      %v738 = vpack.c.b16 %v729, %v728
      %v739 = vpack.c.b16 %v731, %v730
      %748 = vmatprep.subr.bf16.mxu0 0
      %749 = vmatpush1.bf16.msra.mxu0 %v739
      %750 = vmatprep.subr.bf16.mxu0 0
      %751 = vmatpush1.bf16.msra.mxu0 %v738
      %752 = vmatprep.subr.bf16.mxu0 0
      %753 = vmatpush1.bf16.msra.mxu0 %v737
      %754 = vmatprep.subr.bf16.mxu0 0
      %755 = vmatpush1.bf16.msra.mxu0 %v736
      %756 = vmatprep.subr.bf16.mxu0 0
      %757 = vmatpush1.bf16.msra.mxu0 %v735
      %758 = vmatprep.subr.bf16.mxu0 0
      %759 = vmatpush1.bf16.msra.mxu0 %v734
      %760 = vmatprep.subr.bf16.mxu0 0
      %761 = vmatpush1.bf16.msra.mxu0 %v733
      %762 = vmatprep.subr.bf16.mxu0 0
      %763 = vmatpush1.bf16.msra.mxu0 %v732
      %764 = vmatprep.subr.bf16.mxu0 0
      %765 = vmatpush2.bf16.msra.mxu0 0
      %766 = vmatprep.subr.bf16.mxu0 0
      %767 = vmatpush2.bf16.msra.mxu0 0
      %768 = vmatprep.subr.bf16.mxu0 0
      %769 = vmatpush2.bf16.msra.mxu0 0
      %770 = vmatprep.subr.bf16.mxu0 0
      %771 = vmatpush2.bf16.msra.mxu0 0
      %772 = vmatprep.subr.bf16.mxu0 0
      %773 = vmatpush2.bf16.msra.mxu0 0
      %774 = vmatprep.subr.bf16.mxu0 0
      %775 = vmatpush2.bf16.msra.mxu0 0
      %776 = vmatprep.subr.bf16.mxu0 0
      %777 = vmatpush2.bf16.msra.mxu0 0
      %778 = vmatprep.subr.bf16.mxu0 0
      %779 = vmatpush2.bf16.msra.mxu0 0
      %780 = vmatprep.mubr.bf16.mxu0 0
      %781 = vmatmul.mubr.bf16.gmra.mxu0 %v697
      %v782 = vpop.f32.mrf.mxu0
      %v783 = vadd.f32 0.0, %v782
      %v784 = vpop.f32.mrf.mxu0
      %v785 = vpop.f32.mrf.mxu0
      %v786 = vadd.f32 0.0, %v785
      %v787 = vpop.f32.mrf.mxu0
      %788 = vmatprep.mubr.bf16.mxu0 0
      %789 = vmatmul.mubr.bf16.gmra.mxu0 %v696
      %v790 = vpop.f32.mrf.mxu0
      %v791 = vadd.f32 0.0, %v790
      %v792 = vpop.f32.mrf.mxu0
      %v793 = vpop.f32.mrf.mxu0
      %v794 = vpop.f32.mrf.mxu0
      %795 = vdwg.mxu0
      %v796 = vadd.f32 %v671, %v783
      %v797 = vadd.f32 %v672, %v786
      %v798 = vadd.f32 %v673, %v791
      %v799 = vld [vmem:[%s1 + $0x140] sm:$0xf]
      %v800 = vld [vmem:[%s1 + $0x144] sm:$0xf]
      %v801 = vld [vmem:[%s1 + $0x148] sm:$0xf]
      %v802 = vld [vmem:[%s1 + $0x14c] sm:$0xf]
      %v803 = vld [vmem:[%s1 + $0x150] sm:$0xf]
      %v804 = vld [vmem:[%s1 + $0x154] sm:$0xf]
      %v805 = vld [vmem:[%s1 + $0x158] sm:$0xf]
      %v806 = vld [vmem:[%s1 + $0x15c] sm:$0xf]
      %v807 = vld [vmem:[%s1 + $0x160] sm:$0xf]
      %v808 = vld [vmem:[%s1 + $0x164] sm:$0xf]
      %v809 = vld [vmem:[%s1 + $0x168] sm:$0xf]
      %v810 = vld [vmem:[%s1 + $0x16c] sm:$0xf]
      %v811 = vld [vmem:[%s1 + $0x170] sm:$0xf]
      %v812 = vld [vmem:[%s1 + $0x174] sm:$0xf]
      %v813 = vld [vmem:[%s1 + $0x178] sm:$0xf]
      %v814 = vld [vmem:[%s1 + $0x17c] sm:$0xf]
      %v815 = vpack.c.b16 %v215, %v214
      %v816 = vpack.c.b16 %v216, %v216
      %v835 = vunpack.c.l.b16 %v799
      %v836 = vunpack.c.l.b16 %v800
      %v837 = vunpack.c.l.b16 %v801
      %v838 = vunpack.c.l.b16 %v802
      %v839 = vunpack.c.l.b16 %v803
      %v840 = vunpack.c.l.b16 %v804
      %v841 = vunpack.c.l.b16 %v805
      %v842 = vunpack.c.l.b16 %v806
      %v843 = vunpack.c.l.b16 %v807
      %v844 = vunpack.c.l.b16 %v808
      %v845 = vunpack.c.l.b16 %v809
      %v846 = vunpack.c.l.b16 %v810
      %v847 = vunpack.c.l.b16 %v811
      %v848 = vunpack.c.l.b16 %v812
      %v849 = vunpack.c.l.b16 %v813
      %v850 = vunpack.c.l.b16 %v814
      %v851 = vpack.c.b16 %v836, %v835
      %v852 = vpack.c.b16 %v838, %v837
      %v853 = vpack.c.b16 %v840, %v839
      %v854 = vpack.c.b16 %v842, %v841
      %v855 = vpack.c.b16 %v844, %v843
      %v856 = vpack.c.b16 %v846, %v845
      %v857 = vpack.c.b16 %v848, %v847
      %v858 = vpack.c.b16 %v850, %v849
      %867 = vmatprep.subr.bf16.mxu0 0
      %868 = vmatpush1.bf16.msra.mxu0 %v858
      %869 = vmatprep.subr.bf16.mxu0 0
      %870 = vmatpush1.bf16.msra.mxu0 %v857
      %871 = vmatprep.subr.bf16.mxu0 0
      %872 = vmatpush1.bf16.msra.mxu0 %v856
      %873 = vmatprep.subr.bf16.mxu0 0
      %874 = vmatpush1.bf16.msra.mxu0 %v855
      %875 = vmatprep.subr.bf16.mxu0 0
      %876 = vmatpush1.bf16.msra.mxu0 %v854
      %877 = vmatprep.subr.bf16.mxu0 0
      %878 = vmatpush1.bf16.msra.mxu0 %v853
      %879 = vmatprep.subr.bf16.mxu0 0
      %880 = vmatpush1.bf16.msra.mxu0 %v852
      %881 = vmatprep.subr.bf16.mxu0 0
      %882 = vmatpush1.bf16.msra.mxu0 %v851
      %883 = vmatprep.subr.bf16.mxu0 0
      %884 = vmatpush2.bf16.msra.mxu0 0
      %885 = vmatprep.subr.bf16.mxu0 0
      %886 = vmatpush2.bf16.msra.mxu0 0
      %887 = vmatprep.subr.bf16.mxu0 0
      %888 = vmatpush2.bf16.msra.mxu0 0
      %889 = vmatprep.subr.bf16.mxu0 0
      %890 = vmatpush2.bf16.msra.mxu0 0
      %891 = vmatprep.subr.bf16.mxu0 0
      %892 = vmatpush2.bf16.msra.mxu0 0
      %893 = vmatprep.subr.bf16.mxu0 0
      %894 = vmatpush2.bf16.msra.mxu0 0
      %895 = vmatprep.subr.bf16.mxu0 0
      %896 = vmatpush2.bf16.msra.mxu0 0
      %897 = vmatprep.subr.bf16.mxu0 0
      %898 = vmatpush2.bf16.msra.mxu0 0
      %899 = vmatprep.mubr.bf16.mxu0 0
      %900 = vmatmul.mubr.bf16.gmra.mxu0 %v815
      %v901 = vpop.f32.mrf.mxu0
      %v902 = vadd.f32 0.0, %v901
      %v903 = vpop.f32.mrf.mxu0
      %v904 = vpop.f32.mrf.mxu0
      %v905 = vadd.f32 0.0, %v904
      %v906 = vpop.f32.mrf.mxu0
      %907 = vmatprep.mubr.bf16.mxu0 0
      %908 = vmatmul.mubr.bf16.gmra.mxu0 %v816
      %v909 = vpop.f32.mrf.mxu0
      %v910 = vadd.f32 0.0, %v909
      %v911 = vpop.f32.mrf.mxu0
      %v912 = vpop.f32.mrf.mxu0
      %v913 = vpop.f32.mrf.mxu0
      %914 = vdwg.mxu0
      %v915 = vadd.f32 %v796, %v902
      %v916 = vadd.f32 %v797, %v905
      %v917 = vadd.f32 %v798, %v910
      %v918 = vld [vmem:[%s1 + $0x180] sm:$0xf]
      %v919 = vld [vmem:[%s1 + $0x184] sm:$0xf]
      %v920 = vld [vmem:[%s1 + $0x188] sm:$0xf]
      %v921 = vld [vmem:[%s1 + $0x18c] sm:$0xf]
      %v922 = vld [vmem:[%s1 + $0x190] sm:$0xf]
      %v923 = vld [vmem:[%s1 + $0x194] sm:$0xf]
      %v924 = vld [vmem:[%s1 + $0x198] sm:$0xf]
      %v925 = vld [vmem:[%s1 + $0x19c] sm:$0xf]
      %v926 = vld [vmem:[%s1 + $0x1a0] sm:$0xf]
      %v927 = vld [vmem:[%s1 + $0x1a4] sm:$0xf]
      %v928 = vld [vmem:[%s1 + $0x1a8] sm:$0xf]
      %v929 = vld [vmem:[%s1 + $0x1ac] sm:$0xf]
      %v930 = vld [vmem:[%s1 + $0x1b0] sm:$0xf]
      %v931 = vld [vmem:[%s1 + $0x1b4] sm:$0xf]
      %v932 = vld [vmem:[%s1 + $0x1b8] sm:$0xf]
      %v933 = vld [vmem:[%s1 + $0x1bc] sm:$0xf]
      %v935 = vunpack.c.l.b16 %v176
      %v936 = vpack.c.b16 %v935, %v216
      %vm937 = vcmask 1045504
      %v938 = vrot.slane %v815, 2
      %v939 = vrot.slane %v936, 2
      %v940 = vsel %vm937, %v938, %v939
      %v959 = vunpack.c.l.b16 %v918
      %v960 = vunpack.c.l.b16 %v919
      %v961 = vunpack.c.l.b16 %v920
      %v962 = vunpack.c.l.b16 %v921
      %v963 = vunpack.c.l.b16 %v922
      %v964 = vunpack.c.l.b16 %v923
      %v965 = vunpack.c.l.b16 %v924
      %v966 = vunpack.c.l.b16 %v925
      %v967 = vunpack.c.l.b16 %v926
      %v968 = vunpack.c.l.b16 %v927
      %v969 = vunpack.c.l.b16 %v928
      %v970 = vunpack.c.l.b16 %v929
      %v971 = vunpack.c.l.b16 %v930
      %v972 = vunpack.c.l.b16 %v931
      %v973 = vunpack.c.l.b16 %v932
      %v974 = vunpack.c.l.b16 %v933
      %v975 = vpack.c.b16 %v960, %v959
      %v976 = vpack.c.b16 %v962, %v961
      %v977 = vpack.c.b16 %v964, %v963
      %v978 = vpack.c.b16 %v966, %v965
      %v979 = vpack.c.b16 %v968, %v967
      %v980 = vpack.c.b16 %v970, %v969
      %v981 = vpack.c.b16 %v972, %v971
      %v982 = vpack.c.b16 %v974, %v973
      %991 = vmatprep.subr.bf16.mxu0 0
      %992 = vmatpush1.bf16.msra.mxu0 %v982
      %993 = vmatprep.subr.bf16.mxu0 0
      %994 = vmatpush1.bf16.msra.mxu0 %v981
      %995 = vmatprep.subr.bf16.mxu0 0
      %996 = vmatpush1.bf16.msra.mxu0 %v980
      %997 = vmatprep.subr.bf16.mxu0 0
      %998 = vmatpush1.bf16.msra.mxu0 %v979
      %999 = vmatprep.subr.bf16.mxu0 0
      %1000 = vmatpush1.bf16.msra.mxu0 %v978
      %1001 = vmatprep.subr.bf16.mxu0 0
      %1002 = vmatpush1.bf16.msra.mxu0 %v977
      %1003 = vmatprep.subr.bf16.mxu0 0
      %1004 = vmatpush1.bf16.msra.mxu0 %v976
      %1005 = vmatprep.subr.bf16.mxu0 0
      %1006 = vmatpush1.bf16.msra.mxu0 %v975
      %1007 = vmatprep.subr.bf16.mxu0 0
      %1008 = vmatpush2.bf16.msra.mxu0 0
      %1009 = vmatprep.subr.bf16.mxu0 0
      %1010 = vmatpush2.bf16.msra.mxu0 0
      %1011 = vmatprep.subr.bf16.mxu0 0
      %1012 = vmatpush2.bf16.msra.mxu0 0
      %1013 = vmatprep.subr.bf16.mxu0 0
      %1014 = vmatpush2.bf16.msra.mxu0 0
      %1015 = vmatprep.subr.bf16.mxu0 0
      %1016 = vmatpush2.bf16.msra.mxu0 0
      %1017 = vmatprep.subr.bf16.mxu0 0
      %1018 = vmatpush2.bf16.msra.mxu0 0
      %1019 = vmatprep.subr.bf16.mxu0 0
      %1020 = vmatpush2.bf16.msra.mxu0 0
      %1021 = vmatprep.subr.bf16.mxu0 0
      %1022 = vmatpush2.bf16.msra.mxu0 0
      %1023 = vmatprep.mubr.bf16.mxu0 0
      %1024 = vmatmul.mubr.bf16.gmra.mxu0 %v940
      %v1025 = vpop.f32.mrf.mxu0
      %v1026 = vadd.f32 0.0, %v1025
      %v1027 = vpop.f32.mrf.mxu0
      %v1028 = vpop.f32.mrf.mxu0
      %v1029 = vadd.f32 0.0, %v1028
      %v1030 = vpop.f32.mrf.mxu0
      %1031 = vmatprep.mubr.bf16.mxu0 0
      %1032 = vmatmul.mubr.bf16.gmra.mxu0 %v939
      %v1033 = vpop.f32.mrf.mxu0
      %v1034 = vadd.f32 0.0, %v1033
      %v1035 = vpop.f32.mrf.mxu0
      %v1036 = vpop.f32.mrf.mxu0
      %v1037 = vpop.f32.mrf.mxu0
      %1038 = vdwg.mxu0
      %v1039 = vadd.f32 %v915, %v1026
      %v1040 = vadd.f32 %v916, %v1029
      %v1041 = vadd.f32 %v917, %v1034
      %v1042 = vld [vmem:[%s1 + $0x1c0] sm:$0xf]
      %v1043 = vld [vmem:[%s1 + $0x1c4] sm:$0xf]
      %v1044 = vld [vmem:[%s1 + $0x1c8] sm:$0xf]
      %v1045 = vld [vmem:[%s1 + $0x1cc] sm:$0xf]
      %v1046 = vld [vmem:[%s1 + $0x1d0] sm:$0xf]
      %v1047 = vld [vmem:[%s1 + $0x1d4] sm:$0xf]
      %v1048 = vld [vmem:[%s1 + $0x1d8] sm:$0xf]
      %v1049 = vld [vmem:[%s1 + $0x1dc] sm:$0xf]
      %v1050 = vld [vmem:[%s1 + $0x1e0] sm:$0xf]
      %v1051 = vld [vmem:[%s1 + $0x1e4] sm:$0xf]
      %v1052 = vld [vmem:[%s1 + $0x1e8] sm:$0xf]
      %v1053 = vld [vmem:[%s1 + $0x1ec] sm:$0xf]
      %v1054 = vld [vmem:[%s1 + $0x1f0] sm:$0xf]
      %v1055 = vld [vmem:[%s1 + $0x1f4] sm:$0xf]
      %v1056 = vld [vmem:[%s1 + $0x1f8] sm:$0xf]
      %v1057 = vld [vmem:[%s1 + $0x1fc] sm:$0xf]
      %vm1058 = vsmask.f32 5376
      %v1060 = vshrl.u32 %v815, 16
      %v1062 = vrot.slane %v1060, 2
      %v1063 = vshll.u32 %v815, 16
      %v1065 = vrot.slane %v1063, 3
      %v1066 = vor.u32 %v1062, %v1065
      %v1068 = vshrl.u32 %v936, 16
      %v1070 = vrot.slane %v1068, 2
      %v1071 = vshll.u32 %v936, 16
      %v1073 = vrot.slane %v1071, 3
      %v1074 = vor.u32 %v1070, %v1073
      %v1075 = vsel %vm1058, %v1066, %v1074
      %v1094 = vunpack.c.l.b16 %v1042
      %v1095 = vunpack.c.l.b16 %v1043
      %v1096 = vunpack.c.l.b16 %v1044
      %v1097 = vunpack.c.l.b16 %v1045
      %v1098 = vunpack.c.l.b16 %v1046
      %v1099 = vunpack.c.l.b16 %v1047
      %v1100 = vunpack.c.l.b16 %v1048
      %v1101 = vunpack.c.l.b16 %v1049
      %v1102 = vunpack.c.l.b16 %v1050
      %v1103 = vunpack.c.l.b16 %v1051
      %v1104 = vunpack.c.l.b16 %v1052
      %v1105 = vunpack.c.l.b16 %v1053
      %v1106 = vunpack.c.l.b16 %v1054
      %v1107 = vunpack.c.l.b16 %v1055
      %v1108 = vunpack.c.l.b16 %v1056
      %v1109 = vunpack.c.l.b16 %v1057
      %v1110 = vpack.c.b16 %v1095, %v1094
      %v1111 = vpack.c.b16 %v1097, %v1096
      %v1112 = vpack.c.b16 %v1099, %v1098
      %v1113 = vpack.c.b16 %v1101, %v1100
      %v1114 = vpack.c.b16 %v1103, %v1102
      %v1115 = vpack.c.b16 %v1105, %v1104
      %v1116 = vpack.c.b16 %v1107, %v1106
      %v1117 = vpack.c.b16 %v1109, %v1108
      %1126 = vmatprep.subr.bf16.mxu0 0
      %1127 = vmatpush1.bf16.msra.mxu0 %v1117
      %1128 = vmatprep.subr.bf16.mxu0 0
      %1129 = vmatpush1.bf16.msra.mxu0 %v1116
      %1130 = vmatprep.subr.bf16.mxu0 0
      %1131 = vmatpush1.bf16.msra.mxu0 %v1115
      %1132 = vmatprep.subr.bf16.mxu0 0
      %1133 = vmatpush1.bf16.msra.mxu0 %v1114
      %1134 = vmatprep.subr.bf16.mxu0 0
      %1135 = vmatpush1.bf16.msra.mxu0 %v1113
      %1136 = vmatprep.subr.bf16.mxu0 0
      %1137 = vmatpush1.bf16.msra.mxu0 %v1112
      %1138 = vmatprep.subr.bf16.mxu0 0
      %1139 = vmatpush1.bf16.msra.mxu0 %v1111
      %1140 = vmatprep.subr.bf16.mxu0 0
      %1141 = vmatpush1.bf16.msra.mxu0 %v1110
      %1142 = vmatprep.subr.bf16.mxu0 0
      %1143 = vmatpush2.bf16.msra.mxu0 0
      %1144 = vmatprep.subr.bf16.mxu0 0
      %1145 = vmatpush2.bf16.msra.mxu0 0
      %1146 = vmatprep.subr.bf16.mxu0 0
      %1147 = vmatpush2.bf16.msra.mxu0 0
      %1148 = vmatprep.subr.bf16.mxu0 0
      %1149 = vmatpush2.bf16.msra.mxu0 0
      %1150 = vmatprep.subr.bf16.mxu0 0
      %1151 = vmatpush2.bf16.msra.mxu0 0
      %1152 = vmatprep.subr.bf16.mxu0 0
      %1153 = vmatpush2.bf16.msra.mxu0 0
      %1154 = vmatprep.subr.bf16.mxu0 0
      %1155 = vmatpush2.bf16.msra.mxu0 0
      %1156 = vmatprep.subr.bf16.mxu0 0
      %1157 = vmatpush2.bf16.msra.mxu0 0
      %1158 = vmatprep.mubr.bf16.mxu0 0
      %1159 = vmatmul.mubr.bf16.gmra.mxu0 %v1075
      %v1160 = vpop.f32.mrf.mxu0
      %v1161 = vadd.f32 0.0, %v1160
      %v1162 = vpop.f32.mrf.mxu0
      %v1163 = vpop.f32.mrf.mxu0
      %v1164 = vadd.f32 0.0, %v1163
      %v1165 = vpop.f32.mrf.mxu0
      %1166 = vmatprep.mubr.bf16.mxu0 0
      %1167 = vmatmul.mubr.bf16.gmra.mxu0 %v1074
      %v1168 = vpop.f32.mrf.mxu0
      %v1169 = vadd.f32 0.0, %v1168
      %v1170 = vpop.f32.mrf.mxu0
      %v1171 = vpop.f32.mrf.mxu0
      %v1172 = vpop.f32.mrf.mxu0
      %1173 = vdwg.mxu0
      %v1174 = vadd.f32 %v1039, %v1161
      %v1175 = vadd.f32 %v1040, %v1164
      %v1176 = vadd.f32 %v1041, %v1169
      %v1177 = vld [vmem:[%s1 + $0x200] sm:$0xf]
      %v1178 = vld [vmem:[%s1 + $0x204] sm:$0xf]
      %v1179 = vld [vmem:[%s1 + $0x208] sm:$0xf]
      %v1180 = vld [vmem:[%s1 + $0x20c] sm:$0xf]
      %v1181 = vld [vmem:[%s1 + $0x210] sm:$0xf]
      %v1182 = vld [vmem:[%s1 + $0x214] sm:$0xf]
      %v1183 = vld [vmem:[%s1 + $0x218] sm:$0xf]
      %v1184 = vld [vmem:[%s1 + $0x21c] sm:$0xf]
      %v1185 = vld [vmem:[%s1 + $0x220] sm:$0xf]
      %v1186 = vld [vmem:[%s1 + $0x224] sm:$0xf]
      %v1187 = vld [vmem:[%s1 + $0x228] sm:$0xf]
      %v1188 = vld [vmem:[%s1 + $0x22c] sm:$0xf]
      %v1189 = vld [vmem:[%s1 + $0x230] sm:$0xf]
      %v1190 = vld [vmem:[%s1 + $0x234] sm:$0xf]
      %v1191 = vld [vmem:[%s1 + $0x238] sm:$0xf]
      %v1192 = vld [vmem:[%s1 + $0x23c] sm:$0xf]
      %v1193 = vrot.slane %v815, 3
      %v1194 = vrot.slane %v936, 3
      %v1195 = vsel %vm569, %v1193, %v1194
      %v1214 = vunpack.c.l.b16 %v1177
      %v1215 = vunpack.c.l.b16 %v1178
      %v1216 = vunpack.c.l.b16 %v1179
      %v1217 = vunpack.c.l.b16 %v1180
      %v1218 = vunpack.c.l.b16 %v1181
      %v1219 = vunpack.c.l.b16 %v1182
      %v1220 = vunpack.c.l.b16 %v1183
      %v1221 = vunpack.c.l.b16 %v1184
      %v1222 = vunpack.c.l.b16 %v1185
      %v1223 = vunpack.c.l.b16 %v1186
      %v1224 = vunpack.c.l.b16 %v1187
      %v1225 = vunpack.c.l.b16 %v1188
      %v1226 = vunpack.c.l.b16 %v1189
      %v1227 = vunpack.c.l.b16 %v1190
      %v1228 = vunpack.c.l.b16 %v1191
      %v1229 = vunpack.c.l.b16 %v1192
      %v1230 = vpack.c.b16 %v1215, %v1214
      %v1231 = vpack.c.b16 %v1217, %v1216
      %v1232 = vpack.c.b16 %v1219, %v1218
      %v1233 = vpack.c.b16 %v1221, %v1220
      %v1234 = vpack.c.b16 %v1223, %v1222
      %v1235 = vpack.c.b16 %v1225, %v1224
      %v1236 = vpack.c.b16 %v1227, %v1226
      %v1237 = vpack.c.b16 %v1229, %v1228
      %1246 = vmatprep.subr.bf16.mxu0 0
      %1247 = vmatpush1.bf16.msra.mxu0 %v1237
      %1248 = vmatprep.subr.bf16.mxu0 0
      %1249 = vmatpush1.bf16.msra.mxu0 %v1236
      %1250 = vmatprep.subr.bf16.mxu0 0
      %1251 = vmatpush1.bf16.msra.mxu0 %v1235
      %1252 = vmatprep.subr.bf16.mxu0 0
      %1253 = vmatpush1.bf16.msra.mxu0 %v1234
      %1254 = vmatprep.subr.bf16.mxu0 0
      %1255 = vmatpush1.bf16.msra.mxu0 %v1233
      %1256 = vmatprep.subr.bf16.mxu0 0
      %1257 = vmatpush1.bf16.msra.mxu0 %v1232
      %1258 = vmatprep.subr.bf16.mxu0 0
      %1259 = vmatpush1.bf16.msra.mxu0 %v1231
      %1260 = vmatprep.subr.bf16.mxu0 0
      %1261 = vmatpush1.bf16.msra.mxu0 %v1230
      %1262 = vmatprep.subr.bf16.mxu0 0
      %1263 = vmatpush2.bf16.msra.mxu0 0
      %1264 = vmatprep.subr.bf16.mxu0 0
      %1265 = vmatpush2.bf16.msra.mxu0 0
      %1266 = vmatprep.subr.bf16.mxu0 0
      %1267 = vmatpush2.bf16.msra.mxu0 0
      %1268 = vmatprep.subr.bf16.mxu0 0
      %1269 = vmatpush2.bf16.msra.mxu0 0
      %1270 = vmatprep.subr.bf16.mxu0 0
      %1271 = vmatpush2.bf16.msra.mxu0 0
      %1272 = vmatprep.subr.bf16.mxu0 0
      %1273 = vmatpush2.bf16.msra.mxu0 0
      %1274 = vmatprep.subr.bf16.mxu0 0
      %1275 = vmatpush2.bf16.msra.mxu0 0
      %1276 = vmatprep.subr.bf16.mxu0 0
      %1277 = vmatpush2.bf16.msra.mxu0 0
      %1278 = vmatprep.mubr.bf16.mxu0 0
      %1279 = vmatmul.mubr.bf16.gmra.mxu0 %v1195
      %v1280 = vpop.f32.mrf.mxu0
      %v1281 = vadd.f32 0.0, %v1280
      %v1282 = vpop.f32.mrf.mxu0
      %v1283 = vpop.f32.mrf.mxu0
      %v1284 = vadd.f32 0.0, %v1283
      %v1285 = vpop.f32.mrf.mxu0
      %1286 = vmatprep.mubr.bf16.mxu0 0
      %1287 = vmatmul.mubr.bf16.gmra.mxu0 %v1194
      %v1288 = vpop.f32.mrf.mxu0
      %v1289 = vadd.f32 0.0, %v1288
      %v1290 = vpop.f32.mrf.mxu0
      %v1291 = vpop.f32.mrf.mxu0
      %v1292 = vpop.f32.mrf.mxu0
      %1293 = vdwg.mxu0
      %v1294 = vadd.f32 %v1174, %v1281
      %v1295 = vadd.f32 %v1175, %v1284
      %v1296 = vadd.f32 %v1176, %v1289
      %v1297 = vld [vmem:[%s2] sm:$0x1]
      %v1299 = vlaneseq
      %v1300 = vshrl.u32 %v1299, 7
      %v1301 = vsub.s32 0, %v1300
      %v1302 = vrot.slane %v1297, %v1301
      %v1304 = vadd.f32 %v1294, %v1302
      %v1305 = vadd.f32 %v1295, %v1302
      %v1306 = vadd.f32 %v1296, %v1302
      %v1307 = vmax.f32 %v1304, 0.0
      %v1308 = vmax.f32 %v1305, 0.0
      %v1309 = vmax.f32 %v1306, 0.0
      %v1310 = vpack.c.bf16 %v1308, %v1307
      %v1311 = vpack.c.bf16 %v1309, %v1309
      %v1314 = vunpack.c.l.b16 %v1310
      %v1315 = vunpack.c.h.b16 %v1310
      %v1316 = vunpack.c.l.b16 %v1311
      %v1317 = vpack.c.b16 %v1314, %v1314
      %v1318 = vpack.c.b16 %v1315, %v1315
      %v1319 = vpack.c.b16 %v1316, %v1316
      %1323 = vst [vmem:[%s170] sm:$0xf] %v1317
      %1324 = vst [vmem:[%s170 + $0x4] sm:$0xf] %v1318
      %1325 = vst [vmem:[%s170 + $0x8] sm:$0xf] %v1319
      %p1326 = scmp.lt.s32.totalorder %s14, 1
      %s1327 = scalar_select %p1326, %s14, 1
      %s1328 = smul.addr %s1327, 3
      %s1329 = smul.addr %s1328, 4
      %s1330 = scalar_lea.vmem %s3, %s1329
      // Predicated region
      $region33: #{inception_fid_forward.17} parent=31 // pred_check
        %p1331 = pneg %p100
      $region34: #{inception_fid_forward.17} parent=31 // pred_check_branch
        %1333 = sbr.rel (%p1331) target = $region36
      $region35: #{inception_fid_forward.17} parent=31 // pred_region
        _
      $region36: #{inception_fid_forward.17} parent=31 // pred_fallthru
        _
    $region32: #{inception_fid_forward.17} parent=5 // pred_fallthru
      _
    %p1334 = scmp.le.s32.totalorder 2, %s9
    // Predicated region
    $region37: #{inception_fid_forward.17} parent=5 // pred_check
      %p1335 = pneg %p1334
    $region38: #{inception_fid_forward.17} parent=5 // pred_check_branch
      %1337 = sbr.rel (%p1335) target = $region40
    $region39: #{inception_fid_forward.17} parent=5 // pred_region
      %s1338 = ssub.s32 %s9, 2
      // Predicated region
      $region41: #{inception_fid_forward.17} parent=39 // pred_check
        %p1339 = pneg %p106
      $region42: #{inception_fid_forward.17} parent=39 // pred_check_branch
        %1341 = sbr.rel (%p1339) target = $region44
      $region43: #{inception_fid_forward.17} parent=39 // pred_region
        %p1342 = scmp.lt.s32.totalorder %s15, 1
        %s1343 = scalar_select %p1342, %s15, 1
        %s1344 = smul.addr %s1343, 3
        %s1345 = smul.addr %s1344, 4
        %s1346 = scalar_lea.vmem %s3, %s1345
      $region44: #{inception_fid_forward.17} parent=39 // pred_fallthru
        _
    $region40: #{inception_fid_forward.17} parent=5 // pred_fallthru
      _
  $region6: #{inception_fid_forward.17} parent=0 // loop_footer
    %s13 = sadd.s32 1, %s9
  $region7: #{inception_fid_forward.17} parent=0 // loop_footer_branch
    %8 = sbr.rel target = $region3
  $region8: #{inception_fid_forward.17} parent=0 // loop_exit
    _

// kernel: inception_fid_forward.23
$region0: #{inception_fid_forward.23}
  #allocation0 [shape = 'u32[]', space=smem, size = 0x4, offset = 0x4, fixed_abs, tag = 'smem constant byte address 0x4 - core index']
  #allocation1 [shape = 'u32[144,128]{1,0:T(1,128)}', space=vmem, size = 0x12000, scoped, tag = 'internal scratch']
  %s0 = inlined_call_operand.vmem [shape: bf16[2,16,512], index: 0, kind: input, shape index: {}]
  %s1 = inlined_call_operand.vmem [shape: f32[2,512], index: 1, kind: output, shape index: {}]
  %s2 = sld [smem:[#allocation0]]
  $region14: #{inception_fid_forward.23} parent=0
    _
  %s4 = ssub.s32 1, %s2
  %s5 = scalar_select 0, %s4, %s2
  // Predicated region
  $region2: #{inception_fid_forward.23} parent=0 // pred_check
    _
  $region3: #{inception_fid_forward.23} parent=0 // pred_check_branch
    %7 = sbr.rel (0) target = $region5
  $region4: #{inception_fid_forward.23} parent=0 // pred_region
    _
  $region5: #{inception_fid_forward.23} parent=0 // pred_fallthru
    _
  %v8 = vld [vmem:[%s0] sm:$0xff]
  %v9 = vld [vmem:[%s0 + $0x8] sm:$0xff]
  %v10 = vld [vmem:[%s0 + $0x10] sm:$0xff]
  %v11 = vld [vmem:[%s0 + $0x18] sm:$0xff]
  %v12 = vld [vmem:[%s0 + $0x20] sm:$0xff]
  %v13 = vld [vmem:[%s0 + $0x28] sm:$0xff]
  %v14 = vld [vmem:[%s0 + $0x30] sm:$0xff]
  %v15 = vld [vmem:[%s0 + $0x38] sm:$0xff]
  %v16 = vunpack.c.l.bf16 %v8
  %v17 = vunpack.c.h.bf16 %v8
  %v18 = vunpack.c.l.bf16 %v9
  %v19 = vunpack.c.h.bf16 %v9
  %v20 = vunpack.c.l.bf16 %v10
  %v21 = vunpack.c.h.bf16 %v10
  %v22 = vunpack.c.l.bf16 %v11
  %v23 = vunpack.c.h.bf16 %v11
  %v24 = vunpack.c.l.bf16 %v12
  %v25 = vunpack.c.h.bf16 %v12
  %v26 = vunpack.c.l.bf16 %v13
  %v27 = vunpack.c.h.bf16 %v13
  %v28 = vunpack.c.l.bf16 %v14
  %v29 = vunpack.c.h.bf16 %v14
  %v30 = vunpack.c.l.bf16 %v15
  %v31 = vunpack.c.h.bf16 %v15
  %v32 = vadd.f32 %v16, %v20
  %v33 = vrot.slane %v32, 4
  %v34 = vadd.f32 %v32, %v33
  %v35 = vrot.slane %v34, 2
  %v36 = vadd.f32 %v34, %v35
  %v37 = vrot.slane %v36, 1
  %v38 = vadd.f32 %v36, %v37
  %v39 = vadd.f32 %v17, %v21
  %v40 = vrot.slane %v39, 4
  %v41 = vadd.f32 %v39, %v40
  %v42 = vrot.slane %v41, 2
  %v43 = vadd.f32 %v41, %v42
  %v44 = vrot.slane %v43, 1
  %v45 = vadd.f32 %v43, %v44
  %v46 = vadd.f32 %v18, %v22
  %v47 = vrot.slane %v46, 4
  %v48 = vadd.f32 %v46, %v47
  %v49 = vrot.slane %v48, 2
  %v50 = vadd.f32 %v48, %v49
  %v51 = vrot.slane %v50, 1
  %v52 = vadd.f32 %v50, %v51
  %v53 = vadd.f32 %v19, %v23
  %v54 = vrot.slane %v53, 4
  %v55 = vadd.f32 %v53, %v54
  %v56 = vrot.slane %v55, 2
  %v57 = vadd.f32 %v55, %v56
  %v58 = vrot.slane %v57, 1
  %v59 = vadd.f32 %v57, %v58
  %v60 = vadd.f32 %v24, %v28
  %v61 = vrot.slane %v60, 4
  %v62 = vadd.f32 %v60, %v61
  %v63 = vrot.slane %v62, 2
  %v64 = vadd.f32 %v62, %v63
  %v65 = vrot.slane %v64, 1
  %v66 = vadd.f32 %v64, %v65
  %v67 = vadd.f32 %v25, %v29
  %v68 = vrot.slane %v67, 4
  %v69 = vadd.f32 %v67, %v68
  %v70 = vrot.slane %v69, 2
  %v71 = vadd.f32 %v69, %v70
  %v72 = vrot.slane %v71, 1
  %v73 = vadd.f32 %v71, %v72
  %v74 = vadd.f32 %v26, %v30
  %v75 = vrot.slane %v74, 4
  %v76 = vadd.f32 %v74, %v75
  %v77 = vrot.slane %v76, 2
  %v78 = vadd.f32 %v76, %v77
  %v79 = vrot.slane %v78, 1
  %v80 = vadd.f32 %v78, %v79
  %v81 = vadd.f32 %v27, %v31
  %v82 = vrot.slane %v81, 4
  %v83 = vadd.f32 %v81, %v82
  %v84 = vrot.slane %v83, 2
  %v85 = vadd.f32 %v83, %v84
  %v86 = vrot.slane %v85, 1
  %v87 = vadd.f32 %v85, %v86
  %v88 = vmul.f32 %v38, 0.0625
  %v89 = vmul.f32 %v45, 0.0625
  %v90 = vmul.f32 %v52, 0.0625
  %v91 = vmul.f32 %v59, 0.0625
  %v92 = vmul.f32 %v66, 0.0625
  %v93 = vmul.f32 %v73, 0.0625
  %v94 = vmul.f32 %v80, 0.0625
  %v95 = vmul.f32 %v87, 0.0625
  %v104 = vcombine.low %v88, %v89
  %v105 = vcombine.low %v90, %v91
  %v107 = vunpack.c.l.s4 1983009808
  %v108 = vunpack.c.0.s8 %v107
  %v109 = vlaneseq
  %v110 = vshrl.u32 %v109, 7
  %v111 = vsub.s32 %v108, %v110
  %v112 = vrot.slane %v104, %v111
  %v114 = vunpack.c.l.s4 1983009808
  %v115 = vunpack.c.0.s8 %v114
  %v116 = vlaneseq
  %v117 = vshrl.u32 %v116, 7
  %v118 = vsub.s32 %v115, %v117
  %v119 = vrot.slane %v105, %v118
  %v120 = vcombine.low %v112, %v119
  %v121 = vcombine.low %v92, %v93
  %v122 = vcombine.low %v94, %v95
  %v124 = vunpack.c.l.s4 1983009808
  %v125 = vunpack.c.0.s8 %v124
  %v126 = vlaneseq
  %v127 = vshrl.u32 %v126, 7
  %v128 = vsub.s32 %v125, %v127
  %v129 = vrot.slane %v121, %v128
  %v131 = vunpack.c.l.s4 1983009808
  %v132 = vunpack.c.0.s8 %v131
  %v133 = vlaneseq
  %v134 = vshrl.u32 %v133, 7
  %v135 = vsub.s32 %v132, %v134
  %v136 = vrot.slane %v122, %v135
  %v137 = vcombine.low %v129, %v136
  %vm138 = vcmask 1044484
  %v139 = vsel %vm138, %v120, %v120
  %vm140 = vcmask 1046534
  %v141 = vsel %vm140, %v120, %v139
  %v142 = vrot.slane %v137, 7
  %vm143 = vcmask 1041409
  %v144 = vsel %vm143, %v142, %v141
  %vm145 = vcmask 1043459
  %v146 = vsel %vm145, %v142, %v144
  %vm147 = vcmask 1045509
  %v148 = vsel %vm147, %v142, %v146
  %vm149 = vcmask 1047559
  %v150 = vsel %vm149, %v142, %v148
  %152 = vst [vmem:[%s1] sm:$0xff] %v150
  // Predicated region
  $region6: #{inception_fid_forward.23} parent=0 // pred_check
    _
  $region7: #{inception_fid_forward.23} parent=0 // pred_check_branch
    %154 = sbr.rel (0) target = $region9
  $region8: #{inception_fid_forward.23} parent=0 // pred_region
    _
  $region9: #{inception_fid_forward.23} parent=0 // pred_fallthru
    _
  // Predicated region
  $region10: #{inception_fid_forward.23} parent=0 // pred_check
    _
  $region11: #{inception_fid_forward.23} parent=0 // pred_check_branch
    %156 = sbr.rel (0) target = $region13
  $region12: #{inception_fid_forward.23} parent=0 // pred_region
    _
  $region13: #{inception_fid_forward.23} parent=0 // pred_fallthru
    _

// kernel: inception_fid_forward.19
$region0: #{inception_fid_forward.19}
  #allocation0 [shape = 'u32[]', space=smem, size = 0x4, offset = 0x4, fixed_abs, tag = 'smem constant byte address 0x4 - core index']
  #allocation1 [shape = 'u32[144,128]{1,0:T(1,128)}', space=vmem, size = 0x12000, scoped, tag = 'internal scratch']
  %s0 = inlined_call_operand.vmem [shape: bf16[2,68,128], index: 0, kind: input, shape index: {}]
  %s1 = inlined_call_operand.vmem [shape: bf16[3200,128], index: 1, kind: input, shape index: {}]
  %s2 = inlined_call_operand.vmem [shape: f32[1,128], index: 2, kind: input, shape index: {}]
  %s3 = inlined_call_operand.vmem [shape: bf16[2,32,128], index: 3, kind: output, shape index: {}]
  %s4 = sld [smem:[#allocation0]]
  $region45: #{inception_fid_forward.19} parent=0
    _
  %s6 = ssub.s32 1, %s4
  %s7 = scalar_select 0, %s6, %s4
  loop: start=0, step=1, limit=4
  $region2: #{inception_fid_forward.19} parent=0 // loop_pre_header
    _
  $region3: #{inception_fid_forward.19} parent=0 // loop_header
    %s9 = sphi 0, %s13
    %p10 = scmp.ge.s32.totalorder %s9, 4
    %s19 = sphi 0, %s21
    %s22 = sphi 0, %s19
    %s23 = sphi 0, %s22
    %s39 = sphi 0, %s23
    %s43 = sphi 0, %s43
    %s45 = sphi 0, %s43
    %s46 = sphi 0, %s45
    %s60 = sphi 0, %s46
    %s64 = sphi 0, %s64
    %s66 = sphi 0, %s64
    %s67 = sphi 0, %s66
    %s81 = sphi 0, %s67
    %s87 = sphi 0, %s89
    %s90 = sphi 0, %s87
    %s91 = sphi 0, %s90
    %s107 = sphi 0, %s91
  $region4: #{inception_fid_forward.19} parent=0 // loop_header_branch
    %12 = sbr.rel (%p10) target = $region8
  $region5: #{inception_fid_forward.19} parent=0 // loop_body
    %s14 = ssub.s32 %s9, 1
    %s15 = ssub.s32 %s9, 2
    %s16 = sadd.s32 %s9, 1
    %s17 = ssub.s32 %s9, %s16
    %p18 = scmp.eq.s32.totalorder %s17, 0
    %s20 = sadd.s32 %s19, 1
    %s21 = scalar_select %p18, %s19, %s20
    %p24 = pneg %p18
    %p25 = scmp.eq.s32.totalorder %s9, 1
    %p26 = por %p24, %p25
    %p27 = scmp.ne.s32.totalorder %s19, %s22
    %p28 = scmp.eq.s32.totalorder %s9, 0
    %p29 = por %p27, %p28
    %p30 = scmp.ne.s32.totalorder %s19, %s22
    %p31 = scmp.eq.s32.totalorder %s14, 1
    %p32 = por %p30, %p31
    %p33 = scmp.ne.s32.totalorder %s22, %s23
    %p34 = scmp.eq.s32.totalorder %s14, 0
    %p35 = por %p33, %p34
    %p36 = scmp.ne.s32.totalorder %s22, %s23
    %p37 = scmp.eq.s32.totalorder %s15, 1
    %p38 = por %p36, %p37
    %p40 = scmp.ne.s32.totalorder %s23, %s39
    %p41 = scmp.eq.s32.totalorder %s15, 0
    %p42 = por %p40, %p41
    %s44 = sadd.s32 %s43, 1
    %p47 = scmp.eq.s32.totalorder %s9, 1
    %p48 = scmp.ne.s32.totalorder %s43, %s45
    %p49 = scmp.eq.s32.totalorder %s9, 0
    %p50 = por %p48, %p49
    %p51 = scmp.ne.s32.totalorder %s43, %s45
    %p52 = scmp.eq.s32.totalorder %s14, 1
    %p53 = por %p51, %p52
    %p54 = scmp.ne.s32.totalorder %s45, %s46
    %p55 = scmp.eq.s32.totalorder %s14, 0
    %p56 = por %p54, %p55
    %p57 = scmp.ne.s32.totalorder %s45, %s46
    %p58 = scmp.eq.s32.totalorder %s15, 1
    %p59 = por %p57, %p58
    %p61 = scmp.ne.s32.totalorder %s46, %s60
    %p62 = scmp.eq.s32.totalorder %s15, 0
    %p63 = por %p61, %p62
    %s65 = sadd.s32 %s64, 1
    %p68 = scmp.eq.s32.totalorder %s9, 1
    %p69 = scmp.ne.s32.totalorder %s64, %s66
    %p70 = scmp.eq.s32.totalorder %s9, 0
    %p71 = por %p69, %p70
    %p72 = scmp.ne.s32.totalorder %s64, %s66
    %p73 = scmp.eq.s32.totalorder %s14, 1
    %p74 = por %p72, %p73
    %p75 = scmp.ne.s32.totalorder %s66, %s67
    %p76 = scmp.eq.s32.totalorder %s14, 0
    %p77 = por %p75, %p76
    %p78 = scmp.ne.s32.totalorder %s66, %s67
    %p79 = scmp.eq.s32.totalorder %s15, 1
    %p80 = por %p78, %p79
    %p82 = scmp.ne.s32.totalorder %s67, %s81
    %p83 = scmp.eq.s32.totalorder %s15, 0
    %p84 = por %p82, %p83
    %s85 = ssub.s32 %s9, %s16
    %p86 = scmp.eq.s32.totalorder %s85, 0
    %s88 = sadd.s32 %s87, 1
    %s89 = scalar_select %p86, %s87, %s88
    %p92 = pneg %p86
    %p93 = scmp.eq.s32.totalorder %s9, 1
    %p94 = por %p92, %p93
    %p95 = scmp.ne.s32.totalorder %s87, %s90
    %p96 = scmp.eq.s32.totalorder %s9, 0
    %p97 = por %p95, %p96
    %p98 = scmp.ne.s32.totalorder %s87, %s90
    %p99 = scmp.eq.s32.totalorder %s14, 1
    %p100 = por %p98, %p99
    %p101 = scmp.ne.s32.totalorder %s90, %s91
    %p102 = scmp.eq.s32.totalorder %s14, 0
    %p103 = por %p101, %p102
    %p104 = scmp.ne.s32.totalorder %s90, %s91
    %p105 = scmp.eq.s32.totalorder %s15, 1
    %p106 = por %p104, %p105
    %p108 = scmp.ne.s32.totalorder %s91, %s107
    %p109 = scmp.eq.s32.totalorder %s15, 0
    %p110 = por %p108, %p109
    %p111 = scmp.le.s32.totalorder 1, %s9
    %p112 = scmp.lt.s32.totalorder %s9, 3
    %p113 = pnand %p111, %p112
    %p114 = pneg %p113
    // Predicated region
    $region9: #{inception_fid_forward.19} parent=5 // pred_check
      _
    $region10: #{inception_fid_forward.19} parent=5 // pred_check_branch
      %116 = sbr.rel (%p113) target = $region12
    $region11: #{inception_fid_forward.19} parent=5 // pred_region
      %s117 = ssub.s32 %s9, 1
      // Predicated region
      $region13: #{inception_fid_forward.19} parent=11 // pred_check
        %p118 = pneg %p56
      $region14: #{inception_fid_forward.19} parent=11 // pred_check_branch
        %120 = sbr.rel (%p118) target = $region16
      $region15: #{inception_fid_forward.19} parent=11 // pred_region
        _
      $region16: #{inception_fid_forward.19} parent=11 // pred_fallthru
        _
      // Predicated region
      $region17: #{inception_fid_forward.19} parent=11 // pred_check
        %p121 = pneg %p77
      $region18: #{inception_fid_forward.19} parent=11 // pred_check_branch
        %123 = sbr.rel (%p121) target = $region20
      $region19: #{inception_fid_forward.19} parent=11 // pred_region
        _
      $region20: #{inception_fid_forward.19} parent=11 // pred_fallthru
        _
    $region12: #{inception_fid_forward.19} parent=5 // pred_fallthru
      _
    %p124 = scmp.lt.s32.totalorder %s9, 2
    // Predicated region
    $region21: #{inception_fid_forward.19} parent=5 // pred_check
      %p125 = pneg %p124
    $region22: #{inception_fid_forward.19} parent=5 // pred_check_branch
      %127 = sbr.rel (%p125) target = $region24
    $region23: #{inception_fid_forward.19} parent=5 // pred_region
      // Predicated region
      $region25: #{inception_fid_forward.19} parent=23 // pred_check
        %p128 = pneg %p29
      $region26: #{inception_fid_forward.19} parent=23 // pred_check_branch
        %130 = sbr.rel (%p128) target = $region28
      $region27: #{inception_fid_forward.19} parent=23 // pred_region
        %p131 = scmp.lt.s32.totalorder %s9, 1
        %s132 = scalar_select %p131, %s9, 1
        %s133 = smul.addr %s132, 9
        %s134 = smul.addr %s133, 4
        %s135 = scalar_lea.vmem %s0, %s134
      $region28: #{inception_fid_forward.19} parent=23 // pred_fallthru
        _
    $region24: #{inception_fid_forward.19} parent=5 // pred_fallthru
      _
    %p136 = scmp.le.s32.totalorder 1, %s9
    %p137 = scmp.lt.s32.totalorder %s9, 3
    %p138 = pnand %p136, %p137
    %p139 = pneg %p138
    // Predicated region
    $region29: #{inception_fid_forward.19} parent=5 // pred_check
      _
    $region30: #{inception_fid_forward.19} parent=5 // pred_check_branch
      %141 = sbr.rel (%p138) target = $region32
    $region31: #{inception_fid_forward.19} parent=5 // pred_region
      %s142 = ssub.s32 %s9, 1
      %p143 = scmp.lt.s32.totalorder %s14, 1
      %s144 = scalar_select %p143, %s14, 1
      %s145 = smul.addr %s144, 9
      %s146 = smul.addr %s145, 4
      %s147 = scalar_lea.vmem %s0, %s146
      %p148 = pneg %p35
      %p149 = pneg %p32
      %p150 = pneg %p56
      %p151 = pneg %p53
      %p152 = pneg %p77
      %p153 = pneg %p74
      %p154 = pneg %p103
      %p155 = pneg %p100
      %p156 = scmp.lt.s32.totalorder %s14, 1
      %s157 = scalar_select %p156, %s14, 1
      %s158 = smul.addr %s157, 4
      %s159 = smul.addr %s158, 4
      %s160 = scalar_lea.vmem %s3, %s159
      %p161 = scmp.lt.s32.totalorder %s14, 1
      %s162 = scalar_select %p161, %s14, 1
      %s163 = smul.addr %s162, 9
      %s164 = smul.addr %s163, 4
      %s165 = scalar_lea.vmem %s0, %s164
      %p166 = scmp.lt.s32.totalorder %s14, 1
      %s167 = scalar_select %p166, %s14, 1
      %s168 = smul.addr %s167, 4
      %s169 = smul.addr %s168, 4
      %s170 = scalar_lea.vmem %s3, %s169
      %v172 = vld [vmem:[%s165] sm:$0xf]
      %v173 = vld [vmem:[%s165 + $0x4] sm:$0xf]
      %v174 = vld [vmem:[%s165 + $0x8] sm:$0xf]
      %v175 = vld [vmem:[%s165 + $0xc] sm:$0xf]
      %v176 = vld [vmem:[%s165 + $0x10] sm:$0xf]
      %v177 = vld [vmem:[%s165 + $0x14] sm:$0xf]
      %v178 = vld [vmem:[%s165 + $0x18] sm:$0xf]
      %v179 = vld [vmem:[%s165 + $0x1c] sm:$0xf]
      %v180 = vld [vmem:[%s165 + $0x20] sm:$0x3]
      %v181 = vld [vmem:[%s1] sm:$0xf]
      %v182 = vld [vmem:[%s1 + $0x4] sm:$0xf]
      %v183 = vld [vmem:[%s1 + $0x8] sm:$0xf]
      %v184 = vld [vmem:[%s1 + $0xc] sm:$0xf]
      %v185 = vld [vmem:[%s1 + $0x10] sm:$0xf]
      %v186 = vld [vmem:[%s1 + $0x14] sm:$0xf]
      %v187 = vld [vmem:[%s1 + $0x18] sm:$0xf]
      %v188 = vld [vmem:[%s1 + $0x1c] sm:$0xf]
      %v189 = vld [vmem:[%s1 + $0x20] sm:$0xf]
      %v190 = vld [vmem:[%s1 + $0x24] sm:$0xf]
      %v191 = vld [vmem:[%s1 + $0x28] sm:$0xf]
      %v192 = vld [vmem:[%s1 + $0x2c] sm:$0xf]
      %v193 = vld [vmem:[%s1 + $0x30] sm:$0xf]
      %v194 = vld [vmem:[%s1 + $0x34] sm:$0xf]
      %v195 = vld [vmem:[%s1 + $0x38] sm:$0xf]
      %v196 = vld [vmem:[%s1 + $0x3c] sm:$0xf]
      %v197 = vld [vmem:[%s1 + $0x40] sm:$0xf]
      %v198 = vld [vmem:[%s1 + $0x44] sm:$0xf]
      %v199 = vld [vmem:[%s1 + $0x48] sm:$0xf]
      %v200 = vld [vmem:[%s1 + $0x4c] sm:$0xf]
      %v201 = vld [vmem:[%s1 + $0x50] sm:$0xf]
      %v202 = vld [vmem:[%s1 + $0x54] sm:$0xf]
      %v203 = vld [vmem:[%s1 + $0x58] sm:$0xf]
      %v204 = vld [vmem:[%s1 + $0x5c] sm:$0xf]
      %v205 = vld [vmem:[%s1 + $0x60] sm:$0xf]
      %v206 = vld [vmem:[%s1 + $0x64] sm:$0xf]
      %v207 = vld [vmem:[%s1 + $0x68] sm:$0xf]
      %v208 = vld [vmem:[%s1 + $0x6c] sm:$0xf]
      %v209 = vld [vmem:[%s1 + $0x70] sm:$0xf]
      %v210 = vld [vmem:[%s1 + $0x74] sm:$0xf]
      %v211 = vld [vmem:[%s1 + $0x78] sm:$0xf]
      %v212 = vld [vmem:[%s1 + $0x7c] sm:$0xf]
      %v218 = vunpack.c.l.b16 %v172
      %v219 = vunpack.c.l.b16 %v173
      %v220 = vunpack.c.l.b16 %v174
      %v221 = vunpack.c.l.b16 %v175
      %v222 = vunpack.c.l.b16 %v176
      %v223 = vpack.c.b16 %v219, %v218
      %v224 = vpack.c.b16 %v221, %v220
      %v225 = vpack.c.b16 %v222, %v222
      %vm226 = vsmask.f32 7424
      %v228 = vshrl.u32 %v223, 16
      %v230 = vshll.u32 %v223, 16
      %v232 = vrot.slane %v230, 1
      %v233 = vor.u32 %v228, %v232
      %v235 = vshll.u32 %v224, 16
      %v237 = vrot.slane %v235, 1
      %v238 = vsel %vm226, %v233, %v237
      %v239 = vshrl.u32 %v224, 16
      %v241 = vor.u32 %v239, %v237
      %v243 = vshll.u32 %v225, 16
      %v245 = vrot.slane %v243, 1
      %v246 = vsel %vm226, %v241, %v245
      %v265 = vunpack.c.l.b16 %v197
      %v266 = vunpack.c.l.b16 %v198
      %v267 = vunpack.c.l.b16 %v199
      %v268 = vunpack.c.l.b16 %v200
      %v269 = vunpack.c.l.b16 %v201
      %v270 = vunpack.c.l.b16 %v202
      %v271 = vunpack.c.l.b16 %v203
      %v272 = vunpack.c.l.b16 %v204
      %v273 = vunpack.c.l.b16 %v205
      %v274 = vunpack.c.l.b16 %v206
      %v275 = vunpack.c.l.b16 %v207
      %v276 = vunpack.c.l.b16 %v208
      %v277 = vunpack.c.l.b16 %v209
      %v278 = vunpack.c.l.b16 %v210
      %v279 = vunpack.c.l.b16 %v211
      %v280 = vunpack.c.l.b16 %v212
      %v281 = vpack.c.b16 %v266, %v265
      %v282 = vpack.c.b16 %v268, %v267
      %v283 = vpack.c.b16 %v270, %v269
      %v284 = vpack.c.b16 %v272, %v271
      %v285 = vpack.c.b16 %v274, %v273
      %v286 = vpack.c.b16 %v276, %v275
      %v287 = vpack.c.b16 %v278, %v277
      %v288 = vpack.c.b16 %v280, %v279
      %297 = vmatprep.subr.bf16.mxu0 0
      %298 = vmatpush1.bf16.msra.mxu0 %v288
      %299 = vmatprep.subr.bf16.mxu0 0
      %300 = vmatpush1.bf16.msra.mxu0 %v287
      %301 = vmatprep.subr.bf16.mxu0 0
      %302 = vmatpush1.bf16.msra.mxu0 %v286
      %303 = vmatprep.subr.bf16.mxu0 0
      %304 = vmatpush1.bf16.msra.mxu0 %v285
      %305 = vmatprep.subr.bf16.mxu0 0
      %306 = vmatpush1.bf16.msra.mxu0 %v284
      %307 = vmatprep.subr.bf16.mxu0 0
      %308 = vmatpush1.bf16.msra.mxu0 %v283
      %309 = vmatprep.subr.bf16.mxu0 0
      %310 = vmatpush1.bf16.msra.mxu0 %v282
      %311 = vmatprep.subr.bf16.mxu0 0
      %312 = vmatpush1.bf16.msra.mxu0 %v281
      %313 = vmatprep.subr.bf16.mxu0 0
      %314 = vmatpush2.bf16.msra.mxu0 0
      %315 = vmatprep.subr.bf16.mxu0 0
      %316 = vmatpush2.bf16.msra.mxu0 0
      %317 = vmatprep.subr.bf16.mxu0 0
      %318 = vmatpush2.bf16.msra.mxu0 0
      %319 = vmatprep.subr.bf16.mxu0 0
      %320 = vmatpush2.bf16.msra.mxu0 0
      %321 = vmatprep.subr.bf16.mxu0 0
      %322 = vmatpush2.bf16.msra.mxu0 0
      %323 = vmatprep.subr.bf16.mxu0 0
      %324 = vmatpush2.bf16.msra.mxu0 0
      %325 = vmatprep.subr.bf16.mxu0 0
      %326 = vmatpush2.bf16.msra.mxu0 0
      %327 = vmatprep.subr.bf16.mxu0 0
      %328 = vmatpush2.bf16.msra.mxu0 0
      %329 = vmatprep.mubr.bf16.mxu0 0
      %330 = vmatmul.mubr.bf16.gmra.mxu0 %v238
      %v331 = vpop.f32.mrf.mxu0
      %v332 = vadd.f32 0.0, %v331
      %v333 = vpop.f32.mrf.mxu0
      %v334 = vpop.f32.mrf.mxu0
      %v335 = vadd.f32 0.0, %v334
      %v336 = vpop.f32.mrf.mxu0
      %337 = vmatprep.mubr.bf16.mxu0 0
      %338 = vmatmul.mubr.bf16.gmra.mxu0 %v246
      %v339 = vpop.f32.mrf.mxu0
      %v340 = vadd.f32 0.0, %v339
      %v341 = vpop.f32.mrf.mxu0
      %v342 = vpop.f32.mrf.mxu0
      %v343 = vadd.f32 0.0, %v342
      %v344 = vpop.f32.mrf.mxu0
      %345 = vdwg.mxu0
      %v364 = vunpack.c.l.b16 %v181
      %v365 = vunpack.c.l.b16 %v182
      %v366 = vunpack.c.l.b16 %v183
      %v367 = vunpack.c.l.b16 %v184
      %v368 = vunpack.c.l.b16 %v185
      %v369 = vunpack.c.l.b16 %v186
      %v370 = vunpack.c.l.b16 %v187
      %v371 = vunpack.c.l.b16 %v188
      %v372 = vunpack.c.l.b16 %v189
      %v373 = vunpack.c.l.b16 %v190
      %v374 = vunpack.c.l.b16 %v191
      %v375 = vunpack.c.l.b16 %v192
      %v376 = vunpack.c.l.b16 %v193
      %v377 = vunpack.c.l.b16 %v194
      %v378 = vunpack.c.l.b16 %v195
      %v379 = vunpack.c.l.b16 %v196
      %v380 = vpack.c.b16 %v365, %v364
      %v381 = vpack.c.b16 %v367, %v366
      %v382 = vpack.c.b16 %v369, %v368
      %v383 = vpack.c.b16 %v371, %v370
      %v384 = vpack.c.b16 %v373, %v372
      %v385 = vpack.c.b16 %v375, %v374
      %v386 = vpack.c.b16 %v377, %v376
      %v387 = vpack.c.b16 %v379, %v378
      %396 = vmatprep.subr.bf16.mxu0 0
      %397 = vmatpush1.bf16.msra.mxu0 %v387
      %398 = vmatprep.subr.bf16.mxu0 0
      %399 = vmatpush1.bf16.msra.mxu0 %v386
      %400 = vmatprep.subr.bf16.mxu0 0
      %401 = vmatpush1.bf16.msra.mxu0 %v385
      %402 = vmatprep.subr.bf16.mxu0 0
      %403 = vmatpush1.bf16.msra.mxu0 %v384
      %404 = vmatprep.subr.bf16.mxu0 0
      %405 = vmatpush1.bf16.msra.mxu0 %v383
      %406 = vmatprep.subr.bf16.mxu0 0
      %407 = vmatpush1.bf16.msra.mxu0 %v382
      %408 = vmatprep.subr.bf16.mxu0 0
      %409 = vmatpush1.bf16.msra.mxu0 %v381
      %410 = vmatprep.subr.bf16.mxu0 0
      %411 = vmatpush1.bf16.msra.mxu0 %v380
      %412 = vmatprep.subr.bf16.mxu0 0
      %413 = vmatpush2.bf16.msra.mxu0 0
      %414 = vmatprep.subr.bf16.mxu0 0
      %415 = vmatpush2.bf16.msra.mxu0 0
      %416 = vmatprep.subr.bf16.mxu0 0
      %417 = vmatpush2.bf16.msra.mxu0 0
      %418 = vmatprep.subr.bf16.mxu0 0
      %419 = vmatpush2.bf16.msra.mxu0 0
      %420 = vmatprep.subr.bf16.mxu0 0
      %421 = vmatpush2.bf16.msra.mxu0 0
      %422 = vmatprep.subr.bf16.mxu0 0
      %423 = vmatpush2.bf16.msra.mxu0 0
      %424 = vmatprep.subr.bf16.mxu0 0
      %425 = vmatpush2.bf16.msra.mxu0 0
      %426 = vmatprep.subr.bf16.mxu0 0
      %427 = vmatpush2.bf16.msra.mxu0 0
      %428 = vmatprep.mubr.bf16.mxu0 0
      %429 = vmatmul.mubr.bf16.gmra.mxu0 %v223
      %v430 = vpop.f32.mrf.mxu0
      %v431 = vadd.f32 %v332, %v430
      %v432 = vpop.f32.mrf.mxu0
      %v433 = vpop.f32.mrf.mxu0
      %v434 = vadd.f32 %v335, %v433
      %v435 = vpop.f32.mrf.mxu0
      %436 = vmatprep.mubr.bf16.mxu0 0
      %437 = vmatmul.mubr.bf16.gmra.mxu0 %v224
      %v438 = vpop.f32.mrf.mxu0
      %v439 = vadd.f32 %v340, %v438
      %v440 = vpop.f32.mrf.mxu0
      %v441 = vpop.f32.mrf.mxu0
      %v442 = vadd.f32 %v343, %v441
      %v443 = vpop.f32.mrf.mxu0
      %444 = vdwg.mxu0
      %v445 = vld [vmem:[%s1 + $0x80] sm:$0xf]
      %v446 = vld [vmem:[%s1 + $0x84] sm:$0xf]
      %v447 = vld [vmem:[%s1 + $0x88] sm:$0xf]
      %v448 = vld [vmem:[%s1 + $0x8c] sm:$0xf]
      %v449 = vld [vmem:[%s1 + $0x90] sm:$0xf]
      %v450 = vld [vmem:[%s1 + $0x94] sm:$0xf]
      %v451 = vld [vmem:[%s1 + $0x98] sm:$0xf]
      %v452 = vld [vmem:[%s1 + $0x9c] sm:$0xf]
      %v453 = vld [vmem:[%s1 + $0xa0] sm:$0xf]
      %v454 = vld [vmem:[%s1 + $0xa4] sm:$0xf]
      %v455 = vld [vmem:[%s1 + $0xa8] sm:$0xf]
      %v456 = vld [vmem:[%s1 + $0xac] sm:$0xf]
      %v457 = vld [vmem:[%s1 + $0xb0] sm:$0xf]
      %v458 = vld [vmem:[%s1 + $0xb4] sm:$0xf]
      %v459 = vld [vmem:[%s1 + $0xb8] sm:$0xf]
      %v460 = vld [vmem:[%s1 + $0xbc] sm:$0xf]
      %vm461 = vcmask 1046528
      %v462 = vrot.slane %v223, 1
      %v463 = vrot.slane %v224, 1
      %v464 = vsel %vm461, %v462, %v463
      %v465 = vrot.slane %v225, 1
      %v466 = vsel %vm461, %v463, %v465
      %v485 = vunpack.c.l.b16 %v445
      %v486 = vunpack.c.l.b16 %v446
      %v487 = vunpack.c.l.b16 %v447
      %v488 = vunpack.c.l.b16 %v448
      %v489 = vunpack.c.l.b16 %v449
      %v490 = vunpack.c.l.b16 %v450
      %v491 = vunpack.c.l.b16 %v451
      %v492 = vunpack.c.l.b16 %v452
      %v493 = vunpack.c.l.b16 %v453
      %v494 = vunpack.c.l.b16 %v454
      %v495 = vunpack.c.l.b16 %v455
      %v496 = vunpack.c.l.b16 %v456
      %v497 = vunpack.c.l.b16 %v457
      %v498 = vunpack.c.l.b16 %v458
      %v499 = vunpack.c.l.b16 %v459
      %v500 = vunpack.c.l.b16 %v460
      %v501 = vpack.c.b16 %v486, %v485
      %v502 = vpack.c.b16 %v488, %v487
      %v503 = vpack.c.b16 %v490, %v489
      %v504 = vpack.c.b16 %v492, %v491
      %v505 = vpack.c.b16 %v494, %v493
      %v506 = vpack.c.b16 %v496, %v495
      %v507 = vpack.c.b16 %v498, %v497
      %v508 = vpack.c.b16 %v500, %v499
      %517 = vmatprep.subr.bf16.mxu0 0
      %518 = vmatpush1.bf16.msra.mxu0 %v508
      %519 = vmatprep.subr.bf16.mxu0 0
      %520 = vmatpush1.bf16.msra.mxu0 %v507
      %521 = vmatprep.subr.bf16.mxu0 0
      %522 = vmatpush1.bf16.msra.mxu0 %v506
      %523 = vmatprep.subr.bf16.mxu0 0
      %524 = vmatpush1.bf16.msra.mxu0 %v505
      %525 = vmatprep.subr.bf16.mxu0 0
      %526 = vmatpush1.bf16.msra.mxu0 %v504
      %527 = vmatprep.subr.bf16.mxu0 0
      %528 = vmatpush1.bf16.msra.mxu0 %v503
      %529 = vmatprep.subr.bf16.mxu0 0
      %530 = vmatpush1.bf16.msra.mxu0 %v502
      %531 = vmatprep.subr.bf16.mxu0 0
      %532 = vmatpush1.bf16.msra.mxu0 %v501
      %533 = vmatprep.subr.bf16.mxu0 0
      %534 = vmatpush2.bf16.msra.mxu0 0
      %535 = vmatprep.subr.bf16.mxu0 0
      %536 = vmatpush2.bf16.msra.mxu0 0
      %537 = vmatprep.subr.bf16.mxu0 0
      %538 = vmatpush2.bf16.msra.mxu0 0
      %539 = vmatprep.subr.bf16.mxu0 0
      %540 = vmatpush2.bf16.msra.mxu0 0
      %541 = vmatprep.subr.bf16.mxu0 0
      %542 = vmatpush2.bf16.msra.mxu0 0
      %543 = vmatprep.subr.bf16.mxu0 0
      %544 = vmatpush2.bf16.msra.mxu0 0
      %545 = vmatprep.subr.bf16.mxu0 0
      %546 = vmatpush2.bf16.msra.mxu0 0
      %547 = vmatprep.subr.bf16.mxu0 0
      %548 = vmatpush2.bf16.msra.mxu0 0
      %549 = vmatprep.mubr.bf16.mxu0 0
      %550 = vmatmul.mubr.bf16.gmra.mxu0 %v464
      %v551 = vpop.f32.mrf.mxu0
      %v552 = vadd.f32 0.0, %v551
      %v553 = vpop.f32.mrf.mxu0
      %v554 = vpop.f32.mrf.mxu0
      %v555 = vadd.f32 0.0, %v554
      %v556 = vpop.f32.mrf.mxu0
      %557 = vmatprep.mubr.bf16.mxu0 0
      %558 = vmatmul.mubr.bf16.gmra.mxu0 %v466
      %v559 = vpop.f32.mrf.mxu0
      %v560 = vadd.f32 0.0, %v559
      %v561 = vpop.f32.mrf.mxu0
      %v562 = vpop.f32.mrf.mxu0
      %v563 = vadd.f32 0.0, %v562
      %v564 = vpop.f32.mrf.mxu0
      %565 = vdwg.mxu0
      %v566 = vadd.f32 %v431, %v552
      %v567 = vadd.f32 %v434, %v555
      %v568 = vadd.f32 %v439, %v560
      %v569 = vadd.f32 %v442, %v563
      %v570 = vld [vmem:[%s1 + $0xc0] sm:$0xf]
      %v571 = vld [vmem:[%s1 + $0xc4] sm:$0xf]
      %v572 = vld [vmem:[%s1 + $0xc8] sm:$0xf]
      %v573 = vld [vmem:[%s1 + $0xcc] sm:$0xf]
      %v574 = vld [vmem:[%s1 + $0xd0] sm:$0xf]
      %v575 = vld [vmem:[%s1 + $0xd4] sm:$0xf]
      %v576 = vld [vmem:[%s1 + $0xd8] sm:$0xf]
      %v577 = vld [vmem:[%s1 + $0xdc] sm:$0xf]
      %v578 = vld [vmem:[%s1 + $0xe0] sm:$0xf]
      %v579 = vld [vmem:[%s1 + $0xe4] sm:$0xf]
      %v580 = vld [vmem:[%s1 + $0xe8] sm:$0xf]
      %v581 = vld [vmem:[%s1 + $0xec] sm:$0xf]
      %v582 = vld [vmem:[%s1 + $0xf0] sm:$0xf]
      %v583 = vld [vmem:[%s1 + $0xf4] sm:$0xf]
      %v584 = vld [vmem:[%s1 + $0xf8] sm:$0xf]
      %v585 = vld [vmem:[%s1 + $0xfc] sm:$0xf]
      %vm586 = vsmask.f32 6400
      %v587 = vrot.slane %v228, 1
      %v588 = vrot.slane %v230, 2
      %v589 = vor.u32 %v587, %v588
      %v590 = vrot.slane %v239, 1
      %v591 = vrot.slane %v235, 2
      %v592 = vor.u32 %v590, %v591
      %v593 = vsel %vm586, %v589, %v592
      %v594 = vshrl.u32 %v225, 16
      %v596 = vrot.slane %v594, 1
      %v597 = vrot.slane %v243, 2
      %v598 = vor.u32 %v596, %v597
      %v599 = vsel %vm586, %v592, %v598
      %v618 = vunpack.c.l.b16 %v570
      %v619 = vunpack.c.l.b16 %v571
      %v620 = vunpack.c.l.b16 %v572
      %v621 = vunpack.c.l.b16 %v573
      %v622 = vunpack.c.l.b16 %v574
      %v623 = vunpack.c.l.b16 %v575
      %v624 = vunpack.c.l.b16 %v576
      %v625 = vunpack.c.l.b16 %v577
      %v626 = vunpack.c.l.b16 %v578
      %v627 = vunpack.c.l.b16 %v579
      %v628 = vunpack.c.l.b16 %v580
      %v629 = vunpack.c.l.b16 %v581
      %v630 = vunpack.c.l.b16 %v582
      %v631 = vunpack.c.l.b16 %v583
      %v632 = vunpack.c.l.b16 %v584
      %v633 = vunpack.c.l.b16 %v585
      %v634 = vpack.c.b16 %v619, %v618
      %v635 = vpack.c.b16 %v621, %v620
      %v636 = vpack.c.b16 %v623, %v622
      %v637 = vpack.c.b16 %v625, %v624
      %v638 = vpack.c.b16 %v627, %v626
      %v639 = vpack.c.b16 %v629, %v628
      %v640 = vpack.c.b16 %v631, %v630
      %v641 = vpack.c.b16 %v633, %v632
      %650 = vmatprep.subr.bf16.mxu0 0
      %651 = vmatpush1.bf16.msra.mxu0 %v641
      %652 = vmatprep.subr.bf16.mxu0 0
      %653 = vmatpush1.bf16.msra.mxu0 %v640
      %654 = vmatprep.subr.bf16.mxu0 0
      %655 = vmatpush1.bf16.msra.mxu0 %v639
      %656 = vmatprep.subr.bf16.mxu0 0
      %657 = vmatpush1.bf16.msra.mxu0 %v638
      %658 = vmatprep.subr.bf16.mxu0 0
      %659 = vmatpush1.bf16.msra.mxu0 %v637
      %660 = vmatprep.subr.bf16.mxu0 0
      %661 = vmatpush1.bf16.msra.mxu0 %v636
      %662 = vmatprep.subr.bf16.mxu0 0
      %663 = vmatpush1.bf16.msra.mxu0 %v635
      %664 = vmatprep.subr.bf16.mxu0 0
      %665 = vmatpush1.bf16.msra.mxu0 %v634
      %666 = vmatprep.subr.bf16.mxu0 0
      %667 = vmatpush2.bf16.msra.mxu0 0
      %668 = vmatprep.subr.bf16.mxu0 0
      %669 = vmatpush2.bf16.msra.mxu0 0
      %670 = vmatprep.subr.bf16.mxu0 0
      %671 = vmatpush2.bf16.msra.mxu0 0
      %672 = vmatprep.subr.bf16.mxu0 0
      %673 = vmatpush2.bf16.msra.mxu0 0
      %674 = vmatprep.subr.bf16.mxu0 0
      %675 = vmatpush2.bf16.msra.mxu0 0
      %676 = vmatprep.subr.bf16.mxu0 0
      %677 = vmatpush2.bf16.msra.mxu0 0
      %678 = vmatprep.subr.bf16.mxu0 0
      %679 = vmatpush2.bf16.msra.mxu0 0
      %680 = vmatprep.subr.bf16.mxu0 0
      %681 = vmatpush2.bf16.msra.mxu0 0
      %682 = vmatprep.mubr.bf16.mxu0 0
      %683 = vmatmul.mubr.bf16.gmra.mxu0 %v593
      %v684 = vpop.f32.mrf.mxu0
      %v685 = vadd.f32 0.0, %v684
      %v686 = vpop.f32.mrf.mxu0
      %v687 = vpop.f32.mrf.mxu0
      %v688 = vadd.f32 0.0, %v687
      %v689 = vpop.f32.mrf.mxu0
      %690 = vmatprep.mubr.bf16.mxu0 0
      %691 = vmatmul.mubr.bf16.gmra.mxu0 %v599
      %v692 = vpop.f32.mrf.mxu0
      %v693 = vadd.f32 0.0, %v692
      %v694 = vpop.f32.mrf.mxu0
      %v695 = vpop.f32.mrf.mxu0
      %v696 = vadd.f32 0.0, %v695
      %v697 = vpop.f32.mrf.mxu0
      %698 = vdwg.mxu0
      %v699 = vadd.f32 %v566, %v685
      %v700 = vadd.f32 %v567, %v688
      %v701 = vadd.f32 %v568, %v693
      %v702 = vadd.f32 %v569, %v696
      %v703 = vld [vmem:[%s1 + $0x100] sm:$0xf]
      %v704 = vld [vmem:[%s1 + $0x104] sm:$0xf]
      %v705 = vld [vmem:[%s1 + $0x108] sm:$0xf]
      %v706 = vld [vmem:[%s1 + $0x10c] sm:$0xf]
      %v707 = vld [vmem:[%s1 + $0x110] sm:$0xf]
      %v708 = vld [vmem:[%s1 + $0x114] sm:$0xf]
      %v709 = vld [vmem:[%s1 + $0x118] sm:$0xf]
      %v710 = vld [vmem:[%s1 + $0x11c] sm:$0xf]
      %v711 = vld [vmem:[%s1 + $0x120] sm:$0xf]
      %v712 = vld [vmem:[%s1 + $0x124] sm:$0xf]
      %v713 = vld [vmem:[%s1 + $0x128] sm:$0xf]
      %v714 = vld [vmem:[%s1 + $0x12c] sm:$0xf]
      %v715 = vld [vmem:[%s1 + $0x130] sm:$0xf]
      %v716 = vld [vmem:[%s1 + $0x134] sm:$0xf]
      %v717 = vld [vmem:[%s1 + $0x138] sm:$0xf]
      %v718 = vld [vmem:[%s1 + $0x13c] sm:$0xf]
      %vm719 = vcmask 1045504
      %v720 = vrot.slane %v223, 2
      %v721 = vrot.slane %v224, 2
      %v722 = vsel %vm719, %v720, %v721
      %v723 = vrot.slane %v225, 2
      %v724 = vsel %vm719, %v721, %v723
      %v743 = vunpack.c.l.b16 %v703
      %v744 = vunpack.c.l.b16 %v704
      %v745 = vunpack.c.l.b16 %v705
      %v746 = vunpack.c.l.b16 %v706
      %v747 = vunpack.c.l.b16 %v707
      %v748 = vunpack.c.l.b16 %v708
      %v749 = vunpack.c.l.b16 %v709
      %v750 = vunpack.c.l.b16 %v710
      %v751 = vunpack.c.l.b16 %v711
      %v752 = vunpack.c.l.b16 %v712
      %v753 = vunpack.c.l.b16 %v713
      %v754 = vunpack.c.l.b16 %v714
      %v755 = vunpack.c.l.b16 %v715
      %v756 = vunpack.c.l.b16 %v716
      %v757 = vunpack.c.l.b16 %v717
      %v758 = vunpack.c.l.b16 %v718
      %v759 = vpack.c.b16 %v744, %v743
      %v760 = vpack.c.b16 %v746, %v745
      %v761 = vpack.c.b16 %v748, %v747
      %v762 = vpack.c.b16 %v750, %v749
      %v763 = vpack.c.b16 %v752, %v751
      %v764 = vpack.c.b16 %v754, %v753
      %v765 = vpack.c.b16 %v756, %v755
      %v766 = vpack.c.b16 %v758, %v757
      %775 = vmatprep.subr.bf16.mxu0 0
      %776 = vmatpush1.bf16.msra.mxu0 %v766
      %777 = vmatprep.subr.bf16.mxu0 0
      %778 = vmatpush1.bf16.msra.mxu0 %v765
      %779 = vmatprep.subr.bf16.mxu0 0
      %780 = vmatpush1.bf16.msra.mxu0 %v764
      %781 = vmatprep.subr.bf16.mxu0 0
      %782 = vmatpush1.bf16.msra.mxu0 %v763
      %783 = vmatprep.subr.bf16.mxu0 0
      %784 = vmatpush1.bf16.msra.mxu0 %v762
      %785 = vmatprep.subr.bf16.mxu0 0
      %786 = vmatpush1.bf16.msra.mxu0 %v761
      %787 = vmatprep.subr.bf16.mxu0 0
      %788 = vmatpush1.bf16.msra.mxu0 %v760
      %789 = vmatprep.subr.bf16.mxu0 0
      %790 = vmatpush1.bf16.msra.mxu0 %v759
      %791 = vmatprep.subr.bf16.mxu0 0
      %792 = vmatpush2.bf16.msra.mxu0 0
      %793 = vmatprep.subr.bf16.mxu0 0
      %794 = vmatpush2.bf16.msra.mxu0 0
      %795 = vmatprep.subr.bf16.mxu0 0
      %796 = vmatpush2.bf16.msra.mxu0 0
      %797 = vmatprep.subr.bf16.mxu0 0
      %798 = vmatpush2.bf16.msra.mxu0 0
      %799 = vmatprep.subr.bf16.mxu0 0
      %800 = vmatpush2.bf16.msra.mxu0 0
      %801 = vmatprep.subr.bf16.mxu0 0
      %802 = vmatpush2.bf16.msra.mxu0 0
      %803 = vmatprep.subr.bf16.mxu0 0
      %804 = vmatpush2.bf16.msra.mxu0 0
      %805 = vmatprep.subr.bf16.mxu0 0
      %806 = vmatpush2.bf16.msra.mxu0 0
      %807 = vmatprep.mubr.bf16.mxu0 0
      %808 = vmatmul.mubr.bf16.gmra.mxu0 %v722
      %v809 = vpop.f32.mrf.mxu0
      %v810 = vadd.f32 0.0, %v809
      %v811 = vpop.f32.mrf.mxu0
      %v812 = vpop.f32.mrf.mxu0
      %v813 = vadd.f32 0.0, %v812
      %v814 = vpop.f32.mrf.mxu0
      %815 = vmatprep.mubr.bf16.mxu0 0
      %816 = vmatmul.mubr.bf16.gmra.mxu0 %v724
      %v817 = vpop.f32.mrf.mxu0
      %v818 = vadd.f32 0.0, %v817
      %v819 = vpop.f32.mrf.mxu0
      %v820 = vpop.f32.mrf.mxu0
      %v821 = vadd.f32 0.0, %v820
      %v822 = vpop.f32.mrf.mxu0
      %823 = vdwg.mxu0
      %v824 = vadd.f32 %v699, %v810
      %v825 = vadd.f32 %v700, %v813
      %v826 = vadd.f32 %v701, %v818
      %v827 = vadd.f32 %v702, %v821
      %v828 = vld [vmem:[%s1 + $0x140] sm:$0xf]
      %v829 = vld [vmem:[%s1 + $0x144] sm:$0xf]
      %v830 = vld [vmem:[%s1 + $0x148] sm:$0xf]
      %v831 = vld [vmem:[%s1 + $0x14c] sm:$0xf]
      %v832 = vld [vmem:[%s1 + $0x150] sm:$0xf]
      %v833 = vld [vmem:[%s1 + $0x154] sm:$0xf]
      %v834 = vld [vmem:[%s1 + $0x158] sm:$0xf]
      %v835 = vld [vmem:[%s1 + $0x15c] sm:$0xf]
      %v836 = vld [vmem:[%s1 + $0x160] sm:$0xf]
      %v837 = vld [vmem:[%s1 + $0x164] sm:$0xf]
      %v838 = vld [vmem:[%s1 + $0x168] sm:$0xf]
      %v839 = vld [vmem:[%s1 + $0x16c] sm:$0xf]
      %v840 = vld [vmem:[%s1 + $0x170] sm:$0xf]
      %v841 = vld [vmem:[%s1 + $0x174] sm:$0xf]
      %v842 = vld [vmem:[%s1 + $0x178] sm:$0xf]
      %v843 = vld [vmem:[%s1 + $0x17c] sm:$0xf]
      %v844 = vpack.c.b16 %v220, %v219
      %v845 = vpack.c.b16 %v222, %v221
      %v864 = vunpack.c.l.b16 %v828
      %v865 = vunpack.c.l.b16 %v829
      %v866 = vunpack.c.l.b16 %v830
      %v867 = vunpack.c.l.b16 %v831
      %v868 = vunpack.c.l.b16 %v832
      %v869 = vunpack.c.l.b16 %v833
      %v870 = vunpack.c.l.b16 %v834
      %v871 = vunpack.c.l.b16 %v835
      %v872 = vunpack.c.l.b16 %v836
      %v873 = vunpack.c.l.b16 %v837
      %v874 = vunpack.c.l.b16 %v838
      %v875 = vunpack.c.l.b16 %v839
      %v876 = vunpack.c.l.b16 %v840
      %v877 = vunpack.c.l.b16 %v841
      %v878 = vunpack.c.l.b16 %v842
      %v879 = vunpack.c.l.b16 %v843
      %v880 = vpack.c.b16 %v865, %v864
      %v881 = vpack.c.b16 %v867, %v866
      %v882 = vpack.c.b16 %v869, %v868
      %v883 = vpack.c.b16 %v871, %v870
      %v884 = vpack.c.b16 %v873, %v872
      %v885 = vpack.c.b16 %v875, %v874
      %v886 = vpack.c.b16 %v877, %v876
      %v887 = vpack.c.b16 %v879, %v878
      %896 = vmatprep.subr.bf16.mxu0 0
      %897 = vmatpush1.bf16.msra.mxu0 %v887
      %898 = vmatprep.subr.bf16.mxu0 0
      %899 = vmatpush1.bf16.msra.mxu0 %v886
      %900 = vmatprep.subr.bf16.mxu0 0
      %901 = vmatpush1.bf16.msra.mxu0 %v885
      %902 = vmatprep.subr.bf16.mxu0 0
      %903 = vmatpush1.bf16.msra.mxu0 %v884
      %904 = vmatprep.subr.bf16.mxu0 0
      %905 = vmatpush1.bf16.msra.mxu0 %v883
      %906 = vmatprep.subr.bf16.mxu0 0
      %907 = vmatpush1.bf16.msra.mxu0 %v882
      %908 = vmatprep.subr.bf16.mxu0 0
      %909 = vmatpush1.bf16.msra.mxu0 %v881
      %910 = vmatprep.subr.bf16.mxu0 0
      %911 = vmatpush1.bf16.msra.mxu0 %v880
      %912 = vmatprep.subr.bf16.mxu0 0
      %913 = vmatpush2.bf16.msra.mxu0 0
      %914 = vmatprep.subr.bf16.mxu0 0
      %915 = vmatpush2.bf16.msra.mxu0 0
      %916 = vmatprep.subr.bf16.mxu0 0
      %917 = vmatpush2.bf16.msra.mxu0 0
      %918 = vmatprep.subr.bf16.mxu0 0
      %919 = vmatpush2.bf16.msra.mxu0 0
      %920 = vmatprep.subr.bf16.mxu0 0
      %921 = vmatpush2.bf16.msra.mxu0 0
      %922 = vmatprep.subr.bf16.mxu0 0
      %923 = vmatpush2.bf16.msra.mxu0 0
      %924 = vmatprep.subr.bf16.mxu0 0
      %925 = vmatpush2.bf16.msra.mxu0 0
      %926 = vmatprep.subr.bf16.mxu0 0
      %927 = vmatpush2.bf16.msra.mxu0 0
      %928 = vmatprep.mubr.bf16.mxu0 0
      %929 = vmatmul.mubr.bf16.gmra.mxu0 %v844
      %v930 = vpop.f32.mrf.mxu0
      %v931 = vadd.f32 0.0, %v930
      %v932 = vpop.f32.mrf.mxu0
      %v933 = vpop.f32.mrf.mxu0
      %v934 = vadd.f32 0.0, %v933
      %v935 = vpop.f32.mrf.mxu0
      %936 = vmatprep.mubr.bf16.mxu0 0
      %937 = vmatmul.mubr.bf16.gmra.mxu0 %v845
      %v938 = vpop.f32.mrf.mxu0
      %v939 = vadd.f32 0.0, %v938
      %v940 = vpop.f32.mrf.mxu0
      %v941 = vpop.f32.mrf.mxu0
      %v942 = vadd.f32 0.0, %v941
      %v943 = vpop.f32.mrf.mxu0
      %944 = vdwg.mxu0
      %v945 = vadd.f32 %v824, %v931
      %v946 = vadd.f32 %v825, %v934
      %v947 = vadd.f32 %v826, %v939
      %v948 = vadd.f32 %v827, %v942
      %v949 = vld [vmem:[%s1 + $0x180] sm:$0xf]
      %v950 = vld [vmem:[%s1 + $0x184] sm:$0xf]
      %v951 = vld [vmem:[%s1 + $0x188] sm:$0xf]
      %v952 = vld [vmem:[%s1 + $0x18c] sm:$0xf]
      %v953 = vld [vmem:[%s1 + $0x190] sm:$0xf]
      %v954 = vld [vmem:[%s1 + $0x194] sm:$0xf]
      %v955 = vld [vmem:[%s1 + $0x198] sm:$0xf]
      %v956 = vld [vmem:[%s1 + $0x19c] sm:$0xf]
      %v957 = vld [vmem:[%s1 + $0x1a0] sm:$0xf]
      %v958 = vld [vmem:[%s1 + $0x1a4] sm:$0xf]
      %v959 = vld [vmem:[%s1 + $0x1a8] sm:$0xf]
      %v960 = vld [vmem:[%s1 + $0x1ac] sm:$0xf]
      %v961 = vld [vmem:[%s1 + $0x1b0] sm:$0xf]
      %v962 = vld [vmem:[%s1 + $0x1b4] sm:$0xf]
      %v963 = vld [vmem:[%s1 + $0x1b8] sm:$0xf]
      %v964 = vld [vmem:[%s1 + $0x1bc] sm:$0xf]
      %v966 = vunpack.c.l.b16 %v177
      %v967 = vpack.c.b16 %v966, %v966
      %v969 = vshrl.u32 %v844, 16
      %v971 = vshll.u32 %v844, 16
      %v973 = vrot.slane %v971, 1
      %v974 = vor.u32 %v969, %v973
      %v976 = vshll.u32 %v845, 16
      %v978 = vrot.slane %v976, 1
      %v979 = vsel %vm226, %v974, %v978
      %v980 = vshrl.u32 %v845, 16
      %v982 = vor.u32 %v980, %v978
      %v984 = vshll.u32 %v967, 16
      %v986 = vrot.slane %v984, 1
      %v987 = vsel %vm226, %v982, %v986
      %v1006 = vunpack.c.l.b16 %v949
      %v1007 = vunpack.c.l.b16 %v950
      %v1008 = vunpack.c.l.b16 %v951
      %v1009 = vunpack.c.l.b16 %v952
      %v1010 = vunpack.c.l.b16 %v953
      %v1011 = vunpack.c.l.b16 %v954
      %v1012 = vunpack.c.l.b16 %v955
      %v1013 = vunpack.c.l.b16 %v956
      %v1014 = vunpack.c.l.b16 %v957
      %v1015 = vunpack.c.l.b16 %v958
      %v1016 = vunpack.c.l.b16 %v959
      %v1017 = vunpack.c.l.b16 %v960
      %v1018 = vunpack.c.l.b16 %v961
      %v1019 = vunpack.c.l.b16 %v962
      %v1020 = vunpack.c.l.b16 %v963
      %v1021 = vunpack.c.l.b16 %v964
      %v1022 = vpack.c.b16 %v1007, %v1006
      %v1023 = vpack.c.b16 %v1009, %v1008
      %v1024 = vpack.c.b16 %v1011, %v1010
      %v1025 = vpack.c.b16 %v1013, %v1012
      %v1026 = vpack.c.b16 %v1015, %v1014
      %v1027 = vpack.c.b16 %v1017, %v1016
      %v1028 = vpack.c.b16 %v1019, %v1018
      %v1029 = vpack.c.b16 %v1021, %v1020
      %1038 = vmatprep.subr.bf16.mxu0 0
      %1039 = vmatpush1.bf16.msra.mxu0 %v1029
      %1040 = vmatprep.subr.bf16.mxu0 0
      %1041 = vmatpush1.bf16.msra.mxu0 %v1028
      %1042 = vmatprep.subr.bf16.mxu0 0
      %1043 = vmatpush1.bf16.msra.mxu0 %v1027
      %1044 = vmatprep.subr.bf16.mxu0 0
      %1045 = vmatpush1.bf16.msra.mxu0 %v1026
      %1046 = vmatprep.subr.bf16.mxu0 0
      %1047 = vmatpush1.bf16.msra.mxu0 %v1025
      %1048 = vmatprep.subr.bf16.mxu0 0
      %1049 = vmatpush1.bf16.msra.mxu0 %v1024
      %1050 = vmatprep.subr.bf16.mxu0 0
      %1051 = vmatpush1.bf16.msra.mxu0 %v1023
      %1052 = vmatprep.subr.bf16.mxu0 0
      %1053 = vmatpush1.bf16.msra.mxu0 %v1022
      %1054 = vmatprep.subr.bf16.mxu0 0
      %1055 = vmatpush2.bf16.msra.mxu0 0
      %1056 = vmatprep.subr.bf16.mxu0 0
      %1057 = vmatpush2.bf16.msra.mxu0 0
      %1058 = vmatprep.subr.bf16.mxu0 0
      %1059 = vmatpush2.bf16.msra.mxu0 0
      %1060 = vmatprep.subr.bf16.mxu0 0
      %1061 = vmatpush2.bf16.msra.mxu0 0
      %1062 = vmatprep.subr.bf16.mxu0 0
      %1063 = vmatpush2.bf16.msra.mxu0 0
      %1064 = vmatprep.subr.bf16.mxu0 0
      %1065 = vmatpush2.bf16.msra.mxu0 0
      %1066 = vmatprep.subr.bf16.mxu0 0
      %1067 = vmatpush2.bf16.msra.mxu0 0
      %1068 = vmatprep.subr.bf16.mxu0 0
      %1069 = vmatpush2.bf16.msra.mxu0 0
      %1070 = vmatprep.mubr.bf16.mxu0 0
      %1071 = vmatmul.mubr.bf16.gmra.mxu0 %v979
      %v1072 = vpop.f32.mrf.mxu0
      %v1073 = vadd.f32 0.0, %v1072
      %v1074 = vpop.f32.mrf.mxu0
      %v1075 = vpop.f32.mrf.mxu0
      %v1076 = vadd.f32 0.0, %v1075
      %v1077 = vpop.f32.mrf.mxu0
      %1078 = vmatprep.mubr.bf16.mxu0 0
      %1079 = vmatmul.mubr.bf16.gmra.mxu0 %v987
      %v1080 = vpop.f32.mrf.mxu0
      %v1081 = vadd.f32 0.0, %v1080
      %v1082 = vpop.f32.mrf.mxu0
      %v1083 = vpop.f32.mrf.mxu0
      %v1084 = vadd.f32 0.0, %v1083
      %v1085 = vpop.f32.mrf.mxu0
      %1086 = vdwg.mxu0
      %v1087 = vadd.f32 %v945, %v1073
      %v1088 = vadd.f32 %v946, %v1076
      %v1089 = vadd.f32 %v947, %v1081
      %v1090 = vadd.f32 %v948, %v1084
      %v1091 = vld [vmem:[%s1 + $0x1c0] sm:$0xf]
      %v1092 = vld [vmem:[%s1 + $0x1c4] sm:$0xf]
      %v1093 = vld [vmem:[%s1 + $0x1c8] sm:$0xf]
      %v1094 = vld [vmem:[%s1 + $0x1cc] sm:$0xf]
      %v1095 = vld [vmem:[%s1 + $0x1d0] sm:$0xf]
      %v1096 = vld [vmem:[%s1 + $0x1d4] sm:$0xf]
      %v1097 = vld [vmem:[%s1 + $0x1d8] sm:$0xf]
      %v1098 = vld [vmem:[%s1 + $0x1dc] sm:$0xf]
      %v1099 = vld [vmem:[%s1 + $0x1e0] sm:$0xf]
      %v1100 = vld [vmem:[%s1 + $0x1e4] sm:$0xf]
      %v1101 = vld [vmem:[%s1 + $0x1e8] sm:$0xf]
      %v1102 = vld [vmem:[%s1 + $0x1ec] sm:$0xf]
      %v1103 = vld [vmem:[%s1 + $0x1f0] sm:$0xf]
      %v1104 = vld [vmem:[%s1 + $0x1f4] sm:$0xf]
      %v1105 = vld [vmem:[%s1 + $0x1f8] sm:$0xf]
      %v1106 = vld [vmem:[%s1 + $0x1fc] sm:$0xf]
      %v1107 = vrot.slane %v844, 1
      %v1108 = vrot.slane %v845, 1
      %v1109 = vsel %vm461, %v1107, %v1108
      %v1110 = vrot.slane %v967, 1
      %v1111 = vsel %vm461, %v1108, %v1110
      %v1130 = vunpack.c.l.b16 %v1091
      %v1131 = vunpack.c.l.b16 %v1092
      %v1132 = vunpack.c.l.b16 %v1093
      %v1133 = vunpack.c.l.b16 %v1094
      %v1134 = vunpack.c.l.b16 %v1095
      %v1135 = vunpack.c.l.b16 %v1096
      %v1136 = vunpack.c.l.b16 %v1097
      %v1137 = vunpack.c.l.b16 %v1098
      %v1138 = vunpack.c.l.b16 %v1099
      %v1139 = vunpack.c.l.b16 %v1100
      %v1140 = vunpack.c.l.b16 %v1101
      %v1141 = vunpack.c.l.b16 %v1102
      %v1142 = vunpack.c.l.b16 %v1103
      %v1143 = vunpack.c.l.b16 %v1104
      %v1144 = vunpack.c.l.b16 %v1105
      %v1145 = vunpack.c.l.b16 %v1106
      %v1146 = vpack.c.b16 %v1131, %v1130
      %v1147 = vpack.c.b16 %v1133, %v1132
      %v1148 = vpack.c.b16 %v1135, %v1134
      %v1149 = vpack.c.b16 %v1137, %v1136
      %v1150 = vpack.c.b16 %v1139, %v1138
      %v1151 = vpack.c.b16 %v1141, %v1140
      %v1152 = vpack.c.b16 %v1143, %v1142
      %v1153 = vpack.c.b16 %v1145, %v1144
      %1162 = vmatprep.subr.bf16.mxu0 0
      %1163 = vmatpush1.bf16.msra.mxu0 %v1153
      %1164 = vmatprep.subr.bf16.mxu0 0
      %1165 = vmatpush1.bf16.msra.mxu0 %v1152
      %1166 = vmatprep.subr.bf16.mxu0 0
      %1167 = vmatpush1.bf16.msra.mxu0 %v1151
      %1168 = vmatprep.subr.bf16.mxu0 0
      %1169 = vmatpush1.bf16.msra.mxu0 %v1150
      %1170 = vmatprep.subr.bf16.mxu0 0
      %1171 = vmatpush1.bf16.msra.mxu0 %v1149
      %1172 = vmatprep.subr.bf16.mxu0 0
      %1173 = vmatpush1.bf16.msra.mxu0 %v1148
      %1174 = vmatprep.subr.bf16.mxu0 0
      %1175 = vmatpush1.bf16.msra.mxu0 %v1147
      %1176 = vmatprep.subr.bf16.mxu0 0
      %1177 = vmatpush1.bf16.msra.mxu0 %v1146
      %1178 = vmatprep.subr.bf16.mxu0 0
      %1179 = vmatpush2.bf16.msra.mxu0 0
      %1180 = vmatprep.subr.bf16.mxu0 0
      %1181 = vmatpush2.bf16.msra.mxu0 0
      %1182 = vmatprep.subr.bf16.mxu0 0
      %1183 = vmatpush2.bf16.msra.mxu0 0
      %1184 = vmatprep.subr.bf16.mxu0 0
      %1185 = vmatpush2.bf16.msra.mxu0 0
      %1186 = vmatprep.subr.bf16.mxu0 0
      %1187 = vmatpush2.bf16.msra.mxu0 0
      %1188 = vmatprep.subr.bf16.mxu0 0
      %1189 = vmatpush2.bf16.msra.mxu0 0
      %1190 = vmatprep.subr.bf16.mxu0 0
      %1191 = vmatpush2.bf16.msra.mxu0 0
      %1192 = vmatprep.subr.bf16.mxu0 0
      %1193 = vmatpush2.bf16.msra.mxu0 0
      %1194 = vmatprep.mubr.bf16.mxu0 0
      %1195 = vmatmul.mubr.bf16.gmra.mxu0 %v1109
      %v1196 = vpop.f32.mrf.mxu0
      %v1197 = vadd.f32 0.0, %v1196
      %v1198 = vpop.f32.mrf.mxu0
      %v1199 = vpop.f32.mrf.mxu0
      %v1200 = vadd.f32 0.0, %v1199
      %v1201 = vpop.f32.mrf.mxu0
      %1202 = vmatprep.mubr.bf16.mxu0 0
      %1203 = vmatmul.mubr.bf16.gmra.mxu0 %v1111
      %v1204 = vpop.f32.mrf.mxu0
      %v1205 = vadd.f32 0.0, %v1204
      %v1206 = vpop.f32.mrf.mxu0
      %v1207 = vpop.f32.mrf.mxu0
      %v1208 = vadd.f32 0.0, %v1207
      %v1209 = vpop.f32.mrf.mxu0
      %1210 = vdwg.mxu0
      %v1211 = vadd.f32 %v1087, %v1197
      %v1212 = vadd.f32 %v1088, %v1200
      %v1213 = vadd.f32 %v1089, %v1205
      %v1214 = vadd.f32 %v1090, %v1208
      %v1215 = vld [vmem:[%s1 + $0x200] sm:$0xf]
      %v1216 = vld [vmem:[%s1 + $0x204] sm:$0xf]
      %v1217 = vld [vmem:[%s1 + $0x208] sm:$0xf]
      %v1218 = vld [vmem:[%s1 + $0x20c] sm:$0xf]
      %v1219 = vld [vmem:[%s1 + $0x210] sm:$0xf]
      %v1220 = vld [vmem:[%s1 + $0x214] sm:$0xf]
      %v1221 = vld [vmem:[%s1 + $0x218] sm:$0xf]
      %v1222 = vld [vmem:[%s1 + $0x21c] sm:$0xf]
      %v1223 = vld [vmem:[%s1 + $0x220] sm:$0xf]
      %v1224 = vld [vmem:[%s1 + $0x224] sm:$0xf]
      %v1225 = vld [vmem:[%s1 + $0x228] sm:$0xf]
      %v1226 = vld [vmem:[%s1 + $0x22c] sm:$0xf]
      %v1227 = vld [vmem:[%s1 + $0x230] sm:$0xf]
      %v1228 = vld [vmem:[%s1 + $0x234] sm:$0xf]
      %v1229 = vld [vmem:[%s1 + $0x238] sm:$0xf]
      %v1230 = vld [vmem:[%s1 + $0x23c] sm:$0xf]
      %v1231 = vrot.slane %v969, 1
      %v1232 = vrot.slane %v971, 2
      %v1233 = vor.u32 %v1231, %v1232
      %v1234 = vrot.slane %v980, 1
      %v1235 = vrot.slane %v976, 2
      %v1236 = vor.u32 %v1234, %v1235
      %v1237 = vsel %vm586, %v1233, %v1236
      %v1238 = vshrl.u32 %v967, 16
      %v1240 = vrot.slane %v1238, 1
      %v1241 = vrot.slane %v984, 2
      %v1242 = vor.u32 %v1240, %v1241
      %v1243 = vsel %vm586, %v1236, %v1242
      %v1262 = vunpack.c.l.b16 %v1215
      %v1263 = vunpack.c.l.b16 %v1216
      %v1264 = vunpack.c.l.b16 %v1217
      %v1265 = vunpack.c.l.b16 %v1218
      %v1266 = vunpack.c.l.b16 %v1219
      %v1267 = vunpack.c.l.b16 %v1220
      %v1268 = vunpack.c.l.b16 %v1221
      %v1269 = vunpack.c.l.b16 %v1222
      %v1270 = vunpack.c.l.b16 %v1223
      %v1271 = vunpack.c.l.b16 %v1224
      %v1272 = vunpack.c.l.b16 %v1225
      %v1273 = vunpack.c.l.b16 %v1226
      %v1274 = vunpack.c.l.b16 %v1227
      %v1275 = vunpack.c.l.b16 %v1228
      %v1276 = vunpack.c.l.b16 %v1229
      %v1277 = vunpack.c.l.b16 %v1230
      %v1278 = vpack.c.b16 %v1263, %v1262
      %v1279 = vpack.c.b16 %v1265, %v1264
      %v1280 = vpack.c.b16 %v1267, %v1266
      %v1281 = vpack.c.b16 %v1269, %v1268
      %v1282 = vpack.c.b16 %v1271, %v1270
      %v1283 = vpack.c.b16 %v1273, %v1272
      %v1284 = vpack.c.b16 %v1275, %v1274
      %v1285 = vpack.c.b16 %v1277, %v1276
      %1294 = vmatprep.subr.bf16.mxu0 0
      %1295 = vmatpush1.bf16.msra.mxu0 %v1285
      %1296 = vmatprep.subr.bf16.mxu0 0
      %1297 = vmatpush1.bf16.msra.mxu0 %v1284
      %1298 = vmatprep.subr.bf16.mxu0 0
      %1299 = vmatpush1.bf16.msra.mxu0 %v1283
      %1300 = vmatprep.subr.bf16.mxu0 0
      %1301 = vmatpush1.bf16.msra.mxu0 %v1282
      %1302 = vmatprep.subr.bf16.mxu0 0
      %1303 = vmatpush1.bf16.msra.mxu0 %v1281
      %1304 = vmatprep.subr.bf16.mxu0 0
      %1305 = vmatpush1.bf16.msra.mxu0 %v1280
      %1306 = vmatprep.subr.bf16.mxu0 0
      %1307 = vmatpush1.bf16.msra.mxu0 %v1279
      %1308 = vmatprep.subr.bf16.mxu0 0
      %1309 = vmatpush1.bf16.msra.mxu0 %v1278
      %1310 = vmatprep.subr.bf16.mxu0 0
      %1311 = vmatpush2.bf16.msra.mxu0 0
      %1312 = vmatprep.subr.bf16.mxu0 0
      %1313 = vmatpush2.bf16.msra.mxu0 0
      %1314 = vmatprep.subr.bf16.mxu0 0
      %1315 = vmatpush2.bf16.msra.mxu0 0
      %1316 = vmatprep.subr.bf16.mxu0 0
      %1317 = vmatpush2.bf16.msra.mxu0 0
      %1318 = vmatprep.subr.bf16.mxu0 0
      %1319 = vmatpush2.bf16.msra.mxu0 0
      %1320 = vmatprep.subr.bf16.mxu0 0
      %1321 = vmatpush2.bf16.msra.mxu0 0
      %1322 = vmatprep.subr.bf16.mxu0 0
      %1323 = vmatpush2.bf16.msra.mxu0 0
      %1324 = vmatprep.subr.bf16.mxu0 0
      %1325 = vmatpush2.bf16.msra.mxu0 0
      %1326 = vmatprep.mubr.bf16.mxu0 0
      %1327 = vmatmul.mubr.bf16.gmra.mxu0 %v1237
      %v1328 = vpop.f32.mrf.mxu0
      %v1329 = vadd.f32 0.0, %v1328
      %v1330 = vpop.f32.mrf.mxu0
      %v1331 = vpop.f32.mrf.mxu0
      %v1332 = vadd.f32 0.0, %v1331
      %v1333 = vpop.f32.mrf.mxu0
      %1334 = vmatprep.mubr.bf16.mxu0 0
      %1335 = vmatmul.mubr.bf16.gmra.mxu0 %v1243
      %v1336 = vpop.f32.mrf.mxu0
      %v1337 = vadd.f32 0.0, %v1336
      %v1338 = vpop.f32.mrf.mxu0
      %v1339 = vpop.f32.mrf.mxu0
      %v1340 = vadd.f32 0.0, %v1339
      %v1341 = vpop.f32.mrf.mxu0
      %1342 = vdwg.mxu0
      %v1343 = vadd.f32 %v1211, %v1329
      %v1344 = vadd.f32 %v1212, %v1332
      %v1345 = vadd.f32 %v1213, %v1337
      %v1346 = vadd.f32 %v1214, %v1340
      %v1347 = vld [vmem:[%s1 + $0x240] sm:$0xf]
      %v1348 = vld [vmem:[%s1 + $0x244] sm:$0xf]
      %v1349 = vld [vmem:[%s1 + $0x248] sm:$0xf]
      %v1350 = vld [vmem:[%s1 + $0x24c] sm:$0xf]
      %v1351 = vld [vmem:[%s1 + $0x250] sm:$0xf]
      %v1352 = vld [vmem:[%s1 + $0x254] sm:$0xf]
      %v1353 = vld [vmem:[%s1 + $0x258] sm:$0xf]
      %v1354 = vld [vmem:[%s1 + $0x25c] sm:$0xf]
      %v1355 = vld [vmem:[%s1 + $0x260] sm:$0xf]
      %v1356 = vld [vmem:[%s1 + $0x264] sm:$0xf]
      %v1357 = vld [vmem:[%s1 + $0x268] sm:$0xf]
      %v1358 = vld [vmem:[%s1 + $0x26c] sm:$0xf]
      %v1359 = vld [vmem:[%s1 + $0x270] sm:$0xf]
      %v1360 = vld [vmem:[%s1 + $0x274] sm:$0xf]
      %v1361 = vld [vmem:[%s1 + $0x278] sm:$0xf]
      %v1362 = vld [vmem:[%s1 + $0x27c] sm:$0xf]
      %v1363 = vrot.slane %v844, 2
      %v1364 = vrot.slane %v845, 2
      %v1365 = vsel %vm719, %v1363, %v1364
      %v1366 = vrot.slane %v967, 2
      %v1367 = vsel %vm719, %v1364, %v1366
      %v1386 = vunpack.c.l.b16 %v1347
      %v1387 = vunpack.c.l.b16 %v1348
      %v1388 = vunpack.c.l.b16 %v1349
      %v1389 = vunpack.c.l.b16 %v1350
      %v1390 = vunpack.c.l.b16 %v1351
      %v1391 = vunpack.c.l.b16 %v1352
      %v1392 = vunpack.c.l.b16 %v1353
      %v1393 = vunpack.c.l.b16 %v1354
      %v1394 = vunpack.c.l.b16 %v1355
      %v1395 = vunpack.c.l.b16 %v1356
      %v1396 = vunpack.c.l.b16 %v1357
      %v1397 = vunpack.c.l.b16 %v1358
      %v1398 = vunpack.c.l.b16 %v1359
      %v1399 = vunpack.c.l.b16 %v1360
      %v1400 = vunpack.c.l.b16 %v1361
      %v1401 = vunpack.c.l.b16 %v1362
      %v1402 = vpack.c.b16 %v1387, %v1386
      %v1403 = vpack.c.b16 %v1389, %v1388
      %v1404 = vpack.c.b16 %v1391, %v1390
      %v1405 = vpack.c.b16 %v1393, %v1392
      %v1406 = vpack.c.b16 %v1395, %v1394
      %v1407 = vpack.c.b16 %v1397, %v1396
      %v1408 = vpack.c.b16 %v1399, %v1398
      %v1409 = vpack.c.b16 %v1401, %v1400
      %1418 = vmatprep.subr.bf16.mxu0 0
      %1419 = vmatpush1.bf16.msra.mxu0 %v1409
      %1420 = vmatprep.subr.bf16.mxu0 0
      %1421 = vmatpush1.bf16.msra.mxu0 %v1408
      %1422 = vmatprep.subr.bf16.mxu0 0
      %1423 = vmatpush1.bf16.msra.mxu0 %v1407
      %1424 = vmatprep.subr.bf16.mxu0 0
      %1425 = vmatpush1.bf16.msra.mxu0 %v1406
      %1426 = vmatprep.subr.bf16.mxu0 0
      %1427 = vmatpush1.bf16.msra.mxu0 %v1405
      %1428 = vmatprep.subr.bf16.mxu0 0
      %1429 = vmatpush1.bf16.msra.mxu0 %v1404
      %1430 = vmatprep.subr.bf16.mxu0 0
      %1431 = vmatpush1.bf16.msra.mxu0 %v1403
      %1432 = vmatprep.subr.bf16.mxu0 0
      %1433 = vmatpush1.bf16.msra.mxu0 %v1402
      %1434 = vmatprep.subr.bf16.mxu0 0
      %1435 = vmatpush2.bf16.msra.mxu0 0
      %1436 = vmatprep.subr.bf16.mxu0 0
      %1437 = vmatpush2.bf16.msra.mxu0 0
      %1438 = vmatprep.subr.bf16.mxu0 0
      %1439 = vmatpush2.bf16.msra.mxu0 0
      %1440 = vmatprep.subr.bf16.mxu0 0
      %1441 = vmatpush2.bf16.msra.mxu0 0
      %1442 = vmatprep.subr.bf16.mxu0 0
      %1443 = vmatpush2.bf16.msra.mxu0 0
      %1444 = vmatprep.subr.bf16.mxu0 0
      %1445 = vmatpush2.bf16.msra.mxu0 0
      %1446 = vmatprep.subr.bf16.mxu0 0
      %1447 = vmatpush2.bf16.msra.mxu0 0
      %1448 = vmatprep.subr.bf16.mxu0 0
      %1449 = vmatpush2.bf16.msra.mxu0 0
      %1450 = vmatprep.mubr.bf16.mxu0 0
      %1451 = vmatmul.mubr.bf16.gmra.mxu0 %v1365
      %v1452 = vpop.f32.mrf.mxu0
      %v1453 = vadd.f32 0.0, %v1452
      %v1454 = vpop.f32.mrf.mxu0
      %v1455 = vpop.f32.mrf.mxu0
      %v1456 = vadd.f32 0.0, %v1455
      %v1457 = vpop.f32.mrf.mxu0
      %1458 = vmatprep.mubr.bf16.mxu0 0
      %1459 = vmatmul.mubr.bf16.gmra.mxu0 %v1367
      %v1460 = vpop.f32.mrf.mxu0
      %v1461 = vadd.f32 0.0, %v1460
      %v1462 = vpop.f32.mrf.mxu0
      %v1463 = vpop.f32.mrf.mxu0
      %v1464 = vadd.f32 0.0, %v1463
      %v1465 = vpop.f32.mrf.mxu0
      %1466 = vdwg.mxu0
      %v1467 = vadd.f32 %v1343, %v1453
      %v1468 = vadd.f32 %v1344, %v1456
      %v1469 = vadd.f32 %v1345, %v1461
      %v1470 = vadd.f32 %v1346, %v1464
      %v1471 = vld [vmem:[%s1 + $0x280] sm:$0xf]
      %v1472 = vld [vmem:[%s1 + $0x284] sm:$0xf]
      %v1473 = vld [vmem:[%s1 + $0x288] sm:$0xf]
      %v1474 = vld [vmem:[%s1 + $0x28c] sm:$0xf]
      %v1475 = vld [vmem:[%s1 + $0x290] sm:$0xf]
      %v1476 = vld [vmem:[%s1 + $0x294] sm:$0xf]
      %v1477 = vld [vmem:[%s1 + $0x298] sm:$0xf]
      %v1478 = vld [vmem:[%s1 + $0x29c] sm:$0xf]
      %v1479 = vld [vmem:[%s1 + $0x2a0] sm:$0xf]
      %v1480 = vld [vmem:[%s1 + $0x2a4] sm:$0xf]
      %v1481 = vld [vmem:[%s1 + $0x2a8] sm:$0xf]
      %v1482 = vld [vmem:[%s1 + $0x2ac] sm:$0xf]
      %v1483 = vld [vmem:[%s1 + $0x2b0] sm:$0xf]
      %v1484 = vld [vmem:[%s1 + $0x2b4] sm:$0xf]
      %v1485 = vld [vmem:[%s1 + $0x2b8] sm:$0xf]
      %v1486 = vld [vmem:[%s1 + $0x2bc] sm:$0xf]
      %v1487 = vpack.c.b16 %v966, %v222
      %v1505 = vunpack.c.l.b16 %v1471
      %v1506 = vunpack.c.l.b16 %v1472
      %v1507 = vunpack.c.l.b16 %v1473
      %v1508 = vunpack.c.l.b16 %v1474
      %v1509 = vunpack.c.l.b16 %v1475
      %v1510 = vunpack.c.l.b16 %v1476
      %v1511 = vunpack.c.l.b16 %v1477
      %v1512 = vunpack.c.l.b16 %v1478
      %v1513 = vunpack.c.l.b16 %v1479
      %v1514 = vunpack.c.l.b16 %v1480
      %v1515 = vunpack.c.l.b16 %v1481
      %v1516 = vunpack.c.l.b16 %v1482
      %v1517 = vunpack.c.l.b16 %v1483
      %v1518 = vunpack.c.l.b16 %v1484
      %v1519 = vunpack.c.l.b16 %v1485
      %v1520 = vunpack.c.l.b16 %v1486
      %v1521 = vpack.c.b16 %v1506, %v1505
      %v1522 = vpack.c.b16 %v1508, %v1507
      %v1523 = vpack.c.b16 %v1510, %v1509
      %v1524 = vpack.c.b16 %v1512, %v1511
      %v1525 = vpack.c.b16 %v1514, %v1513
      %v1526 = vpack.c.b16 %v1516, %v1515
      %v1527 = vpack.c.b16 %v1518, %v1517
      %v1528 = vpack.c.b16 %v1520, %v1519
      %1537 = vmatprep.subr.bf16.mxu0 0
      %1538 = vmatpush1.bf16.msra.mxu0 %v1528
      %1539 = vmatprep.subr.bf16.mxu0 0
      %1540 = vmatpush1.bf16.msra.mxu0 %v1527
      %1541 = vmatprep.subr.bf16.mxu0 0
      %1542 = vmatpush1.bf16.msra.mxu0 %v1526
      %1543 = vmatprep.subr.bf16.mxu0 0
      %1544 = vmatpush1.bf16.msra.mxu0 %v1525
      %1545 = vmatprep.subr.bf16.mxu0 0
      %1546 = vmatpush1.bf16.msra.mxu0 %v1524
      %1547 = vmatprep.subr.bf16.mxu0 0
      %1548 = vmatpush1.bf16.msra.mxu0 %v1523
      %1549 = vmatprep.subr.bf16.mxu0 0
      %1550 = vmatpush1.bf16.msra.mxu0 %v1522
      %1551 = vmatprep.subr.bf16.mxu0 0
      %1552 = vmatpush1.bf16.msra.mxu0 %v1521
      %1553 = vmatprep.subr.bf16.mxu0 0
      %1554 = vmatpush2.bf16.msra.mxu0 0
      %1555 = vmatprep.subr.bf16.mxu0 0
      %1556 = vmatpush2.bf16.msra.mxu0 0
      %1557 = vmatprep.subr.bf16.mxu0 0
      %1558 = vmatpush2.bf16.msra.mxu0 0
      %1559 = vmatprep.subr.bf16.mxu0 0
      %1560 = vmatpush2.bf16.msra.mxu0 0
      %1561 = vmatprep.subr.bf16.mxu0 0
      %1562 = vmatpush2.bf16.msra.mxu0 0
      %1563 = vmatprep.subr.bf16.mxu0 0
      %1564 = vmatpush2.bf16.msra.mxu0 0
      %1565 = vmatprep.subr.bf16.mxu0 0
      %1566 = vmatpush2.bf16.msra.mxu0 0
      %1567 = vmatprep.subr.bf16.mxu0 0
      %1568 = vmatpush2.bf16.msra.mxu0 0
      %1569 = vmatprep.mubr.bf16.mxu0 0
      %1570 = vmatmul.mubr.bf16.gmra.mxu0 %v224
      %v1571 = vpop.f32.mrf.mxu0
      %v1572 = vadd.f32 0.0, %v1571
      %v1573 = vpop.f32.mrf.mxu0
      %v1574 = vpop.f32.mrf.mxu0
      %v1575 = vadd.f32 0.0, %v1574
      %v1576 = vpop.f32.mrf.mxu0
      %1577 = vmatprep.mubr.bf16.mxu0 0
      %1578 = vmatmul.mubr.bf16.gmra.mxu0 %v1487
      %v1579 = vpop.f32.mrf.mxu0
      %v1580 = vadd.f32 0.0, %v1579
      %v1581 = vpop.f32.mrf.mxu0
      %v1582 = vpop.f32.mrf.mxu0
      %v1583 = vadd.f32 0.0, %v1582
      %v1584 = vpop.f32.mrf.mxu0
      %1585 = vdwg.mxu0
      %v1586 = vadd.f32 %v1467, %v1572
      %v1587 = vadd.f32 %v1468, %v1575
      %v1588 = vadd.f32 %v1469, %v1580
      %v1589 = vadd.f32 %v1470, %v1583
      %v1590 = vld [vmem:[%s1 + $0x2c0] sm:$0xf]
      %v1591 = vld [vmem:[%s1 + $0x2c4] sm:$0xf]
      %v1592 = vld [vmem:[%s1 + $0x2c8] sm:$0xf]
      %v1593 = vld [vmem:[%s1 + $0x2cc] sm:$0xf]
      %v1594 = vld [vmem:[%s1 + $0x2d0] sm:$0xf]
      %v1595 = vld [vmem:[%s1 + $0x2d4] sm:$0xf]
      %v1596 = vld [vmem:[%s1 + $0x2d8] sm:$0xf]
      %v1597 = vld [vmem:[%s1 + $0x2dc] sm:$0xf]
      %v1598 = vld [vmem:[%s1 + $0x2e0] sm:$0xf]
      %v1599 = vld [vmem:[%s1 + $0x2e4] sm:$0xf]
      %v1600 = vld [vmem:[%s1 + $0x2e8] sm:$0xf]
      %v1601 = vld [vmem:[%s1 + $0x2ec] sm:$0xf]
      %v1602 = vld [vmem:[%s1 + $0x2f0] sm:$0xf]
      %v1603 = vld [vmem:[%s1 + $0x2f4] sm:$0xf]
      %v1604 = vld [vmem:[%s1 + $0x2f8] sm:$0xf]
      %v1605 = vld [vmem:[%s1 + $0x2fc] sm:$0xf]
      %v1607 = vunpack.c.l.b16 %v178
      %v1608 = vpack.c.b16 %v1607, %v1607
      %v1610 = vshll.u32 %v1487, 16
      %v1612 = vrot.slane %v1610, 1
      %v1613 = vsel %vm226, %v241, %v1612
      %v1614 = vshrl.u32 %v1487, 16
      %v1616 = vor.u32 %v1614, %v1612
      %v1618 = vshll.u32 %v1608, 16
      %v1620 = vrot.slane %v1618, 1
      %v1621 = vsel %vm226, %v1616, %v1620
      %v1640 = vunpack.c.l.b16 %v1590
      %v1641 = vunpack.c.l.b16 %v1591
      %v1642 = vunpack.c.l.b16 %v1592
      %v1643 = vunpack.c.l.b16 %v1593
      %v1644 = vunpack.c.l.b16 %v1594
      %v1645 = vunpack.c.l.b16 %v1595
      %v1646 = vunpack.c.l.b16 %v1596
      %v1647 = vunpack.c.l.b16 %v1597
      %v1648 = vunpack.c.l.b16 %v1598
      %v1649 = vunpack.c.l.b16 %v1599
      %v1650 = vunpack.c.l.b16 %v1600
      %v1651 = vunpack.c.l.b16 %v1601
      %v1652 = vunpack.c.l.b16 %v1602
      %v1653 = vunpack.c.l.b16 %v1603
      %v1654 = vunpack.c.l.b16 %v1604
      %v1655 = vunpack.c.l.b16 %v1605
      %v1656 = vpack.c.b16 %v1641, %v1640
      %v1657 = vpack.c.b16 %v1643, %v1642
      %v1658 = vpack.c.b16 %v1645, %v1644
      %v1659 = vpack.c.b16 %v1647, %v1646
      %v1660 = vpack.c.b16 %v1649, %v1648
      %v1661 = vpack.c.b16 %v1651, %v1650
      %v1662 = vpack.c.b16 %v1653, %v1652
      %v1663 = vpack.c.b16 %v1655, %v1654
      %1672 = vmatprep.subr.bf16.mxu0 0
      %1673 = vmatpush1.bf16.msra.mxu0 %v1663
      %1674 = vmatprep.subr.bf16.mxu0 0
      %1675 = vmatpush1.bf16.msra.mxu0 %v1662
      %1676 = vmatprep.subr.bf16.mxu0 0
      %1677 = vmatpush1.bf16.msra.mxu0 %v1661
      %1678 = vmatprep.subr.bf16.mxu0 0
      %1679 = vmatpush1.bf16.msra.mxu0 %v1660
      %1680 = vmatprep.subr.bf16.mxu0 0
      %1681 = vmatpush1.bf16.msra.mxu0 %v1659
      %1682 = vmatprep.subr.bf16.mxu0 0
      %1683 = vmatpush1.bf16.msra.mxu0 %v1658
      %1684 = vmatprep.subr.bf16.mxu0 0
      %1685 = vmatpush1.bf16.msra.mxu0 %v1657
      %1686 = vmatprep.subr.bf16.mxu0 0
      %1687 = vmatpush1.bf16.msra.mxu0 %v1656
      %1688 = vmatprep.subr.bf16.mxu0 0
      %1689 = vmatpush2.bf16.msra.mxu0 0
      %1690 = vmatprep.subr.bf16.mxu0 0
      %1691 = vmatpush2.bf16.msra.mxu0 0
      %1692 = vmatprep.subr.bf16.mxu0 0
      %1693 = vmatpush2.bf16.msra.mxu0 0
      %1694 = vmatprep.subr.bf16.mxu0 0
      %1695 = vmatpush2.bf16.msra.mxu0 0
      %1696 = vmatprep.subr.bf16.mxu0 0
      %1697 = vmatpush2.bf16.msra.mxu0 0
      %1698 = vmatprep.subr.bf16.mxu0 0
      %1699 = vmatpush2.bf16.msra.mxu0 0
      %1700 = vmatprep.subr.bf16.mxu0 0
      %1701 = vmatpush2.bf16.msra.mxu0 0
      %1702 = vmatprep.subr.bf16.mxu0 0
      %1703 = vmatpush2.bf16.msra.mxu0 0
      %1704 = vmatprep.mubr.bf16.mxu0 0
      %1705 = vmatmul.mubr.bf16.gmra.mxu0 %v1613
      %v1706 = vpop.f32.mrf.mxu0
      %v1707 = vadd.f32 0.0, %v1706
      %v1708 = vpop.f32.mrf.mxu0
      %v1709 = vpop.f32.mrf.mxu0
      %v1710 = vadd.f32 0.0, %v1709
      %v1711 = vpop.f32.mrf.mxu0
      %1712 = vmatprep.mubr.bf16.mxu0 0
      %1713 = vmatmul.mubr.bf16.gmra.mxu0 %v1621
      %v1714 = vpop.f32.mrf.mxu0
      %v1715 = vadd.f32 0.0, %v1714
      %v1716 = vpop.f32.mrf.mxu0
      %v1717 = vpop.f32.mrf.mxu0
      %v1718 = vadd.f32 0.0, %v1717
      %v1719 = vpop.f32.mrf.mxu0
      %1720 = vdwg.mxu0
      %v1721 = vadd.f32 %v1586, %v1707
      %v1722 = vadd.f32 %v1587, %v1710
      %v1723 = vadd.f32 %v1588, %v1715
      %v1724 = vadd.f32 %v1589, %v1718
      %v1725 = vld [vmem:[%s1 + $0x300] sm:$0xf]
      %v1726 = vld [vmem:[%s1 + $0x304] sm:$0xf]
      %v1727 = vld [vmem:[%s1 + $0x308] sm:$0xf]
      %v1728 = vld [vmem:[%s1 + $0x30c] sm:$0xf]
      %v1729 = vld [vmem:[%s1 + $0x310] sm:$0xf]
      %v1730 = vld [vmem:[%s1 + $0x314] sm:$0xf]
      %v1731 = vld [vmem:[%s1 + $0x318] sm:$0xf]
      %v1732 = vld [vmem:[%s1 + $0x31c] sm:$0xf]
      %v1733 = vld [vmem:[%s1 + $0x320] sm:$0xf]
      %v1734 = vld [vmem:[%s1 + $0x324] sm:$0xf]
      %v1735 = vld [vmem:[%s1 + $0x328] sm:$0xf]
      %v1736 = vld [vmem:[%s1 + $0x32c] sm:$0xf]
      %v1737 = vld [vmem:[%s1 + $0x330] sm:$0xf]
      %v1738 = vld [vmem:[%s1 + $0x334] sm:$0xf]
      %v1739 = vld [vmem:[%s1 + $0x338] sm:$0xf]
      %v1740 = vld [vmem:[%s1 + $0x33c] sm:$0xf]
      %v1741 = vrot.slane %v1487, 1
      %v1742 = vsel %vm461, %v463, %v1741
      %v1743 = vrot.slane %v1608, 1
      %v1744 = vsel %vm461, %v1741, %v1743
      %v1763 = vunpack.c.l.b16 %v1725
      %v1764 = vunpack.c.l.b16 %v1726
      %v1765 = vunpack.c.l.b16 %v1727
      %v1766 = vunpack.c.l.b16 %v1728
      %v1767 = vunpack.c.l.b16 %v1729
      %v1768 = vunpack.c.l.b16 %v1730
      %v1769 = vunpack.c.l.b16 %v1731
      %v1770 = vunpack.c.l.b16 %v1732
      %v1771 = vunpack.c.l.b16 %v1733
      %v1772 = vunpack.c.l.b16 %v1734
      %v1773 = vunpack.c.l.b16 %v1735
      %v1774 = vunpack.c.l.b16 %v1736
      %v1775 = vunpack.c.l.b16 %v1737
      %v1776 = vunpack.c.l.b16 %v1738
      %v1777 = vunpack.c.l.b16 %v1739
      %v1778 = vunpack.c.l.b16 %v1740
      %v1779 = vpack.c.b16 %v1764, %v1763
      %v1780 = vpack.c.b16 %v1766, %v1765
      %v1781 = vpack.c.b16 %v1768, %v1767
      %v1782 = vpack.c.b16 %v1770, %v1769
      %v1783 = vpack.c.b16 %v1772, %v1771
      %v1784 = vpack.c.b16 %v1774, %v1773
      %v1785 = vpack.c.b16 %v1776, %v1775
      %v1786 = vpack.c.b16 %v1778, %v1777
      %1795 = vmatprep.subr.bf16.mxu0 0
      %1796 = vmatpush1.bf16.msra.mxu0 %v1786
      %1797 = vmatprep.subr.bf16.mxu0 0
      %1798 = vmatpush1.bf16.msra.mxu0 %v1785
      %1799 = vmatprep.subr.bf16.mxu0 0
      %1800 = vmatpush1.bf16.msra.mxu0 %v1784
      %1801 = vmatprep.subr.bf16.mxu0 0
      %1802 = vmatpush1.bf16.msra.mxu0 %v1783
      %1803 = vmatprep.subr.bf16.mxu0 0
      %1804 = vmatpush1.bf16.msra.mxu0 %v1782
      %1805 = vmatprep.subr.bf16.mxu0 0
      %1806 = vmatpush1.bf16.msra.mxu0 %v1781
      %1807 = vmatprep.subr.bf16.mxu0 0
      %1808 = vmatpush1.bf16.msra.mxu0 %v1780
      %1809 = vmatprep.subr.bf16.mxu0 0
      %1810 = vmatpush1.bf16.msra.mxu0 %v1779
      %1811 = vmatprep.subr.bf16.mxu0 0
      %1812 = vmatpush2.bf16.msra.mxu0 0
      %1813 = vmatprep.subr.bf16.mxu0 0
      %1814 = vmatpush2.bf16.msra.mxu0 0
      %1815 = vmatprep.subr.bf16.mxu0 0
      %1816 = vmatpush2.bf16.msra.mxu0 0
      %1817 = vmatprep.subr.bf16.mxu0 0
      %1818 = vmatpush2.bf16.msra.mxu0 0
      %1819 = vmatprep.subr.bf16.mxu0 0
      %1820 = vmatpush2.bf16.msra.mxu0 0
      %1821 = vmatprep.subr.bf16.mxu0 0
      %1822 = vmatpush2.bf16.msra.mxu0 0
      %1823 = vmatprep.subr.bf16.mxu0 0
      %1824 = vmatpush2.bf16.msra.mxu0 0
      %1825 = vmatprep.subr.bf16.mxu0 0
      %1826 = vmatpush2.bf16.msra.mxu0 0
      %1827 = vmatprep.mubr.bf16.mxu0 0
      %1828 = vmatmul.mubr.bf16.gmra.mxu0 %v1742
      %v1829 = vpop.f32.mrf.mxu0
      %v1830 = vadd.f32 0.0, %v1829
      %v1831 = vpop.f32.mrf.mxu0
      %v1832 = vpop.f32.mrf.mxu0
      %v1833 = vadd.f32 0.0, %v1832
      %v1834 = vpop.f32.mrf.mxu0
      %1835 = vmatprep.mubr.bf16.mxu0 0
      %1836 = vmatmul.mubr.bf16.gmra.mxu0 %v1744
      %v1837 = vpop.f32.mrf.mxu0
      %v1838 = vadd.f32 0.0, %v1837
      %v1839 = vpop.f32.mrf.mxu0
      %v1840 = vpop.f32.mrf.mxu0
      %v1841 = vadd.f32 0.0, %v1840
      %v1842 = vpop.f32.mrf.mxu0
      %1843 = vdwg.mxu0
      %v1844 = vadd.f32 %v1721, %v1830
      %v1845 = vadd.f32 %v1722, %v1833
      %v1846 = vadd.f32 %v1723, %v1838
      %v1847 = vadd.f32 %v1724, %v1841
      %v1848 = vld [vmem:[%s1 + $0x340] sm:$0xf]
      %v1849 = vld [vmem:[%s1 + $0x344] sm:$0xf]
      %v1850 = vld [vmem:[%s1 + $0x348] sm:$0xf]
      %v1851 = vld [vmem:[%s1 + $0x34c] sm:$0xf]
      %v1852 = vld [vmem:[%s1 + $0x350] sm:$0xf]
      %v1853 = vld [vmem:[%s1 + $0x354] sm:$0xf]
      %v1854 = vld [vmem:[%s1 + $0x358] sm:$0xf]
      %v1855 = vld [vmem:[%s1 + $0x35c] sm:$0xf]
      %v1856 = vld [vmem:[%s1 + $0x360] sm:$0xf]
      %v1857 = vld [vmem:[%s1 + $0x364] sm:$0xf]
      %v1858 = vld [vmem:[%s1 + $0x368] sm:$0xf]
      %v1859 = vld [vmem:[%s1 + $0x36c] sm:$0xf]
      %v1860 = vld [vmem:[%s1 + $0x370] sm:$0xf]
      %v1861 = vld [vmem:[%s1 + $0x374] sm:$0xf]
      %v1862 = vld [vmem:[%s1 + $0x378] sm:$0xf]
      %v1863 = vld [vmem:[%s1 + $0x37c] sm:$0xf]
      %v1864 = vrot.slane %v1614, 1
      %v1865 = vrot.slane %v1610, 2
      %v1866 = vor.u32 %v1864, %v1865
      %v1867 = vsel %vm586, %v592, %v1866
      %v1868 = vshrl.u32 %v1608, 16
      %v1870 = vrot.slane %v1868, 1
      %v1871 = vrot.slane %v1618, 2
      %v1872 = vor.u32 %v1870, %v1871
      %v1873 = vsel %vm586, %v1866, %v1872
      %v1892 = vunpack.c.l.b16 %v1848
      %v1893 = vunpack.c.l.b16 %v1849
      %v1894 = vunpack.c.l.b16 %v1850
      %v1895 = vunpack.c.l.b16 %v1851
      %v1896 = vunpack.c.l.b16 %v1852
      %v1897 = vunpack.c.l.b16 %v1853
      %v1898 = vunpack.c.l.b16 %v1854
      %v1899 = vunpack.c.l.b16 %v1855
      %v1900 = vunpack.c.l.b16 %v1856
      %v1901 = vunpack.c.l.b16 %v1857
      %v1902 = vunpack.c.l.b16 %v1858
      %v1903 = vunpack.c.l.b16 %v1859
      %v1904 = vunpack.c.l.b16 %v1860
      %v1905 = vunpack.c.l.b16 %v1861
      %v1906 = vunpack.c.l.b16 %v1862
      %v1907 = vunpack.c.l.b16 %v1863
      %v1908 = vpack.c.b16 %v1893, %v1892
      %v1909 = vpack.c.b16 %v1895, %v1894
      %v1910 = vpack.c.b16 %v1897, %v1896
      %v1911 = vpack.c.b16 %v1899, %v1898
      %v1912 = vpack.c.b16 %v1901, %v1900
      %v1913 = vpack.c.b16 %v1903, %v1902
      %v1914 = vpack.c.b16 %v1905, %v1904
      %v1915 = vpack.c.b16 %v1907, %v1906
      %1924 = vmatprep.subr.bf16.mxu0 0
      %1925 = vmatpush1.bf16.msra.mxu0 %v1915
      %1926 = vmatprep.subr.bf16.mxu0 0
      %1927 = vmatpush1.bf16.msra.mxu0 %v1914
      %1928 = vmatprep.subr.bf16.mxu0 0
      %1929 = vmatpush1.bf16.msra.mxu0 %v1913
      %1930 = vmatprep.subr.bf16.mxu0 0
      %1931 = vmatpush1.bf16.msra.mxu0 %v1912
      %1932 = vmatprep.subr.bf16.mxu0 0
      %1933 = vmatpush1.bf16.msra.mxu0 %v1911
      %1934 = vmatprep.subr.bf16.mxu0 0
      %1935 = vmatpush1.bf16.msra.mxu0 %v1910
      %1936 = vmatprep.subr.bf16.mxu0 0
      %1937 = vmatpush1.bf16.msra.mxu0 %v1909
      %1938 = vmatprep.subr.bf16.mxu0 0
      %1939 = vmatpush1.bf16.msra.mxu0 %v1908
      %1940 = vmatprep.subr.bf16.mxu0 0
      %1941 = vmatpush2.bf16.msra.mxu0 0
      %1942 = vmatprep.subr.bf16.mxu0 0
      %1943 = vmatpush2.bf16.msra.mxu0 0
      %1944 = vmatprep.subr.bf16.mxu0 0
      %1945 = vmatpush2.bf16.msra.mxu0 0
      %1946 = vmatprep.subr.bf16.mxu0 0
      %1947 = vmatpush2.bf16.msra.mxu0 0
      %1948 = vmatprep.subr.bf16.mxu0 0
      %1949 = vmatpush2.bf16.msra.mxu0 0
      %1950 = vmatprep.subr.bf16.mxu0 0
      %1951 = vmatpush2.bf16.msra.mxu0 0
      %1952 = vmatprep.subr.bf16.mxu0 0
      %1953 = vmatpush2.bf16.msra.mxu0 0
      %1954 = vmatprep.subr.bf16.mxu0 0
      %1955 = vmatpush2.bf16.msra.mxu0 0
      %1956 = vmatprep.mubr.bf16.mxu0 0
      %1957 = vmatmul.mubr.bf16.gmra.mxu0 %v1867
      %v1958 = vpop.f32.mrf.mxu0
      %v1959 = vadd.f32 0.0, %v1958
      %v1960 = vpop.f32.mrf.mxu0
      %v1961 = vpop.f32.mrf.mxu0
      %v1962 = vadd.f32 0.0, %v1961
      %v1963 = vpop.f32.mrf.mxu0
      %1964 = vmatprep.mubr.bf16.mxu0 0
      %1965 = vmatmul.mubr.bf16.gmra.mxu0 %v1873
      %v1966 = vpop.f32.mrf.mxu0
      %v1967 = vadd.f32 0.0, %v1966
      %v1968 = vpop.f32.mrf.mxu0
      %v1969 = vpop.f32.mrf.mxu0
      %v1970 = vadd.f32 0.0, %v1969
      %v1971 = vpop.f32.mrf.mxu0
      %1972 = vdwg.mxu0
      %v1973 = vadd.f32 %v1844, %v1959
      %v1974 = vadd.f32 %v1845, %v1962
      %v1975 = vadd.f32 %v1846, %v1967
      %v1976 = vadd.f32 %v1847, %v1970
      %v1977 = vld [vmem:[%s1 + $0x380] sm:$0xf]
      %v1978 = vld [vmem:[%s1 + $0x384] sm:$0xf]
      %v1979 = vld [vmem:[%s1 + $0x388] sm:$0xf]
      %v1980 = vld [vmem:[%s1 + $0x38c] sm:$0xf]
      %v1981 = vld [vmem:[%s1 + $0x390] sm:$0xf]
      %v1982 = vld [vmem:[%s1 + $0x394] sm:$0xf]
      %v1983 = vld [vmem:[%s1 + $0x398] sm:$0xf]
      %v1984 = vld [vmem:[%s1 + $0x39c] sm:$0xf]
      %v1985 = vld [vmem:[%s1 + $0x3a0] sm:$0xf]
      %v1986 = vld [vmem:[%s1 + $0x3a4] sm:$0xf]
      %v1987 = vld [vmem:[%s1 + $0x3a8] sm:$0xf]
      %v1988 = vld [vmem:[%s1 + $0x3ac] sm:$0xf]
      %v1989 = vld [vmem:[%s1 + $0x3b0] sm:$0xf]
      %v1990 = vld [vmem:[%s1 + $0x3b4] sm:$0xf]
      %v1991 = vld [vmem:[%s1 + $0x3b8] sm:$0xf]
      %v1992 = vld [vmem:[%s1 + $0x3bc] sm:$0xf]
      %v1993 = vrot.slane %v1487, 2
      %v1994 = vsel %vm719, %v721, %v1993
      %v1995 = vrot.slane %v1608, 2
      %v1996 = vsel %vm719, %v1993, %v1995
      %v2015 = vunpack.c.l.b16 %v1977
      %v2016 = vunpack.c.l.b16 %v1978
      %v2017 = vunpack.c.l.b16 %v1979
      %v2018 = vunpack.c.l.b16 %v1980
      %v2019 = vunpack.c.l.b16 %v1981
      %v2020 = vunpack.c.l.b16 %v1982
      %v2021 = vunpack.c.l.b16 %v1983
      %v2022 = vunpack.c.l.b16 %v1984
      %v2023 = vunpack.c.l.b16 %v1985
      %v2024 = vunpack.c.l.b16 %v1986
      %v2025 = vunpack.c.l.b16 %v1987
      %v2026 = vunpack.c.l.b16 %v1988
      %v2027 = vunpack.c.l.b16 %v1989
      %v2028 = vunpack.c.l.b16 %v1990
      %v2029 = vunpack.c.l.b16 %v1991
      %v2030 = vunpack.c.l.b16 %v1992
      %v2031 = vpack.c.b16 %v2016, %v2015
      %v2032 = vpack.c.b16 %v2018, %v2017
      %v2033 = vpack.c.b16 %v2020, %v2019
      %v2034 = vpack.c.b16 %v2022, %v2021
      %v2035 = vpack.c.b16 %v2024, %v2023
      %v2036 = vpack.c.b16 %v2026, %v2025
      %v2037 = vpack.c.b16 %v2028, %v2027
      %v2038 = vpack.c.b16 %v2030, %v2029
      %2047 = vmatprep.subr.bf16.mxu0 0
      %2048 = vmatpush1.bf16.msra.mxu0 %v2038
      %2049 = vmatprep.subr.bf16.mxu0 0
      %2050 = vmatpush1.bf16.msra.mxu0 %v2037
      %2051 = vmatprep.subr.bf16.mxu0 0
      %2052 = vmatpush1.bf16.msra.mxu0 %v2036
      %2053 = vmatprep.subr.bf16.mxu0 0
      %2054 = vmatpush1.bf16.msra.mxu0 %v2035
      %2055 = vmatprep.subr.bf16.mxu0 0
      %2056 = vmatpush1.bf16.msra.mxu0 %v2034
      %2057 = vmatprep.subr.bf16.mxu0 0
      %2058 = vmatpush1.bf16.msra.mxu0 %v2033
      %2059 = vmatprep.subr.bf16.mxu0 0
      %2060 = vmatpush1.bf16.msra.mxu0 %v2032
      %2061 = vmatprep.subr.bf16.mxu0 0
      %2062 = vmatpush1.bf16.msra.mxu0 %v2031
      %2063 = vmatprep.subr.bf16.mxu0 0
      %2064 = vmatpush2.bf16.msra.mxu0 0
      %2065 = vmatprep.subr.bf16.mxu0 0
      %2066 = vmatpush2.bf16.msra.mxu0 0
      %2067 = vmatprep.subr.bf16.mxu0 0
      %2068 = vmatpush2.bf16.msra.mxu0 0
      %2069 = vmatprep.subr.bf16.mxu0 0
      %2070 = vmatpush2.bf16.msra.mxu0 0
      %2071 = vmatprep.subr.bf16.mxu0 0
      %2072 = vmatpush2.bf16.msra.mxu0 0
      %2073 = vmatprep.subr.bf16.mxu0 0
      %2074 = vmatpush2.bf16.msra.mxu0 0
      %2075 = vmatprep.subr.bf16.mxu0 0
      %2076 = vmatpush2.bf16.msra.mxu0 0
      %2077 = vmatprep.subr.bf16.mxu0 0
      %2078 = vmatpush2.bf16.msra.mxu0 0
      %2079 = vmatprep.mubr.bf16.mxu0 0
      %2080 = vmatmul.mubr.bf16.gmra.mxu0 %v1994
      %v2081 = vpop.f32.mrf.mxu0
      %v2082 = vadd.f32 0.0, %v2081
      %v2083 = vpop.f32.mrf.mxu0
      %v2084 = vpop.f32.mrf.mxu0
      %v2085 = vadd.f32 0.0, %v2084
      %v2086 = vpop.f32.mrf.mxu0
      %2087 = vmatprep.mubr.bf16.mxu0 0
      %2088 = vmatmul.mubr.bf16.gmra.mxu0 %v1996
      %v2089 = vpop.f32.mrf.mxu0
      %v2090 = vadd.f32 0.0, %v2089
      %v2091 = vpop.f32.mrf.mxu0
      %v2092 = vpop.f32.mrf.mxu0
      %v2093 = vadd.f32 0.0, %v2092
      %v2094 = vpop.f32.mrf.mxu0
      %2095 = vdwg.mxu0
      %v2096 = vadd.f32 %v1973, %v2082
      %v2097 = vadd.f32 %v1974, %v2085
      %v2098 = vadd.f32 %v1975, %v2090
      %v2099 = vadd.f32 %v1976, %v2093
      %v2100 = vld [vmem:[%s1 + $0x3c0] sm:$0xf]
      %v2101 = vld [vmem:[%s1 + $0x3c4] sm:$0xf]
      %v2102 = vld [vmem:[%s1 + $0x3c8] sm:$0xf]
      %v2103 = vld [vmem:[%s1 + $0x3cc] sm:$0xf]
      %v2104 = vld [vmem:[%s1 + $0x3d0] sm:$0xf]
      %v2105 = vld [vmem:[%s1 + $0x3d4] sm:$0xf]
      %v2106 = vld [vmem:[%s1 + $0x3d8] sm:$0xf]
      %v2107 = vld [vmem:[%s1 + $0x3dc] sm:$0xf]
      %v2108 = vld [vmem:[%s1 + $0x3e0] sm:$0xf]
      %v2109 = vld [vmem:[%s1 + $0x3e4] sm:$0xf]
      %v2110 = vld [vmem:[%s1 + $0x3e8] sm:$0xf]
      %v2111 = vld [vmem:[%s1 + $0x3ec] sm:$0xf]
      %v2112 = vld [vmem:[%s1 + $0x3f0] sm:$0xf]
      %v2113 = vld [vmem:[%s1 + $0x3f4] sm:$0xf]
      %v2114 = vld [vmem:[%s1 + $0x3f8] sm:$0xf]
      %v2115 = vld [vmem:[%s1 + $0x3fc] sm:$0xf]
      %v2116 = vpack.c.b16 %v1607, %v966
      %v2134 = vunpack.c.l.b16 %v2100
      %v2135 = vunpack.c.l.b16 %v2101
      %v2136 = vunpack.c.l.b16 %v2102
      %v2137 = vunpack.c.l.b16 %v2103
      %v2138 = vunpack.c.l.b16 %v2104
      %v2139 = vunpack.c.l.b16 %v2105
      %v2140 = vunpack.c.l.b16 %v2106
      %v2141 = vunpack.c.l.b16 %v2107
      %v2142 = vunpack.c.l.b16 %v2108
      %v2143 = vunpack.c.l.b16 %v2109
      %v2144 = vunpack.c.l.b16 %v2110
      %v2145 = vunpack.c.l.b16 %v2111
      %v2146 = vunpack.c.l.b16 %v2112
      %v2147 = vunpack.c.l.b16 %v2113
      %v2148 = vunpack.c.l.b16 %v2114
      %v2149 = vunpack.c.l.b16 %v2115
      %v2150 = vpack.c.b16 %v2135, %v2134
      %v2151 = vpack.c.b16 %v2137, %v2136
      %v2152 = vpack.c.b16 %v2139, %v2138
      %v2153 = vpack.c.b16 %v2141, %v2140
      %v2154 = vpack.c.b16 %v2143, %v2142
      %v2155 = vpack.c.b16 %v2145, %v2144
      %v2156 = vpack.c.b16 %v2147, %v2146
      %v2157 = vpack.c.b16 %v2149, %v2148
      %2166 = vmatprep.subr.bf16.mxu0 0
      %2167 = vmatpush1.bf16.msra.mxu0 %v2157
      %2168 = vmatprep.subr.bf16.mxu0 0
      %2169 = vmatpush1.bf16.msra.mxu0 %v2156
      %2170 = vmatprep.subr.bf16.mxu0 0
      %2171 = vmatpush1.bf16.msra.mxu0 %v2155
      %2172 = vmatprep.subr.bf16.mxu0 0
      %2173 = vmatpush1.bf16.msra.mxu0 %v2154
      %2174 = vmatprep.subr.bf16.mxu0 0
      %2175 = vmatpush1.bf16.msra.mxu0 %v2153
      %2176 = vmatprep.subr.bf16.mxu0 0
      %2177 = vmatpush1.bf16.msra.mxu0 %v2152
      %2178 = vmatprep.subr.bf16.mxu0 0
      %2179 = vmatpush1.bf16.msra.mxu0 %v2151
      %2180 = vmatprep.subr.bf16.mxu0 0
      %2181 = vmatpush1.bf16.msra.mxu0 %v2150
      %2182 = vmatprep.subr.bf16.mxu0 0
      %2183 = vmatpush2.bf16.msra.mxu0 0
      %2184 = vmatprep.subr.bf16.mxu0 0
      %2185 = vmatpush2.bf16.msra.mxu0 0
      %2186 = vmatprep.subr.bf16.mxu0 0
      %2187 = vmatpush2.bf16.msra.mxu0 0
      %2188 = vmatprep.subr.bf16.mxu0 0
      %2189 = vmatpush2.bf16.msra.mxu0 0
      %2190 = vmatprep.subr.bf16.mxu0 0
      %2191 = vmatpush2.bf16.msra.mxu0 0
      %2192 = vmatprep.subr.bf16.mxu0 0
      %2193 = vmatpush2.bf16.msra.mxu0 0
      %2194 = vmatprep.subr.bf16.mxu0 0
      %2195 = vmatpush2.bf16.msra.mxu0 0
      %2196 = vmatprep.subr.bf16.mxu0 0
      %2197 = vmatpush2.bf16.msra.mxu0 0
      %2198 = vmatprep.mubr.bf16.mxu0 0
      %2199 = vmatmul.mubr.bf16.gmra.mxu0 %v845
      %v2200 = vpop.f32.mrf.mxu0
      %v2201 = vadd.f32 0.0, %v2200
      %v2202 = vpop.f32.mrf.mxu0
      %v2203 = vpop.f32.mrf.mxu0
      %v2204 = vadd.f32 0.0, %v2203
      %v2205 = vpop.f32.mrf.mxu0
      %2206 = vmatprep.mubr.bf16.mxu0 0
      %2207 = vmatmul.mubr.bf16.gmra.mxu0 %v2116
      %v2208 = vpop.f32.mrf.mxu0
      %v2209 = vadd.f32 0.0, %v2208
      %v2210 = vpop.f32.mrf.mxu0
      %v2211 = vpop.f32.mrf.mxu0
      %v2212 = vadd.f32 0.0, %v2211
      %v2213 = vpop.f32.mrf.mxu0
      %2214 = vdwg.mxu0
      %v2215 = vadd.f32 %v2096, %v2201
      %v2216 = vadd.f32 %v2097, %v2204
      %v2217 = vadd.f32 %v2098, %v2209
      %v2218 = vadd.f32 %v2099, %v2212
      %v2219 = vld [vmem:[%s1 + $0x400] sm:$0xf]
      %v2220 = vld [vmem:[%s1 + $0x404] sm:$0xf]
      %v2221 = vld [vmem:[%s1 + $0x408] sm:$0xf]
      %v2222 = vld [vmem:[%s1 + $0x40c] sm:$0xf]
      %v2223 = vld [vmem:[%s1 + $0x410] sm:$0xf]
      %v2224 = vld [vmem:[%s1 + $0x414] sm:$0xf]
      %v2225 = vld [vmem:[%s1 + $0x418] sm:$0xf]
      %v2226 = vld [vmem:[%s1 + $0x41c] sm:$0xf]
      %v2227 = vld [vmem:[%s1 + $0x420] sm:$0xf]
      %v2228 = vld [vmem:[%s1 + $0x424] sm:$0xf]
      %v2229 = vld [vmem:[%s1 + $0x428] sm:$0xf]
      %v2230 = vld [vmem:[%s1 + $0x42c] sm:$0xf]
      %v2231 = vld [vmem:[%s1 + $0x430] sm:$0xf]
      %v2232 = vld [vmem:[%s1 + $0x434] sm:$0xf]
      %v2233 = vld [vmem:[%s1 + $0x438] sm:$0xf]
      %v2234 = vld [vmem:[%s1 + $0x43c] sm:$0xf]
      %v2236 = vunpack.c.l.b16 %v179
      %v2237 = vpack.c.b16 %v2236, %v2236
      %v2239 = vshll.u32 %v2116, 16
      %v2241 = vrot.slane %v2239, 1
      %v2242 = vsel %vm226, %v982, %v2241
      %v2243 = vshrl.u32 %v2116, 16
      %v2245 = vor.u32 %v2243, %v2241
      %v2247 = vshll.u32 %v2237, 16
      %v2249 = vrot.slane %v2247, 1
      %v2250 = vsel %vm226, %v2245, %v2249
      %v2269 = vunpack.c.l.b16 %v2219
      %v2270 = vunpack.c.l.b16 %v2220
      %v2271 = vunpack.c.l.b16 %v2221
      %v2272 = vunpack.c.l.b16 %v2222
      %v2273 = vunpack.c.l.b16 %v2223
      %v2274 = vunpack.c.l.b16 %v2224
      %v2275 = vunpack.c.l.b16 %v2225
      %v2276 = vunpack.c.l.b16 %v2226
      %v2277 = vunpack.c.l.b16 %v2227
      %v2278 = vunpack.c.l.b16 %v2228
      %v2279 = vunpack.c.l.b16 %v2229
      %v2280 = vunpack.c.l.b16 %v2230
      %v2281 = vunpack.c.l.b16 %v2231
      %v2282 = vunpack.c.l.b16 %v2232
      %v2283 = vunpack.c.l.b16 %v2233
      %v2284 = vunpack.c.l.b16 %v2234
      %v2285 = vpack.c.b16 %v2270, %v2269
      %v2286 = vpack.c.b16 %v2272, %v2271
      %v2287 = vpack.c.b16 %v2274, %v2273
      %v2288 = vpack.c.b16 %v2276, %v2275
      %v2289 = vpack.c.b16 %v2278, %v2277
      %v2290 = vpack.c.b16 %v2280, %v2279
      %v2291 = vpack.c.b16 %v2282, %v2281
      %v2292 = vpack.c.b16 %v2284, %v2283
      %2301 = vmatprep.subr.bf16.mxu0 0
      %2302 = vmatpush1.bf16.msra.mxu0 %v2292
      %2303 = vmatprep.subr.bf16.mxu0 0
      %2304 = vmatpush1.bf16.msra.mxu0 %v2291
      %2305 = vmatprep.subr.bf16.mxu0 0
      %2306 = vmatpush1.bf16.msra.mxu0 %v2290
      %2307 = vmatprep.subr.bf16.mxu0 0
      %2308 = vmatpush1.bf16.msra.mxu0 %v2289
      %2309 = vmatprep.subr.bf16.mxu0 0
      %2310 = vmatpush1.bf16.msra.mxu0 %v2288
      %2311 = vmatprep.subr.bf16.mxu0 0
      %2312 = vmatpush1.bf16.msra.mxu0 %v2287
      %2313 = vmatprep.subr.bf16.mxu0 0
      %2314 = vmatpush1.bf16.msra.mxu0 %v2286
      %2315 = vmatprep.subr.bf16.mxu0 0
      %2316 = vmatpush1.bf16.msra.mxu0 %v2285
      %2317 = vmatprep.subr.bf16.mxu0 0
      %2318 = vmatpush2.bf16.msra.mxu0 0
      %2319 = vmatprep.subr.bf16.mxu0 0
      %2320 = vmatpush2.bf16.msra.mxu0 0
      %2321 = vmatprep.subr.bf16.mxu0 0
      %2322 = vmatpush2.bf16.msra.mxu0 0
      %2323 = vmatprep.subr.bf16.mxu0 0
      %2324 = vmatpush2.bf16.msra.mxu0 0
      %2325 = vmatprep.subr.bf16.mxu0 0
      %2326 = vmatpush2.bf16.msra.mxu0 0
      %2327 = vmatprep.subr.bf16.mxu0 0
      %2328 = vmatpush2.bf16.msra.mxu0 0
      %2329 = vmatprep.subr.bf16.mxu0 0
      %2330 = vmatpush2.bf16.msra.mxu0 0
      %2331 = vmatprep.subr.bf16.mxu0 0
      %2332 = vmatpush2.bf16.msra.mxu0 0
      %2333 = vmatprep.mubr.bf16.mxu0 0
      %2334 = vmatmul.mubr.bf16.gmra.mxu0 %v2242
      %v2335 = vpop.f32.mrf.mxu0
      %v2336 = vadd.f32 0.0, %v2335
      %v2337 = vpop.f32.mrf.mxu0
      %v2338 = vpop.f32.mrf.mxu0
      %v2339 = vadd.f32 0.0, %v2338
      %v2340 = vpop.f32.mrf.mxu0
      %2341 = vmatprep.mubr.bf16.mxu0 0
      %2342 = vmatmul.mubr.bf16.gmra.mxu0 %v2250
      %v2343 = vpop.f32.mrf.mxu0
      %v2344 = vadd.f32 0.0, %v2343
      %v2345 = vpop.f32.mrf.mxu0
      %v2346 = vpop.f32.mrf.mxu0
      %v2347 = vadd.f32 0.0, %v2346
      %v2348 = vpop.f32.mrf.mxu0
      %2349 = vdwg.mxu0
      %v2350 = vadd.f32 %v2215, %v2336
      %v2351 = vadd.f32 %v2216, %v2339
      %v2352 = vadd.f32 %v2217, %v2344
      %v2353 = vadd.f32 %v2218, %v2347
      %v2354 = vld [vmem:[%s1 + $0x440] sm:$0xf]
      %v2355 = vld [vmem:[%s1 + $0x444] sm:$0xf]
      %v2356 = vld [vmem:[%s1 + $0x448] sm:$0xf]
      %v2357 = vld [vmem:[%s1 + $0x44c] sm:$0xf]
      %v2358 = vld [vmem:[%s1 + $0x450] sm:$0xf]
      %v2359 = vld [vmem:[%s1 + $0x454] sm:$0xf]
      %v2360 = vld [vmem:[%s1 + $0x458] sm:$0xf]
      %v2361 = vld [vmem:[%s1 + $0x45c] sm:$0xf]
      %v2362 = vld [vmem:[%s1 + $0x460] sm:$0xf]
      %v2363 = vld [vmem:[%s1 + $0x464] sm:$0xf]
      %v2364 = vld [vmem:[%s1 + $0x468] sm:$0xf]
      %v2365 = vld [vmem:[%s1 + $0x46c] sm:$0xf]
      %v2366 = vld [vmem:[%s1 + $0x470] sm:$0xf]
      %v2367 = vld [vmem:[%s1 + $0x474] sm:$0xf]
      %v2368 = vld [vmem:[%s1 + $0x478] sm:$0xf]
      %v2369 = vld [vmem:[%s1 + $0x47c] sm:$0xf]
      %v2370 = vrot.slane %v2116, 1
      %v2371 = vsel %vm461, %v1108, %v2370
      %v2372 = vrot.slane %v2237, 1
      %v2373 = vsel %vm461, %v2370, %v2372
      %v2392 = vunpack.c.l.b16 %v2354
      %v2393 = vunpack.c.l.b16 %v2355
      %v2394 = vunpack.c.l.b16 %v2356
      %v2395 = vunpack.c.l.b16 %v2357
      %v2396 = vunpack.c.l.b16 %v2358
      %v2397 = vunpack.c.l.b16 %v2359
      %v2398 = vunpack.c.l.b16 %v2360
      %v2399 = vunpack.c.l.b16 %v2361
      %v2400 = vunpack.c.l.b16 %v2362
      %v2401 = vunpack.c.l.b16 %v2363
      %v2402 = vunpack.c.l.b16 %v2364
      %v2403 = vunpack.c.l.b16 %v2365
      %v2404 = vunpack.c.l.b16 %v2366
      %v2405 = vunpack.c.l.b16 %v2367
      %v2406 = vunpack.c.l.b16 %v2368
      %v2407 = vunpack.c.l.b16 %v2369
      %v2408 = vpack.c.b16 %v2393, %v2392
      %v2409 = vpack.c.b16 %v2395, %v2394
      %v2410 = vpack.c.b16 %v2397, %v2396
      %v2411 = vpack.c.b16 %v2399, %v2398
      %v2412 = vpack.c.b16 %v2401, %v2400
      %v2413 = vpack.c.b16 %v2403, %v2402
      %v2414 = vpack.c.b16 %v2405, %v2404
      %v2415 = vpack.c.b16 %v2407, %v2406
      %2424 = vmatprep.subr.bf16.mxu0 0
      %2425 = vmatpush1.bf16.msra.mxu0 %v2415
      %2426 = vmatprep.subr.bf16.mxu0 0
      %2427 = vmatpush1.bf16.msra.mxu0 %v2414
      %2428 = vmatprep.subr.bf16.mxu0 0
      %2429 = vmatpush1.bf16.msra.mxu0 %v2413
      %2430 = vmatprep.subr.bf16.mxu0 0
      %2431 = vmatpush1.bf16.msra.mxu0 %v2412
      %2432 = vmatprep.subr.bf16.mxu0 0
      %2433 = vmatpush1.bf16.msra.mxu0 %v2411
      %2434 = vmatprep.subr.bf16.mxu0 0
      %2435 = vmatpush1.bf16.msra.mxu0 %v2410
      %2436 = vmatprep.subr.bf16.mxu0 0
      %2437 = vmatpush1.bf16.msra.mxu0 %v2409
      %2438 = vmatprep.subr.bf16.mxu0 0
      %2439 = vmatpush1.bf16.msra.mxu0 %v2408
      %2440 = vmatprep.subr.bf16.mxu0 0
      %2441 = vmatpush2.bf16.msra.mxu0 0
      %2442 = vmatprep.subr.bf16.mxu0 0
      %2443 = vmatpush2.bf16.msra.mxu0 0
      %2444 = vmatprep.subr.bf16.mxu0 0
      %2445 = vmatpush2.bf16.msra.mxu0 0
      %2446 = vmatprep.subr.bf16.mxu0 0
      %2447 = vmatpush2.bf16.msra.mxu0 0
      %2448 = vmatprep.subr.bf16.mxu0 0
      %2449 = vmatpush2.bf16.msra.mxu0 0
      %2450 = vmatprep.subr.bf16.mxu0 0
      %2451 = vmatpush2.bf16.msra.mxu0 0
      %2452 = vmatprep.subr.bf16.mxu0 0
      %2453 = vmatpush2.bf16.msra.mxu0 0
      %2454 = vmatprep.subr.bf16.mxu0 0
      %2455 = vmatpush2.bf16.msra.mxu0 0
      %2456 = vmatprep.mubr.bf16.mxu0 0
      %2457 = vmatmul.mubr.bf16.gmra.mxu0 %v2371
      %v2458 = vpop.f32.mrf.mxu0
      %v2459 = vadd.f32 0.0, %v2458
      %v2460 = vpop.f32.mrf.mxu0
      %v2461 = vpop.f32.mrf.mxu0
      %v2462 = vadd.f32 0.0, %v2461
      %v2463 = vpop.f32.mrf.mxu0
      %2464 = vmatprep.mubr.bf16.mxu0 0
      %2465 = vmatmul.mubr.bf16.gmra.mxu0 %v2373
      %v2466 = vpop.f32.mrf.mxu0
      %v2467 = vadd.f32 0.0, %v2466
      %v2468 = vpop.f32.mrf.mxu0
      %v2469 = vpop.f32.mrf.mxu0
      %v2470 = vadd.f32 0.0, %v2469
      %v2471 = vpop.f32.mrf.mxu0
      %2472 = vdwg.mxu0
      %v2473 = vadd.f32 %v2350, %v2459
      %v2474 = vadd.f32 %v2351, %v2462
      %v2475 = vadd.f32 %v2352, %v2467
      %v2476 = vadd.f32 %v2353, %v2470
      %v2477 = vld [vmem:[%s1 + $0x480] sm:$0xf]
      %v2478 = vld [vmem:[%s1 + $0x484] sm:$0xf]
      %v2479 = vld [vmem:[%s1 + $0x488] sm:$0xf]
      %v2480 = vld [vmem:[%s1 + $0x48c] sm:$0xf]
      %v2481 = vld [vmem:[%s1 + $0x490] sm:$0xf]
      %v2482 = vld [vmem:[%s1 + $0x494] sm:$0xf]
      %v2483 = vld [vmem:[%s1 + $0x498] sm:$0xf]
      %v2484 = vld [vmem:[%s1 + $0x49c] sm:$0xf]
      %v2485 = vld [vmem:[%s1 + $0x4a0] sm:$0xf]
      %v2486 = vld [vmem:[%s1 + $0x4a4] sm:$0xf]
      %v2487 = vld [vmem:[%s1 + $0x4a8] sm:$0xf]
      %v2488 = vld [vmem:[%s1 + $0x4ac] sm:$0xf]
      %v2489 = vld [vmem:[%s1 + $0x4b0] sm:$0xf]
      %v2490 = vld [vmem:[%s1 + $0x4b4] sm:$0xf]
      %v2491 = vld [vmem:[%s1 + $0x4b8] sm:$0xf]
      %v2492 = vld [vmem:[%s1 + $0x4bc] sm:$0xf]
      %v2493 = vrot.slane %v2243, 1
      %v2494 = vrot.slane %v2239, 2
      %v2495 = vor.u32 %v2493, %v2494
      %v2496 = vsel %vm586, %v1236, %v2495
      %v2497 = vshrl.u32 %v2237, 16
      %v2499 = vrot.slane %v2497, 1
      %v2500 = vrot.slane %v2247, 2
      %v2501 = vor.u32 %v2499, %v2500
      %v2502 = vsel %vm586, %v2495, %v2501
      %v2521 = vunpack.c.l.b16 %v2477
      %v2522 = vunpack.c.l.b16 %v2478
      %v2523 = vunpack.c.l.b16 %v2479
      %v2524 = vunpack.c.l.b16 %v2480
      %v2525 = vunpack.c.l.b16 %v2481
      %v2526 = vunpack.c.l.b16 %v2482
      %v2527 = vunpack.c.l.b16 %v2483
      %v2528 = vunpack.c.l.b16 %v2484
      %v2529 = vunpack.c.l.b16 %v2485
      %v2530 = vunpack.c.l.b16 %v2486
      %v2531 = vunpack.c.l.b16 %v2487
      %v2532 = vunpack.c.l.b16 %v2488
      %v2533 = vunpack.c.l.b16 %v2489
      %v2534 = vunpack.c.l.b16 %v2490
      %v2535 = vunpack.c.l.b16 %v2491
      %v2536 = vunpack.c.l.b16 %v2492
      %v2537 = vpack.c.b16 %v2522, %v2521
      %v2538 = vpack.c.b16 %v2524, %v2523
      %v2539 = vpack.c.b16 %v2526, %v2525
      %v2540 = vpack.c.b16 %v2528, %v2527
      %v2541 = vpack.c.b16 %v2530, %v2529
      %v2542 = vpack.c.b16 %v2532, %v2531
      %v2543 = vpack.c.b16 %v2534, %v2533
      %v2544 = vpack.c.b16 %v2536, %v2535
      %2553 = vmatprep.subr.bf16.mxu0 0
      %2554 = vmatpush1.bf16.msra.mxu0 %v2544
      %2555 = vmatprep.subr.bf16.mxu0 0
      %2556 = vmatpush1.bf16.msra.mxu0 %v2543
      %2557 = vmatprep.subr.bf16.mxu0 0
      %2558 = vmatpush1.bf16.msra.mxu0 %v2542
      %2559 = vmatprep.subr.bf16.mxu0 0
      %2560 = vmatpush1.bf16.msra.mxu0 %v2541
      %2561 = vmatprep.subr.bf16.mxu0 0
      %2562 = vmatpush1.bf16.msra.mxu0 %v2540
      %2563 = vmatprep.subr.bf16.mxu0 0
      %2564 = vmatpush1.bf16.msra.mxu0 %v2539
      %2565 = vmatprep.subr.bf16.mxu0 0
      %2566 = vmatpush1.bf16.msra.mxu0 %v2538
      %2567 = vmatprep.subr.bf16.mxu0 0
      %2568 = vmatpush1.bf16.msra.mxu0 %v2537
      %2569 = vmatprep.subr.bf16.mxu0 0
      %2570 = vmatpush2.bf16.msra.mxu0 0
      %2571 = vmatprep.subr.bf16.mxu0 0
      %2572 = vmatpush2.bf16.msra.mxu0 0
      %2573 = vmatprep.subr.bf16.mxu0 0
      %2574 = vmatpush2.bf16.msra.mxu0 0
      %2575 = vmatprep.subr.bf16.mxu0 0
      %2576 = vmatpush2.bf16.msra.mxu0 0
      %2577 = vmatprep.subr.bf16.mxu0 0
      %2578 = vmatpush2.bf16.msra.mxu0 0
      %2579 = vmatprep.subr.bf16.mxu0 0
      %2580 = vmatpush2.bf16.msra.mxu0 0
      %2581 = vmatprep.subr.bf16.mxu0 0
      %2582 = vmatpush2.bf16.msra.mxu0 0
      %2583 = vmatprep.subr.bf16.mxu0 0
      %2584 = vmatpush2.bf16.msra.mxu0 0
      %2585 = vmatprep.mubr.bf16.mxu0 0
      %2586 = vmatmul.mubr.bf16.gmra.mxu0 %v2496
      %v2587 = vpop.f32.mrf.mxu0
      %v2588 = vadd.f32 0.0, %v2587
      %v2589 = vpop.f32.mrf.mxu0
      %v2590 = vpop.f32.mrf.mxu0
      %v2591 = vadd.f32 0.0, %v2590
      %v2592 = vpop.f32.mrf.mxu0
      %2593 = vmatprep.mubr.bf16.mxu0 0
      %2594 = vmatmul.mubr.bf16.gmra.mxu0 %v2502
      %v2595 = vpop.f32.mrf.mxu0
      %v2596 = vadd.f32 0.0, %v2595
      %v2597 = vpop.f32.mrf.mxu0
      %v2598 = vpop.f32.mrf.mxu0
      %v2599 = vadd.f32 0.0, %v2598
      %v2600 = vpop.f32.mrf.mxu0
      %2601 = vdwg.mxu0
      %v2602 = vadd.f32 %v2473, %v2588
      %v2603 = vadd.f32 %v2474, %v2591
      %v2604 = vadd.f32 %v2475, %v2596
      %v2605 = vadd.f32 %v2476, %v2599
      %v2606 = vld [vmem:[%s1 + $0x4c0] sm:$0xf]
      %v2607 = vld [vmem:[%s1 + $0x4c4] sm:$0xf]
      %v2608 = vld [vmem:[%s1 + $0x4c8] sm:$0xf]
      %v2609 = vld [vmem:[%s1 + $0x4cc] sm:$0xf]
      %v2610 = vld [vmem:[%s1 + $0x4d0] sm:$0xf]
      %v2611 = vld [vmem:[%s1 + $0x4d4] sm:$0xf]
      %v2612 = vld [vmem:[%s1 + $0x4d8] sm:$0xf]
      %v2613 = vld [vmem:[%s1 + $0x4dc] sm:$0xf]
      %v2614 = vld [vmem:[%s1 + $0x4e0] sm:$0xf]
      %v2615 = vld [vmem:[%s1 + $0x4e4] sm:$0xf]
      %v2616 = vld [vmem:[%s1 + $0x4e8] sm:$0xf]
      %v2617 = vld [vmem:[%s1 + $0x4ec] sm:$0xf]
      %v2618 = vld [vmem:[%s1 + $0x4f0] sm:$0xf]
      %v2619 = vld [vmem:[%s1 + $0x4f4] sm:$0xf]
      %v2620 = vld [vmem:[%s1 + $0x4f8] sm:$0xf]
      %v2621 = vld [vmem:[%s1 + $0x4fc] sm:$0xf]
      %v2622 = vrot.slane %v2116, 2
      %v2623 = vsel %vm719, %v1364, %v2622
      %v2624 = vrot.slane %v2237, 2
      %v2625 = vsel %vm719, %v2622, %v2624
      %v2644 = vunpack.c.l.b16 %v2606
      %v2645 = vunpack.c.l.b16 %v2607
      %v2646 = vunpack.c.l.b16 %v2608
      %v2647 = vunpack.c.l.b16 %v2609
      %v2648 = vunpack.c.l.b16 %v2610
      %v2649 = vunpack.c.l.b16 %v2611
      %v2650 = vunpack.c.l.b16 %v2612
      %v2651 = vunpack.c.l.b16 %v2613
      %v2652 = vunpack.c.l.b16 %v2614
      %v2653 = vunpack.c.l.b16 %v2615
      %v2654 = vunpack.c.l.b16 %v2616
      %v2655 = vunpack.c.l.b16 %v2617
      %v2656 = vunpack.c.l.b16 %v2618
      %v2657 = vunpack.c.l.b16 %v2619
      %v2658 = vunpack.c.l.b16 %v2620
      %v2659 = vunpack.c.l.b16 %v2621
      %v2660 = vpack.c.b16 %v2645, %v2644
      %v2661 = vpack.c.b16 %v2647, %v2646
      %v2662 = vpack.c.b16 %v2649, %v2648
      %v2663 = vpack.c.b16 %v2651, %v2650
      %v2664 = vpack.c.b16 %v2653, %v2652
      %v2665 = vpack.c.b16 %v2655, %v2654
      %v2666 = vpack.c.b16 %v2657, %v2656
      %v2667 = vpack.c.b16 %v2659, %v2658
      %2676 = vmatprep.subr.bf16.mxu0 0
      %2677 = vmatpush1.bf16.msra.mxu0 %v2667
      %2678 = vmatprep.subr.bf16.mxu0 0
      %2679 = vmatpush1.bf16.msra.mxu0 %v2666
      %2680 = vmatprep.subr.bf16.mxu0 0
      %2681 = vmatpush1.bf16.msra.mxu0 %v2665
      %2682 = vmatprep.subr.bf16.mxu0 0
      %2683 = vmatpush1.bf16.msra.mxu0 %v2664
      %2684 = vmatprep.subr.bf16.mxu0 0
      %2685 = vmatpush1.bf16.msra.mxu0 %v2663
      %2686 = vmatprep.subr.bf16.mxu0 0
      %2687 = vmatpush1.bf16.msra.mxu0 %v2662
      %2688 = vmatprep.subr.bf16.mxu0 0
      %2689 = vmatpush1.bf16.msra.mxu0 %v2661
      %2690 = vmatprep.subr.bf16.mxu0 0
      %2691 = vmatpush1.bf16.msra.mxu0 %v2660
      %2692 = vmatprep.subr.bf16.mxu0 0
      %2693 = vmatpush2.bf16.msra.mxu0 0
      %2694 = vmatprep.subr.bf16.mxu0 0
      %2695 = vmatpush2.bf16.msra.mxu0 0
      %2696 = vmatprep.subr.bf16.mxu0 0
      %2697 = vmatpush2.bf16.msra.mxu0 0
      %2698 = vmatprep.subr.bf16.mxu0 0
      %2699 = vmatpush2.bf16.msra.mxu0 0
      %2700 = vmatprep.subr.bf16.mxu0 0
      %2701 = vmatpush2.bf16.msra.mxu0 0
      %2702 = vmatprep.subr.bf16.mxu0 0
      %2703 = vmatpush2.bf16.msra.mxu0 0
      %2704 = vmatprep.subr.bf16.mxu0 0
      %2705 = vmatpush2.bf16.msra.mxu0 0
      %2706 = vmatprep.subr.bf16.mxu0 0
      %2707 = vmatpush2.bf16.msra.mxu0 0
      %2708 = vmatprep.mubr.bf16.mxu0 0
      %2709 = vmatmul.mubr.bf16.gmra.mxu0 %v2623
      %v2710 = vpop.f32.mrf.mxu0
      %v2711 = vadd.f32 0.0, %v2710
      %v2712 = vpop.f32.mrf.mxu0
      %v2713 = vpop.f32.mrf.mxu0
      %v2714 = vadd.f32 0.0, %v2713
      %v2715 = vpop.f32.mrf.mxu0
      %2716 = vmatprep.mubr.bf16.mxu0 0
      %2717 = vmatmul.mubr.bf16.gmra.mxu0 %v2625
      %v2718 = vpop.f32.mrf.mxu0
      %v2719 = vadd.f32 0.0, %v2718
      %v2720 = vpop.f32.mrf.mxu0
      %v2721 = vpop.f32.mrf.mxu0
      %v2722 = vadd.f32 0.0, %v2721
      %v2723 = vpop.f32.mrf.mxu0
      %2724 = vdwg.mxu0
      %v2725 = vadd.f32 %v2602, %v2711
      %v2726 = vadd.f32 %v2603, %v2714
      %v2727 = vadd.f32 %v2604, %v2719
      %v2728 = vadd.f32 %v2605, %v2722
      %v2729 = vld [vmem:[%s1 + $0x500] sm:$0xf]
      %v2730 = vld [vmem:[%s1 + $0x504] sm:$0xf]
      %v2731 = vld [vmem:[%s1 + $0x508] sm:$0xf]
      %v2732 = vld [vmem:[%s1 + $0x50c] sm:$0xf]
      %v2733 = vld [vmem:[%s1 + $0x510] sm:$0xf]
      %v2734 = vld [vmem:[%s1 + $0x514] sm:$0xf]
      %v2735 = vld [vmem:[%s1 + $0x518] sm:$0xf]
      %v2736 = vld [vmem:[%s1 + $0x51c] sm:$0xf]
      %v2737 = vld [vmem:[%s1 + $0x520] sm:$0xf]
      %v2738 = vld [vmem:[%s1 + $0x524] sm:$0xf]
      %v2739 = vld [vmem:[%s1 + $0x528] sm:$0xf]
      %v2740 = vld [vmem:[%s1 + $0x52c] sm:$0xf]
      %v2741 = vld [vmem:[%s1 + $0x530] sm:$0xf]
      %v2742 = vld [vmem:[%s1 + $0x534] sm:$0xf]
      %v2743 = vld [vmem:[%s1 + $0x538] sm:$0xf]
      %v2744 = vld [vmem:[%s1 + $0x53c] sm:$0xf]
      %v2745 = vpack.c.b16 %v2236, %v1607
      %v2763 = vunpack.c.l.b16 %v2729
      %v2764 = vunpack.c.l.b16 %v2730
      %v2765 = vunpack.c.l.b16 %v2731
      %v2766 = vunpack.c.l.b16 %v2732
      %v2767 = vunpack.c.l.b16 %v2733
      %v2768 = vunpack.c.l.b16 %v2734
      %v2769 = vunpack.c.l.b16 %v2735
      %v2770 = vunpack.c.l.b16 %v2736
      %v2771 = vunpack.c.l.b16 %v2737
      %v2772 = vunpack.c.l.b16 %v2738
      %v2773 = vunpack.c.l.b16 %v2739
      %v2774 = vunpack.c.l.b16 %v2740
      %v2775 = vunpack.c.l.b16 %v2741
      %v2776 = vunpack.c.l.b16 %v2742
      %v2777 = vunpack.c.l.b16 %v2743
      %v2778 = vunpack.c.l.b16 %v2744
      %v2779 = vpack.c.b16 %v2764, %v2763
      %v2780 = vpack.c.b16 %v2766, %v2765
      %v2781 = vpack.c.b16 %v2768, %v2767
      %v2782 = vpack.c.b16 %v2770, %v2769
      %v2783 = vpack.c.b16 %v2772, %v2771
      %v2784 = vpack.c.b16 %v2774, %v2773
      %v2785 = vpack.c.b16 %v2776, %v2775
      %v2786 = vpack.c.b16 %v2778, %v2777
      %2795 = vmatprep.subr.bf16.mxu0 0
      %2796 = vmatpush1.bf16.msra.mxu0 %v2786
      %2797 = vmatprep.subr.bf16.mxu0 0
      %2798 = vmatpush1.bf16.msra.mxu0 %v2785
      %2799 = vmatprep.subr.bf16.mxu0 0
      %2800 = vmatpush1.bf16.msra.mxu0 %v2784
      %2801 = vmatprep.subr.bf16.mxu0 0
      %2802 = vmatpush1.bf16.msra.mxu0 %v2783
      %2803 = vmatprep.subr.bf16.mxu0 0
      %2804 = vmatpush1.bf16.msra.mxu0 %v2782
      %2805 = vmatprep.subr.bf16.mxu0 0
      %2806 = vmatpush1.bf16.msra.mxu0 %v2781
      %2807 = vmatprep.subr.bf16.mxu0 0
      %2808 = vmatpush1.bf16.msra.mxu0 %v2780
      %2809 = vmatprep.subr.bf16.mxu0 0
      %2810 = vmatpush1.bf16.msra.mxu0 %v2779
      %2811 = vmatprep.subr.bf16.mxu0 0
      %2812 = vmatpush2.bf16.msra.mxu0 0
      %2813 = vmatprep.subr.bf16.mxu0 0
      %2814 = vmatpush2.bf16.msra.mxu0 0
      %2815 = vmatprep.subr.bf16.mxu0 0
      %2816 = vmatpush2.bf16.msra.mxu0 0
      %2817 = vmatprep.subr.bf16.mxu0 0
      %2818 = vmatpush2.bf16.msra.mxu0 0
      %2819 = vmatprep.subr.bf16.mxu0 0
      %2820 = vmatpush2.bf16.msra.mxu0 0
      %2821 = vmatprep.subr.bf16.mxu0 0
      %2822 = vmatpush2.bf16.msra.mxu0 0
      %2823 = vmatprep.subr.bf16.mxu0 0
      %2824 = vmatpush2.bf16.msra.mxu0 0
      %2825 = vmatprep.subr.bf16.mxu0 0
      %2826 = vmatpush2.bf16.msra.mxu0 0
      %2827 = vmatprep.mubr.bf16.mxu0 0
      %2828 = vmatmul.mubr.bf16.gmra.mxu0 %v1487
      %v2829 = vpop.f32.mrf.mxu0
      %v2830 = vadd.f32 0.0, %v2829
      %v2831 = vpop.f32.mrf.mxu0
      %v2832 = vpop.f32.mrf.mxu0
      %v2833 = vadd.f32 0.0, %v2832
      %v2834 = vpop.f32.mrf.mxu0
      %2835 = vmatprep.mubr.bf16.mxu0 0
      %2836 = vmatmul.mubr.bf16.gmra.mxu0 %v2745
      %v2837 = vpop.f32.mrf.mxu0
      %v2838 = vadd.f32 0.0, %v2837
      %v2839 = vpop.f32.mrf.mxu0
      %v2840 = vpop.f32.mrf.mxu0
      %v2841 = vadd.f32 0.0, %v2840
      %v2842 = vpop.f32.mrf.mxu0
      %2843 = vdwg.mxu0
      %v2844 = vadd.f32 %v2725, %v2830
      %v2845 = vadd.f32 %v2726, %v2833
      %v2846 = vadd.f32 %v2727, %v2838
      %v2847 = vadd.f32 %v2728, %v2841
      %v2848 = vld [vmem:[%s1 + $0x540] sm:$0xf]
      %v2849 = vld [vmem:[%s1 + $0x544] sm:$0xf]
      %v2850 = vld [vmem:[%s1 + $0x548] sm:$0xf]
      %v2851 = vld [vmem:[%s1 + $0x54c] sm:$0xf]
      %v2852 = vld [vmem:[%s1 + $0x550] sm:$0xf]
      %v2853 = vld [vmem:[%s1 + $0x554] sm:$0xf]
      %v2854 = vld [vmem:[%s1 + $0x558] sm:$0xf]
      %v2855 = vld [vmem:[%s1 + $0x55c] sm:$0xf]
      %v2856 = vld [vmem:[%s1 + $0x560] sm:$0xf]
      %v2857 = vld [vmem:[%s1 + $0x564] sm:$0xf]
      %v2858 = vld [vmem:[%s1 + $0x568] sm:$0xf]
      %v2859 = vld [vmem:[%s1 + $0x56c] sm:$0xf]
      %v2860 = vld [vmem:[%s1 + $0x570] sm:$0xf]
      %v2861 = vld [vmem:[%s1 + $0x574] sm:$0xf]
      %v2862 = vld [vmem:[%s1 + $0x578] sm:$0xf]
      %v2863 = vld [vmem:[%s1 + $0x57c] sm:$0xf]
      %v2865 = vunpack.c.l.b16 %v180
      %v2866 = vpack.c.b16 %v2865, %v2865
      %v2868 = vshll.u32 %v2745, 16
      %v2870 = vrot.slane %v2868, 1
      %v2871 = vsel %vm226, %v1616, %v2870
      %v2872 = vshrl.u32 %v2745, 16
      %v2874 = vor.u32 %v2872, %v2870
      %v2876 = vshll.u32 %v2866, 16
      %v2878 = vrot.slane %v2876, 1
      %v2879 = vsel %vm226, %v2874, %v2878
      %v2898 = vunpack.c.l.b16 %v2848
      %v2899 = vunpack.c.l.b16 %v2849
      %v2900 = vunpack.c.l.b16 %v2850
      %v2901 = vunpack.c.l.b16 %v2851
      %v2902 = vunpack.c.l.b16 %v2852
      %v2903 = vunpack.c.l.b16 %v2853
      %v2904 = vunpack.c.l.b16 %v2854
      %v2905 = vunpack.c.l.b16 %v2855
      %v2906 = vunpack.c.l.b16 %v2856
      %v2907 = vunpack.c.l.b16 %v2857
      %v2908 = vunpack.c.l.b16 %v2858
      %v2909 = vunpack.c.l.b16 %v2859
      %v2910 = vunpack.c.l.b16 %v2860
      %v2911 = vunpack.c.l.b16 %v2861
      %v2912 = vunpack.c.l.b16 %v2862
      %v2913 = vunpack.c.l.b16 %v2863
      %v2914 = vpack.c.b16 %v2899, %v2898
      %v2915 = vpack.c.b16 %v2901, %v2900
      %v2916 = vpack.c.b16 %v2903, %v2902
      %v2917 = vpack.c.b16 %v2905, %v2904
      %v2918 = vpack.c.b16 %v2907, %v2906
      %v2919 = vpack.c.b16 %v2909, %v2908
      %v2920 = vpack.c.b16 %v2911, %v2910
      %v2921 = vpack.c.b16 %v2913, %v2912
      %2930 = vmatprep.subr.bf16.mxu0 0
      %2931 = vmatpush1.bf16.msra.mxu0 %v2921
      %2932 = vmatprep.subr.bf16.mxu0 0
      %2933 = vmatpush1.bf16.msra.mxu0 %v2920
      %2934 = vmatprep.subr.bf16.mxu0 0
      %2935 = vmatpush1.bf16.msra.mxu0 %v2919
      %2936 = vmatprep.subr.bf16.mxu0 0
      %2937 = vmatpush1.bf16.msra.mxu0 %v2918
      %2938 = vmatprep.subr.bf16.mxu0 0
      %2939 = vmatpush1.bf16.msra.mxu0 %v2917
      %2940 = vmatprep.subr.bf16.mxu0 0
      %2941 = vmatpush1.bf16.msra.mxu0 %v2916
      %2942 = vmatprep.subr.bf16.mxu0 0
      %2943 = vmatpush1.bf16.msra.mxu0 %v2915
      %2944 = vmatprep.subr.bf16.mxu0 0
      %2945 = vmatpush1.bf16.msra.mxu0 %v2914
      %2946 = vmatprep.subr.bf16.mxu0 0
      %2947 = vmatpush2.bf16.msra.mxu0 0
      %2948 = vmatprep.subr.bf16.mxu0 0
      %2949 = vmatpush2.bf16.msra.mxu0 0
      %2950 = vmatprep.subr.bf16.mxu0 0
      %2951 = vmatpush2.bf16.msra.mxu0 0
      %2952 = vmatprep.subr.bf16.mxu0 0
      %2953 = vmatpush2.bf16.msra.mxu0 0
      %2954 = vmatprep.subr.bf16.mxu0 0
      %2955 = vmatpush2.bf16.msra.mxu0 0
      %2956 = vmatprep.subr.bf16.mxu0 0
      %2957 = vmatpush2.bf16.msra.mxu0 0
      %2958 = vmatprep.subr.bf16.mxu0 0
      %2959 = vmatpush2.bf16.msra.mxu0 0
      %2960 = vmatprep.subr.bf16.mxu0 0
      %2961 = vmatpush2.bf16.msra.mxu0 0
      %2962 = vmatprep.mubr.bf16.mxu0 0
      %2963 = vmatmul.mubr.bf16.gmra.mxu0 %v2871
      %v2964 = vpop.f32.mrf.mxu0
      %v2965 = vadd.f32 0.0, %v2964
      %v2966 = vpop.f32.mrf.mxu0
      %v2967 = vpop.f32.mrf.mxu0
      %v2968 = vadd.f32 0.0, %v2967
      %v2969 = vpop.f32.mrf.mxu0
      %2970 = vmatprep.mubr.bf16.mxu0 0
      %2971 = vmatmul.mubr.bf16.gmra.mxu0 %v2879
      %v2972 = vpop.f32.mrf.mxu0
      %v2973 = vadd.f32 0.0, %v2972
      %v2974 = vpop.f32.mrf.mxu0
      %v2975 = vpop.f32.mrf.mxu0
      %v2976 = vadd.f32 0.0, %v2975
      %v2977 = vpop.f32.mrf.mxu0
      %2978 = vdwg.mxu0
      %v2979 = vadd.f32 %v2844, %v2965
      %v2980 = vadd.f32 %v2845, %v2968
      %v2981 = vadd.f32 %v2846, %v2973
      %v2982 = vadd.f32 %v2847, %v2976
      %v2983 = vld [vmem:[%s1 + $0x580] sm:$0xf]
      %v2984 = vld [vmem:[%s1 + $0x584] sm:$0xf]
      %v2985 = vld [vmem:[%s1 + $0x588] sm:$0xf]
      %v2986 = vld [vmem:[%s1 + $0x58c] sm:$0xf]
      %v2987 = vld [vmem:[%s1 + $0x590] sm:$0xf]
      %v2988 = vld [vmem:[%s1 + $0x594] sm:$0xf]
      %v2989 = vld [vmem:[%s1 + $0x598] sm:$0xf]
      %v2990 = vld [vmem:[%s1 + $0x59c] sm:$0xf]
      %v2991 = vld [vmem:[%s1 + $0x5a0] sm:$0xf]
      %v2992 = vld [vmem:[%s1 + $0x5a4] sm:$0xf]
      %v2993 = vld [vmem:[%s1 + $0x5a8] sm:$0xf]
      %v2994 = vld [vmem:[%s1 + $0x5ac] sm:$0xf]
      %v2995 = vld [vmem:[%s1 + $0x5b0] sm:$0xf]
      %v2996 = vld [vmem:[%s1 + $0x5b4] sm:$0xf]
      %v2997 = vld [vmem:[%s1 + $0x5b8] sm:$0xf]
      %v2998 = vld [vmem:[%s1 + $0x5bc] sm:$0xf]
      %v2999 = vrot.slane %v2745, 1
      %v3000 = vsel %vm461, %v1741, %v2999
      %v3001 = vrot.slane %v2866, 1
      %v3002 = vsel %vm461, %v2999, %v3001
      %v3021 = vunpack.c.l.b16 %v2983
      %v3022 = vunpack.c.l.b16 %v2984
      %v3023 = vunpack.c.l.b16 %v2985
      %v3024 = vunpack.c.l.b16 %v2986
      %v3025 = vunpack.c.l.b16 %v2987
      %v3026 = vunpack.c.l.b16 %v2988
      %v3027 = vunpack.c.l.b16 %v2989
      %v3028 = vunpack.c.l.b16 %v2990
      %v3029 = vunpack.c.l.b16 %v2991
      %v3030 = vunpack.c.l.b16 %v2992
      %v3031 = vunpack.c.l.b16 %v2993
      %v3032 = vunpack.c.l.b16 %v2994
      %v3033 = vunpack.c.l.b16 %v2995
      %v3034 = vunpack.c.l.b16 %v2996
      %v3035 = vunpack.c.l.b16 %v2997
      %v3036 = vunpack.c.l.b16 %v2998
      %v3037 = vpack.c.b16 %v3022, %v3021
      %v3038 = vpack.c.b16 %v3024, %v3023
      %v3039 = vpack.c.b16 %v3026, %v3025
      %v3040 = vpack.c.b16 %v3028, %v3027
      %v3041 = vpack.c.b16 %v3030, %v3029
      %v3042 = vpack.c.b16 %v3032, %v3031
      %v3043 = vpack.c.b16 %v3034, %v3033
      %v3044 = vpack.c.b16 %v3036, %v3035
      %3053 = vmatprep.subr.bf16.mxu0 0
      %3054 = vmatpush1.bf16.msra.mxu0 %v3044
      %3055 = vmatprep.subr.bf16.mxu0 0
      %3056 = vmatpush1.bf16.msra.mxu0 %v3043
      %3057 = vmatprep.subr.bf16.mxu0 0
      %3058 = vmatpush1.bf16.msra.mxu0 %v3042
      %3059 = vmatprep.subr.bf16.mxu0 0
      %3060 = vmatpush1.bf16.msra.mxu0 %v3041
      %3061 = vmatprep.subr.bf16.mxu0 0
      %3062 = vmatpush1.bf16.msra.mxu0 %v3040
      %3063 = vmatprep.subr.bf16.mxu0 0
      %3064 = vmatpush1.bf16.msra.mxu0 %v3039
      %3065 = vmatprep.subr.bf16.mxu0 0
      %3066 = vmatpush1.bf16.msra.mxu0 %v3038
      %3067 = vmatprep.subr.bf16.mxu0 0
      %3068 = vmatpush1.bf16.msra.mxu0 %v3037
      %3069 = vmatprep.subr.bf16.mxu0 0
      %3070 = vmatpush2.bf16.msra.mxu0 0
      %3071 = vmatprep.subr.bf16.mxu0 0
      %3072 = vmatpush2.bf16.msra.mxu0 0
      %3073 = vmatprep.subr.bf16.mxu0 0
      %3074 = vmatpush2.bf16.msra.mxu0 0
      %3075 = vmatprep.subr.bf16.mxu0 0
      %3076 = vmatpush2.bf16.msra.mxu0 0
      %3077 = vmatprep.subr.bf16.mxu0 0
      %3078 = vmatpush2.bf16.msra.mxu0 0
      %3079 = vmatprep.subr.bf16.mxu0 0
      %3080 = vmatpush2.bf16.msra.mxu0 0
      %3081 = vmatprep.subr.bf16.mxu0 0
      %3082 = vmatpush2.bf16.msra.mxu0 0
      %3083 = vmatprep.subr.bf16.mxu0 0
      %3084 = vmatpush2.bf16.msra.mxu0 0
      %3085 = vmatprep.mubr.bf16.mxu0 0
      %3086 = vmatmul.mubr.bf16.gmra.mxu0 %v3000
      %v3087 = vpop.f32.mrf.mxu0
      %v3088 = vadd.f32 0.0, %v3087
      %v3089 = vpop.f32.mrf.mxu0
      %v3090 = vpop.f32.mrf.mxu0
      %v3091 = vadd.f32 0.0, %v3090
      %v3092 = vpop.f32.mrf.mxu0
      %3093 = vmatprep.mubr.bf16.mxu0 0
      %3094 = vmatmul.mubr.bf16.gmra.mxu0 %v3002
      %v3095 = vpop.f32.mrf.mxu0
      %v3096 = vadd.f32 0.0, %v3095
      %v3097 = vpop.f32.mrf.mxu0
      %v3098 = vpop.f32.mrf.mxu0
      %v3099 = vadd.f32 0.0, %v3098
      %v3100 = vpop.f32.mrf.mxu0
      %3101 = vdwg.mxu0
      %v3102 = vadd.f32 %v2979, %v3088
      %v3103 = vadd.f32 %v2980, %v3091
      %v3104 = vadd.f32 %v2981, %v3096
      %v3105 = vadd.f32 %v2982, %v3099
      %v3106 = vld [vmem:[%s1 + $0x5c0] sm:$0xf]
      %v3107 = vld [vmem:[%s1 + $0x5c4] sm:$0xf]
      %v3108 = vld [vmem:[%s1 + $0x5c8] sm:$0xf]
      %v3109 = vld [vmem:[%s1 + $0x5cc] sm:$0xf]
      %v3110 = vld [vmem:[%s1 + $0x5d0] sm:$0xf]
      %v3111 = vld [vmem:[%s1 + $0x5d4] sm:$0xf]
      %v3112 = vld [vmem:[%s1 + $0x5d8] sm:$0xf]
      %v3113 = vld [vmem:[%s1 + $0x5dc] sm:$0xf]
      %v3114 = vld [vmem:[%s1 + $0x5e0] sm:$0xf]
      %v3115 = vld [vmem:[%s1 + $0x5e4] sm:$0xf]
      %v3116 = vld [vmem:[%s1 + $0x5e8] sm:$0xf]
      %v3117 = vld [vmem:[%s1 + $0x5ec] sm:$0xf]
      %v3118 = vld [vmem:[%s1 + $0x5f0] sm:$0xf]
      %v3119 = vld [vmem:[%s1 + $0x5f4] sm:$0xf]
      %v3120 = vld [vmem:[%s1 + $0x5f8] sm:$0xf]
      %v3121 = vld [vmem:[%s1 + $0x5fc] sm:$0xf]
      %v3122 = vrot.slane %v2872, 1
      %v3123 = vrot.slane %v2868, 2
      %v3124 = vor.u32 %v3122, %v3123
      %v3125 = vsel %vm586, %v1866, %v3124
      %v3126 = vshrl.u32 %v2866, 16
      %v3128 = vrot.slane %v3126, 1
      %v3129 = vrot.slane %v2876, 2
      %v3130 = vor.u32 %v3128, %v3129
      %v3131 = vsel %vm586, %v3124, %v3130
      %v3150 = vunpack.c.l.b16 %v3106
      %v3151 = vunpack.c.l.b16 %v3107
      %v3152 = vunpack.c.l.b16 %v3108
      %v3153 = vunpack.c.l.b16 %v3109
      %v3154 = vunpack.c.l.b16 %v3110
      %v3155 = vunpack.c.l.b16 %v3111
      %v3156 = vunpack.c.l.b16 %v3112
      %v3157 = vunpack.c.l.b16 %v3113
      %v3158 = vunpack.c.l.b16 %v3114
      %v3159 = vunpack.c.l.b16 %v3115
      %v3160 = vunpack.c.l.b16 %v3116
      %v3161 = vunpack.c.l.b16 %v3117
      %v3162 = vunpack.c.l.b16 %v3118
      %v3163 = vunpack.c.l.b16 %v3119
      %v3164 = vunpack.c.l.b16 %v3120
      %v3165 = vunpack.c.l.b16 %v3121
      %v3166 = vpack.c.b16 %v3151, %v3150
      %v3167 = vpack.c.b16 %v3153, %v3152
      %v3168 = vpack.c.b16 %v3155, %v3154
      %v3169 = vpack.c.b16 %v3157, %v3156
      %v3170 = vpack.c.b16 %v3159, %v3158
      %v3171 = vpack.c.b16 %v3161, %v3160
      %v3172 = vpack.c.b16 %v3163, %v3162
      %v3173 = vpack.c.b16 %v3165, %v3164
      %3182 = vmatprep.subr.bf16.mxu0 0
      %3183 = vmatpush1.bf16.msra.mxu0 %v3173
      %3184 = vmatprep.subr.bf16.mxu0 0
      %3185 = vmatpush1.bf16.msra.mxu0 %v3172
      %3186 = vmatprep.subr.bf16.mxu0 0
      %3187 = vmatpush1.bf16.msra.mxu0 %v3171
      %3188 = vmatprep.subr.bf16.mxu0 0
      %3189 = vmatpush1.bf16.msra.mxu0 %v3170
      %3190 = vmatprep.subr.bf16.mxu0 0
      %3191 = vmatpush1.bf16.msra.mxu0 %v3169
      %3192 = vmatprep.subr.bf16.mxu0 0
      %3193 = vmatpush1.bf16.msra.mxu0 %v3168
      %3194 = vmatprep.subr.bf16.mxu0 0
      %3195 = vmatpush1.bf16.msra.mxu0 %v3167
      %3196 = vmatprep.subr.bf16.mxu0 0
      %3197 = vmatpush1.bf16.msra.mxu0 %v3166
      %3198 = vmatprep.subr.bf16.mxu0 0
      %3199 = vmatpush2.bf16.msra.mxu0 0
      %3200 = vmatprep.subr.bf16.mxu0 0
      %3201 = vmatpush2.bf16.msra.mxu0 0
      %3202 = vmatprep.subr.bf16.mxu0 0
      %3203 = vmatpush2.bf16.msra.mxu0 0
      %3204 = vmatprep.subr.bf16.mxu0 0
      %3205 = vmatpush2.bf16.msra.mxu0 0
      %3206 = vmatprep.subr.bf16.mxu0 0
      %3207 = vmatpush2.bf16.msra.mxu0 0
      %3208 = vmatprep.subr.bf16.mxu0 0
      %3209 = vmatpush2.bf16.msra.mxu0 0
      %3210 = vmatprep.subr.bf16.mxu0 0
      %3211 = vmatpush2.bf16.msra.mxu0 0
      %3212 = vmatprep.subr.bf16.mxu0 0
      %3213 = vmatpush2.bf16.msra.mxu0 0
      %3214 = vmatprep.mubr.bf16.mxu0 0
      %3215 = vmatmul.mubr.bf16.gmra.mxu0 %v3125
      %v3216 = vpop.f32.mrf.mxu0
      %v3217 = vadd.f32 0.0, %v3216
      %v3218 = vpop.f32.mrf.mxu0
      %v3219 = vpop.f32.mrf.mxu0
      %v3220 = vadd.f32 0.0, %v3219
      %v3221 = vpop.f32.mrf.mxu0
      %3222 = vmatprep.mubr.bf16.mxu0 0
      %3223 = vmatmul.mubr.bf16.gmra.mxu0 %v3131
      %v3224 = vpop.f32.mrf.mxu0
      %v3225 = vadd.f32 0.0, %v3224
      %v3226 = vpop.f32.mrf.mxu0
      %v3227 = vpop.f32.mrf.mxu0
      %v3228 = vadd.f32 0.0, %v3227
      %v3229 = vpop.f32.mrf.mxu0
      %3230 = vdwg.mxu0
      %v3231 = vadd.f32 %v3102, %v3217
      %v3232 = vadd.f32 %v3103, %v3220
      %v3233 = vadd.f32 %v3104, %v3225
      %v3234 = vadd.f32 %v3105, %v3228
      %v3235 = vld [vmem:[%s1 + $0x600] sm:$0xf]
      %v3236 = vld [vmem:[%s1 + $0x604] sm:$0xf]
      %v3237 = vld [vmem:[%s1 + $0x608] sm:$0xf]
      %v3238 = vld [vmem:[%s1 + $0x60c] sm:$0xf]
      %v3239 = vld [vmem:[%s1 + $0x610] sm:$0xf]
      %v3240 = vld [vmem:[%s1 + $0x614] sm:$0xf]
      %v3241 = vld [vmem:[%s1 + $0x618] sm:$0xf]
      %v3242 = vld [vmem:[%s1 + $0x61c] sm:$0xf]
      %v3243 = vld [vmem:[%s1 + $0x620] sm:$0xf]
      %v3244 = vld [vmem:[%s1 + $0x624] sm:$0xf]
      %v3245 = vld [vmem:[%s1 + $0x628] sm:$0xf]
      %v3246 = vld [vmem:[%s1 + $0x62c] sm:$0xf]
      %v3247 = vld [vmem:[%s1 + $0x630] sm:$0xf]
      %v3248 = vld [vmem:[%s1 + $0x634] sm:$0xf]
      %v3249 = vld [vmem:[%s1 + $0x638] sm:$0xf]
      %v3250 = vld [vmem:[%s1 + $0x63c] sm:$0xf]
      %v3251 = vrot.slane %v2745, 2
      %v3252 = vsel %vm719, %v1993, %v3251
      %v3253 = vrot.slane %v2866, 2
      %v3254 = vsel %vm719, %v3251, %v3253
      %v3273 = vunpack.c.l.b16 %v3235
      %v3274 = vunpack.c.l.b16 %v3236
      %v3275 = vunpack.c.l.b16 %v3237
      %v3276 = vunpack.c.l.b16 %v3238
      %v3277 = vunpack.c.l.b16 %v3239
      %v3278 = vunpack.c.l.b16 %v3240
      %v3279 = vunpack.c.l.b16 %v3241
      %v3280 = vunpack.c.l.b16 %v3242
      %v3281 = vunpack.c.l.b16 %v3243
      %v3282 = vunpack.c.l.b16 %v3244
      %v3283 = vunpack.c.l.b16 %v3245
      %v3284 = vunpack.c.l.b16 %v3246
      %v3285 = vunpack.c.l.b16 %v3247
      %v3286 = vunpack.c.l.b16 %v3248
      %v3287 = vunpack.c.l.b16 %v3249
      %v3288 = vunpack.c.l.b16 %v3250
      %v3289 = vpack.c.b16 %v3274, %v3273
      %v3290 = vpack.c.b16 %v3276, %v3275
      %v3291 = vpack.c.b16 %v3278, %v3277
      %v3292 = vpack.c.b16 %v3280, %v3279
      %v3293 = vpack.c.b16 %v3282, %v3281
      %v3294 = vpack.c.b16 %v3284, %v3283
      %v3295 = vpack.c.b16 %v3286, %v3285
      %v3296 = vpack.c.b16 %v3288, %v3287
      %3305 = vmatprep.subr.bf16.mxu0 0
      %3306 = vmatpush1.bf16.msra.mxu0 %v3296
      %3307 = vmatprep.subr.bf16.mxu0 0
      %3308 = vmatpush1.bf16.msra.mxu0 %v3295
      %3309 = vmatprep.subr.bf16.mxu0 0
      %3310 = vmatpush1.bf16.msra.mxu0 %v3294
      %3311 = vmatprep.subr.bf16.mxu0 0
      %3312 = vmatpush1.bf16.msra.mxu0 %v3293
      %3313 = vmatprep.subr.bf16.mxu0 0
      %3314 = vmatpush1.bf16.msra.mxu0 %v3292
      %3315 = vmatprep.subr.bf16.mxu0 0
      %3316 = vmatpush1.bf16.msra.mxu0 %v3291
      %3317 = vmatprep.subr.bf16.mxu0 0
      %3318 = vmatpush1.bf16.msra.mxu0 %v3290
      %3319 = vmatprep.subr.bf16.mxu0 0
      %3320 = vmatpush1.bf16.msra.mxu0 %v3289
      %3321 = vmatprep.subr.bf16.mxu0 0
      %3322 = vmatpush2.bf16.msra.mxu0 0
      %3323 = vmatprep.subr.bf16.mxu0 0
      %3324 = vmatpush2.bf16.msra.mxu0 0
      %3325 = vmatprep.subr.bf16.mxu0 0
      %3326 = vmatpush2.bf16.msra.mxu0 0
      %3327 = vmatprep.subr.bf16.mxu0 0
      %3328 = vmatpush2.bf16.msra.mxu0 0
      %3329 = vmatprep.subr.bf16.mxu0 0
      %3330 = vmatpush2.bf16.msra.mxu0 0
      %3331 = vmatprep.subr.bf16.mxu0 0
      %3332 = vmatpush2.bf16.msra.mxu0 0
      %3333 = vmatprep.subr.bf16.mxu0 0
      %3334 = vmatpush2.bf16.msra.mxu0 0
      %3335 = vmatprep.subr.bf16.mxu0 0
      %3336 = vmatpush2.bf16.msra.mxu0 0
      %3337 = vmatprep.mubr.bf16.mxu0 0
      %3338 = vmatmul.mubr.bf16.gmra.mxu0 %v3252
      %v3339 = vpop.f32.mrf.mxu0
      %v3340 = vadd.f32 0.0, %v3339
      %v3341 = vpop.f32.mrf.mxu0
      %v3342 = vpop.f32.mrf.mxu0
      %v3343 = vadd.f32 0.0, %v3342
      %v3344 = vpop.f32.mrf.mxu0
      %3345 = vmatprep.mubr.bf16.mxu0 0
      %3346 = vmatmul.mubr.bf16.gmra.mxu0 %v3254
      %v3347 = vpop.f32.mrf.mxu0
      %v3348 = vadd.f32 0.0, %v3347
      %v3349 = vpop.f32.mrf.mxu0
      %v3350 = vpop.f32.mrf.mxu0
      %v3351 = vadd.f32 0.0, %v3350
      %v3352 = vpop.f32.mrf.mxu0
      %3353 = vdwg.mxu0
      %v3354 = vadd.f32 %v3231, %v3340
      %v3355 = vadd.f32 %v3232, %v3343
      %v3356 = vadd.f32 %v3233, %v3348
      %v3357 = vadd.f32 %v3234, %v3351
      %v3358 = vld [vmem:[%s2] sm:$0x1]
      %v3360 = vlaneseq
      %v3361 = vshrl.u32 %v3360, 7
      %v3362 = vsub.s32 0, %v3361
      %v3363 = vrot.slane %v3358, %v3362
      %v3365 = vadd.f32 %v3354, %v3363
      %v3366 = vadd.f32 %v3355, %v3363
      %v3367 = vadd.f32 %v3356, %v3363
      %v3368 = vadd.f32 %v3357, %v3363
      %v3369 = vmax.f32 %v3365, 0.0
      %v3370 = vmax.f32 %v3366, 0.0
      %v3371 = vmax.f32 %v3367, 0.0
      %v3372 = vmax.f32 %v3368, 0.0
      %v3373 = vpack.c.bf16 %v3370, %v3369
      %v3374 = vpack.c.bf16 %v3372, %v3371
      %v3377 = vunpack.c.l.b16 %v3373
      %v3378 = vunpack.c.h.b16 %v3373
      %v3379 = vunpack.c.l.b16 %v3374
      %v3380 = vunpack.c.h.b16 %v3374
      %v3381 = vpack.c.b16 %v3377, %v3377
      %v3382 = vpack.c.b16 %v3378, %v3378
      %v3383 = vpack.c.b16 %v3379, %v3379
      %v3384 = vpack.c.b16 %v3380, %v3380
      %3389 = vst [vmem:[%s170] sm:$0xf] %v3381
      %3390 = vst [vmem:[%s170 + $0x4] sm:$0xf] %v3382
      %3391 = vst [vmem:[%s170 + $0x8] sm:$0xf] %v3383
      %3392 = vst [vmem:[%s170 + $0xc] sm:$0xf] %v3384
      %p3393 = scmp.lt.s32.totalorder %s14, 1
      %s3394 = scalar_select %p3393, %s14, 1
      %s3395 = smul.addr %s3394, 4
      %s3396 = smul.addr %s3395, 4
      %s3397 = scalar_lea.vmem %s3, %s3396
      // Predicated region
      $region33: #{inception_fid_forward.19} parent=31 // pred_check
        %p3398 = pneg %p100
      $region34: #{inception_fid_forward.19} parent=31 // pred_check_branch
        %3400 = sbr.rel (%p3398) target = $region36
      $region35: #{inception_fid_forward.19} parent=31 // pred_region
        _
      $region36: #{inception_fid_forward.19} parent=31 // pred_fallthru
        _
    $region32: #{inception_fid_forward.19} parent=5 // pred_fallthru
      _
    %p3401 = scmp.le.s32.totalorder 2, %s9
    // Predicated region
    $region37: #{inception_fid_forward.19} parent=5 // pred_check
      %p3402 = pneg %p3401
    $region38: #{inception_fid_forward.19} parent=5 // pred_check_branch
      %3404 = sbr.rel (%p3402) target = $region40
    $region39: #{inception_fid_forward.19} parent=5 // pred_region
      %s3405 = ssub.s32 %s9, 2
      // Predicated region
      $region41: #{inception_fid_forward.19} parent=39 // pred_check
        %p3406 = pneg %p106
      $region42: #{inception_fid_forward.19} parent=39 // pred_check_branch
        %3408 = sbr.rel (%p3406) target = $region44
      $region43: #{inception_fid_forward.19} parent=39 // pred_region
        %p3409 = scmp.lt.s32.totalorder %s15, 1
        %s3410 = scalar_select %p3409, %s15, 1
        %s3411 = smul.addr %s3410, 4
        %s3412 = smul.addr %s3411, 4
        %s3413 = scalar_lea.vmem %s3, %s3412
      $region44: #{inception_fid_forward.19} parent=39 // pred_fallthru
        _
    $region40: #{inception_fid_forward.19} parent=5 // pred_fallthru
      _
  $region6: #{inception_fid_forward.19} parent=0 // loop_footer
    %s13 = sadd.s32 1, %s9
  $region7: #{inception_fid_forward.19} parent=0 // loop_footer_branch
    %8 = sbr.rel target = $region3
  $region8: #{inception_fid_forward.19} parent=0 // loop_exit
    _

</llo_original>
